<compile_context>
chip_gen: v7x
topology: tpu7x:2x2x1
jax: 0.10.0
libtpu: 0.0.40
codegen_flags: <defaults>
</compile_context>

<pallas_src>
import functools

import jax
import jax.numpy as jnp
from jax.experimental import pallas as pl
from jax.experimental.pallas import tpu as pltpu

_MXU_DTYPE = jnp.float32   # set to jnp.bfloat16 on v6e/v7x for larger shapes


# ----------------------------------------------------------------------------
# Fused kernel: whole GATModel forward for Bb batch elements per grid step.
# ----------------------------------------------------------------------------
def _gat_fused_kernel(x_ref, adj_ref, w_in_ref, w_lr_ref, a_blkT_ref,
                      head_exp_ref, w_out_ref, o_ref,
                      *, n_layers, n_heads, n_hidden, slope):
    """
    x_ref:        (Bb, N, Din)       node features
    adj_ref:      (Bb, N, N)         adjacency (0 => masked)
    w_in_ref:     (Din, D)           input projection
    w_lr_ref:     (L, D, 2D)         per-layer [w_l | w_r]
    a_blkT_ref:   (L, H, D)          per-layer block-diagonal attention vectors
    head_exp_ref: (H, D)             0/1 head -> lane-block mask
    w_out_ref:    (D, Dout_pad)      output projection (lane-padded)
    o_ref:        (Bb, N, Dout_pad)
    """
    Bb, N, Din = x_ref.shape
    D = n_heads * n_hidden
    P = Bb * N

    # ---- per-grid-step constants, hoisted out of the layer loop -------------
    # Additive softmax mask already in the (P, H, Nj) logits layout so nothing
    # is re-broadcast inside the layer loop. -1e30 instead of -inf: identical
    # wherever a row has >=1 neighbour (self-loops guaranteed in the demo) and
    # NaN-free otherwise.
    adj = adj_ref[...]                                             # (Bb, Ni, Nj)
    bias = jnp.where(adj != 0.0, 0.0, -1e30).astype(jnp.float32)
    bias = jnp.broadcast_to(bias[:, :, None, :], (Bb, N, n_heads, N))
    bias = bias.reshape(P, n_heads, N)                             # (P, H, Nj)

    # 0/1 head -> lane-block masks, pre-broadcast to the value shape.
    head_mask = jnp.broadcast_to(head_exp_ref[...][:, None, None, :],
                                 (n_heads, Bb, N, D))              # (H, Bb, N, D)

    # ---- fused input projection ---------------------------------------------
    x2 = x_ref[...].reshape(P, Din)
    h2 = jnp.dot(x2.astype(_MXU_DTYPE), w_in_ref[...].astype(_MXU_DTYPE),
                 preferred_element_type=jnp.float32)               # (P, D)

    # ---- GATv2 layers (static unroll; n_layers is small).
    # TODO(synk): switch to lax.fori_loop with dynamic w_lr_ref[l] indexing if
    # n_layers grows beyond a handful (bounds vreg live ranges).
    for l in range(n_layers):
        # Both GATv2 projections (w_l | w_r) in one MXU matmul.
        glr = jnp.dot(h2.astype(_MXU_DTYPE), w_lr_ref[l].astype(_MXU_DTYPE),
                      preferred_element_type=jnp.float32)          # (P, 2D)
        gl3 = glr[:, :D].reshape(Bb, N, D)                         # "j" side
        gr3 = glr[:, D:].reshape(Bb, N, D)                         # "i" side & values

        # Pairwise GATv2 scores for all heads, D on lanes (dense LeakyReLU):
        # s[b, i, j, :] = g_r[b, i] + g_l[b, j]   (torch repeat/interleave).
        s = gr3[:, :, None, :] + gl3[:, None, :, :]                # (Bb, Ni, Nj, D)
        act = jnp.where(s >= 0.0, s, slope * s)
        act = act.reshape(P, N, D)                                 # (P, Nj, D)

        # Per-head logits with neighbours j on the LANE axis: batched
        # (H, D) x (Nj, D)^T contraction per (b, i)  ('phd,pjd->phj', the same
        # dot_general pattern as flash-attention's 'bqd,bkd->bqk').
        a_blkT = jnp.broadcast_to(a_blkT_ref[l][None], (P, n_heads, D))
        e = jnp.einsum('phd,pjd->phj',
                       a_blkT.astype(_MXU_DTYPE), act.astype(_MXU_DTYPE),
                       preferred_element_type=jnp.float32)         # (P, H, Nj)
        e = e + bias

        # Softmax over neighbours j = lane axis (cross-lane XLU reductions).
        m = jnp.max(e, axis=-1, keepdims=True)
        p = jnp.exp(e - m)
        den = jnp.sum(p, axis=-1, keepdims=True)
        attn = p * pl.reciprocal(den, approx=False)                # (P, H, Nj)

        # Aggregation on the MXU: per head, (Bb,Ni,Nj) @ (Bb,Nj,D) with the
        # values lane-masked to that head's block; heads accumulate directly
        # into their concatenated lane positions (no (N,N,D) a_full tensor).
        a4 = attn.reshape(Bb, N, n_heads, N)
        hn = jnp.zeros((Bb, N, D), jnp.float32)
        for hh in range(n_heads):
            a_h = a4[:, :, hh, :]                                  # (Bb, Ni, Nj)
            v_h = gr3 * head_mask[hh]                              # (Bb, Nj, D)
            hn = hn + jnp.einsum('bij,bjd->bid',
                                 a_h.astype(_MXU_DTYPE),
                                 v_h.astype(_MXU_DTYPE),
                                 preferred_element_type=jnp.float32)
        h2 = hn.reshape(P, D)

    # ---- fused output projection; lane-padded weight -> lane-dense store ----
    out = jnp.dot(h2.astype(_MXU_DTYPE), w_out_ref[...].astype(_MXU_DTYPE),
                  preferred_element_type=jnp.float32)              # (P, Dout_pad)
    o_ref[...] = out.reshape(Bb, N, o_ref.shape[-1]).astype(o_ref.dtype)


# ----------------------------------------------------------------------------
# One-time weight packing (kept OUT of the jitted per-call forward).
# ----------------------------------------------------------------------------
def pack_gat_params(params, *, n_heads, n_hidden):
    D = n_heads * n_hidden
    node_out_dim = params["w_out"].shape[1]

    # Per-layer [w_l | w_r] packed on the lane axis -> one matmul per layer.
    w_lr = jnp.stack([jnp.concatenate([lp["w_l"], lp["w_r"]], axis=1)
                      for lp in params["layers"]], axis=0)          # (L, D, 2D)

    # 0/1 head -> lane-block mask: head_exp[h, d] = 1 iff d // n_hidden == h.
    head_exp = jnp.repeat(jnp.eye(n_heads, dtype=jnp.float32),
                          n_hidden, axis=1)                         # (H, D)

    # Block-diagonal attention vectors: a_blkT[l, h, h*nh + f] = a_w[l, f].
    a_blkT = jnp.stack([head_exp * jnp.tile(lp["a_w"][0], n_heads)[None, :]
                        for lp in params["layers"]], axis=0)        # (L, H, D)

    # Output projection zero-padded to a lane-dense width (multiple of 128).
    dout_pad = max(128, ((node_out_dim + 127) // 128) * 128)
    w_out_p = jnp.zeros((D, dout_pad), jnp.float32)
    w_out_p = w_out_p.at[:, :node_out_dim].set(params["w_out"])

    return {"w_in": params["w_in"], "w_lr": w_lr, "a_blkT": a_blkT,
            "head_exp": head_exp, "w_out_pad": w_out_p}


def _pick_block_b(batch):
    # Fold as much batch as possible per grid step while keeping the grid
    # length >= 2 (v7x has two TensorCores; v5e/v6e just see a shorter loop).
    limit = max(1, batch // 2)
    for cand in range(limit, 0, -1):
        if batch % cand == 0:
            return cand
    return 1


# ----------------------------------------------------------------------------
# Jitted forward: one pallas_call for the whole model.
# ----------------------------------------------------------------------------
@functools.partial(jax.jit,
                   static_argnames=("n_heads", "n_hidden", "slope",
                                    "node_out_dim", "block_b"))
def gat_model_forward(node_features, adj, packed, *, n_heads, n_hidden, slope,
                      node_out_dim, block_b=None):
    B, N, Din = node_features.shape
    D = n_heads * n_hidden
    n_layers = packed["w_lr"].shape[0]
    dout_pad = packed["w_out_pad"].shape[1]

    Bb = block_b if block_b is not None else _pick_block_b(B)
    assert B % Bb == 0
    grid = (B // Bb,)

    kernel = functools.partial(_gat_fused_kernel, n_layers=n_layers,
                               n_heads=n_heads, n_hidden=n_hidden, slope=slope)

    # Rough cost hint so XLA schedules sensibly around the custom call.
    flops = (2 * B * N * Din * D
             + n_layers * (2 * B * N * D * 2 * D            # l/r projections
                           + 3 * B * N * N * D              # pairwise + LeakyReLU
                           + 2 * B * N * N * n_heads * D    # logits
                           + 6 * B * N * N * n_heads        # softmax
                           + 2 * B * n_heads * N * N * D    # aggregation
                           + 2 * B * n_heads * N * D)       # value masking
             + 2 * B * N * D * dout_pad)
    transcendentals = n_layers * B * N * N * n_heads
    bytes_accessed = 4 * (node_features.size + adj.size + packed["w_in"].size
                          + packed["w_lr"].size + packed["a_blkT"].size
                          + packed["head_exp"].size + packed["w_out_pad"].size
                          + B * N * dout_pad)

    out_p = pl.pallas_call(
        kernel,
        out_shape=jax.ShapeDtypeStruct((B, N, dout_pad), jnp.float32),
        grid=grid,
        in_specs=[
            pl.BlockSpec((Bb, N, Din), lambda g: (g, 0, 0)),            # x
            pl.BlockSpec((Bb, N, N), lambda g: (g, 0, 0)),              # adj
            pl.BlockSpec((Din, D), lambda g: (0, 0)),                   # w_in
            pl.BlockSpec((n_layers, D, 2 * D), lambda g: (0, 0, 0)),    # w_l|w_r
            pl.BlockSpec((n_layers, n_heads, D), lambda g: (0, 0, 0)),  # attn vec
            pl.BlockSpec((n_heads, D), lambda g: (0, 0)),               # head mask
            pl.BlockSpec((D, dout_pad), lambda g: (0, 0)),              # w_out
        ],
        out_specs=pl.BlockSpec((Bb, N, dout_pad), lambda g: (g, 0, 0)),
        compiler_params=pltpu.CompilerParams(
            dimension_semantics=("parallel",)),
        cost_estimate=pl.CostEstimate(flops=flops,
                                      transcendentals=transcendentals,
                                      bytes_accessed=bytes_accessed),
    )(node_features, adj, packed["w_in"], packed["w_lr"], packed["a_blkT"],
      packed["head_exp"], packed["w_out_pad"])

    return out_p[:, :, :node_out_dim]


# ----------------------------------------------------------------------------
# Pure-JAX reference (mirrors the PyTorch forward) for verification.
# ----------------------------------------------------------------------------
def gat_model_ref(x, adj, params, *, n_heads, n_hidden, slope):
    h = x @ params["w_in"]
    B, N, D = h.shape
    for lp in params["layers"]:
        gl = (h @ lp["w_l"]).reshape(B, N, n_heads, n_hidden)
        gr = (h @ lp["w_r"]).reshape(B, N, n_heads, n_hidden)
        s = gr[:, :, None, :, :] + gl[:, None, :, :, :]        # (B, i, j, H, nh)
        act = jnp.where(s >= 0.0, s, slope * s)
        e = jnp.einsum('bijhf,f->bijh', act, lp["a_w"][0])
        e = jnp.where((adj != 0.0)[..., None], e, -jnp.inf)
        a = jax.nn.softmax(e, axis=2)
        h = jnp.einsum('bijh,bjhf->bihf', a, gr).reshape(B, N, D)
    return h @ params["w_out"]


def init_params(key, node_in_dim, hidden_dim, node_out_dim, n_layers, n_hidden):
    def uniform(k, shape, fan_in):
        bound = 1.0 / jnp.sqrt(jnp.float32(fan_in))
        return jax.random.uniform(k, shape, jnp.float32, -bound, bound)

    keys = jax.random.split(key, 2 + 3 * n_layers)
    params = {
        "w_in": uniform(keys[0], (node_in_dim, hidden_dim), node_in_dim),
        "w_out": uniform(keys[1], (hidden_dim, node_out_dim), hidden_dim),
        "layers": [],
    }
    for l in range(n_layers):
        k0, k1, k2 = keys[2 + 3 * l: 5 + 3 * l]
        params["layers"].append({
            "w_l": uniform(k0, (hidden_dim, hidden_dim), hidden_dim),
            "w_r": uniform(k1, (hidden_dim, hidden_dim), hidden_dim),
            "a_w": uniform(k2, (1, n_hidden), n_hidden),
        })
    return params


if __name__ == "__main__":
    # Small config consistent with GATModel(node_in_dim, version='v2', ...).
    B, N = 4, 16                 # B=4 -> Bb=2 per grid step, grid=(2,)
    node_in_dim = 4
    hidden_dim = 32
    n_heads = 4
    n_hidden = hidden_dim // n_heads   # is_concat=True
    n_layers = 2
    node_out_dim = 1
    slope = 0.2                        # leaky_relu_negative_slope
    # dropout=0.0 -> identity at inference; bias=False -> no bias terms.

    key = jax.random.PRNGKey(0)
    k_x, k_adj, k_p = jax.random.split(key, 3)

    node_features = jax.random.normal(k_x, (B, N, node_in_dim), jnp.float32)
    # Adjacency with guaranteed self-loops so no softmax row is fully masked.
    rand_adj = (jax.random.uniform(k_adj, (B, N, N)) > 0.5).astype(jnp.float32)
    adj = jnp.maximum(rand_adj, jnp.eye(N, dtype=jnp.float32)[None])

    params = init_params(k_p, node_in_dim, hidden_dim, node_out_dim,
                         n_layers, n_hidden)
    packed = pack_gat_params(params, n_heads=n_heads, n_hidden=n_hidden)

    out = gat_model_forward(node_features, adj, packed,
                            n_heads=n_heads, n_hidden=n_hidden, slope=slope,
                            node_out_dim=node_out_dim)
    out = jax.block_until_ready(out)

    ref = gat_model_ref(node_features, adj, params,
                        n_heads=n_heads, n_hidden=n_hidden, slope=slope)
    ref = jax.block_until_ready(ref)

    assert out.shape == (B, N, node_out_dim)
    assert bool(jnp.all(jnp.isfinite(out)))
    assert jnp.allclose(out, ref, atol=1e-2, rtol=1e-2)

    print("KERNEL_OK")
</pallas_src>

<mosaic_0001>
module attributes {stable_mosaic.version = 11 : i64} {
  func.func @_gat_fused_kernel(%arg0: i32, %arg1: memref<2x16x4xf32, #tpu.memory_space<vmem>>, %arg2: memref<2x16x16xf32, #tpu.memory_space<vmem>>, %arg3: memref<4x32xf32, #tpu.memory_space<vmem>>, %arg4: memref<2x32x64xf32, #tpu.memory_space<vmem>>, %arg5: memref<2x4x32xf32, #tpu.memory_space<vmem>>, %arg6: memref<4x32xf32, #tpu.memory_space<vmem>>, %arg7: memref<32x128xf32, #tpu.memory_space<vmem>>, %arg8: memref<2x16x128xf32, #tpu.memory_space<vmem>>) attributes {dimension_semantics = [#tpu.dimension_semantics<parallel>], iteration_bounds = array<i64: 2>, scalar_prefetch = 0 : i64, scratch_operands = 0 : i64, tpu.core_type = #tpu.core_type<tc>, window_params = [{transform_indices = @transform_0, window_bounds = array<i64: 2, 16, 4>}, {transform_indices = @transform_1, window_bounds = array<i64: 2, 16, 16>}, {pipeline_mode = #tpu.pipeline_mode<synchronous>, transform_indices = @transform_2, window_bounds = array<i64: 4, 32>}, {pipeline_mode = #tpu.pipeline_mode<synchronous>, transform_indices = @transform_3, window_bounds = array<i64: 2, 32, 64>}, {pipeline_mode = #tpu.pipeline_mode<synchronous>, transform_indices = @transform_4, window_bounds = array<i64: 2, 4, 32>}, {pipeline_mode = #tpu.pipeline_mode<synchronous>, transform_indices = @transform_5, window_bounds = array<i64: 4, 32>}, {pipeline_mode = #tpu.pipeline_mode<synchronous>, transform_indices = @transform_6, window_bounds = array<i64: 32, 128>}, {transform_indices = @transform_7, window_bounds = array<i64: 2, 16, 128>}]} {
    %c0 = arith.constant 0 : index
    %c0_0 = arith.constant 0 : index
    %c0_1 = arith.constant 0 : index
    %0 = vector.load %arg2[%c0, %c0_0, %c0_1] : memref<2x16x16xf32, #tpu.memory_space<vmem>>, vector<2x16x16xf32>
    %cst = arith.constant 0.000000e+00 : f32
    %1 = vector.broadcast %cst : f32 to vector<2x16x16xf32>
    %2 = arith.cmpf one, %0, %1 : vector<2x16x16xf32>
    %cst_2 = arith.constant 0.000000e+00 : f32
    %cst_3 = arith.constant -1.000000e+30 : f32
    %3 = vector.broadcast %cst_2 : f32 to vector<2x16x16xf32>
    %4 = vector.broadcast %cst_3 : f32 to vector<2x16x16xf32>
    %5 = arith.select %2, %3, %4 : vector<2x16x16xi1>, vector<2x16x16xf32>
    %6 = vector.shape_cast %5 : vector<2x16x16xf32> to vector<2x16x1x16xf32>
    %7 = vector.shape_cast %6 : vector<2x16x1x16xf32> to vector<2x16x1x16xf32>
    %8 = vector.broadcast %7 : vector<2x16x1x16xf32> to vector<2x16x4x16xf32>
    %9 = vector.shape_cast %8 : vector<2x16x4x16xf32> to vector<32x4x16xf32>
    %c0_4 = arith.constant 0 : index
    %c0_5 = arith.constant 0 : index
    %10 = vector.load %arg6[%c0_4, %c0_5] : memref<4x32xf32, #tpu.memory_space<vmem>>, vector<4x32xf32>
    %11 = vector.shape_cast %10 : vector<4x32xf32> to vector<4x1x1x32xf32>
    %12 = vector.shape_cast %11 : vector<4x1x1x32xf32> to vector<4x1x1x32xf32>
    %13 = vector.broadcast %12 : vector<4x1x1x32xf32> to vector<4x2x16x32xf32>
    %c0_6 = arith.constant 0 : index
    %c0_7 = arith.constant 0 : index
    %c0_8 = arith.constant 0 : index
    %14 = vector.load %arg1[%c0_6, %c0_7, %c0_8] : memref<2x16x4xf32, #tpu.memory_space<vmem>>, vector<2x16x4xf32>
    %15 = vector.shape_cast %14 : vector<2x16x4xf32> to vector<32x4xf32>
    %c0_9 = arith.constant 0 : index
    %c0_10 = arith.constant 0 : index
    %16 = vector.load %arg3[%c0_9, %c0_10] : memref<4x32xf32, #tpu.memory_space<vmem>>, vector<4x32xf32>
    %cst_11 = arith.constant dense<0.000000e+00> : vector<32x32xf32>
    %17 = tpu.matmul %15, %16, %cst_11 {dimension_numbers = #tpu.dot_dimension_numbers<[1], [0], [0], [1], [0, 0, 1, 1], [], []>} : vector<32x4xf32>, vector<4x32xf32>, vector<32x32xf32> -> vector<32x32xf32>
    %c0_12 = arith.constant 0 : index
    %c0_13 = arith.constant 0 : index
    %c0_14 = arith.constant 0 : index
    %18 = vector.load %arg4[%c0_12, %c0_13, %c0_14] : memref<2x32x64xf32, #tpu.memory_space<vmem>>, vector<1x32x64xf32>
    %19 = vector.shape_cast %18 : vector<1x32x64xf32> to vector<32x64xf32>
    %cst_15 = arith.constant dense<0.000000e+00> : vector<32x64xf32>
    %20 = tpu.matmul %17, %19, %cst_15 {dimension_numbers = #tpu.dot_dimension_numbers<[1], [0], [0], [1], [0, 0, 1, 1], [], []>} : vector<32x32xf32>, vector<32x64xf32>, vector<32x64xf32> -> vector<32x64xf32>
    %21 = vector.extract_strided_slice %20 {offsets = [0, 0], sizes = [32, 32], strides = [1, 1]} : vector<32x64xf32> to vector<32x32xf32>
    %22 = vector.shape_cast %21 : vector<32x32xf32> to vector<2x16x32xf32>
    %23 = vector.extract_strided_slice %20 {offsets = [0, 32], sizes = [32, 32], strides = [1, 1]} : vector<32x64xf32> to vector<32x32xf32>
    %24 = vector.shape_cast %23 : vector<32x32xf32> to vector<2x16x32xf32>
    %25 = vector.shape_cast %24 : vector<2x16x32xf32> to vector<2x16x1x32xf32>
    %26 = vector.shape_cast %22 : vector<2x16x32xf32> to vector<2x1x16x32xf32>
    %27 = vector.broadcast %25 : vector<2x16x1x32xf32> to vector<2x16x16x32xf32>
    %28 = vector.broadcast %26 : vector<2x1x16x32xf32> to vector<2x16x16x32xf32>
    %29 = arith.addf %27, %28 : vector<2x16x16x32xf32>
    %cst_16 = arith.constant 0.000000e+00 : f32
    %30 = vector.broadcast %cst_16 : f32 to vector<2x16x16x32xf32>
    %31 = arith.cmpf oge, %29, %30 : vector<2x16x16x32xf32>
    %cst_17 = arith.constant 2.000000e-01 : f32
    %32 = vector.broadcast %cst_17 : f32 to vector<2x16x16x32xf32>
    %33 = arith.mulf %32, %29 : vector<2x16x16x32xf32>
    %34 = arith.select %31, %29, %33 : vector<2x16x16x32xi1>, vector<2x16x16x32xf32>
    %35 = vector.shape_cast %34 : vector<2x16x16x32xf32> to vector<32x16x32xf32>
    %c0_18 = arith.constant 0 : index
    %c0_19 = arith.constant 0 : index
    %c0_20 = arith.constant 0 : index
    %36 = vector.load %arg5[%c0_18, %c0_19, %c0_20] : memref<2x4x32xf32, #tpu.memory_space<vmem>>, vector<1x4x32xf32>
    %37 = vector.shape_cast %36 : vector<1x4x32xf32> to vector<4x32xf32>
    %38 = vector.shape_cast %37 : vector<4x32xf32> to vector<1x4x32xf32>
    %39 = vector.shape_cast %38 : vector<1x4x32xf32> to vector<1x4x32xf32>
    %40 = vector.broadcast %39 : vector<1x4x32xf32> to vector<32x4x32xf32>
    "tpu.trace_start"() <{level = 10 : i32, message = "phd,pjd->phj"}> : () -> ()
    %cst_21 = arith.constant dense<0.000000e+00> : vector<32x4x16xf32>
    %41 = tpu.matmul %40, %35, %cst_21 {dimension_numbers = #tpu.dot_dimension_numbers<[2], [2], [1], [1], [0, 0, 0, 1, 1, 1], [0], [0]>} : vector<32x4x32xf32>, vector<32x16x32xf32>, vector<32x4x16xf32> -> vector<32x4x16xf32>
    "tpu.trace_stop"() : () -> ()
    %42 = arith.addf %41, %9 : vector<32x4x16xf32>
    %cst_22 = arith.constant dense<0xFF800000> : vector<32x4xf32>
    %43 = vector.multi_reduction <maximumf>, %42, %cst_22 [2] : vector<32x4x16xf32> to vector<32x4xf32>
    %44 = vector.shape_cast %43 : vector<32x4xf32> to vector<32x4x1xf32>
    %45 = vector.broadcast %44 : vector<32x4x1xf32> to vector<32x4x16xf32>
    %46 = arith.subf %42, %45 : vector<32x4x16xf32>
    %47 = math.exp %46 : vector<32x4x16xf32>
    %cst_23 = arith.constant dense<0.000000e+00> : vector<32x4xf32>
    %48 = vector.multi_reduction <add>, %47, %cst_23 [2] : vector<32x4x16xf32> to vector<32x4xf32>
    %49 = vector.shape_cast %48 : vector<32x4xf32> to vector<32x4x1xf32>
    %50 = tpu.reciprocal %49 : vector<32x4x1xf32> -> vector<32x4x1xf32>
    %51 = vector.broadcast %50 : vector<32x4x1xf32> to vector<32x4x16xf32>
    %52 = arith.mulf %47, %51 : vector<32x4x16xf32>
    %53 = vector.shape_cast %52 : vector<32x4x16xf32> to vector<2x16x4x16xf32>
    %cst_24 = arith.constant 0.000000e+00 : f32
    %54 = vector.broadcast %cst_24 : f32 to vector<2x16x32xf32>
    %55 = vector.extract_strided_slice %53 {offsets = [0, 0, 0, 0], sizes = [2, 16, 1, 16], strides = [1, 1, 1, 1]} : vector<2x16x4x16xf32> to vector<2x16x1x16xf32>
    %56 = vector.shape_cast %55 : vector<2x16x1x16xf32> to vector<2x16x16xf32>
    %57 = vector.extract_strided_slice %13 {offsets = [0, 0, 0, 0], sizes = [1, 2, 16, 32], strides = [1, 1, 1, 1]} : vector<4x2x16x32xf32> to vector<1x2x16x32xf32>
    %58 = vector.shape_cast %57 : vector<1x2x16x32xf32> to vector<2x16x32xf32>
    %59 = arith.mulf %24, %58 : vector<2x16x32xf32>
    "tpu.trace_start"() <{level = 10 : i32, message = "bij,bjd->bid"}> : () -> ()
    %cst_25 = arith.constant dense<0.000000e+00> : vector<2x16x32xf32>
    %60 = tpu.matmul %56, %59, %cst_25 {dimension_numbers = #tpu.dot_dimension_numbers<[2], [1], [1], [2], [0, 0, 0, 1, 1, 2], [0], [0]>} : vector<2x16x16xf32>, vector<2x16x32xf32>, vector<2x16x32xf32> -> vector<2x16x32xf32>
    "tpu.trace_stop"() : () -> ()
    %61 = arith.addf %54, %60 : vector<2x16x32xf32>
    %62 = vector.extract_strided_slice %53 {offsets = [0, 0, 1, 0], sizes = [2, 16, 1, 16], strides = [1, 1, 1, 1]} : vector<2x16x4x16xf32> to vector<2x16x1x16xf32>
    %63 = vector.shape_cast %62 : vector<2x16x1x16xf32> to vector<2x16x16xf32>
    %64 = vector.extract_strided_slice %13 {offsets = [1, 0, 0, 0], sizes = [1, 2, 16, 32], strides = [1, 1, 1, 1]} : vector<4x2x16x32xf32> to vector<1x2x16x32xf32>
    %65 = vector.shape_cast %64 : vector<1x2x16x32xf32> to vector<2x16x32xf32>
    %66 = arith.mulf %24, %65 : vector<2x16x32xf32>
    "tpu.trace_start"() <{level = 10 : i32, message = "bij,bjd->bid"}> : () -> ()
    %cst_26 = arith.constant dense<0.000000e+00> : vector<2x16x32xf32>
    %67 = tpu.matmul %63, %66, %cst_26 {dimension_numbers = #tpu.dot_dimension_numbers<[2], [1], [1], [2], [0, 0, 0, 1, 1, 2], [0], [0]>} : vector<2x16x16xf32>, vector<2x16x32xf32>, vector<2x16x32xf32> -> vector<2x16x32xf32>
    "tpu.trace_stop"() : () -> ()
    %68 = arith.addf %61, %67 : vector<2x16x32xf32>
    %69 = vector.extract_strided_slice %53 {offsets = [0, 0, 2, 0], sizes = [2, 16, 1, 16], strides = [1, 1, 1, 1]} : vector<2x16x4x16xf32> to vector<2x16x1x16xf32>
    %70 = vector.shape_cast %69 : vector<2x16x1x16xf32> to vector<2x16x16xf32>
    %71 = vector.extract_strided_slice %13 {offsets = [2, 0, 0, 0], sizes = [1, 2, 16, 32], strides = [1, 1, 1, 1]} : vector<4x2x16x32xf32> to vector<1x2x16x32xf32>
    %72 = vector.shape_cast %71 : vector<1x2x16x32xf32> to vector<2x16x32xf32>
    %73 = arith.mulf %24, %72 : vector<2x16x32xf32>
    "tpu.trace_start"() <{level = 10 : i32, message = "bij,bjd->bid"}> : () -> ()
    %cst_27 = arith.constant dense<0.000000e+00> : vector<2x16x32xf32>
    %74 = tpu.matmul %70, %73, %cst_27 {dimension_numbers = #tpu.dot_dimension_numbers<[2], [1], [1], [2], [0, 0, 0, 1, 1, 2], [0], [0]>} : vector<2x16x16xf32>, vector<2x16x32xf32>, vector<2x16x32xf32> -> vector<2x16x32xf32>
    "tpu.trace_stop"() : () -> ()
    %75 = arith.addf %68, %74 : vector<2x16x32xf32>
    %76 = vector.extract_strided_slice %53 {offsets = [0, 0, 3, 0], sizes = [2, 16, 1, 16], strides = [1, 1, 1, 1]} : vector<2x16x4x16xf32> to vector<2x16x1x16xf32>
    %77 = vector.shape_cast %76 : vector<2x16x1x16xf32> to vector<2x16x16xf32>
    %78 = vector.extract_strided_slice %13 {offsets = [3, 0, 0, 0], sizes = [1, 2, 16, 32], strides = [1, 1, 1, 1]} : vector<4x2x16x32xf32> to vector<1x2x16x32xf32>
    %79 = vector.shape_cast %78 : vector<1x2x16x32xf32> to vector<2x16x32xf32>
    %80 = arith.mulf %24, %79 : vector<2x16x32xf32>
    "tpu.trace_start"() <{level = 10 : i32, message = "bij,bjd->bid"}> : () -> ()
    %cst_28 = arith.constant dense<0.000000e+00> : vector<2x16x32xf32>
    %81 = tpu.matmul %77, %80, %cst_28 {dimension_numbers = #tpu.dot_dimension_numbers<[2], [1], [1], [2], [0, 0, 0, 1, 1, 2], [0], [0]>} : vector<2x16x16xf32>, vector<2x16x32xf32>, vector<2x16x32xf32> -> vector<2x16x32xf32>
    "tpu.trace_stop"() : () -> ()
    %82 = arith.addf %75, %81 : vector<2x16x32xf32>
    %83 = vector.shape_cast %82 : vector<2x16x32xf32> to vector<32x32xf32>
    %c1 = arith.constant 1 : index
    %c0_29 = arith.constant 0 : index
    %c0_30 = arith.constant 0 : index
    %84 = vector.load %arg4[%c1, %c0_29, %c0_30] : memref<2x32x64xf32, #tpu.memory_space<vmem>>, vector<1x32x64xf32>
    %85 = vector.shape_cast %84 : vector<1x32x64xf32> to vector<32x64xf32>
    %cst_31 = arith.constant dense<0.000000e+00> : vector<32x64xf32>
    %86 = tpu.matmul %83, %85, %cst_31 {dimension_numbers = #tpu.dot_dimension_numbers<[1], [0], [0], [1], [0, 0, 1, 1], [], []>} : vector<32x32xf32>, vector<32x64xf32>, vector<32x64xf32> -> vector<32x64xf32>
    %87 = vector.extract_strided_slice %86 {offsets = [0, 0], sizes = [32, 32], strides = [1, 1]} : vector<32x64xf32> to vector<32x32xf32>
    %88 = vector.shape_cast %87 : vector<32x32xf32> to vector<2x16x32xf32>
    %89 = vector.extract_strided_slice %86 {offsets = [0, 32], sizes = [32, 32], strides = [1, 1]} : vector<32x64xf32> to vector<32x32xf32>
    %90 = vector.shape_cast %89 : vector<32x32xf32> to vector<2x16x32xf32>
    %91 = vector.shape_cast %90 : vector<2x16x32xf32> to vector<2x16x1x32xf32>
    %92 = vector.shape_cast %88 : vector<2x16x32xf32> to vector<2x1x16x32xf32>
    %93 = vector.broadcast %91 : vector<2x16x1x32xf32> to vector<2x16x16x32xf32>
    %94 = vector.broadcast %92 : vector<2x1x16x32xf32> to vector<2x16x16x32xf32>
    %95 = arith.addf %93, %94 : vector<2x16x16x32xf32>
    %cst_32 = arith.constant 0.000000e+00 : f32
    %96 = vector.broadcast %cst_32 : f32 to vector<2x16x16x32xf32>
    %97 = arith.cmpf oge, %95, %96 : vector<2x16x16x32xf32>
    %cst_33 = arith.constant 2.000000e-01 : f32
    %98 = vector.broadcast %cst_33 : f32 to vector<2x16x16x32xf32>
    %99 = arith.mulf %98, %95 : vector<2x16x16x32xf32>
    %100 = arith.select %97, %95, %99 : vector<2x16x16x32xi1>, vector<2x16x16x32xf32>
    %101 = vector.shape_cast %100 : vector<2x16x16x32xf32> to vector<32x16x32xf32>
    %c1_34 = arith.constant 1 : index
    %c0_35 = arith.constant 0 : index
    %c0_36 = arith.constant 0 : index
    %102 = vector.load %arg5[%c1_34, %c0_35, %c0_36] : memref<2x4x32xf32, #tpu.memory_space<vmem>>, vector<1x4x32xf32>
    %103 = vector.shape_cast %102 : vector<1x4x32xf32> to vector<4x32xf32>
    %104 = vector.shape_cast %103 : vector<4x32xf32> to vector<1x4x32xf32>
    %105 = vector.shape_cast %104 : vector<1x4x32xf32> to vector<1x4x32xf32>
    %106 = vector.broadcast %105 : vector<1x4x32xf32> to vector<32x4x32xf32>
    "tpu.trace_start"() <{level = 10 : i32, message = "phd,pjd->phj"}> : () -> ()
    %cst_37 = arith.constant dense<0.000000e+00> : vector<32x4x16xf32>
    %107 = tpu.matmul %106, %101, %cst_37 {dimension_numbers = #tpu.dot_dimension_numbers<[2], [2], [1], [1], [0, 0, 0, 1, 1, 1], [0], [0]>} : vector<32x4x32xf32>, vector<32x16x32xf32>, vector<32x4x16xf32> -> vector<32x4x16xf32>
    "tpu.trace_stop"() : () -> ()
    %108 = arith.addf %107, %9 : vector<32x4x16xf32>
    %cst_38 = arith.constant dense<0xFF800000> : vector<32x4xf32>
    %109 = vector.multi_reduction <maximumf>, %108, %cst_38 [2] : vector<32x4x16xf32> to vector<32x4xf32>
    %110 = vector.shape_cast %109 : vector<32x4xf32> to vector<32x4x1xf32>
    %111 = vector.broadcast %110 : vector<32x4x1xf32> to vector<32x4x16xf32>
    %112 = arith.subf %108, %111 : vector<32x4x16xf32>
    %113 = math.exp %112 : vector<32x4x16xf32>
    %cst_39 = arith.constant dense<0.000000e+00> : vector<32x4xf32>
    %114 = vector.multi_reduction <add>, %113, %cst_39 [2] : vector<32x4x16xf32> to vector<32x4xf32>
    %115 = vector.shape_cast %114 : vector<32x4xf32> to vector<32x4x1xf32>
    %116 = tpu.reciprocal %115 : vector<32x4x1xf32> -> vector<32x4x1xf32>
    %117 = vector.broadcast %116 : vector<32x4x1xf32> to vector<32x4x16xf32>
    %118 = arith.mulf %113, %117 : vector<32x4x16xf32>
    %119 = vector.shape_cast %118 : vector<32x4x16xf32> to vector<2x16x4x16xf32>
    %cst_40 = arith.constant 0.000000e+00 : f32
    %120 = vector.broadcast %cst_40 : f32 to vector<2x16x32xf32>
    %121 = vector.extract_strided_slice %119 {offsets = [0, 0, 0, 0], sizes = [2, 16, 1, 16], strides = [1, 1, 1, 1]} : vector<2x16x4x16xf32> to vector<2x16x1x16xf32>
    %122 = vector.shape_cast %121 : vector<2x16x1x16xf32> to vector<2x16x16xf32>
    %123 = vector.extract_strided_slice %13 {offsets = [0, 0, 0, 0], sizes = [1, 2, 16, 32], strides = [1, 1, 1, 1]} : vector<4x2x16x32xf32> to vector<1x2x16x32xf32>
    %124 = vector.shape_cast %123 : vector<1x2x16x32xf32> to vector<2x16x32xf32>
    %125 = arith.mulf %90, %124 : vector<2x16x32xf32>
    "tpu.trace_start"() <{level = 10 : i32, message = "bij,bjd->bid"}> : () -> ()
    %cst_41 = arith.constant dense<0.000000e+00> : vector<2x16x32xf32>
    %126 = tpu.matmul %122, %125, %cst_41 {dimension_numbers = #tpu.dot_dimension_numbers<[2], [1], [1], [2], [0, 0, 0, 1, 1, 2], [0], [0]>} : vector<2x16x16xf32>, vector<2x16x32xf32>, vector<2x16x32xf32> -> vector<2x16x32xf32>
    "tpu.trace_stop"() : () -> ()
    %127 = arith.addf %120, %126 : vector<2x16x32xf32>
    %128 = vector.extract_strided_slice %119 {offsets = [0, 0, 1, 0], sizes = [2, 16, 1, 16], strides = [1, 1, 1, 1]} : vector<2x16x4x16xf32> to vector<2x16x1x16xf32>
    %129 = vector.shape_cast %128 : vector<2x16x1x16xf32> to vector<2x16x16xf32>
    %130 = vector.extract_strided_slice %13 {offsets = [1, 0, 0, 0], sizes = [1, 2, 16, 32], strides = [1, 1, 1, 1]} : vector<4x2x16x32xf32> to vector<1x2x16x32xf32>
    %131 = vector.shape_cast %130 : vector<1x2x16x32xf32> to vector<2x16x32xf32>
    %132 = arith.mulf %90, %131 : vector<2x16x32xf32>
    "tpu.trace_start"() <{level = 10 : i32, message = "bij,bjd->bid"}> : () -> ()
    %cst_42 = arith.constant dense<0.000000e+00> : vector<2x16x32xf32>
    %133 = tpu.matmul %129, %132, %cst_42 {dimension_numbers = #tpu.dot_dimension_numbers<[2], [1], [1], [2], [0, 0, 0, 1, 1, 2], [0], [0]>} : vector<2x16x16xf32>, vector<2x16x32xf32>, vector<2x16x32xf32> -> vector<2x16x32xf32>
    "tpu.trace_stop"() : () -> ()
    %134 = arith.addf %127, %133 : vector<2x16x32xf32>
    %135 = vector.extract_strided_slice %119 {offsets = [0, 0, 2, 0], sizes = [2, 16, 1, 16], strides = [1, 1, 1, 1]} : vector<2x16x4x16xf32> to vector<2x16x1x16xf32>
    %136 = vector.shape_cast %135 : vector<2x16x1x16xf32> to vector<2x16x16xf32>
    %137 = vector.extract_strided_slice %13 {offsets = [2, 0, 0, 0], sizes = [1, 2, 16, 32], strides = [1, 1, 1, 1]} : vector<4x2x16x32xf32> to vector<1x2x16x32xf32>
    %138 = vector.shape_cast %137 : vector<1x2x16x32xf32> to vector<2x16x32xf32>
    %139 = arith.mulf %90, %138 : vector<2x16x32xf32>
    "tpu.trace_start"() <{level = 10 : i32, message = "bij,bjd->bid"}> : () -> ()
    %cst_43 = arith.constant dense<0.000000e+00> : vector<2x16x32xf32>
    %140 = tpu.matmul %136, %139, %cst_43 {dimension_numbers = #tpu.dot_dimension_numbers<[2], [1], [1], [2], [0, 0, 0, 1, 1, 2], [0], [0]>} : vector<2x16x16xf32>, vector<2x16x32xf32>, vector<2x16x32xf32> -> vector<2x16x32xf32>
    "tpu.trace_stop"() : () -> ()
    %141 = arith.addf %134, %140 : vector<2x16x32xf32>
    %142 = vector.extract_strided_slice %119 {offsets = [0, 0, 3, 0], sizes = [2, 16, 1, 16], strides = [1, 1, 1, 1]} : vector<2x16x4x16xf32> to vector<2x16x1x16xf32>
    %143 = vector.shape_cast %142 : vector<2x16x1x16xf32> to vector<2x16x16xf32>
    %144 = vector.extract_strided_slice %13 {offsets = [3, 0, 0, 0], sizes = [1, 2, 16, 32], strides = [1, 1, 1, 1]} : vector<4x2x16x32xf32> to vector<1x2x16x32xf32>
    %145 = vector.shape_cast %144 : vector<1x2x16x32xf32> to vector<2x16x32xf32>
    %146 = arith.mulf %90, %145 : vector<2x16x32xf32>
    "tpu.trace_start"() <{level = 10 : i32, message = "bij,bjd->bid"}> : () -> ()
    %cst_44 = arith.constant dense<0.000000e+00> : vector<2x16x32xf32>
    %147 = tpu.matmul %143, %146, %cst_44 {dimension_numbers = #tpu.dot_dimension_numbers<[2], [1], [1], [2], [0, 0, 0, 1, 1, 2], [0], [0]>} : vector<2x16x16xf32>, vector<2x16x32xf32>, vector<2x16x32xf32> -> vector<2x16x32xf32>
    "tpu.trace_stop"() : () -> ()
    %148 = arith.addf %141, %147 : vector<2x16x32xf32>
    %149 = vector.shape_cast %148 : vector<2x16x32xf32> to vector<32x32xf32>
    %c0_45 = arith.constant 0 : index
    %c0_46 = arith.constant 0 : index
    %150 = vector.load %arg7[%c0_45, %c0_46] : memref<32x128xf32, #tpu.memory_space<vmem>>, vector<32x128xf32>
    %cst_47 = arith.constant dense<0.000000e+00> : vector<32x128xf32>
    %151 = tpu.matmul %149, %150, %cst_47 {dimension_numbers = #tpu.dot_dimension_numbers<[1], [0], [0], [1], [0, 0, 1, 1], [], []>} : vector<32x32xf32>, vector<32x128xf32>, vector<32x128xf32> -> vector<32x128xf32>
    %152 = vector.shape_cast %151 : vector<32x128xf32> to vector<2x16x128xf32>
    %c0_48 = arith.constant 0 : index
    %c0_49 = arith.constant 0 : index
    %c0_50 = arith.constant 0 : index
    %153 = vector.load %arg8[%c0_48, %c0_49, %c0_50] : memref<2x16x128xf32, #tpu.memory_space<vmem>>, vector<2x16x128xf32>
    tpu.vector_store %arg8[%c0_48, %c0_49, %c0_50], %152 {strides = array<i32>} : memref<2x16x128xf32, #tpu.memory_space<vmem>>, vector<2x16x128xf32>,
    return
  }
  func.func @transform_0(%arg0: i32) -> (i32, i32, i32) {
    %c0_i32 = arith.constant 0 : i32
    %c0_i32_0 = arith.constant 0 : i32
    %c0_i32_1 = arith.constant 0 : i32
    return %arg0, %c0_i32, %c0_i32_0 : i32, i32, i32
  }
  func.func @transform_1(%arg0: i32) -> (i32, i32, i32) {
    %c0_i32 = arith.constant 0 : i32
    %c0_i32_0 = arith.constant 0 : i32
    %c0_i32_1 = arith.constant 0 : i32
    return %arg0, %c0_i32, %c0_i32_0 : i32, i32, i32
  }
  func.func @transform_2(%arg0: i32) -> (i32, i32) {
    %c0_i32 = arith.constant 0 : i32
    %c0_i32_0 = arith.constant 0 : i32
    %c0_i32_1 = arith.constant 0 : i32
    return %c0_i32, %c0_i32_0 : i32, i32
  }
  func.func @transform_3(%arg0: i32) -> (i32, i32, i32) {
    %c0_i32 = arith.constant 0 : i32
    %c0_i32_0 = arith.constant 0 : i32
    %c0_i32_1 = arith.constant 0 : i32
    %c0_i32_2 = arith.constant 0 : i32
    return %c0_i32, %c0_i32_0, %c0_i32_1 : i32, i32, i32
  }
  func.func @transform_4(%arg0: i32) -> (i32, i32, i32) {
    %c0_i32 = arith.constant 0 : i32
    %c0_i32_0 = arith.constant 0 : i32
    %c0_i32_1 = arith.constant 0 : i32
    %c0_i32_2 = arith.constant 0 : i32
    return %c0_i32, %c0_i32_0, %c0_i32_1 : i32, i32, i32
  }
  func.func @transform_5(%arg0: i32) -> (i32, i32) {
    %c0_i32 = arith.constant 0 : i32
    %c0_i32_0 = arith.constant 0 : i32
    %c0_i32_1 = arith.constant 0 : i32
    return %c0_i32, %c0_i32_0 : i32, i32
  }
  func.func @transform_6(%arg0: i32) -> (i32, i32) {
    %c0_i32 = arith.constant 0 : i32
    %c0_i32_0 = arith.constant 0 : i32
    %c0_i32_1 = arith.constant 0 : i32
    return %c0_i32, %c0_i32_0 : i32, i32
  }
  func.func @transform_7(%arg0: i32) -> (i32, i32, i32) {
    %c0_i32 = arith.constant 0 : i32
    %c0_i32_0 = arith.constant 0 : i32
    %c0_i32_1 = arith.constant 0 : i32
    return %arg0, %c0_i32, %c0_i32_0 : i32, i32, i32
  }
}

</mosaic_0001>

<llo_original>
// kernel: gat_model_forward.1
$region0: #{gat_model_forward.1}
  #allocation0 [shape = 'u32[]', space=smem, size = 0x4, offset = 0x4, fixed_abs, tag = 'smem constant byte address 0x4 - core index']
  #allocation1 [shape = 'u32[144,128]{1,0:T(1,128)}', space=vmem, size = 0x12000, scoped, tag = 'internal scratch']
  %s0 = inlined_call_operand.vmem [shape: f32[4,16,4], index: 0, kind: input, shape index: {}]
  %s1 = inlined_call_operand.vmem [shape: f32[4,16,16], index: 1, kind: input, shape index: {}]
  %s2 = inlined_call_operand.hbm [shape: f32[4,32], index: 2, kind: input, shape index: {}]
  %s3 = inlined_call_operand.hbm [shape: f32[2,32,64], index: 3, kind: input, shape index: {}]
  %s4 = inlined_call_operand.hbm [shape: f32[2,4,32], index: 4, kind: input, shape index: {}]
  %s5 = inlined_call_operand.hbm [shape: f32[4,32], index: 5, kind: input, shape index: {}]
  %s6 = inlined_call_operand.vmem [shape: f32[32,128], index: 6, kind: input, shape index: {}]
  %s7 = inlined_call_operand.vmem [shape: f32[4,16,128], index: 7, kind: output, shape index: {}]
  %s8 = sld [smem:[#allocation0]]
  $region77: #{gat_model_forward.1} parent=0
    _
  %s10 = ssub.s32 1, %s8
  %s11 = scalar_select 0, %s10, %s8
  $region1: #{gat_model_forward.1} parent=0
    #allocation2 [shape = 'u8[2048]{0}', space=vmem, size = 0x800, scoped, tag = 'input window, operand 2, single buffered']
    #allocation3 [shape = 's32[2]{0}', space=sflag, size = 0x8, scoped, tag = 'scoped memory for gat_model_forward.1']
    #allocation4 [shape = 'u8[32768]{0}', space=vmem, size = 0x8000, scoped, tag = 'input window, operand 3, single buffered']
    #allocation5 [shape = 's32[1]{0}', space=sflag, size = 0x4, scoped, tag = 'scoped memory for gat_model_forward.1']
    #allocation6 [shape = 'u8[4096]{0}', space=vmem, size = 0x1000, scoped, tag = 'input window, operand 4, single buffered']
    #allocation7 [shape = 'u8[2048]{0}', space=vmem, size = 0x800, scoped, tag = 'input window, operand 5, single buffered']
    #allocation8 [shape = 's32[1]{0}', space=sflag, size = 0x4, scoped, tag = 'scoped memory for gat_model_forward.1']
    %12 = vsyncpa [#allocation3], 0
    %13 = vsyncpa [#allocation5], 0
    %14 = vsyncpa [#allocation8], 0
    loop: start=0, step=1, limit=4
    $region2: #{gat_model_forward.1} parent=1 // loop_pre_header
      _
    $region3: #{gat_model_forward.1} parent=1 // loop_header
      %s16 = sphi 0, %s20
      %p17 = scmp.ge.s32.totalorder %s16, 4
      %s26 = sphi 0, %s28
      %s29 = sphi 0, %s26
      %s30 = sphi 0, %s29
      %s46 = sphi 0, %s30
      %s52 = sphi 0, %s54
      %s55 = sphi 0, %s52
      %s56 = sphi 0, %s55
      %s72 = sphi 0, %s56
      %s76 = sphi 0, %s76
      %s78 = sphi 0, %s76
      %s79 = sphi 0, %s78
      %s93 = sphi 0, %s79
      %s97 = sphi 0, %s97
      %s99 = sphi 0, %s97
      %s100 = sphi 0, %s99
      %s114 = sphi 0, %s100
      %s118 = sphi 0, %s118
      %s120 = sphi 0, %s118
      %s121 = sphi 0, %s120
      %s135 = sphi 0, %s121
      %s139 = sphi 0, %s139
      %s141 = sphi 0, %s139
      %s142 = sphi 0, %s141
      %s156 = sphi 0, %s142
      %s160 = sphi 0, %s160
      %s162 = sphi 0, %s160
      %s163 = sphi 0, %s162
      %s177 = sphi 0, %s163
      %s183 = sphi 0, %s185
      %s186 = sphi 0, %s183
      %s187 = sphi 0, %s186
      %s203 = sphi 0, %s187
    $region4: #{gat_model_forward.1} parent=1 // loop_header_branch
      %19 = sbr.rel (%p17) target = $region8
    $region5: #{gat_model_forward.1} parent=1 // loop_body
      %s21 = ssub.s32 %s16, 1
      %s22 = ssub.s32 %s16, 2
      %s23 = sadd.s32 %s16, 1
      %s24 = ssub.s32 %s16, %s23
      %p25 = scmp.eq.s32.totalorder %s24, 0
      %s27 = sadd.s32 %s26, 1
      %s28 = scalar_select %p25, %s26, %s27
      %p31 = pneg %p25
      %p32 = scmp.eq.s32.totalorder %s16, 1
      %p33 = por %p31, %p32
      %p34 = scmp.ne.s32.totalorder %s26, %s29
      %p35 = scmp.eq.s32.totalorder %s16, 0
      %p36 = por %p34, %p35
      %p37 = scmp.ne.s32.totalorder %s26, %s29
      %p38 = scmp.eq.s32.totalorder %s21, 1
      %p39 = por %p37, %p38
      %p40 = scmp.ne.s32.totalorder %s29, %s30
      %p41 = scmp.eq.s32.totalorder %s21, 0
      %p42 = por %p40, %p41
      %p43 = scmp.ne.s32.totalorder %s29, %s30
      %p44 = scmp.eq.s32.totalorder %s22, 1
      %p45 = por %p43, %p44
      %p47 = scmp.ne.s32.totalorder %s30, %s46
      %p48 = scmp.eq.s32.totalorder %s22, 0
      %p49 = por %p47, %p48
      %s50 = ssub.s32 %s16, %s23
      %p51 = scmp.eq.s32.totalorder %s50, 0
      %s53 = sadd.s32 %s52, 1
      %s54 = scalar_select %p51, %s52, %s53
      %p57 = pneg %p51
      %p58 = scmp.eq.s32.totalorder %s16, 1
      %p59 = por %p57, %p58
      %p60 = scmp.ne.s32.totalorder %s52, %s55
      %p61 = scmp.eq.s32.totalorder %s16, 0
      %p62 = por %p60, %p61
      %p63 = scmp.ne.s32.totalorder %s52, %s55
      %p64 = scmp.eq.s32.totalorder %s21, 1
      %p65 = por %p63, %p64
      %p66 = scmp.ne.s32.totalorder %s55, %s56
      %p67 = scmp.eq.s32.totalorder %s21, 0
      %p68 = por %p66, %p67
      %p69 = scmp.ne.s32.totalorder %s55, %s56
      %p70 = scmp.eq.s32.totalorder %s22, 1
      %p71 = por %p69, %p70
      %p73 = scmp.ne.s32.totalorder %s56, %s72
      %p74 = scmp.eq.s32.totalorder %s22, 0
      %p75 = por %p73, %p74
      %s77 = sadd.s32 %s76, 1
      %p80 = scmp.eq.s32.totalorder %s16, 1
      %p81 = scmp.ne.s32.totalorder %s76, %s78
      %p82 = scmp.eq.s32.totalorder %s16, 0
      %p83 = por %p81, %p82
      %p84 = scmp.ne.s32.totalorder %s76, %s78
      %p85 = scmp.eq.s32.totalorder %s21, 1
      %p86 = por %p84, %p85
      %p87 = scmp.ne.s32.totalorder %s78, %s79
      %p88 = scmp.eq.s32.totalorder %s21, 0
      %p89 = por %p87, %p88
      %p90 = scmp.ne.s32.totalorder %s78, %s79
      %p91 = scmp.eq.s32.totalorder %s22, 1
      %p92 = por %p90, %p91
      %p94 = scmp.ne.s32.totalorder %s79, %s93
      %p95 = scmp.eq.s32.totalorder %s22, 0
      %p96 = por %p94, %p95
      %s98 = sadd.s32 %s97, 1
      %p101 = scmp.eq.s32.totalorder %s16, 1
      %p102 = scmp.ne.s32.totalorder %s97, %s99
      %p103 = scmp.eq.s32.totalorder %s16, 0
      %p104 = por %p102, %p103
      %p105 = scmp.ne.s32.totalorder %s97, %s99
      %p106 = scmp.eq.s32.totalorder %s21, 1
      %p107 = por %p105, %p106
      %p108 = scmp.ne.s32.totalorder %s99, %s100
      %p109 = scmp.eq.s32.totalorder %s21, 0
      %p110 = por %p108, %p109
      %p111 = scmp.ne.s32.totalorder %s99, %s100
      %p112 = scmp.eq.s32.totalorder %s22, 1
      %p113 = por %p111, %p112
      %p115 = scmp.ne.s32.totalorder %s100, %s114
      %p116 = scmp.eq.s32.totalorder %s22, 0
      %p117 = por %p115, %p116
      %s119 = sadd.s32 %s118, 1
      %p122 = scmp.eq.s32.totalorder %s16, 1
      %p123 = scmp.ne.s32.totalorder %s118, %s120
      %p124 = scmp.eq.s32.totalorder %s16, 0
      %p125 = por %p123, %p124
      %p126 = scmp.ne.s32.totalorder %s118, %s120
      %p127 = scmp.eq.s32.totalorder %s21, 1
      %p128 = por %p126, %p127
      %p129 = scmp.ne.s32.totalorder %s120, %s121
      %p130 = scmp.eq.s32.totalorder %s21, 0
      %p131 = por %p129, %p130
      %p132 = scmp.ne.s32.totalorder %s120, %s121
      %p133 = scmp.eq.s32.totalorder %s22, 1
      %p134 = por %p132, %p133
      %p136 = scmp.ne.s32.totalorder %s121, %s135
      %p137 = scmp.eq.s32.totalorder %s22, 0
      %p138 = por %p136, %p137
      %s140 = sadd.s32 %s139, 1
      %p143 = scmp.eq.s32.totalorder %s16, 1
      %p144 = scmp.ne.s32.totalorder %s139, %s141
      %p145 = scmp.eq.s32.totalorder %s16, 0
      %p146 = por %p144, %p145
      %p147 = scmp.ne.s32.totalorder %s139, %s141
      %p148 = scmp.eq.s32.totalorder %s21, 1
      %p149 = por %p147, %p148
      %p150 = scmp.ne.s32.totalorder %s141, %s142
      %p151 = scmp.eq.s32.totalorder %s21, 0
      %p152 = por %p150, %p151
      %p153 = scmp.ne.s32.totalorder %s141, %s142
      %p154 = scmp.eq.s32.totalorder %s22, 1
      %p155 = por %p153, %p154
      %p157 = scmp.ne.s32.totalorder %s142, %s156
      %p158 = scmp.eq.s32.totalorder %s22, 0
      %p159 = por %p157, %p158
      %s161 = sadd.s32 %s160, 1
      %p164 = scmp.eq.s32.totalorder %s16, 1
      %p165 = scmp.ne.s32.totalorder %s160, %s162
      %p166 = scmp.eq.s32.totalorder %s16, 0
      %p167 = por %p165, %p166
      %p168 = scmp.ne.s32.totalorder %s160, %s162
      %p169 = scmp.eq.s32.totalorder %s21, 1
      %p170 = por %p168, %p169
      %p171 = scmp.ne.s32.totalorder %s162, %s163
      %p172 = scmp.eq.s32.totalorder %s21, 0
      %p173 = por %p171, %p172
      %p174 = scmp.ne.s32.totalorder %s162, %s163
      %p175 = scmp.eq.s32.totalorder %s22, 1
      %p176 = por %p174, %p175
      %p178 = scmp.ne.s32.totalorder %s163, %s177
      %p179 = scmp.eq.s32.totalorder %s22, 0
      %p180 = por %p178, %p179
      %s181 = ssub.s32 %s16, %s23
      %p182 = scmp.eq.s32.totalorder %s181, 0
      %s184 = sadd.s32 %s183, 1
      %s185 = scalar_select %p182, %s183, %s184
      %p188 = pneg %p182
      %p189 = scmp.eq.s32.totalorder %s16, 1
      %p190 = por %p188, %p189
      %p191 = scmp.ne.s32.totalorder %s183, %s186
      %p192 = scmp.eq.s32.totalorder %s16, 0
      %p193 = por %p191, %p192
      %p194 = scmp.ne.s32.totalorder %s183, %s186
      %p195 = scmp.eq.s32.totalorder %s21, 1
      %p196 = por %p194, %p195
      %p197 = scmp.ne.s32.totalorder %s186, %s187
      %p198 = scmp.eq.s32.totalorder %s21, 0
      %p199 = por %p197, %p198
      %p200 = scmp.ne.s32.totalorder %s186, %s187
      %p201 = scmp.eq.s32.totalorder %s22, 1
      %p202 = por %p200, %p201
      %p204 = scmp.ne.s32.totalorder %s187, %s203
      %p205 = scmp.eq.s32.totalorder %s22, 0
      %p206 = por %p204, %p205
      %p207 = scmp.le.s32.totalorder 1, %s16
      %p208 = scmp.lt.s32.totalorder %s16, 3
      %p209 = pnand %p207, %p208
      %p210 = pneg %p209
      // Predicated region
      $region9: #{gat_model_forward.1} parent=5 // pred_check
        _
      $region10: #{gat_model_forward.1} parent=5 // pred_check_branch
        %212 = sbr.rel (%p209) target = $region12
      $region11: #{gat_model_forward.1} parent=5 // pred_region
        %s213 = ssub.s32 %s16, 1
        // Predicated region
        $region13: #{gat_model_forward.1} parent=11 // pred_check
          %p214 = pneg %p89
        $region14: #{gat_model_forward.1} parent=11 // pred_check_branch
          %216 = sbr.rel (%p214) target = $region16
        $region15: #{gat_model_forward.1} parent=11 // pred_region
          %s218 = ssub.s32 64, 64
          %219 = vsyncadd [#allocation3], %s218
          %s221 = sshll.u32 [#allocation2], 4
          %s222 = int_to_ptr.vmem [resolvable:$true] %s221
          %224 = dma.hbm_to_vmem [thread:$0]  %s2, 64, %s222, [#allocation3]
        $region16: #{gat_model_forward.1} parent=11 // pred_fallthru
          _
        // Predicated region
        $region17: #{gat_model_forward.1} parent=11 // pred_check
          %p225 = pneg %p110
        $region18: #{gat_model_forward.1} parent=11 // pred_check_branch
          %227 = sbr.rel (%p225) target = $region20
        $region19: #{gat_model_forward.1} parent=11 // pred_region
          %s229 = ssub.s32 1024, 1024
          %230 = vsyncadd [#allocation5], %s229
          %s231 = sshll.u32 [#allocation4], 4
          %s232 = int_to_ptr.vmem [resolvable:$true] %s231
          %237 = dma.hbm_to_vmem [thread:$0]  %s3, 1024, %s232, [#allocation5], 128, 128, 8
        $region20: #{gat_model_forward.1} parent=11 // pred_fallthru
          _
        // Predicated region
        $region21: #{gat_model_forward.1} parent=11 // pred_check
          %p238 = pneg %p131
        $region22: #{gat_model_forward.1} parent=11 // pred_check_branch
          %240 = sbr.rel (%p238) target = $region24
        $region23: #{gat_model_forward.1} parent=11 // pred_region
          %s242 = ssub.s32 128, 128
          %243 = vsyncadd [#allocation5], %s242
          %s244 = sshll.u32 [#allocation6], 4
          %s245 = int_to_ptr.vmem [resolvable:$true] %s244
          %250 = dma.hbm_to_vmem [thread:$0]  %s4, 128, %s245, [#allocation5], 64, 64, 4
        $region24: #{gat_model_forward.1} parent=11 // pred_fallthru
          _
        // Predicated region
        $region25: #{gat_model_forward.1} parent=11 // pred_check
          %p251 = pneg %p152
        $region26: #{gat_model_forward.1} parent=11 // pred_check_branch
          %253 = sbr.rel (%p251) target = $region28
        $region27: #{gat_model_forward.1} parent=11 // pred_region
          %s255 = ssub.s32 64, 64
          %256 = vsyncadd [#allocation8], %s255
          %s258 = sshll.u32 [#allocation7], 4
          %s259 = int_to_ptr.vmem [resolvable:$true] %s258
          %261 = dma.hbm_to_vmem [thread:$0]  %s5, 64, %s259, [#allocation8]
        $region28: #{gat_model_forward.1} parent=11 // pred_fallthru
          _
        // Predicated region
        $region29: #{gat_model_forward.1} parent=11 // pred_check
          %p262 = pneg %p173
        $region30: #{gat_model_forward.1} parent=11 // pred_check_branch
          %264 = sbr.rel (%p262) target = $region32
        $region31: #{gat_model_forward.1} parent=11 // pred_region
          _
        $region32: #{gat_model_forward.1} parent=11 // pred_fallthru
          _
      $region12: #{gat_model_forward.1} parent=5 // pred_fallthru
        _
      %p265 = scmp.lt.s32.totalorder %s16, 2
      // Predicated region
      $region33: #{gat_model_forward.1} parent=5 // pred_check
        %p266 = pneg %p265
      $region34: #{gat_model_forward.1} parent=5 // pred_check_branch
        %268 = sbr.rel (%p266) target = $region36
      $region35: #{gat_model_forward.1} parent=5 // pred_region
        // Predicated region
        $region37: #{gat_model_forward.1} parent=35 // pred_check
          %p269 = pneg %p36
        $region38: #{gat_model_forward.1} parent=35 // pred_check_branch
          %271 = sbr.rel (%p269) target = $region40
        $region39: #{gat_model_forward.1} parent=35 // pred_region
          %s272 = smul.u32 2, %s16
          %p273 = scmp.lt.s32.totalorder %s272, 3
          %s274 = scalar_select %p273, %s272, 3
          %s275 = smul.addr %s274, 2
          %s276 = smul.addr %s275, 8
          %s277 = scalar_lea.vmem %s0, %s276
          %s278 = smul.u32 2, %s16
        $region40: #{gat_model_forward.1} parent=35 // pred_fallthru
          _
        // Predicated region
        $region41: #{gat_model_forward.1} parent=35 // pred_check
          %p279 = pneg %p62
        $region42: #{gat_model_forward.1} parent=35 // pred_check_branch
          %281 = sbr.rel (%p279) target = $region44
        $region43: #{gat_model_forward.1} parent=35 // pred_region
          %s282 = smul.u32 2, %s16
          %p283 = scmp.lt.s32.totalorder %s282, 3
          %s284 = scalar_select %p283, %s282, 3
          %s285 = smul.addr %s284, 2
          %s286 = smul.addr %s285, 8
          %s287 = scalar_lea.vmem %s1, %s286
          %s288 = smul.u32 2, %s16
        $region44: #{gat_model_forward.1} parent=35 // pred_fallthru
          _
      $region36: #{gat_model_forward.1} parent=5 // pred_fallthru
        _
      %p289 = scmp.le.s32.totalorder 1, %s16
      %p290 = scmp.lt.s32.totalorder %s16, 3
      %p291 = pnand %p289, %p290
      %p292 = pneg %p291
      // Predicated region
      $region45: #{gat_model_forward.1} parent=5 // pred_check
        _
      $region46: #{gat_model_forward.1} parent=5 // pred_check_branch
        %294 = sbr.rel (%p291) target = $region48
      $region47: #{gat_model_forward.1} parent=5 // pred_region
        %s295 = ssub.s32 %s16, 1
        // Predicated region
        $region49: #{gat_model_forward.1} parent=47 // pred_check
          %p296 = pneg %p89
        $region50: #{gat_model_forward.1} parent=47 // pred_check_branch
          %298 = sbr.rel (%p296) target = $region52
        $region51: #{gat_model_forward.1} parent=47 // pred_region
          %299 = dma.done [#allocation3], 64
        $region52: #{gat_model_forward.1} parent=47 // pred_fallthru
          _
        // Predicated region
        $region53: #{gat_model_forward.1} parent=47 // pred_check
          %p300 = pneg %p110
        $region54: #{gat_model_forward.1} parent=47 // pred_check_branch
          %302 = sbr.rel (%p300) target = $region56
        $region55: #{gat_model_forward.1} parent=47 // pred_region
          %303 = dma.done [#allocation5], 1024
        $region56: #{gat_model_forward.1} parent=47 // pred_fallthru
          _
        // Predicated region
        $region57: #{gat_model_forward.1} parent=47 // pred_check
          %p304 = pneg %p131
        $region58: #{gat_model_forward.1} parent=47 // pred_check_branch
          %306 = sbr.rel (%p304) target = $region60
        $region59: #{gat_model_forward.1} parent=47 // pred_region
          %307 = dma.done [#allocation5], 128
        $region60: #{gat_model_forward.1} parent=47 // pred_fallthru
          _
        // Predicated region
        $region61: #{gat_model_forward.1} parent=47 // pred_check
          %p308 = pneg %p152
        $region62: #{gat_model_forward.1} parent=47 // pred_check_branch
          %310 = sbr.rel (%p308) target = $region64
        $region63: #{gat_model_forward.1} parent=47 // pred_region
          %311 = dma.done [#allocation8], 64
        $region64: #{gat_model_forward.1} parent=47 // pred_fallthru
          _
        %s312 = smul.u32 2, %s21
        %p313 = scmp.lt.s32.totalorder %s312, 3
        %s314 = scalar_select %p313, %s312, 3
        %s315 = smul.addr %s314, 2
        %s316 = smul.addr %s315, 8
        %s317 = scalar_lea.vmem %s0, %s316
        %p318 = pneg %p42
        %p319 = pneg %p39
        %s320 = smul.u32 2, %s21
        %p321 = scmp.lt.s32.totalorder %s320, 3
        %s322 = scalar_select %p321, %s320, 3
        %s323 = smul.addr %s322, 2
        %s324 = smul.addr %s323, 8
        %s325 = scalar_lea.vmem %s1, %s324
        %p326 = pneg %p68
        %p327 = pneg %p65
        %p328 = pneg %p89
        %p329 = pneg %p86
        %p330 = pneg %p110
        %p331 = pneg %p107
        %p332 = pneg %p131
        %p333 = pneg %p128
        %p334 = pneg %p152
        %p335 = pneg %p149
        %p336 = pneg %p173
        %p337 = pneg %p170
        %p338 = pneg %p199
        %p339 = pneg %p196
        %s340 = smul.u32 2, %s21
        %p341 = scmp.lt.s32.totalorder %s340, 3
        %s342 = scalar_select %p341, %s340, 3
        %s343 = smul.addr %s342, 2
        %s344 = smul.addr %s343, 8
        %s345 = scalar_lea.vmem %s7, %s344
        %s346 = smul.u32 2, %s21
        %p347 = scmp.lt.s32.totalorder %s346, 3
        %s348 = scalar_select %p347, %s346, 3
        %s349 = smul.addr %s348, 2
        %s350 = smul.addr %s349, 8
        %s351 = scalar_lea.vmem %s0, %s350
        %s352 = smul.u32 2, %s21
        %s353 = smul.u32 2, %s21
        %p354 = scmp.lt.s32.totalorder %s353, 3
        %s355 = scalar_select %p354, %s353, 3
        %s356 = smul.addr %s355, 2
        %s357 = smul.addr %s356, 8
        %s358 = scalar_lea.vmem %s1, %s357
        %s359 = smul.u32 2, %s21
        %s360 = smul.u32 2, %s21
        %p361 = scmp.lt.s32.totalorder %s360, 3
        %s362 = scalar_select %p361, %s360, 3
        %s363 = smul.addr %s362, 2
        %s364 = smul.addr %s363, 8
        %s365 = scalar_lea.vmem %s7, %s364
        %s366 = smul.u32 2, %s21
        %v367 = vld [vmem:[%s358] sm:$0xff]
        %v368 = vld [vmem:[%s358 + $0x8] sm:$0xff]
        %v369 = vld [vmem:[%s358 + $0x10] sm:$0xff]
        %v370 = vld [vmem:[%s358 + $0x18] sm:$0xff]
        %vm371 = vcmp.ne.f32.partialorder %v367, 0.0
        %vm372 = vcmp.ne.f32.partialorder %v368, 0.0
        %vm373 = vcmp.ne.f32.partialorder %v369, 0.0
        %vm374 = vcmp.ne.f32.partialorder %v370, 0.0
        %v375 = vsel %vm371, 0.0, -1e+30
        %v376 = vsel %vm372, 0.0, -1e+30
        %v377 = vsel %vm373, 0.0, -1e+30
        %v378 = vsel %vm374, 0.0, -1e+30
        %v383 = vcombine.high %v375, %v375
        %v385 = vunpack.c.l.s4 1966171168
        %v386 = vunpack.c.0.s8 %v385
        %v387 = vlaneseq
        %v388 = vshrl.u32 %v387, 7
        %v389 = vsub.s32 %v386, %v388
        %v390 = vrot.slane %v375, %v389
        %v392 = vunpack.c.l.s4 1966171168
        %v393 = vunpack.c.0.s8 %v392
        %v394 = vlaneseq
        %v395 = vshrl.u32 %v394, 7
        %v396 = vsub.s32 %v393, %v395
        %v397 = vrot.slane %v383, %v396
        %v398 = vcombine.high %v390, %v390
        %v399 = vcombine.high %v397, %v397
        %v401 = vunpack.c.l.s4 1966171168
        %v402 = vunpack.c.0.s8 %v401
        %v403 = vlaneseq
        %v404 = vshrl.u32 %v403, 7
        %v405 = vsub.s32 %v402, %v404
        %v406 = vrot.slane %v390, %v405
        %v408 = vunpack.c.l.s4 1966171168
        %v409 = vunpack.c.0.s8 %v408
        %v410 = vlaneseq
        %v411 = vshrl.u32 %v410, 7
        %v412 = vsub.s32 %v409, %v411
        %v413 = vrot.slane %v397, %v412
        %v415 = vunpack.c.l.s4 1966171168
        %v416 = vunpack.c.0.s8 %v415
        %v417 = vlaneseq
        %v418 = vshrl.u32 %v417, 7
        %v419 = vsub.s32 %v416, %v418
        %v420 = vrot.slane %v398, %v419
        %v422 = vunpack.c.l.s4 1966171168
        %v423 = vunpack.c.0.s8 %v422
        %v424 = vlaneseq
        %v425 = vshrl.u32 %v424, 7
        %v426 = vsub.s32 %v423, %v425
        %v427 = vrot.slane %v399, %v426
        %v428 = vcombine.high %v406, %v406
        %v429 = vcombine.high %v413, %v413
        %v430 = vcombine.high %v420, %v420
        %v431 = vcombine.high %v427, %v427
        %v432 = vcombine.high %v376, %v376
        %v434 = vunpack.c.l.s4 1966171168
        %v435 = vunpack.c.0.s8 %v434
        %v436 = vlaneseq
        %v437 = vshrl.u32 %v436, 7
        %v438 = vsub.s32 %v435, %v437
        %v439 = vrot.slane %v376, %v438
        %v441 = vunpack.c.l.s4 1966171168
        %v442 = vunpack.c.0.s8 %v441
        %v443 = vlaneseq
        %v444 = vshrl.u32 %v443, 7
        %v445 = vsub.s32 %v442, %v444
        %v446 = vrot.slane %v432, %v445
        %v447 = vcombine.high %v439, %v439
        %v448 = vcombine.high %v446, %v446
        %v450 = vunpack.c.l.s4 1966171168
        %v451 = vunpack.c.0.s8 %v450
        %v452 = vlaneseq
        %v453 = vshrl.u32 %v452, 7
        %v454 = vsub.s32 %v451, %v453
        %v455 = vrot.slane %v439, %v454
        %v457 = vunpack.c.l.s4 1966171168
        %v458 = vunpack.c.0.s8 %v457
        %v459 = vlaneseq
        %v460 = vshrl.u32 %v459, 7
        %v461 = vsub.s32 %v458, %v460
        %v462 = vrot.slane %v446, %v461
        %v464 = vunpack.c.l.s4 1966171168
        %v465 = vunpack.c.0.s8 %v464
        %v466 = vlaneseq
        %v467 = vshrl.u32 %v466, 7
        %v468 = vsub.s32 %v465, %v467
        %v469 = vrot.slane %v447, %v468
        %v471 = vunpack.c.l.s4 1966171168
        %v472 = vunpack.c.0.s8 %v471
        %v473 = vlaneseq
        %v474 = vshrl.u32 %v473, 7
        %v475 = vsub.s32 %v472, %v474
        %v476 = vrot.slane %v448, %v475
        %v477 = vcombine.high %v455, %v455
        %v478 = vcombine.high %v462, %v462
        %v479 = vcombine.high %v469, %v469
        %v480 = vcombine.high %v476, %v476
        %v481 = vcombine.high %v377, %v377
        %v483 = vunpack.c.l.s4 1966171168
        %v484 = vunpack.c.0.s8 %v483
        %v485 = vlaneseq
        %v486 = vshrl.u32 %v485, 7
        %v487 = vsub.s32 %v484, %v486
        %v488 = vrot.slane %v377, %v487
        %v490 = vunpack.c.l.s4 1966171168
        %v491 = vunpack.c.0.s8 %v490
        %v492 = vlaneseq
        %v493 = vshrl.u32 %v492, 7
        %v494 = vsub.s32 %v491, %v493
        %v495 = vrot.slane %v481, %v494
        %v496 = vcombine.high %v488, %v488
        %v497 = vcombine.high %v495, %v495
        %v499 = vunpack.c.l.s4 1966171168
        %v500 = vunpack.c.0.s8 %v499
        %v501 = vlaneseq
        %v502 = vshrl.u32 %v501, 7
        %v503 = vsub.s32 %v500, %v502
        %v504 = vrot.slane %v488, %v503
        %v506 = vunpack.c.l.s4 1966171168
        %v507 = vunpack.c.0.s8 %v506
        %v508 = vlaneseq
        %v509 = vshrl.u32 %v508, 7
        %v510 = vsub.s32 %v507, %v509
        %v511 = vrot.slane %v495, %v510
        %v513 = vunpack.c.l.s4 1966171168
        %v514 = vunpack.c.0.s8 %v513
        %v515 = vlaneseq
        %v516 = vshrl.u32 %v515, 7
        %v517 = vsub.s32 %v514, %v516
        %v518 = vrot.slane %v496, %v517
        %v520 = vunpack.c.l.s4 1966171168
        %v521 = vunpack.c.0.s8 %v520
        %v522 = vlaneseq
        %v523 = vshrl.u32 %v522, 7
        %v524 = vsub.s32 %v521, %v523
        %v525 = vrot.slane %v497, %v524
        %v526 = vcombine.high %v504, %v504
        %v527 = vcombine.high %v511, %v511
        %v528 = vcombine.high %v518, %v518
        %v529 = vcombine.high %v525, %v525
        %v530 = vcombine.high %v378, %v378
        %v532 = vunpack.c.l.s4 1966171168
        %v533 = vunpack.c.0.s8 %v532
        %v534 = vlaneseq
        %v535 = vshrl.u32 %v534, 7
        %v536 = vsub.s32 %v533, %v535
        %v537 = vrot.slane %v378, %v536
        %v539 = vunpack.c.l.s4 1966171168
        %v540 = vunpack.c.0.s8 %v539
        %v541 = vlaneseq
        %v542 = vshrl.u32 %v541, 7
        %v543 = vsub.s32 %v540, %v542
        %v544 = vrot.slane %v530, %v543
        %v545 = vcombine.high %v537, %v537
        %v546 = vcombine.high %v544, %v544
        %v548 = vunpack.c.l.s4 1966171168
        %v549 = vunpack.c.0.s8 %v548
        %v550 = vlaneseq
        %v551 = vshrl.u32 %v550, 7
        %v552 = vsub.s32 %v549, %v551
        %v553 = vrot.slane %v537, %v552
        %v555 = vunpack.c.l.s4 1966171168
        %v556 = vunpack.c.0.s8 %v555
        %v557 = vlaneseq
        %v558 = vshrl.u32 %v557, 7
        %v559 = vsub.s32 %v556, %v558
        %v560 = vrot.slane %v544, %v559
        %v562 = vunpack.c.l.s4 1966171168
        %v563 = vunpack.c.0.s8 %v562
        %v564 = vlaneseq
        %v565 = vshrl.u32 %v564, 7
        %v566 = vsub.s32 %v563, %v565
        %v567 = vrot.slane %v545, %v566
        %v569 = vunpack.c.l.s4 1966171168
        %v570 = vunpack.c.0.s8 %v569
        %v571 = vlaneseq
        %v572 = vshrl.u32 %v571, 7
        %v573 = vsub.s32 %v570, %v572
        %v574 = vrot.slane %v546, %v573
        %v575 = vcombine.high %v553, %v553
        %v576 = vcombine.high %v560, %v560
        %v577 = vcombine.high %v567, %v567
        %v578 = vcombine.high %v574, %v574
        %v579 = vlaneseq
        %v580 = vshrl.u32 %v579, 7
        %v581 = vsub.s32 0, %v580
        %v582 = vrot.slane %v406, %v581
        %v583 = vlaneseq
        %v584 = vshrl.u32 %v583, 7
        %v585 = vsub.s32 0, %v584
        %v586 = vrot.slane %v420, %v585
        %v587 = vlaneseq
        %v588 = vshrl.u32 %v587, 7
        %v589 = vsub.s32 0, %v588
        %v590 = vrot.slane %v428, %v589
        %v591 = vlaneseq
        %v592 = vshrl.u32 %v591, 7
        %v593 = vsub.s32 0, %v592
        %v594 = vrot.slane %v430, %v593
        %v595 = vlaneseq
        %v596 = vshrl.u32 %v595, 7
        %v597 = vsub.s32 0, %v596
        %v598 = vrot.slane %v413, %v597
        %v599 = vlaneseq
        %v600 = vshrl.u32 %v599, 7
        %v601 = vsub.s32 0, %v600
        %v602 = vrot.slane %v427, %v601
        %v603 = vlaneseq
        %v604 = vshrl.u32 %v603, 7
        %v605 = vsub.s32 0, %v604
        %v606 = vrot.slane %v429, %v605
        %v607 = vlaneseq
        %v608 = vshrl.u32 %v607, 7
        %v609 = vsub.s32 0, %v608
        %v610 = vrot.slane %v431, %v609
        %v611 = vlaneseq
        %v612 = vshrl.u32 %v611, 7
        %v613 = vsub.s32 0, %v612
        %v614 = vrot.slane %v455, %v613
        %v615 = vlaneseq
        %v616 = vshrl.u32 %v615, 7
        %v617 = vsub.s32 0, %v616
        %v618 = vrot.slane %v469, %v617
        %v619 = vlaneseq
        %v620 = vshrl.u32 %v619, 7
        %v621 = vsub.s32 0, %v620
        %v622 = vrot.slane %v477, %v621
        %v623 = vlaneseq
        %v624 = vshrl.u32 %v623, 7
        %v625 = vsub.s32 0, %v624
        %v626 = vrot.slane %v479, %v625
        %v627 = vlaneseq
        %v628 = vshrl.u32 %v627, 7
        %v629 = vsub.s32 0, %v628
        %v630 = vrot.slane %v462, %v629
        %v631 = vlaneseq
        %v632 = vshrl.u32 %v631, 7
        %v633 = vsub.s32 0, %v632
        %v634 = vrot.slane %v476, %v633
        %v635 = vlaneseq
        %v636 = vshrl.u32 %v635, 7
        %v637 = vsub.s32 0, %v636
        %v638 = vrot.slane %v478, %v637
        %v639 = vlaneseq
        %v640 = vshrl.u32 %v639, 7
        %v641 = vsub.s32 0, %v640
        %v642 = vrot.slane %v480, %v641
        %v643 = vlaneseq
        %v644 = vshrl.u32 %v643, 7
        %v645 = vsub.s32 0, %v644
        %v646 = vrot.slane %v504, %v645
        %v647 = vlaneseq
        %v648 = vshrl.u32 %v647, 7
        %v649 = vsub.s32 0, %v648
        %v650 = vrot.slane %v518, %v649
        %v651 = vlaneseq
        %v652 = vshrl.u32 %v651, 7
        %v653 = vsub.s32 0, %v652
        %v654 = vrot.slane %v526, %v653
        %v655 = vlaneseq
        %v656 = vshrl.u32 %v655, 7
        %v657 = vsub.s32 0, %v656
        %v658 = vrot.slane %v528, %v657
        %v659 = vlaneseq
        %v660 = vshrl.u32 %v659, 7
        %v661 = vsub.s32 0, %v660
        %v662 = vrot.slane %v511, %v661
        %v663 = vlaneseq
        %v664 = vshrl.u32 %v663, 7
        %v665 = vsub.s32 0, %v664
        %v666 = vrot.slane %v525, %v665
        %v667 = vlaneseq
        %v668 = vshrl.u32 %v667, 7
        %v669 = vsub.s32 0, %v668
        %v670 = vrot.slane %v527, %v669
        %v671 = vlaneseq
        %v672 = vshrl.u32 %v671, 7
        %v673 = vsub.s32 0, %v672
        %v674 = vrot.slane %v529, %v673
        %v675 = vlaneseq
        %v676 = vshrl.u32 %v675, 7
        %v677 = vsub.s32 0, %v676
        %v678 = vrot.slane %v553, %v677
        %v679 = vlaneseq
        %v680 = vshrl.u32 %v679, 7
        %v681 = vsub.s32 0, %v680
        %v682 = vrot.slane %v567, %v681
        %v683 = vlaneseq
        %v684 = vshrl.u32 %v683, 7
        %v685 = vsub.s32 0, %v684
        %v686 = vrot.slane %v575, %v685
        %v687 = vlaneseq
        %v688 = vshrl.u32 %v687, 7
        %v689 = vsub.s32 0, %v688
        %v690 = vrot.slane %v577, %v689
        %v691 = vlaneseq
        %v692 = vshrl.u32 %v691, 7
        %v693 = vsub.s32 0, %v692
        %v694 = vrot.slane %v560, %v693
        %v695 = vlaneseq
        %v696 = vshrl.u32 %v695, 7
        %v697 = vsub.s32 0, %v696
        %v698 = vrot.slane %v574, %v697
        %v699 = vlaneseq
        %v700 = vshrl.u32 %v699, 7
        %v701 = vsub.s32 0, %v700
        %v702 = vrot.slane %v576, %v701
        %v703 = vlaneseq
        %v704 = vshrl.u32 %v703, 7
        %v705 = vsub.s32 0, %v704
        %v706 = vrot.slane %v578, %v705
        %v739 = vld [vmem:[#allocation7] sm:$0xf]
        %v740 = vld [vmem:[%s351] sm:$0xff]
        %v741 = vld [vmem:[%s351 + $0x8] sm:$0xff]
        %v742 = vld [vmem:[%s351 + $0x10] sm:$0xff]
        %v743 = vld [vmem:[%s351 + $0x18] sm:$0xff]
        %v744 = vld [vmem:[#allocation2] sm:$0xf]
        %vm745 = vcmask 31744
        %v747 = vsel %vm745, %v740, 0
        %v750 = vsel %vm745, %v741, 0
        %v753 = vsel %vm745, %v742, 0
        %v756 = vsel %vm745, %v743, 0
        %vm758 = vcmask 1043456
        %v760 = vsel %vm758, %v744, 0
        %762 = vmatprep.subr.mxu0 0.0
        %763 = vmatpush1.msra.mxu0 %v760
        %764 = vmatprep.subr.mxu0 0.0
        %765 = vmatpush1.msra.mxu0 0.0
        %766 = vmatprep.subr.mxu0 0.0
        %767 = vmatpush1.msra.mxu0 0.0
        %768 = vmatprep.subr.mxu0 0.0
        %769 = vmatpush1.msra.mxu0 0.0
        %770 = vmatprep.subr.mxu0 0.0
        %771 = vmatpush1.msra.mxu0 0.0
        %772 = vmatprep.subr.mxu0 0.0
        %773 = vmatpush1.msra.mxu0 0.0
        %774 = vmatprep.subr.mxu0 0.0
        %775 = vmatpush1.msra.mxu0 0.0
        %776 = vmatprep.subr.mxu0 0.0
        %777 = vmatpush1.msra.mxu0 0.0
        %778 = vmatprep.subr.mxu0 0.0
        %779 = vmatpush1.msra.mxu0 0.0
        %780 = vmatprep.subr.mxu0 0.0
        %781 = vmatpush1.msra.mxu0 0.0
        %782 = vmatprep.subr.mxu0 0.0
        %783 = vmatpush1.msra.mxu0 0.0
        %784 = vmatprep.subr.mxu0 0.0
        %785 = vmatpush1.msra.mxu0 0.0
        %786 = vmatprep.subr.mxu0 0.0
        %787 = vmatpush1.msra.mxu0 0.0
        %788 = vmatprep.subr.mxu0 0.0
        %789 = vmatpush1.msra.mxu0 0.0
        %790 = vmatprep.subr.mxu0 0.0
        %791 = vmatpush1.msra.mxu0 0.0
        %792 = vmatprep.subr.mxu0 0.0
        %793 = vmatpush1.msra.mxu0 0.0
        %794 = vmatprep.subr.mxu0 0.0
        %795 = vmatpush1.msra.mxu0 0.0
        %796 = vmatprep.subr.mxu0 0.0
        %797 = vmatpush1.msra.mxu0 0.0
        %798 = vmatprep.subr.mxu0 0.0
        %799 = vmatpush1.msra.mxu0 0.0
        %800 = vmatprep.subr.mxu0 0.0
        %801 = vmatpush1.msra.mxu0 0.0
        %802 = vmatprep.subr.mxu0 0.0
        %803 = vmatpush1.msra.mxu0 0.0
        %804 = vmatprep.subr.mxu0 0.0
        %805 = vmatpush1.msra.mxu0 0.0
        %806 = vmatprep.subr.mxu0 0.0
        %807 = vmatpush1.msra.mxu0 0.0
        %808 = vmatprep.subr.mxu0 0.0
        %809 = vmatpush1.msra.mxu0 0.0
        %810 = vmatprep.subr.mxu0 0.0
        %811 = vmatpush1.msra.mxu0 0.0
        %812 = vmatprep.subr.mxu0 0.0
        %813 = vmatpush1.msra.mxu0 0.0
        %814 = vmatprep.subr.mxu0 0.0
        %815 = vmatpush1.msra.mxu0 0.0
        %816 = vmatprep.subr.mxu0 0.0
        %817 = vmatpush1.msra.mxu0 0.0
        %818 = vmatprep.subr.mxu0 0.0
        %819 = vmatpush1.msra.mxu0 0.0
        %820 = vmatprep.subr.mxu0 0.0
        %821 = vmatpush1.msra.mxu0 0.0
        %822 = vmatprep.subr.mxu0 0.0
        %823 = vmatpush1.msra.mxu0 0.0
        %824 = vmatprep.subr.mxu0 0.0
        %825 = vmatpush1.msra.mxu0 0.0
        %826 = vmatprep.mubr.f32.mxu0 0.0
        %827 = vmatmul.mubr.f32.gmra.mrb[0].mxu0 %v747
        %v828 = vpop.f32.mrb[0].mxu0
        %v829 = vadd.f32 0.0, %v828
        %v830 = vpop.f32.mrb[0].mxu0
        %831 = vmatprep.mubr.f32.mxu0 0.0
        %832 = vmatmul.mubr.f32.gmra.mrb[0].mxu0 %v750
        %v833 = vpop.f32.mrb[0].mxu0
        %v834 = vadd.f32 0.0, %v833
        %v835 = vpop.f32.mrb[0].mxu0
        %836 = vmatprep.mubr.f32.mxu0 0.0
        %837 = vmatmul.mubr.f32.gmra.mrb[0].mxu0 %v753
        %v838 = vpop.f32.mrb[0].mxu0
        %v839 = vadd.f32 0.0, %v838
        %v840 = vpop.f32.mrb[0].mxu0
        %841 = vmatprep.mubr.f32.mxu0 0.0
        %842 = vmatmul.mubr.f32.gmra.mrb[0].mxu0 %v756
        %v843 = vpop.f32.mrb[0].mxu0
        %v844 = vadd.f32 0.0, %v843
        %v845 = vpop.f32.mrb[0].mxu0
        %846 = vdwg.mxu0
        %v847 = vld [vmem:[#allocation4] sm:$0xff]
        %v848 = vld [vmem:[#allocation4 + $0x8] sm:$0xff]
        %v849 = vld [vmem:[#allocation4 + $0x10] sm:$0xff]
        %v850 = vld [vmem:[#allocation4 + $0x18] sm:$0xff]
        %vm851 = vcmask 261120
        %v853 = vsel %vm851, %v829, 0
        %v856 = vsel %vm851, %v834, 0
        %v859 = vsel %vm851, %v839, 0
        %v862 = vsel %vm851, %v844, 0
        %864 = vmatprep.subr.mxu0 0.0
        %865 = vmatpush1.msra.mxu0 %v847
        %866 = vmatprep.subr.mxu0 0.0
        %867 = vmatpush1.msra.mxu0 %v848
        %868 = vmatprep.subr.mxu0 0.0
        %869 = vmatpush1.msra.mxu0 %v849
        %870 = vmatprep.subr.mxu0 0.0
        %871 = vmatpush1.msra.mxu0 %v850
        %872 = vmatprep.subr.mxu0 0.0
        %873 = vmatpush1.msra.mxu0 0.0
        %874 = vmatprep.subr.mxu0 0.0
        %875 = vmatpush1.msra.mxu0 0.0
        %876 = vmatprep.subr.mxu0 0.0
        %877 = vmatpush1.msra.mxu0 0.0
        %878 = vmatprep.subr.mxu0 0.0
        %879 = vmatpush1.msra.mxu0 0.0
        %880 = vmatprep.subr.mxu0 0.0
        %881 = vmatpush1.msra.mxu0 0.0
        %882 = vmatprep.subr.mxu0 0.0
        %883 = vmatpush1.msra.mxu0 0.0
        %884 = vmatprep.subr.mxu0 0.0
        %885 = vmatpush1.msra.mxu0 0.0
        %886 = vmatprep.subr.mxu0 0.0
        %887 = vmatpush1.msra.mxu0 0.0
        %888 = vmatprep.subr.mxu0 0.0
        %889 = vmatpush1.msra.mxu0 0.0
        %890 = vmatprep.subr.mxu0 0.0
        %891 = vmatpush1.msra.mxu0 0.0
        %892 = vmatprep.subr.mxu0 0.0
        %893 = vmatpush1.msra.mxu0 0.0
        %894 = vmatprep.subr.mxu0 0.0
        %895 = vmatpush1.msra.mxu0 0.0
        %896 = vmatprep.subr.mxu0 0.0
        %897 = vmatpush1.msra.mxu0 0.0
        %898 = vmatprep.subr.mxu0 0.0
        %899 = vmatpush1.msra.mxu0 0.0
        %900 = vmatprep.subr.mxu0 0.0
        %901 = vmatpush1.msra.mxu0 0.0
        %902 = vmatprep.subr.mxu0 0.0
        %903 = vmatpush1.msra.mxu0 0.0
        %904 = vmatprep.subr.mxu0 0.0
        %905 = vmatpush1.msra.mxu0 0.0
        %906 = vmatprep.subr.mxu0 0.0
        %907 = vmatpush1.msra.mxu0 0.0
        %908 = vmatprep.subr.mxu0 0.0
        %909 = vmatpush1.msra.mxu0 0.0
        %910 = vmatprep.subr.mxu0 0.0
        %911 = vmatpush1.msra.mxu0 0.0
        %912 = vmatprep.subr.mxu0 0.0
        %913 = vmatpush1.msra.mxu0 0.0
        %914 = vmatprep.subr.mxu0 0.0
        %915 = vmatpush1.msra.mxu0 0.0
        %916 = vmatprep.subr.mxu0 0.0
        %917 = vmatpush1.msra.mxu0 0.0
        %918 = vmatprep.subr.mxu0 0.0
        %919 = vmatpush1.msra.mxu0 0.0
        %920 = vmatprep.subr.mxu0 0.0
        %921 = vmatpush1.msra.mxu0 0.0
        %922 = vmatprep.subr.mxu0 0.0
        %923 = vmatpush1.msra.mxu0 0.0
        %924 = vmatprep.subr.mxu0 0.0
        %925 = vmatpush1.msra.mxu0 0.0
        %926 = vmatprep.subr.mxu0 0.0
        %927 = vmatpush1.msra.mxu0 0.0
        %928 = vmatprep.mubr.f32.mxu0 0.0
        %929 = vmatmul.mubr.f32.gmra.mrb[0].mxu0 %v853
        %v930 = vpop.f32.mrb[0].mxu0
        %v931 = vadd.f32 0.0, %v930
        %v932 = vpop.f32.mrb[0].mxu0
        %933 = vmatprep.mubr.f32.mxu0 0.0
        %934 = vmatmul.mubr.f32.gmra.mrb[0].mxu0 %v856
        %v935 = vpop.f32.mrb[0].mxu0
        %v936 = vadd.f32 0.0, %v935
        %v937 = vpop.f32.mrb[0].mxu0
        %938 = vmatprep.mubr.f32.mxu0 0.0
        %939 = vmatmul.mubr.f32.gmra.mrb[0].mxu0 %v859
        %v940 = vpop.f32.mrb[0].mxu0
        %v941 = vadd.f32 0.0, %v940
        %v942 = vpop.f32.mrb[0].mxu0
        %943 = vmatprep.mubr.f32.mxu0 0.0
        %944 = vmatmul.mubr.f32.gmra.mrb[0].mxu0 %v862
        %v945 = vpop.f32.mrb[0].mxu0
        %v946 = vadd.f32 0.0, %v945
        %v947 = vpop.f32.mrb[0].mxu0
        %948 = vdwg.mxu0
        %v953 = vcombine.high %v931, %v931
        %v955 = vunpack.c.l.s4 1966171168
        %v956 = vunpack.c.0.s8 %v955
        %v957 = vlaneseq
        %v958 = vshrl.u32 %v957, 7
        %v959 = vsub.s32 %v956, %v958
        %v960 = vrot.slane %v931, %v959
        %v962 = vunpack.c.l.s4 1966171168
        %v963 = vunpack.c.0.s8 %v962
        %v964 = vlaneseq
        %v965 = vshrl.u32 %v964, 7
        %v966 = vsub.s32 %v963, %v965
        %v967 = vrot.slane %v953, %v966
        %v968 = vcombine.high %v960, %v960
        %v969 = vcombine.high %v967, %v967
        %v971 = vunpack.c.l.s4 1966171168
        %v972 = vunpack.c.0.s8 %v971
        %v973 = vlaneseq
        %v974 = vshrl.u32 %v973, 7
        %v975 = vsub.s32 %v972, %v974
        %v976 = vrot.slane %v960, %v975
        %v978 = vunpack.c.l.s4 1966171168
        %v979 = vunpack.c.0.s8 %v978
        %v980 = vlaneseq
        %v981 = vshrl.u32 %v980, 7
        %v982 = vsub.s32 %v979, %v981
        %v983 = vrot.slane %v967, %v982
        %v985 = vunpack.c.l.s4 1966171168
        %v986 = vunpack.c.0.s8 %v985
        %v987 = vlaneseq
        %v988 = vshrl.u32 %v987, 7
        %v989 = vsub.s32 %v986, %v988
        %v990 = vrot.slane %v968, %v989
        %v992 = vunpack.c.l.s4 1966171168
        %v993 = vunpack.c.0.s8 %v992
        %v994 = vlaneseq
        %v995 = vshrl.u32 %v994, 7
        %v996 = vsub.s32 %v993, %v995
        %v997 = vrot.slane %v969, %v996
        %v998 = vcombine.high %v976, %v976
        %v999 = vcombine.high %v983, %v983
        %v1000 = vcombine.high %v990, %v990
        %v1001 = vcombine.high %v997, %v997
        %v1002 = vcombine.high %v936, %v936
        %v1004 = vunpack.c.l.s4 1966171168
        %v1005 = vunpack.c.0.s8 %v1004
        %v1006 = vlaneseq
        %v1007 = vshrl.u32 %v1006, 7
        %v1008 = vsub.s32 %v1005, %v1007
        %v1009 = vrot.slane %v936, %v1008
        %v1011 = vunpack.c.l.s4 1966171168
        %v1012 = vunpack.c.0.s8 %v1011
        %v1013 = vlaneseq
        %v1014 = vshrl.u32 %v1013, 7
        %v1015 = vsub.s32 %v1012, %v1014
        %v1016 = vrot.slane %v1002, %v1015
        %v1017 = vcombine.high %v1009, %v1009
        %v1018 = vcombine.high %v1016, %v1016
        %v1020 = vunpack.c.l.s4 1966171168
        %v1021 = vunpack.c.0.s8 %v1020
        %v1022 = vlaneseq
        %v1023 = vshrl.u32 %v1022, 7
        %v1024 = vsub.s32 %v1021, %v1023
        %v1025 = vrot.slane %v1009, %v1024
        %v1027 = vunpack.c.l.s4 1966171168
        %v1028 = vunpack.c.0.s8 %v1027
        %v1029 = vlaneseq
        %v1030 = vshrl.u32 %v1029, 7
        %v1031 = vsub.s32 %v1028, %v1030
        %v1032 = vrot.slane %v1016, %v1031
        %v1034 = vunpack.c.l.s4 1966171168
        %v1035 = vunpack.c.0.s8 %v1034
        %v1036 = vlaneseq
        %v1037 = vshrl.u32 %v1036, 7
        %v1038 = vsub.s32 %v1035, %v1037
        %v1039 = vrot.slane %v1017, %v1038
        %v1041 = vunpack.c.l.s4 1966171168
        %v1042 = vunpack.c.0.s8 %v1041
        %v1043 = vlaneseq
        %v1044 = vshrl.u32 %v1043, 7
        %v1045 = vsub.s32 %v1042, %v1044
        %v1046 = vrot.slane %v1018, %v1045
        %v1047 = vcombine.high %v1025, %v1025
        %v1048 = vcombine.high %v1032, %v1032
        %v1049 = vcombine.high %v1039, %v1039
        %v1050 = vcombine.high %v1046, %v1046
        %v1051 = vcombine.high %v941, %v941
        %v1053 = vunpack.c.l.s4 1966171168
        %v1054 = vunpack.c.0.s8 %v1053
        %v1055 = vlaneseq
        %v1056 = vshrl.u32 %v1055, 7
        %v1057 = vsub.s32 %v1054, %v1056
        %v1058 = vrot.slane %v941, %v1057
        %v1060 = vunpack.c.l.s4 1966171168
        %v1061 = vunpack.c.0.s8 %v1060
        %v1062 = vlaneseq
        %v1063 = vshrl.u32 %v1062, 7
        %v1064 = vsub.s32 %v1061, %v1063
        %v1065 = vrot.slane %v1051, %v1064
        %v1066 = vcombine.high %v1058, %v1058
        %v1067 = vcombine.high %v1065, %v1065
        %v1069 = vunpack.c.l.s4 1966171168
        %v1070 = vunpack.c.0.s8 %v1069
        %v1071 = vlaneseq
        %v1072 = vshrl.u32 %v1071, 7
        %v1073 = vsub.s32 %v1070, %v1072
        %v1074 = vrot.slane %v1058, %v1073
        %v1076 = vunpack.c.l.s4 1966171168
        %v1077 = vunpack.c.0.s8 %v1076
        %v1078 = vlaneseq
        %v1079 = vshrl.u32 %v1078, 7
        %v1080 = vsub.s32 %v1077, %v1079
        %v1081 = vrot.slane %v1065, %v1080
        %v1083 = vunpack.c.l.s4 1966171168
        %v1084 = vunpack.c.0.s8 %v1083
        %v1085 = vlaneseq
        %v1086 = vshrl.u32 %v1085, 7
        %v1087 = vsub.s32 %v1084, %v1086
        %v1088 = vrot.slane %v1066, %v1087
        %v1090 = vunpack.c.l.s4 1966171168
        %v1091 = vunpack.c.0.s8 %v1090
        %v1092 = vlaneseq
        %v1093 = vshrl.u32 %v1092, 7
        %v1094 = vsub.s32 %v1091, %v1093
        %v1095 = vrot.slane %v1067, %v1094
        %v1096 = vcombine.high %v1074, %v1074
        %v1097 = vcombine.high %v1081, %v1081
        %v1098 = vcombine.high %v1088, %v1088
        %v1099 = vcombine.high %v1095, %v1095
        %v1100 = vcombine.high %v946, %v946
        %v1102 = vunpack.c.l.s4 1966171168
        %v1103 = vunpack.c.0.s8 %v1102
        %v1104 = vlaneseq
        %v1105 = vshrl.u32 %v1104, 7
        %v1106 = vsub.s32 %v1103, %v1105
        %v1107 = vrot.slane %v946, %v1106
        %v1109 = vunpack.c.l.s4 1966171168
        %v1110 = vunpack.c.0.s8 %v1109
        %v1111 = vlaneseq
        %v1112 = vshrl.u32 %v1111, 7
        %v1113 = vsub.s32 %v1110, %v1112
        %v1114 = vrot.slane %v1100, %v1113
        %v1115 = vcombine.high %v1107, %v1107
        %v1116 = vcombine.high %v1114, %v1114
        %v1118 = vunpack.c.l.s4 1966171168
        %v1119 = vunpack.c.0.s8 %v1118
        %v1120 = vlaneseq
        %v1121 = vshrl.u32 %v1120, 7
        %v1122 = vsub.s32 %v1119, %v1121
        %v1123 = vrot.slane %v1107, %v1122
        %v1125 = vunpack.c.l.s4 1966171168
        %v1126 = vunpack.c.0.s8 %v1125
        %v1127 = vlaneseq
        %v1128 = vshrl.u32 %v1127, 7
        %v1129 = vsub.s32 %v1126, %v1128
        %v1130 = vrot.slane %v1114, %v1129
        %v1132 = vunpack.c.l.s4 1966171168
        %v1133 = vunpack.c.0.s8 %v1132
        %v1134 = vlaneseq
        %v1135 = vshrl.u32 %v1134, 7
        %v1136 = vsub.s32 %v1133, %v1135
        %v1137 = vrot.slane %v1115, %v1136
        %v1139 = vunpack.c.l.s4 1966171168
        %v1140 = vunpack.c.0.s8 %v1139
        %v1141 = vlaneseq
        %v1142 = vshrl.u32 %v1141, 7
        %v1143 = vsub.s32 %v1140, %v1142
        %v1144 = vrot.slane %v1116, %v1143
        %v1145 = vcombine.high %v1123, %v1123
        %v1146 = vcombine.high %v1130, %v1130
        %v1147 = vcombine.high %v1137, %v1137
        %v1148 = vcombine.high %v1144, %v1144
        %v1149 = vlaneseq
        %v1150 = vshrl.u32 %v1149, 7
        %v1151 = vsub.s32 0, %v1150
        %v1152 = vrot.slane %v976, %v1151
        %v1153 = vlaneseq
        %v1154 = vshrl.u32 %v1153, 7
        %v1155 = vsub.s32 0, %v1154
        %v1156 = vrot.slane %v990, %v1155
        %v1157 = vlaneseq
        %v1158 = vshrl.u32 %v1157, 7
        %v1159 = vsub.s32 0, %v1158
        %v1160 = vrot.slane %v998, %v1159
        %v1161 = vlaneseq
        %v1162 = vshrl.u32 %v1161, 7
        %v1163 = vsub.s32 0, %v1162
        %v1164 = vrot.slane %v1000, %v1163
        %v1165 = vlaneseq
        %v1166 = vshrl.u32 %v1165, 7
        %v1167 = vsub.s32 0, %v1166
        %v1168 = vrot.slane %v983, %v1167
        %v1169 = vlaneseq
        %v1170 = vshrl.u32 %v1169, 7
        %v1171 = vsub.s32 0, %v1170
        %v1172 = vrot.slane %v997, %v1171
        %v1173 = vlaneseq
        %v1174 = vshrl.u32 %v1173, 7
        %v1175 = vsub.s32 0, %v1174
        %v1176 = vrot.slane %v999, %v1175
        %v1177 = vlaneseq
        %v1178 = vshrl.u32 %v1177, 7
        %v1179 = vsub.s32 0, %v1178
        %v1180 = vrot.slane %v1001, %v1179
        %v1181 = vlaneseq
        %v1182 = vshrl.u32 %v1181, 7
        %v1183 = vsub.s32 0, %v1182
        %v1184 = vrot.slane %v1025, %v1183
        %v1185 = vlaneseq
        %v1186 = vshrl.u32 %v1185, 7
        %v1187 = vsub.s32 0, %v1186
        %v1188 = vrot.slane %v1039, %v1187
        %v1189 = vlaneseq
        %v1190 = vshrl.u32 %v1189, 7
        %v1191 = vsub.s32 0, %v1190
        %v1192 = vrot.slane %v1047, %v1191
        %v1193 = vlaneseq
        %v1194 = vshrl.u32 %v1193, 7
        %v1195 = vsub.s32 0, %v1194
        %v1196 = vrot.slane %v1049, %v1195
        %v1197 = vlaneseq
        %v1198 = vshrl.u32 %v1197, 7
        %v1199 = vsub.s32 0, %v1198
        %v1200 = vrot.slane %v1032, %v1199
        %v1201 = vlaneseq
        %v1202 = vshrl.u32 %v1201, 7
        %v1203 = vsub.s32 0, %v1202
        %v1204 = vrot.slane %v1046, %v1203
        %v1205 = vlaneseq
        %v1206 = vshrl.u32 %v1205, 7
        %v1207 = vsub.s32 0, %v1206
        %v1208 = vrot.slane %v1048, %v1207
        %v1209 = vlaneseq
        %v1210 = vshrl.u32 %v1209, 7
        %v1211 = vsub.s32 0, %v1210
        %v1212 = vrot.slane %v1050, %v1211
        %v1213 = vlaneseq
        %v1214 = vshrl.u32 %v1213, 7
        %v1215 = vsub.s32 0, %v1214
        %v1216 = vrot.slane %v1074, %v1215
        %v1217 = vlaneseq
        %v1218 = vshrl.u32 %v1217, 7
        %v1219 = vsub.s32 0, %v1218
        %v1220 = vrot.slane %v1088, %v1219
        %v1221 = vlaneseq
        %v1222 = vshrl.u32 %v1221, 7
        %v1223 = vsub.s32 0, %v1222
        %v1224 = vrot.slane %v1096, %v1223
        %v1225 = vlaneseq
        %v1226 = vshrl.u32 %v1225, 7
        %v1227 = vsub.s32 0, %v1226
        %v1228 = vrot.slane %v1098, %v1227
        %v1229 = vlaneseq
        %v1230 = vshrl.u32 %v1229, 7
        %v1231 = vsub.s32 0, %v1230
        %v1232 = vrot.slane %v1081, %v1231
        %v1233 = vlaneseq
        %v1234 = vshrl.u32 %v1233, 7
        %v1235 = vsub.s32 0, %v1234
        %v1236 = vrot.slane %v1095, %v1235
        %v1237 = vlaneseq
        %v1238 = vshrl.u32 %v1237, 7
        %v1239 = vsub.s32 0, %v1238
        %v1240 = vrot.slane %v1097, %v1239
        %v1241 = vlaneseq
        %v1242 = vshrl.u32 %v1241, 7
        %v1243 = vsub.s32 0, %v1242
        %v1244 = vrot.slane %v1099, %v1243
        %v1245 = vlaneseq
        %v1246 = vshrl.u32 %v1245, 7
        %v1247 = vsub.s32 0, %v1246
        %v1248 = vrot.slane %v1123, %v1247
        %v1249 = vlaneseq
        %v1250 = vshrl.u32 %v1249, 7
        %v1251 = vsub.s32 0, %v1250
        %v1252 = vrot.slane %v1137, %v1251
        %v1253 = vlaneseq
        %v1254 = vshrl.u32 %v1253, 7
        %v1255 = vsub.s32 0, %v1254
        %v1256 = vrot.slane %v1145, %v1255
        %v1257 = vlaneseq
        %v1258 = vshrl.u32 %v1257, 7
        %v1259 = vsub.s32 0, %v1258
        %v1260 = vrot.slane %v1147, %v1259
        %v1261 = vlaneseq
        %v1262 = vshrl.u32 %v1261, 7
        %v1263 = vsub.s32 0, %v1262
        %v1264 = vrot.slane %v1130, %v1263
        %v1265 = vlaneseq
        %v1266 = vshrl.u32 %v1265, 7
        %v1267 = vsub.s32 0, %v1266
        %v1268 = vrot.slane %v1144, %v1267
        %v1269 = vlaneseq
        %v1270 = vshrl.u32 %v1269, 7
        %v1271 = vsub.s32 0, %v1270
        %v1272 = vrot.slane %v1146, %v1271
        %v1273 = vlaneseq
        %v1274 = vshrl.u32 %v1273, 7
        %v1275 = vsub.s32 0, %v1274
        %v1276 = vrot.slane %v1148, %v1275
        %1309 = vrot.lane.b32.xlu0 %v931, 32
        %v1310 = vpop.permute.xlu0 %1309
        %1311 = vrot.lane.b32.xlu0 %v936, 32
        %v1312 = vpop.permute.xlu0 %1311
        %1313 = vrot.lane.b32.xlu0 %v941, 32
        %v1314 = vpop.permute.xlu0 %1313
        %1315 = vrot.lane.b32.xlu0 %v946, 32
        %v1316 = vpop.permute.xlu0 %1315
        %v1321 = vadd.f32 %v1152, %v1310
        %v1322 = vadd.f32 %v1152, %v1312
        %v1323 = vadd.f32 %v1156, %v1310
        %v1324 = vadd.f32 %v1156, %v1312
        %v1325 = vadd.f32 %v1160, %v1310
        %v1326 = vadd.f32 %v1160, %v1312
        %v1327 = vadd.f32 %v1164, %v1310
        %v1328 = vadd.f32 %v1164, %v1312
        %v1329 = vadd.f32 %v1168, %v1310
        %v1330 = vadd.f32 %v1168, %v1312
        %v1331 = vadd.f32 %v1172, %v1310
        %v1332 = vadd.f32 %v1172, %v1312
        %v1333 = vadd.f32 %v1176, %v1310
        %v1334 = vadd.f32 %v1176, %v1312
        %v1335 = vadd.f32 %v1180, %v1310
        %v1336 = vadd.f32 %v1180, %v1312
        %v1337 = vadd.f32 %v1184, %v1310
        %v1338 = vadd.f32 %v1184, %v1312
        %v1339 = vadd.f32 %v1188, %v1310
        %v1340 = vadd.f32 %v1188, %v1312
        %v1341 = vadd.f32 %v1192, %v1310
        %v1342 = vadd.f32 %v1192, %v1312
        %v1343 = vadd.f32 %v1196, %v1310
        %v1344 = vadd.f32 %v1196, %v1312
        %v1345 = vadd.f32 %v1200, %v1310
        %v1346 = vadd.f32 %v1200, %v1312
        %v1347 = vadd.f32 %v1204, %v1310
        %v1348 = vadd.f32 %v1204, %v1312
        %v1349 = vadd.f32 %v1208, %v1310
        %v1350 = vadd.f32 %v1208, %v1312
        %v1351 = vadd.f32 %v1212, %v1310
        %v1352 = vadd.f32 %v1212, %v1312
        %v1353 = vadd.f32 %v1216, %v1314
        %v1354 = vadd.f32 %v1216, %v1316
        %v1355 = vadd.f32 %v1220, %v1314
        %v1356 = vadd.f32 %v1220, %v1316
        %v1357 = vadd.f32 %v1224, %v1314
        %v1358 = vadd.f32 %v1224, %v1316
        %v1359 = vadd.f32 %v1228, %v1314
        %v1360 = vadd.f32 %v1228, %v1316
        %v1361 = vadd.f32 %v1232, %v1314
        %v1362 = vadd.f32 %v1232, %v1316
        %v1363 = vadd.f32 %v1236, %v1314
        %v1364 = vadd.f32 %v1236, %v1316
        %v1365 = vadd.f32 %v1240, %v1314
        %v1366 = vadd.f32 %v1240, %v1316
        %v1367 = vadd.f32 %v1244, %v1314
        %v1368 = vadd.f32 %v1244, %v1316
        %v1369 = vadd.f32 %v1248, %v1314
        %v1370 = vadd.f32 %v1248, %v1316
        %v1371 = vadd.f32 %v1252, %v1314
        %v1372 = vadd.f32 %v1252, %v1316
        %v1373 = vadd.f32 %v1256, %v1314
        %v1374 = vadd.f32 %v1256, %v1316
        %v1375 = vadd.f32 %v1260, %v1314
        %v1376 = vadd.f32 %v1260, %v1316
        %v1377 = vadd.f32 %v1264, %v1314
        %v1378 = vadd.f32 %v1264, %v1316
        %v1379 = vadd.f32 %v1268, %v1314
        %v1380 = vadd.f32 %v1268, %v1316
        %v1381 = vadd.f32 %v1272, %v1314
        %v1382 = vadd.f32 %v1272, %v1316
        %v1383 = vadd.f32 %v1276, %v1314
        %v1384 = vadd.f32 %v1276, %v1316
        %vm1385 = vcmp.ge.f32.partialorder %v1321, 0.0
        %vm1386 = vcmp.ge.f32.partialorder %v1322, 0.0
        %vm1387 = vcmp.ge.f32.partialorder %v1323, 0.0
        %vm1388 = vcmp.ge.f32.partialorder %v1324, 0.0
        %vm1389 = vcmp.ge.f32.partialorder %v1325, 0.0
        %vm1390 = vcmp.ge.f32.partialorder %v1326, 0.0
        %vm1391 = vcmp.ge.f32.partialorder %v1327, 0.0
        %vm1392 = vcmp.ge.f32.partialorder %v1328, 0.0
        %vm1393 = vcmp.ge.f32.partialorder %v1329, 0.0
        %vm1394 = vcmp.ge.f32.partialorder %v1330, 0.0
        %vm1395 = vcmp.ge.f32.partialorder %v1331, 0.0
        %vm1396 = vcmp.ge.f32.partialorder %v1332, 0.0
        %vm1397 = vcmp.ge.f32.partialorder %v1333, 0.0
        %vm1398 = vcmp.ge.f32.partialorder %v1334, 0.0
        %vm1399 = vcmp.ge.f32.partialorder %v1335, 0.0
        %vm1400 = vcmp.ge.f32.partialorder %v1336, 0.0
        %vm1401 = vcmp.ge.f32.partialorder %v1337, 0.0
        %vm1402 = vcmp.ge.f32.partialorder %v1338, 0.0
        %vm1403 = vcmp.ge.f32.partialorder %v1339, 0.0
        %vm1404 = vcmp.ge.f32.partialorder %v1340, 0.0
        %vm1405 = vcmp.ge.f32.partialorder %v1341, 0.0
        %vm1406 = vcmp.ge.f32.partialorder %v1342, 0.0
        %vm1407 = vcmp.ge.f32.partialorder %v1343, 0.0
        %vm1408 = vcmp.ge.f32.partialorder %v1344, 0.0
        %vm1409 = vcmp.ge.f32.partialorder %v1345, 0.0
        %vm1410 = vcmp.ge.f32.partialorder %v1346, 0.0
        %vm1411 = vcmp.ge.f32.partialorder %v1347, 0.0
        %vm1412 = vcmp.ge.f32.partialorder %v1348, 0.0
        %vm1413 = vcmp.ge.f32.partialorder %v1349, 0.0
        %vm1414 = vcmp.ge.f32.partialorder %v1350, 0.0
        %vm1415 = vcmp.ge.f32.partialorder %v1351, 0.0
        %vm1416 = vcmp.ge.f32.partialorder %v1352, 0.0
        %vm1417 = vcmp.ge.f32.partialorder %v1353, 0.0
        %vm1418 = vcmp.ge.f32.partialorder %v1354, 0.0
        %vm1419 = vcmp.ge.f32.partialorder %v1355, 0.0
        %vm1420 = vcmp.ge.f32.partialorder %v1356, 0.0
        %vm1421 = vcmp.ge.f32.partialorder %v1357, 0.0
        %vm1422 = vcmp.ge.f32.partialorder %v1358, 0.0
        %vm1423 = vcmp.ge.f32.partialorder %v1359, 0.0
        %vm1424 = vcmp.ge.f32.partialorder %v1360, 0.0
        %vm1425 = vcmp.ge.f32.partialorder %v1361, 0.0
        %vm1426 = vcmp.ge.f32.partialorder %v1362, 0.0
        %vm1427 = vcmp.ge.f32.partialorder %v1363, 0.0
        %vm1428 = vcmp.ge.f32.partialorder %v1364, 0.0
        %vm1429 = vcmp.ge.f32.partialorder %v1365, 0.0
        %vm1430 = vcmp.ge.f32.partialorder %v1366, 0.0
        %vm1431 = vcmp.ge.f32.partialorder %v1367, 0.0
        %vm1432 = vcmp.ge.f32.partialorder %v1368, 0.0
        %vm1433 = vcmp.ge.f32.partialorder %v1369, 0.0
        %vm1434 = vcmp.ge.f32.partialorder %v1370, 0.0
        %vm1435 = vcmp.ge.f32.partialorder %v1371, 0.0
        %vm1436 = vcmp.ge.f32.partialorder %v1372, 0.0
        %vm1437 = vcmp.ge.f32.partialorder %v1373, 0.0
        %vm1438 = vcmp.ge.f32.partialorder %v1374, 0.0
        %vm1439 = vcmp.ge.f32.partialorder %v1375, 0.0
        %vm1440 = vcmp.ge.f32.partialorder %v1376, 0.0
        %vm1441 = vcmp.ge.f32.partialorder %v1377, 0.0
        %vm1442 = vcmp.ge.f32.partialorder %v1378, 0.0
        %vm1443 = vcmp.ge.f32.partialorder %v1379, 0.0
        %vm1444 = vcmp.ge.f32.partialorder %v1380, 0.0
        %vm1445 = vcmp.ge.f32.partialorder %v1381, 0.0
        %vm1446 = vcmp.ge.f32.partialorder %v1382, 0.0
        %vm1447 = vcmp.ge.f32.partialorder %v1383, 0.0
        %vm1448 = vcmp.ge.f32.partialorder %v1384, 0.0
        %v1449 = vmul.f32 %v1321, 0.2
        %v1450 = vmul.f32 %v1322, 0.2
        %v1451 = vmul.f32 %v1323, 0.2
        %v1452 = vmul.f32 %v1324, 0.2
        %v1453 = vmul.f32 %v1325, 0.2
        %v1454 = vmul.f32 %v1326, 0.2
        %v1455 = vmul.f32 %v1327, 0.2
        %v1456 = vmul.f32 %v1328, 0.2
        %v1457 = vmul.f32 %v1329, 0.2
        %v1458 = vmul.f32 %v1330, 0.2
        %v1459 = vmul.f32 %v1331, 0.2
        %v1460 = vmul.f32 %v1332, 0.2
        %v1461 = vmul.f32 %v1333, 0.2
        %v1462 = vmul.f32 %v1334, 0.2
        %v1463 = vmul.f32 %v1335, 0.2
        %v1464 = vmul.f32 %v1336, 0.2
        %v1465 = vmul.f32 %v1337, 0.2
        %v1466 = vmul.f32 %v1338, 0.2
        %v1467 = vmul.f32 %v1339, 0.2
        %v1468 = vmul.f32 %v1340, 0.2
        %v1469 = vmul.f32 %v1341, 0.2
        %v1470 = vmul.f32 %v1342, 0.2
        %v1471 = vmul.f32 %v1343, 0.2
        %v1472 = vmul.f32 %v1344, 0.2
        %v1473 = vmul.f32 %v1345, 0.2
        %v1474 = vmul.f32 %v1346, 0.2
        %v1475 = vmul.f32 %v1347, 0.2
        %v1476 = vmul.f32 %v1348, 0.2
        %v1477 = vmul.f32 %v1349, 0.2
        %v1478 = vmul.f32 %v1350, 0.2
        %v1479 = vmul.f32 %v1351, 0.2
        %v1480 = vmul.f32 %v1352, 0.2
        %v1481 = vmul.f32 %v1353, 0.2
        %v1482 = vmul.f32 %v1354, 0.2
        %v1483 = vmul.f32 %v1355, 0.2
        %v1484 = vmul.f32 %v1356, 0.2
        %v1485 = vmul.f32 %v1357, 0.2
        %v1486 = vmul.f32 %v1358, 0.2
        %v1487 = vmul.f32 %v1359, 0.2
        %v1488 = vmul.f32 %v1360, 0.2
        %v1489 = vmul.f32 %v1361, 0.2
        %v1490 = vmul.f32 %v1362, 0.2
        %v1491 = vmul.f32 %v1363, 0.2
        %v1492 = vmul.f32 %v1364, 0.2
        %v1493 = vmul.f32 %v1365, 0.2
        %v1494 = vmul.f32 %v1366, 0.2
        %v1495 = vmul.f32 %v1367, 0.2
        %v1496 = vmul.f32 %v1368, 0.2
        %v1497 = vmul.f32 %v1369, 0.2
        %v1498 = vmul.f32 %v1370, 0.2
        %v1499 = vmul.f32 %v1371, 0.2
        %v1500 = vmul.f32 %v1372, 0.2
        %v1501 = vmul.f32 %v1373, 0.2
        %v1502 = vmul.f32 %v1374, 0.2
        %v1503 = vmul.f32 %v1375, 0.2
        %v1504 = vmul.f32 %v1376, 0.2
        %v1505 = vmul.f32 %v1377, 0.2
        %v1506 = vmul.f32 %v1378, 0.2
        %v1507 = vmul.f32 %v1379, 0.2
        %v1508 = vmul.f32 %v1380, 0.2
        %v1509 = vmul.f32 %v1381, 0.2
        %v1510 = vmul.f32 %v1382, 0.2
        %v1511 = vmul.f32 %v1383, 0.2
        %v1512 = vmul.f32 %v1384, 0.2
        %v1513 = vsel %vm1385, %v1321, %v1449
        %v1514 = vsel %vm1386, %v1322, %v1450
        %v1515 = vsel %vm1387, %v1323, %v1451
        %v1516 = vsel %vm1388, %v1324, %v1452
        %v1517 = vsel %vm1389, %v1325, %v1453
        %v1518 = vsel %vm1390, %v1326, %v1454
        %v1519 = vsel %vm1391, %v1327, %v1455
        %v1520 = vsel %vm1392, %v1328, %v1456
        %v1521 = vsel %vm1393, %v1329, %v1457
        %v1522 = vsel %vm1394, %v1330, %v1458
        %v1523 = vsel %vm1395, %v1331, %v1459
        %v1524 = vsel %vm1396, %v1332, %v1460
        %v1525 = vsel %vm1397, %v1333, %v1461
        %v1526 = vsel %vm1398, %v1334, %v1462
        %v1527 = vsel %vm1399, %v1335, %v1463
        %v1528 = vsel %vm1400, %v1336, %v1464
        %v1529 = vsel %vm1401, %v1337, %v1465
        %v1530 = vsel %vm1402, %v1338, %v1466
        %v1531 = vsel %vm1403, %v1339, %v1467
        %v1532 = vsel %vm1404, %v1340, %v1468
        %v1533 = vsel %vm1405, %v1341, %v1469
        %v1534 = vsel %vm1406, %v1342, %v1470
        %v1535 = vsel %vm1407, %v1343, %v1471
        %v1536 = vsel %vm1408, %v1344, %v1472
        %v1537 = vsel %vm1409, %v1345, %v1473
        %v1538 = vsel %vm1410, %v1346, %v1474
        %v1539 = vsel %vm1411, %v1347, %v1475
        %v1540 = vsel %vm1412, %v1348, %v1476
        %v1541 = vsel %vm1413, %v1349, %v1477
        %v1542 = vsel %vm1414, %v1350, %v1478
        %v1543 = vsel %vm1415, %v1351, %v1479
        %v1544 = vsel %vm1416, %v1352, %v1480
        %v1545 = vsel %vm1417, %v1353, %v1481
        %v1546 = vsel %vm1418, %v1354, %v1482
        %v1547 = vsel %vm1419, %v1355, %v1483
        %v1548 = vsel %vm1420, %v1356, %v1484
        %v1549 = vsel %vm1421, %v1357, %v1485
        %v1550 = vsel %vm1422, %v1358, %v1486
        %v1551 = vsel %vm1423, %v1359, %v1487
        %v1552 = vsel %vm1424, %v1360, %v1488
        %v1553 = vsel %vm1425, %v1361, %v1489
        %v1554 = vsel %vm1426, %v1362, %v1490
        %v1555 = vsel %vm1427, %v1363, %v1491
        %v1556 = vsel %vm1428, %v1364, %v1492
        %v1557 = vsel %vm1429, %v1365, %v1493
        %v1558 = vsel %vm1430, %v1366, %v1494
        %v1559 = vsel %vm1431, %v1367, %v1495
        %v1560 = vsel %vm1432, %v1368, %v1496
        %v1561 = vsel %vm1433, %v1369, %v1497
        %v1562 = vsel %vm1434, %v1370, %v1498
        %v1563 = vsel %vm1435, %v1371, %v1499
        %v1564 = vsel %vm1436, %v1372, %v1500
        %v1565 = vsel %vm1437, %v1373, %v1501
        %v1566 = vsel %vm1438, %v1374, %v1502
        %v1567 = vsel %vm1439, %v1375, %v1503
        %v1568 = vsel %vm1440, %v1376, %v1504
        %v1569 = vsel %vm1441, %v1377, %v1505
        %v1570 = vsel %vm1442, %v1378, %v1506
        %v1571 = vsel %vm1443, %v1379, %v1507
        %v1572 = vsel %vm1444, %v1380, %v1508
        %v1573 = vsel %vm1445, %v1381, %v1509
        %v1574 = vsel %vm1446, %v1382, %v1510
        %v1575 = vsel %vm1447, %v1383, %v1511
        %v1576 = vsel %vm1448, %v1384, %v1512
        %v1577 = vld [vmem:[#allocation6] sm:$0xf]
        %1580 = vrot.lane.b32.xlu0 %v1513, 96
        %v1581 = vpop.permute.xlu0 %1580
        %1582 = vrot.lane.b32.xlu0 %v1514, 96
        %v1583 = vpop.permute.xlu0 %1582
        %v1585 = vsel %vm851, %v1577, 0
        %v1587 = vsel %vm851, %v1581, 0
        %v1589 = vsel %vm851, %v1583, 0
        %1591 = vmatprep.subr.mxu0 0.0
        %1592 = vmatpush1.xpose.msra.mxu0 %v1587
        %1593 = vmatprep.subr.mxu0 0.0
        %1594 = vmatpush1.xpose.msra.mxu0 %v1589
        %1595 = vmatprep.subr.mxu0 0.0
        %1596 = vmatpush1.xpose.msra.mxu0 0.0
        %1597 = vmatprep.subr.mxu0 0.0
        %1598 = vmatpush1.xpose.msra.mxu0 0.0
        %1599 = vmatprep.subr.mxu0 0.0
        %1600 = vmatpush1.xpose.msra.mxu0 0.0
        %1601 = vmatprep.subr.mxu0 0.0
        %1602 = vmatpush1.xpose.msra.mxu0 0.0
        %1603 = vmatprep.subr.mxu0 0.0
        %1604 = vmatpush1.xpose.msra.mxu0 0.0
        %1605 = vmatprep.subr.mxu0 0.0
        %1606 = vmatpush1.xpose.msra.mxu0 0.0
        %1607 = vmatprep.subr.mxu0 0.0
        %1608 = vmatpush1.xpose.msra.mxu0 0.0
        %1609 = vmatprep.subr.mxu0 0.0
        %1610 = vmatpush1.xpose.msra.mxu0 0.0
        %1611 = vmatprep.subr.mxu0 0.0
        %1612 = vmatpush1.xpose.msra.mxu0 0.0
        %1613 = vmatprep.subr.mxu0 0.0
        %1614 = vmatpush1.xpose.msra.mxu0 0.0
        %1615 = vmatprep.subr.mxu0 0.0
        %1616 = vmatpush1.xpose.msra.mxu0 0.0
        %1617 = vmatprep.subr.mxu0 0.0
        %1618 = vmatpush1.xpose.msra.mxu0 0.0
        %1619 = vmatprep.subr.mxu0 0.0
        %1620 = vmatpush1.xpose.msra.mxu0 0.0
        %1621 = vmatprep.subr.mxu0 0.0
        %1622 = vmatpush1.xpose.msra.mxu0 0.0
        %1623 = vmatprep.subr.mxu0 0.0
        %1624 = vmatpush1.xpose.msra.mxu0 0.0
        %1625 = vmatprep.subr.mxu0 0.0
        %1626 = vmatpush1.xpose.msra.mxu0 0.0
        %1627 = vmatprep.subr.mxu0 0.0
        %1628 = vmatpush1.xpose.msra.mxu0 0.0
        %1629 = vmatprep.subr.mxu0 0.0
        %1630 = vmatpush1.xpose.msra.mxu0 0.0
        %1631 = vmatprep.subr.mxu0 0.0
        %1632 = vmatpush1.xpose.msra.mxu0 0.0
        %1633 = vmatprep.subr.mxu0 0.0
        %1634 = vmatpush1.xpose.msra.mxu0 0.0
        %1635 = vmatprep.subr.mxu0 0.0
        %1636 = vmatpush1.xpose.msra.mxu0 0.0
        %1637 = vmatprep.subr.mxu0 0.0
        %1638 = vmatpush1.xpose.msra.mxu0 0.0
        %1639 = vmatprep.subr.mxu0 0.0
        %1640 = vmatpush1.xpose.msra.mxu0 0.0
        %1641 = vmatprep.subr.mxu0 0.0
        %1642 = vmatpush1.xpose.msra.mxu0 0.0
        %1643 = vmatprep.subr.mxu0 0.0
        %1644 = vmatpush1.xpose.msra.mxu0 0.0
        %1645 = vmatprep.subr.mxu0 0.0
        %1646 = vmatpush1.xpose.msra.mxu0 0.0
        %1647 = vmatprep.subr.mxu0 0.0
        %1648 = vmatpush1.xpose.msra.mxu0 0.0
        %1649 = vmatprep.subr.mxu0 0.0
        %1650 = vmatpush1.xpose.msra.mxu0 0.0
        %1651 = vmatprep.subr.mxu0 0.0
        %1652 = vmatpush1.xpose.msra.mxu0 0.0
        %1653 = vmatprep.subr.mxu0 0.0
        %1654 = vmatpush1.xpose.msra.mxu0 0.0
        %1655 = vmatprep.mubr.f32.mxu0 0.0
        %1656 = vmatmul.mubr.f32.gmra.mrb[0].mxu0 %v1585
        %v1657 = vpop.f32.mrb[0].mxu0
        %v1658 = vadd.f32 %v582, %v1657
        %v1659 = vpop.f32.mrb[0].mxu0
        %1660 = vdwg.mxu0
        %1663 = vrot.lane.b32.xlu0 %v1515, 96
        %v1664 = vpop.permute.xlu0 %1663
        %1665 = vrot.lane.b32.xlu0 %v1516, 96
        %v1666 = vpop.permute.xlu0 %1665
        %v1667 = vsel %vm851, %v1664, 0
        %v1669 = vsel %vm851, %v1666, 0
        %1671 = vmatprep.subr.mxu0 0.0
        %1672 = vmatpush1.xpose.msra.mxu0 %v1667
        %1673 = vmatprep.subr.mxu0 0.0
        %1674 = vmatpush1.xpose.msra.mxu0 %v1669
        %1675 = vmatprep.subr.mxu0 0.0
        %1676 = vmatpush1.xpose.msra.mxu0 0.0
        %1677 = vmatprep.subr.mxu0 0.0
        %1678 = vmatpush1.xpose.msra.mxu0 0.0
        %1679 = vmatprep.subr.mxu0 0.0
        %1680 = vmatpush1.xpose.msra.mxu0 0.0
        %1681 = vmatprep.subr.mxu0 0.0
        %1682 = vmatpush1.xpose.msra.mxu0 0.0
        %1683 = vmatprep.subr.mxu0 0.0
        %1684 = vmatpush1.xpose.msra.mxu0 0.0
        %1685 = vmatprep.subr.mxu0 0.0
        %1686 = vmatpush1.xpose.msra.mxu0 0.0
        %1687 = vmatprep.subr.mxu0 0.0
        %1688 = vmatpush1.xpose.msra.mxu0 0.0
        %1689 = vmatprep.subr.mxu0 0.0
        %1690 = vmatpush1.xpose.msra.mxu0 0.0
        %1691 = vmatprep.subr.mxu0 0.0
        %1692 = vmatpush1.xpose.msra.mxu0 0.0
        %1693 = vmatprep.subr.mxu0 0.0
        %1694 = vmatpush1.xpose.msra.mxu0 0.0
        %1695 = vmatprep.subr.mxu0 0.0
        %1696 = vmatpush1.xpose.msra.mxu0 0.0
        %1697 = vmatprep.subr.mxu0 0.0
        %1698 = vmatpush1.xpose.msra.mxu0 0.0
        %1699 = vmatprep.subr.mxu0 0.0
        %1700 = vmatpush1.xpose.msra.mxu0 0.0
        %1701 = vmatprep.subr.mxu0 0.0
        %1702 = vmatpush1.xpose.msra.mxu0 0.0
        %1703 = vmatprep.subr.mxu0 0.0
        %1704 = vmatpush1.xpose.msra.mxu0 0.0
        %1705 = vmatprep.subr.mxu0 0.0
        %1706 = vmatpush1.xpose.msra.mxu0 0.0
        %1707 = vmatprep.subr.mxu0 0.0
        %1708 = vmatpush1.xpose.msra.mxu0 0.0
        %1709 = vmatprep.subr.mxu0 0.0
        %1710 = vmatpush1.xpose.msra.mxu0 0.0
        %1711 = vmatprep.subr.mxu0 0.0
        %1712 = vmatpush1.xpose.msra.mxu0 0.0
        %1713 = vmatprep.subr.mxu0 0.0
        %1714 = vmatpush1.xpose.msra.mxu0 0.0
        %1715 = vmatprep.subr.mxu0 0.0
        %1716 = vmatpush1.xpose.msra.mxu0 0.0
        %1717 = vmatprep.subr.mxu0 0.0
        %1718 = vmatpush1.xpose.msra.mxu0 0.0
        %1719 = vmatprep.subr.mxu0 0.0
        %1720 = vmatpush1.xpose.msra.mxu0 0.0
        %1721 = vmatprep.subr.mxu0 0.0
        %1722 = vmatpush1.xpose.msra.mxu0 0.0
        %1723 = vmatprep.subr.mxu0 0.0
        %1724 = vmatpush1.xpose.msra.mxu0 0.0
        %1725 = vmatprep.subr.mxu0 0.0
        %1726 = vmatpush1.xpose.msra.mxu0 0.0
        %1727 = vmatprep.subr.mxu0 0.0
        %1728 = vmatpush1.xpose.msra.mxu0 0.0
        %1729 = vmatprep.subr.mxu0 0.0
        %1730 = vmatpush1.xpose.msra.mxu0 0.0
        %1731 = vmatprep.subr.mxu0 0.0
        %1732 = vmatpush1.xpose.msra.mxu0 0.0
        %1733 = vmatprep.subr.mxu0 0.0
        %1734 = vmatpush1.xpose.msra.mxu0 0.0
        %1735 = vmatprep.mubr.f32.mxu0 0.0
        %1736 = vmatmul.mubr.f32.gmra.mrb[0].mxu0 %v1585
        %v1737 = vpop.f32.mrb[0].mxu0
        %v1738 = vadd.f32 %v586, %v1737
        %v1739 = vpop.f32.mrb[0].mxu0
        %1740 = vdwg.mxu0
        %1743 = vrot.lane.b32.xlu0 %v1517, 96
        %v1744 = vpop.permute.xlu0 %1743
        %1745 = vrot.lane.b32.xlu0 %v1518, 96
        %v1746 = vpop.permute.xlu0 %1745
        %v1747 = vsel %vm851, %v1744, 0
        %v1749 = vsel %vm851, %v1746, 0
        %1751 = vmatprep.subr.mxu0 0.0
        %1752 = vmatpush1.xpose.msra.mxu0 %v1747
        %1753 = vmatprep.subr.mxu0 0.0
        %1754 = vmatpush1.xpose.msra.mxu0 %v1749
        %1755 = vmatprep.subr.mxu0 0.0
        %1756 = vmatpush1.xpose.msra.mxu0 0.0
        %1757 = vmatprep.subr.mxu0 0.0
        %1758 = vmatpush1.xpose.msra.mxu0 0.0
        %1759 = vmatprep.subr.mxu0 0.0
        %1760 = vmatpush1.xpose.msra.mxu0 0.0
        %1761 = vmatprep.subr.mxu0 0.0
        %1762 = vmatpush1.xpose.msra.mxu0 0.0
        %1763 = vmatprep.subr.mxu0 0.0
        %1764 = vmatpush1.xpose.msra.mxu0 0.0
        %1765 = vmatprep.subr.mxu0 0.0
        %1766 = vmatpush1.xpose.msra.mxu0 0.0
        %1767 = vmatprep.subr.mxu0 0.0
        %1768 = vmatpush1.xpose.msra.mxu0 0.0
        %1769 = vmatprep.subr.mxu0 0.0
        %1770 = vmatpush1.xpose.msra.mxu0 0.0
        %1771 = vmatprep.subr.mxu0 0.0
        %1772 = vmatpush1.xpose.msra.mxu0 0.0
        %1773 = vmatprep.subr.mxu0 0.0
        %1774 = vmatpush1.xpose.msra.mxu0 0.0
        %1775 = vmatprep.subr.mxu0 0.0
        %1776 = vmatpush1.xpose.msra.mxu0 0.0
        %1777 = vmatprep.subr.mxu0 0.0
        %1778 = vmatpush1.xpose.msra.mxu0 0.0
        %1779 = vmatprep.subr.mxu0 0.0
        %1780 = vmatpush1.xpose.msra.mxu0 0.0
        %1781 = vmatprep.subr.mxu0 0.0
        %1782 = vmatpush1.xpose.msra.mxu0 0.0
        %1783 = vmatprep.subr.mxu0 0.0
        %1784 = vmatpush1.xpose.msra.mxu0 0.0
        %1785 = vmatprep.subr.mxu0 0.0
        %1786 = vmatpush1.xpose.msra.mxu0 0.0
        %1787 = vmatprep.subr.mxu0 0.0
        %1788 = vmatpush1.xpose.msra.mxu0 0.0
        %1789 = vmatprep.subr.mxu0 0.0
        %1790 = vmatpush1.xpose.msra.mxu0 0.0
        %1791 = vmatprep.subr.mxu0 0.0
        %1792 = vmatpush1.xpose.msra.mxu0 0.0
        %1793 = vmatprep.subr.mxu0 0.0
        %1794 = vmatpush1.xpose.msra.mxu0 0.0
        %1795 = vmatprep.subr.mxu0 0.0
        %1796 = vmatpush1.xpose.msra.mxu0 0.0
        %1797 = vmatprep.subr.mxu0 0.0
        %1798 = vmatpush1.xpose.msra.mxu0 0.0
        %1799 = vmatprep.subr.mxu0 0.0
        %1800 = vmatpush1.xpose.msra.mxu0 0.0
        %1801 = vmatprep.subr.mxu0 0.0
        %1802 = vmatpush1.xpose.msra.mxu0 0.0
        %1803 = vmatprep.subr.mxu0 0.0
        %1804 = vmatpush1.xpose.msra.mxu0 0.0
        %1805 = vmatprep.subr.mxu0 0.0
        %1806 = vmatpush1.xpose.msra.mxu0 0.0
        %1807 = vmatprep.subr.mxu0 0.0
        %1808 = vmatpush1.xpose.msra.mxu0 0.0
        %1809 = vmatprep.subr.mxu0 0.0
        %1810 = vmatpush1.xpose.msra.mxu0 0.0
        %1811 = vmatprep.subr.mxu0 0.0
        %1812 = vmatpush1.xpose.msra.mxu0 0.0
        %1813 = vmatprep.subr.mxu0 0.0
        %1814 = vmatpush1.xpose.msra.mxu0 0.0
        %1815 = vmatprep.mubr.f32.mxu0 0.0
        %1816 = vmatmul.mubr.f32.gmra.mrb[0].mxu0 %v1585
        %v1817 = vpop.f32.mrb[0].mxu0
        %v1818 = vadd.f32 %v590, %v1817
        %v1819 = vpop.f32.mrb[0].mxu0
        %1820 = vdwg.mxu0
        %1823 = vrot.lane.b32.xlu0 %v1519, 96
        %v1824 = vpop.permute.xlu0 %1823
        %1825 = vrot.lane.b32.xlu0 %v1520, 96
        %v1826 = vpop.permute.xlu0 %1825
        %v1827 = vsel %vm851, %v1824, 0
        %v1829 = vsel %vm851, %v1826, 0
        %1831 = vmatprep.subr.mxu0 0.0
        %1832 = vmatpush1.xpose.msra.mxu0 %v1827
        %1833 = vmatprep.subr.mxu0 0.0
        %1834 = vmatpush1.xpose.msra.mxu0 %v1829
        %1835 = vmatprep.subr.mxu0 0.0
        %1836 = vmatpush1.xpose.msra.mxu0 0.0
        %1837 = vmatprep.subr.mxu0 0.0
        %1838 = vmatpush1.xpose.msra.mxu0 0.0
        %1839 = vmatprep.subr.mxu0 0.0
        %1840 = vmatpush1.xpose.msra.mxu0 0.0
        %1841 = vmatprep.subr.mxu0 0.0
        %1842 = vmatpush1.xpose.msra.mxu0 0.0
        %1843 = vmatprep.subr.mxu0 0.0
        %1844 = vmatpush1.xpose.msra.mxu0 0.0
        %1845 = vmatprep.subr.mxu0 0.0
        %1846 = vmatpush1.xpose.msra.mxu0 0.0
        %1847 = vmatprep.subr.mxu0 0.0
        %1848 = vmatpush1.xpose.msra.mxu0 0.0
        %1849 = vmatprep.subr.mxu0 0.0
        %1850 = vmatpush1.xpose.msra.mxu0 0.0
        %1851 = vmatprep.subr.mxu0 0.0
        %1852 = vmatpush1.xpose.msra.mxu0 0.0
        %1853 = vmatprep.subr.mxu0 0.0
        %1854 = vmatpush1.xpose.msra.mxu0 0.0
        %1855 = vmatprep.subr.mxu0 0.0
        %1856 = vmatpush1.xpose.msra.mxu0 0.0
        %1857 = vmatprep.subr.mxu0 0.0
        %1858 = vmatpush1.xpose.msra.mxu0 0.0
        %1859 = vmatprep.subr.mxu0 0.0
        %1860 = vmatpush1.xpose.msra.mxu0 0.0
        %1861 = vmatprep.subr.mxu0 0.0
        %1862 = vmatpush1.xpose.msra.mxu0 0.0
        %1863 = vmatprep.subr.mxu0 0.0
        %1864 = vmatpush1.xpose.msra.mxu0 0.0
        %1865 = vmatprep.subr.mxu0 0.0
        %1866 = vmatpush1.xpose.msra.mxu0 0.0
        %1867 = vmatprep.subr.mxu0 0.0
        %1868 = vmatpush1.xpose.msra.mxu0 0.0
        %1869 = vmatprep.subr.mxu0 0.0
        %1870 = vmatpush1.xpose.msra.mxu0 0.0
        %1871 = vmatprep.subr.mxu0 0.0
        %1872 = vmatpush1.xpose.msra.mxu0 0.0
        %1873 = vmatprep.subr.mxu0 0.0
        %1874 = vmatpush1.xpose.msra.mxu0 0.0
        %1875 = vmatprep.subr.mxu0 0.0
        %1876 = vmatpush1.xpose.msra.mxu0 0.0
        %1877 = vmatprep.subr.mxu0 0.0
        %1878 = vmatpush1.xpose.msra.mxu0 0.0
        %1879 = vmatprep.subr.mxu0 0.0
        %1880 = vmatpush1.xpose.msra.mxu0 0.0
        %1881 = vmatprep.subr.mxu0 0.0
        %1882 = vmatpush1.xpose.msra.mxu0 0.0
        %1883 = vmatprep.subr.mxu0 0.0
        %1884 = vmatpush1.xpose.msra.mxu0 0.0
        %1885 = vmatprep.subr.mxu0 0.0
        %1886 = vmatpush1.xpose.msra.mxu0 0.0
        %1887 = vmatprep.subr.mxu0 0.0
        %1888 = vmatpush1.xpose.msra.mxu0 0.0
        %1889 = vmatprep.subr.mxu0 0.0
        %1890 = vmatpush1.xpose.msra.mxu0 0.0
        %1891 = vmatprep.subr.mxu0 0.0
        %1892 = vmatpush1.xpose.msra.mxu0 0.0
        %1893 = vmatprep.subr.mxu0 0.0
        %1894 = vmatpush1.xpose.msra.mxu0 0.0
        %1895 = vmatprep.mubr.f32.mxu0 0.0
        %1896 = vmatmul.mubr.f32.gmra.mrb[0].mxu0 %v1585
        %v1897 = vpop.f32.mrb[0].mxu0
        %v1898 = vadd.f32 %v594, %v1897
        %v1899 = vpop.f32.mrb[0].mxu0
        %1900 = vdwg.mxu0
        %1903 = vrot.lane.b32.xlu0 %v1521, 96
        %v1904 = vpop.permute.xlu0 %1903
        %1905 = vrot.lane.b32.xlu0 %v1522, 96
        %v1906 = vpop.permute.xlu0 %1905
        %v1907 = vsel %vm851, %v1904, 0
        %v1909 = vsel %vm851, %v1906, 0
        %1911 = vmatprep.subr.mxu0 0.0
        %1912 = vmatpush1.xpose.msra.mxu0 %v1907
        %1913 = vmatprep.subr.mxu0 0.0
        %1914 = vmatpush1.xpose.msra.mxu0 %v1909
        %1915 = vmatprep.subr.mxu0 0.0
        %1916 = vmatpush1.xpose.msra.mxu0 0.0
        %1917 = vmatprep.subr.mxu0 0.0
        %1918 = vmatpush1.xpose.msra.mxu0 0.0
        %1919 = vmatprep.subr.mxu0 0.0
        %1920 = vmatpush1.xpose.msra.mxu0 0.0
        %1921 = vmatprep.subr.mxu0 0.0
        %1922 = vmatpush1.xpose.msra.mxu0 0.0
        %1923 = vmatprep.subr.mxu0 0.0
        %1924 = vmatpush1.xpose.msra.mxu0 0.0
        %1925 = vmatprep.subr.mxu0 0.0
        %1926 = vmatpush1.xpose.msra.mxu0 0.0
        %1927 = vmatprep.subr.mxu0 0.0
        %1928 = vmatpush1.xpose.msra.mxu0 0.0
        %1929 = vmatprep.subr.mxu0 0.0
        %1930 = vmatpush1.xpose.msra.mxu0 0.0
        %1931 = vmatprep.subr.mxu0 0.0
        %1932 = vmatpush1.xpose.msra.mxu0 0.0
        %1933 = vmatprep.subr.mxu0 0.0
        %1934 = vmatpush1.xpose.msra.mxu0 0.0
        %1935 = vmatprep.subr.mxu0 0.0
        %1936 = vmatpush1.xpose.msra.mxu0 0.0
        %1937 = vmatprep.subr.mxu0 0.0
        %1938 = vmatpush1.xpose.msra.mxu0 0.0
        %1939 = vmatprep.subr.mxu0 0.0
        %1940 = vmatpush1.xpose.msra.mxu0 0.0
        %1941 = vmatprep.subr.mxu0 0.0
        %1942 = vmatpush1.xpose.msra.mxu0 0.0
        %1943 = vmatprep.subr.mxu0 0.0
        %1944 = vmatpush1.xpose.msra.mxu0 0.0
        %1945 = vmatprep.subr.mxu0 0.0
        %1946 = vmatpush1.xpose.msra.mxu0 0.0
        %1947 = vmatprep.subr.mxu0 0.0
        %1948 = vmatpush1.xpose.msra.mxu0 0.0
        %1949 = vmatprep.subr.mxu0 0.0
        %1950 = vmatpush1.xpose.msra.mxu0 0.0
        %1951 = vmatprep.subr.mxu0 0.0
        %1952 = vmatpush1.xpose.msra.mxu0 0.0
        %1953 = vmatprep.subr.mxu0 0.0
        %1954 = vmatpush1.xpose.msra.mxu0 0.0
        %1955 = vmatprep.subr.mxu0 0.0
        %1956 = vmatpush1.xpose.msra.mxu0 0.0
        %1957 = vmatprep.subr.mxu0 0.0
        %1958 = vmatpush1.xpose.msra.mxu0 0.0
        %1959 = vmatprep.subr.mxu0 0.0
        %1960 = vmatpush1.xpose.msra.mxu0 0.0
        %1961 = vmatprep.subr.mxu0 0.0
        %1962 = vmatpush1.xpose.msra.mxu0 0.0
        %1963 = vmatprep.subr.mxu0 0.0
        %1964 = vmatpush1.xpose.msra.mxu0 0.0
        %1965 = vmatprep.subr.mxu0 0.0
        %1966 = vmatpush1.xpose.msra.mxu0 0.0
        %1967 = vmatprep.subr.mxu0 0.0
        %1968 = vmatpush1.xpose.msra.mxu0 0.0
        %1969 = vmatprep.subr.mxu0 0.0
        %1970 = vmatpush1.xpose.msra.mxu0 0.0
        %1971 = vmatprep.subr.mxu0 0.0
        %1972 = vmatpush1.xpose.msra.mxu0 0.0
        %1973 = vmatprep.subr.mxu0 0.0
        %1974 = vmatpush1.xpose.msra.mxu0 0.0
        %1975 = vmatprep.mubr.f32.mxu0 0.0
        %1976 = vmatmul.mubr.f32.gmra.mrb[0].mxu0 %v1585
        %v1977 = vpop.f32.mrb[0].mxu0
        %v1978 = vadd.f32 %v598, %v1977
        %v1979 = vpop.f32.mrb[0].mxu0
        %1980 = vdwg.mxu0
        %1983 = vrot.lane.b32.xlu0 %v1523, 96
        %v1984 = vpop.permute.xlu0 %1983
        %1985 = vrot.lane.b32.xlu0 %v1524, 96
        %v1986 = vpop.permute.xlu0 %1985
        %v1987 = vsel %vm851, %v1984, 0
        %v1989 = vsel %vm851, %v1986, 0
        %1991 = vmatprep.subr.mxu0 0.0
        %1992 = vmatpush1.xpose.msra.mxu0 %v1987
        %1993 = vmatprep.subr.mxu0 0.0
        %1994 = vmatpush1.xpose.msra.mxu0 %v1989
        %1995 = vmatprep.subr.mxu0 0.0
        %1996 = vmatpush1.xpose.msra.mxu0 0.0
        %1997 = vmatprep.subr.mxu0 0.0
        %1998 = vmatpush1.xpose.msra.mxu0 0.0
        %1999 = vmatprep.subr.mxu0 0.0
        %2000 = vmatpush1.xpose.msra.mxu0 0.0
        %2001 = vmatprep.subr.mxu0 0.0
        %2002 = vmatpush1.xpose.msra.mxu0 0.0
        %2003 = vmatprep.subr.mxu0 0.0
        %2004 = vmatpush1.xpose.msra.mxu0 0.0
        %2005 = vmatprep.subr.mxu0 0.0
        %2006 = vmatpush1.xpose.msra.mxu0 0.0
        %2007 = vmatprep.subr.mxu0 0.0
        %2008 = vmatpush1.xpose.msra.mxu0 0.0
        %2009 = vmatprep.subr.mxu0 0.0
        %2010 = vmatpush1.xpose.msra.mxu0 0.0
        %2011 = vmatprep.subr.mxu0 0.0
        %2012 = vmatpush1.xpose.msra.mxu0 0.0
        %2013 = vmatprep.subr.mxu0 0.0
        %2014 = vmatpush1.xpose.msra.mxu0 0.0
        %2015 = vmatprep.subr.mxu0 0.0
        %2016 = vmatpush1.xpose.msra.mxu0 0.0
        %2017 = vmatprep.subr.mxu0 0.0
        %2018 = vmatpush1.xpose.msra.mxu0 0.0
        %2019 = vmatprep.subr.mxu0 0.0
        %2020 = vmatpush1.xpose.msra.mxu0 0.0
        %2021 = vmatprep.subr.mxu0 0.0
        %2022 = vmatpush1.xpose.msra.mxu0 0.0
        %2023 = vmatprep.subr.mxu0 0.0
        %2024 = vmatpush1.xpose.msra.mxu0 0.0
        %2025 = vmatprep.subr.mxu0 0.0
        %2026 = vmatpush1.xpose.msra.mxu0 0.0
        %2027 = vmatprep.subr.mxu0 0.0
        %2028 = vmatpush1.xpose.msra.mxu0 0.0
        %2029 = vmatprep.subr.mxu0 0.0
        %2030 = vmatpush1.xpose.msra.mxu0 0.0
        %2031 = vmatprep.subr.mxu0 0.0
        %2032 = vmatpush1.xpose.msra.mxu0 0.0
        %2033 = vmatprep.subr.mxu0 0.0
        %2034 = vmatpush1.xpose.msra.mxu0 0.0
        %2035 = vmatprep.subr.mxu0 0.0
        %2036 = vmatpush1.xpose.msra.mxu0 0.0
        %2037 = vmatprep.subr.mxu0 0.0
        %2038 = vmatpush1.xpose.msra.mxu0 0.0
        %2039 = vmatprep.subr.mxu0 0.0
        %2040 = vmatpush1.xpose.msra.mxu0 0.0
        %2041 = vmatprep.subr.mxu0 0.0
        %2042 = vmatpush1.xpose.msra.mxu0 0.0
        %2043 = vmatprep.subr.mxu0 0.0
        %2044 = vmatpush1.xpose.msra.mxu0 0.0
        %2045 = vmatprep.subr.mxu0 0.0
        %2046 = vmatpush1.xpose.msra.mxu0 0.0
        %2047 = vmatprep.subr.mxu0 0.0
        %2048 = vmatpush1.xpose.msra.mxu0 0.0
        %2049 = vmatprep.subr.mxu0 0.0
        %2050 = vmatpush1.xpose.msra.mxu0 0.0
        %2051 = vmatprep.subr.mxu0 0.0
        %2052 = vmatpush1.xpose.msra.mxu0 0.0
        %2053 = vmatprep.subr.mxu0 0.0
        %2054 = vmatpush1.xpose.msra.mxu0 0.0
        %2055 = vmatprep.mubr.f32.mxu0 0.0
        %2056 = vmatmul.mubr.f32.gmra.mrb[0].mxu0 %v1585
        %v2057 = vpop.f32.mrb[0].mxu0
        %v2058 = vadd.f32 %v602, %v2057
        %v2059 = vpop.f32.mrb[0].mxu0
        %2060 = vdwg.mxu0
        %2063 = vrot.lane.b32.xlu0 %v1525, 96
        %v2064 = vpop.permute.xlu0 %2063
        %2065 = vrot.lane.b32.xlu0 %v1526, 96
        %v2066 = vpop.permute.xlu0 %2065
        %v2067 = vsel %vm851, %v2064, 0
        %v2069 = vsel %vm851, %v2066, 0
        %2071 = vmatprep.subr.mxu0 0.0
        %2072 = vmatpush1.xpose.msra.mxu0 %v2067
        %2073 = vmatprep.subr.mxu0 0.0
        %2074 = vmatpush1.xpose.msra.mxu0 %v2069
        %2075 = vmatprep.subr.mxu0 0.0
        %2076 = vmatpush1.xpose.msra.mxu0 0.0
        %2077 = vmatprep.subr.mxu0 0.0
        %2078 = vmatpush1.xpose.msra.mxu0 0.0
        %2079 = vmatprep.subr.mxu0 0.0
        %2080 = vmatpush1.xpose.msra.mxu0 0.0
        %2081 = vmatprep.subr.mxu0 0.0
        %2082 = vmatpush1.xpose.msra.mxu0 0.0
        %2083 = vmatprep.subr.mxu0 0.0
        %2084 = vmatpush1.xpose.msra.mxu0 0.0
        %2085 = vmatprep.subr.mxu0 0.0
        %2086 = vmatpush1.xpose.msra.mxu0 0.0
        %2087 = vmatprep.subr.mxu0 0.0
        %2088 = vmatpush1.xpose.msra.mxu0 0.0
        %2089 = vmatprep.subr.mxu0 0.0
        %2090 = vmatpush1.xpose.msra.mxu0 0.0
        %2091 = vmatprep.subr.mxu0 0.0
        %2092 = vmatpush1.xpose.msra.mxu0 0.0
        %2093 = vmatprep.subr.mxu0 0.0
        %2094 = vmatpush1.xpose.msra.mxu0 0.0
        %2095 = vmatprep.subr.mxu0 0.0
        %2096 = vmatpush1.xpose.msra.mxu0 0.0
        %2097 = vmatprep.subr.mxu0 0.0
        %2098 = vmatpush1.xpose.msra.mxu0 0.0
        %2099 = vmatprep.subr.mxu0 0.0
        %2100 = vmatpush1.xpose.msra.mxu0 0.0
        %2101 = vmatprep.subr.mxu0 0.0
        %2102 = vmatpush1.xpose.msra.mxu0 0.0
        %2103 = vmatprep.subr.mxu0 0.0
        %2104 = vmatpush1.xpose.msra.mxu0 0.0
        %2105 = vmatprep.subr.mxu0 0.0
        %2106 = vmatpush1.xpose.msra.mxu0 0.0
        %2107 = vmatprep.subr.mxu0 0.0
        %2108 = vmatpush1.xpose.msra.mxu0 0.0
        %2109 = vmatprep.subr.mxu0 0.0
        %2110 = vmatpush1.xpose.msra.mxu0 0.0
        %2111 = vmatprep.subr.mxu0 0.0
        %2112 = vmatpush1.xpose.msra.mxu0 0.0
        %2113 = vmatprep.subr.mxu0 0.0
        %2114 = vmatpush1.xpose.msra.mxu0 0.0
        %2115 = vmatprep.subr.mxu0 0.0
        %2116 = vmatpush1.xpose.msra.mxu0 0.0
        %2117 = vmatprep.subr.mxu0 0.0
        %2118 = vmatpush1.xpose.msra.mxu0 0.0
        %2119 = vmatprep.subr.mxu0 0.0
        %2120 = vmatpush1.xpose.msra.mxu0 0.0
        %2121 = vmatprep.subr.mxu0 0.0
        %2122 = vmatpush1.xpose.msra.mxu0 0.0
        %2123 = vmatprep.subr.mxu0 0.0
        %2124 = vmatpush1.xpose.msra.mxu0 0.0
        %2125 = vmatprep.subr.mxu0 0.0
        %2126 = vmatpush1.xpose.msra.mxu0 0.0
        %2127 = vmatprep.subr.mxu0 0.0
        %2128 = vmatpush1.xpose.msra.mxu0 0.0
        %2129 = vmatprep.subr.mxu0 0.0
        %2130 = vmatpush1.xpose.msra.mxu0 0.0
        %2131 = vmatprep.subr.mxu0 0.0
        %2132 = vmatpush1.xpose.msra.mxu0 0.0
        %2133 = vmatprep.subr.mxu0 0.0
        %2134 = vmatpush1.xpose.msra.mxu0 0.0
        %2135 = vmatprep.mubr.f32.mxu0 0.0
        %2136 = vmatmul.mubr.f32.gmra.mrb[0].mxu0 %v1585
        %v2137 = vpop.f32.mrb[0].mxu0
        %v2138 = vadd.f32 %v606, %v2137
        %v2139 = vpop.f32.mrb[0].mxu0
        %2140 = vdwg.mxu0
        %2143 = vrot.lane.b32.xlu0 %v1527, 96
        %v2144 = vpop.permute.xlu0 %2143
        %2145 = vrot.lane.b32.xlu0 %v1528, 96
        %v2146 = vpop.permute.xlu0 %2145
        %v2147 = vsel %vm851, %v2144, 0
        %v2149 = vsel %vm851, %v2146, 0
        %2151 = vmatprep.subr.mxu0 0.0
        %2152 = vmatpush1.xpose.msra.mxu0 %v2147
        %2153 = vmatprep.subr.mxu0 0.0
        %2154 = vmatpush1.xpose.msra.mxu0 %v2149
        %2155 = vmatprep.subr.mxu0 0.0
        %2156 = vmatpush1.xpose.msra.mxu0 0.0
        %2157 = vmatprep.subr.mxu0 0.0
        %2158 = vmatpush1.xpose.msra.mxu0 0.0
        %2159 = vmatprep.subr.mxu0 0.0
        %2160 = vmatpush1.xpose.msra.mxu0 0.0
        %2161 = vmatprep.subr.mxu0 0.0
        %2162 = vmatpush1.xpose.msra.mxu0 0.0
        %2163 = vmatprep.subr.mxu0 0.0
        %2164 = vmatpush1.xpose.msra.mxu0 0.0
        %2165 = vmatprep.subr.mxu0 0.0
        %2166 = vmatpush1.xpose.msra.mxu0 0.0
        %2167 = vmatprep.subr.mxu0 0.0
        %2168 = vmatpush1.xpose.msra.mxu0 0.0
        %2169 = vmatprep.subr.mxu0 0.0
        %2170 = vmatpush1.xpose.msra.mxu0 0.0
        %2171 = vmatprep.subr.mxu0 0.0
        %2172 = vmatpush1.xpose.msra.mxu0 0.0
        %2173 = vmatprep.subr.mxu0 0.0
        %2174 = vmatpush1.xpose.msra.mxu0 0.0
        %2175 = vmatprep.subr.mxu0 0.0
        %2176 = vmatpush1.xpose.msra.mxu0 0.0
        %2177 = vmatprep.subr.mxu0 0.0
        %2178 = vmatpush1.xpose.msra.mxu0 0.0
        %2179 = vmatprep.subr.mxu0 0.0
        %2180 = vmatpush1.xpose.msra.mxu0 0.0
        %2181 = vmatprep.subr.mxu0 0.0
        %2182 = vmatpush1.xpose.msra.mxu0 0.0
        %2183 = vmatprep.subr.mxu0 0.0
        %2184 = vmatpush1.xpose.msra.mxu0 0.0
        %2185 = vmatprep.subr.mxu0 0.0
        %2186 = vmatpush1.xpose.msra.mxu0 0.0
        %2187 = vmatprep.subr.mxu0 0.0
        %2188 = vmatpush1.xpose.msra.mxu0 0.0
        %2189 = vmatprep.subr.mxu0 0.0
        %2190 = vmatpush1.xpose.msra.mxu0 0.0
        %2191 = vmatprep.subr.mxu0 0.0
        %2192 = vmatpush1.xpose.msra.mxu0 0.0
        %2193 = vmatprep.subr.mxu0 0.0
        %2194 = vmatpush1.xpose.msra.mxu0 0.0
        %2195 = vmatprep.subr.mxu0 0.0
        %2196 = vmatpush1.xpose.msra.mxu0 0.0
        %2197 = vmatprep.subr.mxu0 0.0
        %2198 = vmatpush1.xpose.msra.mxu0 0.0
        %2199 = vmatprep.subr.mxu0 0.0
        %2200 = vmatpush1.xpose.msra.mxu0 0.0
        %2201 = vmatprep.subr.mxu0 0.0
        %2202 = vmatpush1.xpose.msra.mxu0 0.0
        %2203 = vmatprep.subr.mxu0 0.0
        %2204 = vmatpush1.xpose.msra.mxu0 0.0
        %2205 = vmatprep.subr.mxu0 0.0
        %2206 = vmatpush1.xpose.msra.mxu0 0.0
        %2207 = vmatprep.subr.mxu0 0.0
        %2208 = vmatpush1.xpose.msra.mxu0 0.0
        %2209 = vmatprep.subr.mxu0 0.0
        %2210 = vmatpush1.xpose.msra.mxu0 0.0
        %2211 = vmatprep.subr.mxu0 0.0
        %2212 = vmatpush1.xpose.msra.mxu0 0.0
        %2213 = vmatprep.subr.mxu0 0.0
        %2214 = vmatpush1.xpose.msra.mxu0 0.0
        %2215 = vmatprep.mubr.f32.mxu0 0.0
        %2216 = vmatmul.mubr.f32.gmra.mrb[0].mxu0 %v1585
        %v2217 = vpop.f32.mrb[0].mxu0
        %v2218 = vadd.f32 %v610, %v2217
        %v2219 = vpop.f32.mrb[0].mxu0
        %2220 = vdwg.mxu0
        %2223 = vrot.lane.b32.xlu0 %v1529, 96
        %v2224 = vpop.permute.xlu0 %2223
        %2225 = vrot.lane.b32.xlu0 %v1530, 96
        %v2226 = vpop.permute.xlu0 %2225
        %v2227 = vsel %vm851, %v2224, 0
        %v2229 = vsel %vm851, %v2226, 0
        %2231 = vmatprep.subr.mxu0 0.0
        %2232 = vmatpush1.xpose.msra.mxu0 %v2227
        %2233 = vmatprep.subr.mxu0 0.0
        %2234 = vmatpush1.xpose.msra.mxu0 %v2229
        %2235 = vmatprep.subr.mxu0 0.0
        %2236 = vmatpush1.xpose.msra.mxu0 0.0
        %2237 = vmatprep.subr.mxu0 0.0
        %2238 = vmatpush1.xpose.msra.mxu0 0.0
        %2239 = vmatprep.subr.mxu0 0.0
        %2240 = vmatpush1.xpose.msra.mxu0 0.0
        %2241 = vmatprep.subr.mxu0 0.0
        %2242 = vmatpush1.xpose.msra.mxu0 0.0
        %2243 = vmatprep.subr.mxu0 0.0
        %2244 = vmatpush1.xpose.msra.mxu0 0.0
        %2245 = vmatprep.subr.mxu0 0.0
        %2246 = vmatpush1.xpose.msra.mxu0 0.0
        %2247 = vmatprep.subr.mxu0 0.0
        %2248 = vmatpush1.xpose.msra.mxu0 0.0
        %2249 = vmatprep.subr.mxu0 0.0
        %2250 = vmatpush1.xpose.msra.mxu0 0.0
        %2251 = vmatprep.subr.mxu0 0.0
        %2252 = vmatpush1.xpose.msra.mxu0 0.0
        %2253 = vmatprep.subr.mxu0 0.0
        %2254 = vmatpush1.xpose.msra.mxu0 0.0
        %2255 = vmatprep.subr.mxu0 0.0
        %2256 = vmatpush1.xpose.msra.mxu0 0.0
        %2257 = vmatprep.subr.mxu0 0.0
        %2258 = vmatpush1.xpose.msra.mxu0 0.0
        %2259 = vmatprep.subr.mxu0 0.0
        %2260 = vmatpush1.xpose.msra.mxu0 0.0
        %2261 = vmatprep.subr.mxu0 0.0
        %2262 = vmatpush1.xpose.msra.mxu0 0.0
        %2263 = vmatprep.subr.mxu0 0.0
        %2264 = vmatpush1.xpose.msra.mxu0 0.0
        %2265 = vmatprep.subr.mxu0 0.0
        %2266 = vmatpush1.xpose.msra.mxu0 0.0
        %2267 = vmatprep.subr.mxu0 0.0
        %2268 = vmatpush1.xpose.msra.mxu0 0.0
        %2269 = vmatprep.subr.mxu0 0.0
        %2270 = vmatpush1.xpose.msra.mxu0 0.0
        %2271 = vmatprep.subr.mxu0 0.0
        %2272 = vmatpush1.xpose.msra.mxu0 0.0
        %2273 = vmatprep.subr.mxu0 0.0
        %2274 = vmatpush1.xpose.msra.mxu0 0.0
        %2275 = vmatprep.subr.mxu0 0.0
        %2276 = vmatpush1.xpose.msra.mxu0 0.0
        %2277 = vmatprep.subr.mxu0 0.0
        %2278 = vmatpush1.xpose.msra.mxu0 0.0
        %2279 = vmatprep.subr.mxu0 0.0
        %2280 = vmatpush1.xpose.msra.mxu0 0.0
        %2281 = vmatprep.subr.mxu0 0.0
        %2282 = vmatpush1.xpose.msra.mxu0 0.0
        %2283 = vmatprep.subr.mxu0 0.0
        %2284 = vmatpush1.xpose.msra.mxu0 0.0
        %2285 = vmatprep.subr.mxu0 0.0
        %2286 = vmatpush1.xpose.msra.mxu0 0.0
        %2287 = vmatprep.subr.mxu0 0.0
        %2288 = vmatpush1.xpose.msra.mxu0 0.0
        %2289 = vmatprep.subr.mxu0 0.0
        %2290 = vmatpush1.xpose.msra.mxu0 0.0
        %2291 = vmatprep.subr.mxu0 0.0
        %2292 = vmatpush1.xpose.msra.mxu0 0.0
        %2293 = vmatprep.subr.mxu0 0.0
        %2294 = vmatpush1.xpose.msra.mxu0 0.0
        %2295 = vmatprep.mubr.f32.mxu0 0.0
        %2296 = vmatmul.mubr.f32.gmra.mrb[0].mxu0 %v1585
        %v2297 = vpop.f32.mrb[0].mxu0
        %v2298 = vadd.f32 %v614, %v2297
        %v2299 = vpop.f32.mrb[0].mxu0
        %2300 = vdwg.mxu0
        %2303 = vrot.lane.b32.xlu0 %v1531, 96
        %v2304 = vpop.permute.xlu0 %2303
        %2305 = vrot.lane.b32.xlu0 %v1532, 96
        %v2306 = vpop.permute.xlu0 %2305
        %v2307 = vsel %vm851, %v2304, 0
        %v2309 = vsel %vm851, %v2306, 0
        %2311 = vmatprep.subr.mxu0 0.0
        %2312 = vmatpush1.xpose.msra.mxu0 %v2307
        %2313 = vmatprep.subr.mxu0 0.0
        %2314 = vmatpush1.xpose.msra.mxu0 %v2309
        %2315 = vmatprep.subr.mxu0 0.0
        %2316 = vmatpush1.xpose.msra.mxu0 0.0
        %2317 = vmatprep.subr.mxu0 0.0
        %2318 = vmatpush1.xpose.msra.mxu0 0.0
        %2319 = vmatprep.subr.mxu0 0.0
        %2320 = vmatpush1.xpose.msra.mxu0 0.0
        %2321 = vmatprep.subr.mxu0 0.0
        %2322 = vmatpush1.xpose.msra.mxu0 0.0
        %2323 = vmatprep.subr.mxu0 0.0
        %2324 = vmatpush1.xpose.msra.mxu0 0.0
        %2325 = vmatprep.subr.mxu0 0.0
        %2326 = vmatpush1.xpose.msra.mxu0 0.0
        %2327 = vmatprep.subr.mxu0 0.0
        %2328 = vmatpush1.xpose.msra.mxu0 0.0
        %2329 = vmatprep.subr.mxu0 0.0
        %2330 = vmatpush1.xpose.msra.mxu0 0.0
        %2331 = vmatprep.subr.mxu0 0.0
        %2332 = vmatpush1.xpose.msra.mxu0 0.0
        %2333 = vmatprep.subr.mxu0 0.0
        %2334 = vmatpush1.xpose.msra.mxu0 0.0
        %2335 = vmatprep.subr.mxu0 0.0
        %2336 = vmatpush1.xpose.msra.mxu0 0.0
        %2337 = vmatprep.subr.mxu0 0.0
        %2338 = vmatpush1.xpose.msra.mxu0 0.0
        %2339 = vmatprep.subr.mxu0 0.0
        %2340 = vmatpush1.xpose.msra.mxu0 0.0
        %2341 = vmatprep.subr.mxu0 0.0
        %2342 = vmatpush1.xpose.msra.mxu0 0.0
        %2343 = vmatprep.subr.mxu0 0.0
        %2344 = vmatpush1.xpose.msra.mxu0 0.0
        %2345 = vmatprep.subr.mxu0 0.0
        %2346 = vmatpush1.xpose.msra.mxu0 0.0
        %2347 = vmatprep.subr.mxu0 0.0
        %2348 = vmatpush1.xpose.msra.mxu0 0.0
        %2349 = vmatprep.subr.mxu0 0.0
        %2350 = vmatpush1.xpose.msra.mxu0 0.0
        %2351 = vmatprep.subr.mxu0 0.0
        %2352 = vmatpush1.xpose.msra.mxu0 0.0
        %2353 = vmatprep.subr.mxu0 0.0
        %2354 = vmatpush1.xpose.msra.mxu0 0.0
        %2355 = vmatprep.subr.mxu0 0.0
        %2356 = vmatpush1.xpose.msra.mxu0 0.0
        %2357 = vmatprep.subr.mxu0 0.0
        %2358 = vmatpush1.xpose.msra.mxu0 0.0
        %2359 = vmatprep.subr.mxu0 0.0
        %2360 = vmatpush1.xpose.msra.mxu0 0.0
        %2361 = vmatprep.subr.mxu0 0.0
        %2362 = vmatpush1.xpose.msra.mxu0 0.0
        %2363 = vmatprep.subr.mxu0 0.0
        %2364 = vmatpush1.xpose.msra.mxu0 0.0
        %2365 = vmatprep.subr.mxu0 0.0
        %2366 = vmatpush1.xpose.msra.mxu0 0.0
        %2367 = vmatprep.subr.mxu0 0.0
        %2368 = vmatpush1.xpose.msra.mxu0 0.0
        %2369 = vmatprep.subr.mxu0 0.0
        %2370 = vmatpush1.xpose.msra.mxu0 0.0
        %2371 = vmatprep.subr.mxu0 0.0
        %2372 = vmatpush1.xpose.msra.mxu0 0.0
        %2373 = vmatprep.subr.mxu0 0.0
        %2374 = vmatpush1.xpose.msra.mxu0 0.0
        %2375 = vmatprep.mubr.f32.mxu0 0.0
        %2376 = vmatmul.mubr.f32.gmra.mrb[0].mxu0 %v1585
        %v2377 = vpop.f32.mrb[0].mxu0
        %v2378 = vadd.f32 %v618, %v2377
        %v2379 = vpop.f32.mrb[0].mxu0
        %2380 = vdwg.mxu0
        %2383 = vrot.lane.b32.xlu0 %v1533, 96
        %v2384 = vpop.permute.xlu0 %2383
        %2385 = vrot.lane.b32.xlu0 %v1534, 96
        %v2386 = vpop.permute.xlu0 %2385
        %v2387 = vsel %vm851, %v2384, 0
        %v2389 = vsel %vm851, %v2386, 0
        %2391 = vmatprep.subr.mxu0 0.0
        %2392 = vmatpush1.xpose.msra.mxu0 %v2387
        %2393 = vmatprep.subr.mxu0 0.0
        %2394 = vmatpush1.xpose.msra.mxu0 %v2389
        %2395 = vmatprep.subr.mxu0 0.0
        %2396 = vmatpush1.xpose.msra.mxu0 0.0
        %2397 = vmatprep.subr.mxu0 0.0
        %2398 = vmatpush1.xpose.msra.mxu0 0.0
        %2399 = vmatprep.subr.mxu0 0.0
        %2400 = vmatpush1.xpose.msra.mxu0 0.0
        %2401 = vmatprep.subr.mxu0 0.0
        %2402 = vmatpush1.xpose.msra.mxu0 0.0
        %2403 = vmatprep.subr.mxu0 0.0
        %2404 = vmatpush1.xpose.msra.mxu0 0.0
        %2405 = vmatprep.subr.mxu0 0.0
        %2406 = vmatpush1.xpose.msra.mxu0 0.0
        %2407 = vmatprep.subr.mxu0 0.0
        %2408 = vmatpush1.xpose.msra.mxu0 0.0
        %2409 = vmatprep.subr.mxu0 0.0
        %2410 = vmatpush1.xpose.msra.mxu0 0.0
        %2411 = vmatprep.subr.mxu0 0.0
        %2412 = vmatpush1.xpose.msra.mxu0 0.0
        %2413 = vmatprep.subr.mxu0 0.0
        %2414 = vmatpush1.xpose.msra.mxu0 0.0
        %2415 = vmatprep.subr.mxu0 0.0
        %2416 = vmatpush1.xpose.msra.mxu0 0.0
        %2417 = vmatprep.subr.mxu0 0.0
        %2418 = vmatpush1.xpose.msra.mxu0 0.0
        %2419 = vmatprep.subr.mxu0 0.0
        %2420 = vmatpush1.xpose.msra.mxu0 0.0
        %2421 = vmatprep.subr.mxu0 0.0
        %2422 = vmatpush1.xpose.msra.mxu0 0.0
        %2423 = vmatprep.subr.mxu0 0.0
        %2424 = vmatpush1.xpose.msra.mxu0 0.0
        %2425 = vmatprep.subr.mxu0 0.0
        %2426 = vmatpush1.xpose.msra.mxu0 0.0
        %2427 = vmatprep.subr.mxu0 0.0
        %2428 = vmatpush1.xpose.msra.mxu0 0.0
        %2429 = vmatprep.subr.mxu0 0.0
        %2430 = vmatpush1.xpose.msra.mxu0 0.0
        %2431 = vmatprep.subr.mxu0 0.0
        %2432 = vmatpush1.xpose.msra.mxu0 0.0
        %2433 = vmatprep.subr.mxu0 0.0
        %2434 = vmatpush1.xpose.msra.mxu0 0.0
        %2435 = vmatprep.subr.mxu0 0.0
        %2436 = vmatpush1.xpose.msra.mxu0 0.0
        %2437 = vmatprep.subr.mxu0 0.0
        %2438 = vmatpush1.xpose.msra.mxu0 0.0
        %2439 = vmatprep.subr.mxu0 0.0
        %2440 = vmatpush1.xpose.msra.mxu0 0.0
        %2441 = vmatprep.subr.mxu0 0.0
        %2442 = vmatpush1.xpose.msra.mxu0 0.0
        %2443 = vmatprep.subr.mxu0 0.0
        %2444 = vmatpush1.xpose.msra.mxu0 0.0
        %2445 = vmatprep.subr.mxu0 0.0
        %2446 = vmatpush1.xpose.msra.mxu0 0.0
        %2447 = vmatprep.subr.mxu0 0.0
        %2448 = vmatpush1.xpose.msra.mxu0 0.0
        %2449 = vmatprep.subr.mxu0 0.0
        %2450 = vmatpush1.xpose.msra.mxu0 0.0
        %2451 = vmatprep.subr.mxu0 0.0
        %2452 = vmatpush1.xpose.msra.mxu0 0.0
        %2453 = vmatprep.subr.mxu0 0.0
        %2454 = vmatpush1.xpose.msra.mxu0 0.0
        %2455 = vmatprep.mubr.f32.mxu0 0.0
        %2456 = vmatmul.mubr.f32.gmra.mrb[0].mxu0 %v1585
        %v2457 = vpop.f32.mrb[0].mxu0
        %v2458 = vadd.f32 %v622, %v2457
        %v2459 = vpop.f32.mrb[0].mxu0
        %2460 = vdwg.mxu0
        %2463 = vrot.lane.b32.xlu0 %v1535, 96
        %v2464 = vpop.permute.xlu0 %2463
        %2465 = vrot.lane.b32.xlu0 %v1536, 96
        %v2466 = vpop.permute.xlu0 %2465
        %v2467 = vsel %vm851, %v2464, 0
        %v2469 = vsel %vm851, %v2466, 0
        %2471 = vmatprep.subr.mxu0 0.0
        %2472 = vmatpush1.xpose.msra.mxu0 %v2467
        %2473 = vmatprep.subr.mxu0 0.0
        %2474 = vmatpush1.xpose.msra.mxu0 %v2469
        %2475 = vmatprep.subr.mxu0 0.0
        %2476 = vmatpush1.xpose.msra.mxu0 0.0
        %2477 = vmatprep.subr.mxu0 0.0
        %2478 = vmatpush1.xpose.msra.mxu0 0.0
        %2479 = vmatprep.subr.mxu0 0.0
        %2480 = vmatpush1.xpose.msra.mxu0 0.0
        %2481 = vmatprep.subr.mxu0 0.0
        %2482 = vmatpush1.xpose.msra.mxu0 0.0
        %2483 = vmatprep.subr.mxu0 0.0
        %2484 = vmatpush1.xpose.msra.mxu0 0.0
        %2485 = vmatprep.subr.mxu0 0.0
        %2486 = vmatpush1.xpose.msra.mxu0 0.0
        %2487 = vmatprep.subr.mxu0 0.0
        %2488 = vmatpush1.xpose.msra.mxu0 0.0
        %2489 = vmatprep.subr.mxu0 0.0
        %2490 = vmatpush1.xpose.msra.mxu0 0.0
        %2491 = vmatprep.subr.mxu0 0.0
        %2492 = vmatpush1.xpose.msra.mxu0 0.0
        %2493 = vmatprep.subr.mxu0 0.0
        %2494 = vmatpush1.xpose.msra.mxu0 0.0
        %2495 = vmatprep.subr.mxu0 0.0
        %2496 = vmatpush1.xpose.msra.mxu0 0.0
        %2497 = vmatprep.subr.mxu0 0.0
        %2498 = vmatpush1.xpose.msra.mxu0 0.0
        %2499 = vmatprep.subr.mxu0 0.0
        %2500 = vmatpush1.xpose.msra.mxu0 0.0
        %2501 = vmatprep.subr.mxu0 0.0
        %2502 = vmatpush1.xpose.msra.mxu0 0.0
        %2503 = vmatprep.subr.mxu0 0.0
        %2504 = vmatpush1.xpose.msra.mxu0 0.0
        %2505 = vmatprep.subr.mxu0 0.0
        %2506 = vmatpush1.xpose.msra.mxu0 0.0
        %2507 = vmatprep.subr.mxu0 0.0
        %2508 = vmatpush1.xpose.msra.mxu0 0.0
        %2509 = vmatprep.subr.mxu0 0.0
        %2510 = vmatpush1.xpose.msra.mxu0 0.0
        %2511 = vmatprep.subr.mxu0 0.0
        %2512 = vmatpush1.xpose.msra.mxu0 0.0
        %2513 = vmatprep.subr.mxu0 0.0
        %2514 = vmatpush1.xpose.msra.mxu0 0.0
        %2515 = vmatprep.subr.mxu0 0.0
        %2516 = vmatpush1.xpose.msra.mxu0 0.0
        %2517 = vmatprep.subr.mxu0 0.0
        %2518 = vmatpush1.xpose.msra.mxu0 0.0
        %2519 = vmatprep.subr.mxu0 0.0
        %2520 = vmatpush1.xpose.msra.mxu0 0.0
        %2521 = vmatprep.subr.mxu0 0.0
        %2522 = vmatpush1.xpose.msra.mxu0 0.0
        %2523 = vmatprep.subr.mxu0 0.0
        %2524 = vmatpush1.xpose.msra.mxu0 0.0
        %2525 = vmatprep.subr.mxu0 0.0
        %2526 = vmatpush1.xpose.msra.mxu0 0.0
        %2527 = vmatprep.subr.mxu0 0.0
        %2528 = vmatpush1.xpose.msra.mxu0 0.0
        %2529 = vmatprep.subr.mxu0 0.0
        %2530 = vmatpush1.xpose.msra.mxu0 0.0
        %2531 = vmatprep.subr.mxu0 0.0
        %2532 = vmatpush1.xpose.msra.mxu0 0.0
        %2533 = vmatprep.subr.mxu0 0.0
        %2534 = vmatpush1.xpose.msra.mxu0 0.0
        %2535 = vmatprep.mubr.f32.mxu0 0.0
        %2536 = vmatmul.mubr.f32.gmra.mrb[0].mxu0 %v1585
        %v2537 = vpop.f32.mrb[0].mxu0
        %v2538 = vadd.f32 %v626, %v2537
        %v2539 = vpop.f32.mrb[0].mxu0
        %2540 = vdwg.mxu0
        %2543 = vrot.lane.b32.xlu0 %v1537, 96
        %v2544 = vpop.permute.xlu0 %2543
        %2545 = vrot.lane.b32.xlu0 %v1538, 96
        %v2546 = vpop.permute.xlu0 %2545
        %v2547 = vsel %vm851, %v2544, 0
        %v2549 = vsel %vm851, %v2546, 0
        %2551 = vmatprep.subr.mxu0 0.0
        %2552 = vmatpush1.xpose.msra.mxu0 %v2547
        %2553 = vmatprep.subr.mxu0 0.0
        %2554 = vmatpush1.xpose.msra.mxu0 %v2549
        %2555 = vmatprep.subr.mxu0 0.0
        %2556 = vmatpush1.xpose.msra.mxu0 0.0
        %2557 = vmatprep.subr.mxu0 0.0
        %2558 = vmatpush1.xpose.msra.mxu0 0.0
        %2559 = vmatprep.subr.mxu0 0.0
        %2560 = vmatpush1.xpose.msra.mxu0 0.0
        %2561 = vmatprep.subr.mxu0 0.0
        %2562 = vmatpush1.xpose.msra.mxu0 0.0
        %2563 = vmatprep.subr.mxu0 0.0
        %2564 = vmatpush1.xpose.msra.mxu0 0.0
        %2565 = vmatprep.subr.mxu0 0.0
        %2566 = vmatpush1.xpose.msra.mxu0 0.0
        %2567 = vmatprep.subr.mxu0 0.0
        %2568 = vmatpush1.xpose.msra.mxu0 0.0
        %2569 = vmatprep.subr.mxu0 0.0
        %2570 = vmatpush1.xpose.msra.mxu0 0.0
        %2571 = vmatprep.subr.mxu0 0.0
        %2572 = vmatpush1.xpose.msra.mxu0 0.0
        %2573 = vmatprep.subr.mxu0 0.0
        %2574 = vmatpush1.xpose.msra.mxu0 0.0
        %2575 = vmatprep.subr.mxu0 0.0
        %2576 = vmatpush1.xpose.msra.mxu0 0.0
        %2577 = vmatprep.subr.mxu0 0.0
        %2578 = vmatpush1.xpose.msra.mxu0 0.0
        %2579 = vmatprep.subr.mxu0 0.0
        %2580 = vmatpush1.xpose.msra.mxu0 0.0
        %2581 = vmatprep.subr.mxu0 0.0
        %2582 = vmatpush1.xpose.msra.mxu0 0.0
        %2583 = vmatprep.subr.mxu0 0.0
        %2584 = vmatpush1.xpose.msra.mxu0 0.0
        %2585 = vmatprep.subr.mxu0 0.0
        %2586 = vmatpush1.xpose.msra.mxu0 0.0
        %2587 = vmatprep.subr.mxu0 0.0
        %2588 = vmatpush1.xpose.msra.mxu0 0.0
        %2589 = vmatprep.subr.mxu0 0.0
        %2590 = vmatpush1.xpose.msra.mxu0 0.0
        %2591 = vmatprep.subr.mxu0 0.0
        %2592 = vmatpush1.xpose.msra.mxu0 0.0
        %2593 = vmatprep.subr.mxu0 0.0
        %2594 = vmatpush1.xpose.msra.mxu0 0.0
        %2595 = vmatprep.subr.mxu0 0.0
        %2596 = vmatpush1.xpose.msra.mxu0 0.0
        %2597 = vmatprep.subr.mxu0 0.0
        %2598 = vmatpush1.xpose.msra.mxu0 0.0
        %2599 = vmatprep.subr.mxu0 0.0
        %2600 = vmatpush1.xpose.msra.mxu0 0.0
        %2601 = vmatprep.subr.mxu0 0.0
        %2602 = vmatpush1.xpose.msra.mxu0 0.0
        %2603 = vmatprep.subr.mxu0 0.0
        %2604 = vmatpush1.xpose.msra.mxu0 0.0
        %2605 = vmatprep.subr.mxu0 0.0
        %2606 = vmatpush1.xpose.msra.mxu0 0.0
        %2607 = vmatprep.subr.mxu0 0.0
        %2608 = vmatpush1.xpose.msra.mxu0 0.0
        %2609 = vmatprep.subr.mxu0 0.0
        %2610 = vmatpush1.xpose.msra.mxu0 0.0
        %2611 = vmatprep.subr.mxu0 0.0
        %2612 = vmatpush1.xpose.msra.mxu0 0.0
        %2613 = vmatprep.subr.mxu0 0.0
        %2614 = vmatpush1.xpose.msra.mxu0 0.0
        %2615 = vmatprep.mubr.f32.mxu0 0.0
        %2616 = vmatmul.mubr.f32.gmra.mrb[0].mxu0 %v1585
        %v2617 = vpop.f32.mrb[0].mxu0
        %v2618 = vadd.f32 %v630, %v2617
        %v2619 = vpop.f32.mrb[0].mxu0
        %2620 = vdwg.mxu0
        %2623 = vrot.lane.b32.xlu0 %v1539, 96
        %v2624 = vpop.permute.xlu0 %2623
        %2625 = vrot.lane.b32.xlu0 %v1540, 96
        %v2626 = vpop.permute.xlu0 %2625
        %v2627 = vsel %vm851, %v2624, 0
        %v2629 = vsel %vm851, %v2626, 0
        %2631 = vmatprep.subr.mxu0 0.0
        %2632 = vmatpush1.xpose.msra.mxu0 %v2627
        %2633 = vmatprep.subr.mxu0 0.0
        %2634 = vmatpush1.xpose.msra.mxu0 %v2629
        %2635 = vmatprep.subr.mxu0 0.0
        %2636 = vmatpush1.xpose.msra.mxu0 0.0
        %2637 = vmatprep.subr.mxu0 0.0
        %2638 = vmatpush1.xpose.msra.mxu0 0.0
        %2639 = vmatprep.subr.mxu0 0.0
        %2640 = vmatpush1.xpose.msra.mxu0 0.0
        %2641 = vmatprep.subr.mxu0 0.0
        %2642 = vmatpush1.xpose.msra.mxu0 0.0
        %2643 = vmatprep.subr.mxu0 0.0
        %2644 = vmatpush1.xpose.msra.mxu0 0.0
        %2645 = vmatprep.subr.mxu0 0.0
        %2646 = vmatpush1.xpose.msra.mxu0 0.0
        %2647 = vmatprep.subr.mxu0 0.0
        %2648 = vmatpush1.xpose.msra.mxu0 0.0
        %2649 = vmatprep.subr.mxu0 0.0
        %2650 = vmatpush1.xpose.msra.mxu0 0.0
        %2651 = vmatprep.subr.mxu0 0.0
        %2652 = vmatpush1.xpose.msra.mxu0 0.0
        %2653 = vmatprep.subr.mxu0 0.0
        %2654 = vmatpush1.xpose.msra.mxu0 0.0
        %2655 = vmatprep.subr.mxu0 0.0
        %2656 = vmatpush1.xpose.msra.mxu0 0.0
        %2657 = vmatprep.subr.mxu0 0.0
        %2658 = vmatpush1.xpose.msra.mxu0 0.0
        %2659 = vmatprep.subr.mxu0 0.0
        %2660 = vmatpush1.xpose.msra.mxu0 0.0
        %2661 = vmatprep.subr.mxu0 0.0
        %2662 = vmatpush1.xpose.msra.mxu0 0.0
        %2663 = vmatprep.subr.mxu0 0.0
        %2664 = vmatpush1.xpose.msra.mxu0 0.0
        %2665 = vmatprep.subr.mxu0 0.0
        %2666 = vmatpush1.xpose.msra.mxu0 0.0
        %2667 = vmatprep.subr.mxu0 0.0
        %2668 = vmatpush1.xpose.msra.mxu0 0.0
        %2669 = vmatprep.subr.mxu0 0.0
        %2670 = vmatpush1.xpose.msra.mxu0 0.0
        %2671 = vmatprep.subr.mxu0 0.0
        %2672 = vmatpush1.xpose.msra.mxu0 0.0
        %2673 = vmatprep.subr.mxu0 0.0
        %2674 = vmatpush1.xpose.msra.mxu0 0.0
        %2675 = vmatprep.subr.mxu0 0.0
        %2676 = vmatpush1.xpose.msra.mxu0 0.0
        %2677 = vmatprep.subr.mxu0 0.0
        %2678 = vmatpush1.xpose.msra.mxu0 0.0
        %2679 = vmatprep.subr.mxu0 0.0
        %2680 = vmatpush1.xpose.msra.mxu0 0.0
        %2681 = vmatprep.subr.mxu0 0.0
        %2682 = vmatpush1.xpose.msra.mxu0 0.0
        %2683 = vmatprep.subr.mxu0 0.0
        %2684 = vmatpush1.xpose.msra.mxu0 0.0
        %2685 = vmatprep.subr.mxu0 0.0
        %2686 = vmatpush1.xpose.msra.mxu0 0.0
        %2687 = vmatprep.subr.mxu0 0.0
        %2688 = vmatpush1.xpose.msra.mxu0 0.0
        %2689 = vmatprep.subr.mxu0 0.0
        %2690 = vmatpush1.xpose.msra.mxu0 0.0
        %2691 = vmatprep.subr.mxu0 0.0
        %2692 = vmatpush1.xpose.msra.mxu0 0.0
        %2693 = vmatprep.subr.mxu0 0.0
        %2694 = vmatpush1.xpose.msra.mxu0 0.0
        %2695 = vmatprep.mubr.f32.mxu0 0.0
        %2696 = vmatmul.mubr.f32.gmra.mrb[0].mxu0 %v1585
        %v2697 = vpop.f32.mrb[0].mxu0
        %v2698 = vadd.f32 %v634, %v2697
        %v2699 = vpop.f32.mrb[0].mxu0
        %2700 = vdwg.mxu0
        %2703 = vrot.lane.b32.xlu0 %v1541, 96
        %v2704 = vpop.permute.xlu0 %2703
        %2705 = vrot.lane.b32.xlu0 %v1542, 96
        %v2706 = vpop.permute.xlu0 %2705
        %v2707 = vsel %vm851, %v2704, 0
        %v2709 = vsel %vm851, %v2706, 0
        %2711 = vmatprep.subr.mxu0 0.0
        %2712 = vmatpush1.xpose.msra.mxu0 %v2707
        %2713 = vmatprep.subr.mxu0 0.0
        %2714 = vmatpush1.xpose.msra.mxu0 %v2709
        %2715 = vmatprep.subr.mxu0 0.0
        %2716 = vmatpush1.xpose.msra.mxu0 0.0
        %2717 = vmatprep.subr.mxu0 0.0
        %2718 = vmatpush1.xpose.msra.mxu0 0.0
        %2719 = vmatprep.subr.mxu0 0.0
        %2720 = vmatpush1.xpose.msra.mxu0 0.0
        %2721 = vmatprep.subr.mxu0 0.0
        %2722 = vmatpush1.xpose.msra.mxu0 0.0
        %2723 = vmatprep.subr.mxu0 0.0
        %2724 = vmatpush1.xpose.msra.mxu0 0.0
        %2725 = vmatprep.subr.mxu0 0.0
        %2726 = vmatpush1.xpose.msra.mxu0 0.0
        %2727 = vmatprep.subr.mxu0 0.0
        %2728 = vmatpush1.xpose.msra.mxu0 0.0
        %2729 = vmatprep.subr.mxu0 0.0
        %2730 = vmatpush1.xpose.msra.mxu0 0.0
        %2731 = vmatprep.subr.mxu0 0.0
        %2732 = vmatpush1.xpose.msra.mxu0 0.0
        %2733 = vmatprep.subr.mxu0 0.0
        %2734 = vmatpush1.xpose.msra.mxu0 0.0
        %2735 = vmatprep.subr.mxu0 0.0
        %2736 = vmatpush1.xpose.msra.mxu0 0.0
        %2737 = vmatprep.subr.mxu0 0.0
        %2738 = vmatpush1.xpose.msra.mxu0 0.0
        %2739 = vmatprep.subr.mxu0 0.0
        %2740 = vmatpush1.xpose.msra.mxu0 0.0
        %2741 = vmatprep.subr.mxu0 0.0
        %2742 = vmatpush1.xpose.msra.mxu0 0.0
        %2743 = vmatprep.subr.mxu0 0.0
        %2744 = vmatpush1.xpose.msra.mxu0 0.0
        %2745 = vmatprep.subr.mxu0 0.0
        %2746 = vmatpush1.xpose.msra.mxu0 0.0
        %2747 = vmatprep.subr.mxu0 0.0
        %2748 = vmatpush1.xpose.msra.mxu0 0.0
        %2749 = vmatprep.subr.mxu0 0.0
        %2750 = vmatpush1.xpose.msra.mxu0 0.0
        %2751 = vmatprep.subr.mxu0 0.0
        %2752 = vmatpush1.xpose.msra.mxu0 0.0
        %2753 = vmatprep.subr.mxu0 0.0
        %2754 = vmatpush1.xpose.msra.mxu0 0.0
        %2755 = vmatprep.subr.mxu0 0.0
        %2756 = vmatpush1.xpose.msra.mxu0 0.0
        %2757 = vmatprep.subr.mxu0 0.0
        %2758 = vmatpush1.xpose.msra.mxu0 0.0
        %2759 = vmatprep.subr.mxu0 0.0
        %2760 = vmatpush1.xpose.msra.mxu0 0.0
        %2761 = vmatprep.subr.mxu0 0.0
        %2762 = vmatpush1.xpose.msra.mxu0 0.0
        %2763 = vmatprep.subr.mxu0 0.0
        %2764 = vmatpush1.xpose.msra.mxu0 0.0
        %2765 = vmatprep.subr.mxu0 0.0
        %2766 = vmatpush1.xpose.msra.mxu0 0.0
        %2767 = vmatprep.subr.mxu0 0.0
        %2768 = vmatpush1.xpose.msra.mxu0 0.0
        %2769 = vmatprep.subr.mxu0 0.0
        %2770 = vmatpush1.xpose.msra.mxu0 0.0
        %2771 = vmatprep.subr.mxu0 0.0
        %2772 = vmatpush1.xpose.msra.mxu0 0.0
        %2773 = vmatprep.subr.mxu0 0.0
        %2774 = vmatpush1.xpose.msra.mxu0 0.0
        %2775 = vmatprep.mubr.f32.mxu0 0.0
        %2776 = vmatmul.mubr.f32.gmra.mrb[0].mxu0 %v1585
        %v2777 = vpop.f32.mrb[0].mxu0
        %v2778 = vadd.f32 %v638, %v2777
        %v2779 = vpop.f32.mrb[0].mxu0
        %2780 = vdwg.mxu0
        %2783 = vrot.lane.b32.xlu0 %v1543, 96
        %v2784 = vpop.permute.xlu0 %2783
        %2785 = vrot.lane.b32.xlu0 %v1544, 96
        %v2786 = vpop.permute.xlu0 %2785
        %v2787 = vsel %vm851, %v2784, 0
        %v2789 = vsel %vm851, %v2786, 0
        %2791 = vmatprep.subr.mxu0 0.0
        %2792 = vmatpush1.xpose.msra.mxu0 %v2787
        %2793 = vmatprep.subr.mxu0 0.0
        %2794 = vmatpush1.xpose.msra.mxu0 %v2789
        %2795 = vmatprep.subr.mxu0 0.0
        %2796 = vmatpush1.xpose.msra.mxu0 0.0
        %2797 = vmatprep.subr.mxu0 0.0
        %2798 = vmatpush1.xpose.msra.mxu0 0.0
        %2799 = vmatprep.subr.mxu0 0.0
        %2800 = vmatpush1.xpose.msra.mxu0 0.0
        %2801 = vmatprep.subr.mxu0 0.0
        %2802 = vmatpush1.xpose.msra.mxu0 0.0
        %2803 = vmatprep.subr.mxu0 0.0
        %2804 = vmatpush1.xpose.msra.mxu0 0.0
        %2805 = vmatprep.subr.mxu0 0.0
        %2806 = vmatpush1.xpose.msra.mxu0 0.0
        %2807 = vmatprep.subr.mxu0 0.0
        %2808 = vmatpush1.xpose.msra.mxu0 0.0
        %2809 = vmatprep.subr.mxu0 0.0
        %2810 = vmatpush1.xpose.msra.mxu0 0.0
        %2811 = vmatprep.subr.mxu0 0.0
        %2812 = vmatpush1.xpose.msra.mxu0 0.0
        %2813 = vmatprep.subr.mxu0 0.0
        %2814 = vmatpush1.xpose.msra.mxu0 0.0
        %2815 = vmatprep.subr.mxu0 0.0
        %2816 = vmatpush1.xpose.msra.mxu0 0.0
        %2817 = vmatprep.subr.mxu0 0.0
        %2818 = vmatpush1.xpose.msra.mxu0 0.0
        %2819 = vmatprep.subr.mxu0 0.0
        %2820 = vmatpush1.xpose.msra.mxu0 0.0
        %2821 = vmatprep.subr.mxu0 0.0
        %2822 = vmatpush1.xpose.msra.mxu0 0.0
        %2823 = vmatprep.subr.mxu0 0.0
        %2824 = vmatpush1.xpose.msra.mxu0 0.0
        %2825 = vmatprep.subr.mxu0 0.0
        %2826 = vmatpush1.xpose.msra.mxu0 0.0
        %2827 = vmatprep.subr.mxu0 0.0
        %2828 = vmatpush1.xpose.msra.mxu0 0.0
        %2829 = vmatprep.subr.mxu0 0.0
        %2830 = vmatpush1.xpose.msra.mxu0 0.0
        %2831 = vmatprep.subr.mxu0 0.0
        %2832 = vmatpush1.xpose.msra.mxu0 0.0
        %2833 = vmatprep.subr.mxu0 0.0
        %2834 = vmatpush1.xpose.msra.mxu0 0.0
        %2835 = vmatprep.subr.mxu0 0.0
        %2836 = vmatpush1.xpose.msra.mxu0 0.0
        %2837 = vmatprep.subr.mxu0 0.0
        %2838 = vmatpush1.xpose.msra.mxu0 0.0
        %2839 = vmatprep.subr.mxu0 0.0
        %2840 = vmatpush1.xpose.msra.mxu0 0.0
        %2841 = vmatprep.subr.mxu0 0.0
        %2842 = vmatpush1.xpose.msra.mxu0 0.0
        %2843 = vmatprep.subr.mxu0 0.0
        %2844 = vmatpush1.xpose.msra.mxu0 0.0
        %2845 = vmatprep.subr.mxu0 0.0
        %2846 = vmatpush1.xpose.msra.mxu0 0.0
        %2847 = vmatprep.subr.mxu0 0.0
        %2848 = vmatpush1.xpose.msra.mxu0 0.0
        %2849 = vmatprep.subr.mxu0 0.0
        %2850 = vmatpush1.xpose.msra.mxu0 0.0
        %2851 = vmatprep.subr.mxu0 0.0
        %2852 = vmatpush1.xpose.msra.mxu0 0.0
        %2853 = vmatprep.subr.mxu0 0.0
        %2854 = vmatpush1.xpose.msra.mxu0 0.0
        %2855 = vmatprep.mubr.f32.mxu0 0.0
        %2856 = vmatmul.mubr.f32.gmra.mrb[0].mxu0 %v1585
        %v2857 = vpop.f32.mrb[0].mxu0
        %v2858 = vadd.f32 %v642, %v2857
        %v2859 = vpop.f32.mrb[0].mxu0
        %2860 = vdwg.mxu0
        %2863 = vrot.lane.b32.xlu0 %v1545, 96
        %v2864 = vpop.permute.xlu0 %2863
        %2865 = vrot.lane.b32.xlu0 %v1546, 96
        %v2866 = vpop.permute.xlu0 %2865
        %v2867 = vsel %vm851, %v2864, 0
        %v2869 = vsel %vm851, %v2866, 0
        %2871 = vmatprep.subr.mxu0 0.0
        %2872 = vmatpush1.xpose.msra.mxu0 %v2867
        %2873 = vmatprep.subr.mxu0 0.0
        %2874 = vmatpush1.xpose.msra.mxu0 %v2869
        %2875 = vmatprep.subr.mxu0 0.0
        %2876 = vmatpush1.xpose.msra.mxu0 0.0
        %2877 = vmatprep.subr.mxu0 0.0
        %2878 = vmatpush1.xpose.msra.mxu0 0.0
        %2879 = vmatprep.subr.mxu0 0.0
        %2880 = vmatpush1.xpose.msra.mxu0 0.0
        %2881 = vmatprep.subr.mxu0 0.0
        %2882 = vmatpush1.xpose.msra.mxu0 0.0
        %2883 = vmatprep.subr.mxu0 0.0
        %2884 = vmatpush1.xpose.msra.mxu0 0.0
        %2885 = vmatprep.subr.mxu0 0.0
        %2886 = vmatpush1.xpose.msra.mxu0 0.0
        %2887 = vmatprep.subr.mxu0 0.0
        %2888 = vmatpush1.xpose.msra.mxu0 0.0
        %2889 = vmatprep.subr.mxu0 0.0
        %2890 = vmatpush1.xpose.msra.mxu0 0.0
        %2891 = vmatprep.subr.mxu0 0.0
        %2892 = vmatpush1.xpose.msra.mxu0 0.0
        %2893 = vmatprep.subr.mxu0 0.0
        %2894 = vmatpush1.xpose.msra.mxu0 0.0
        %2895 = vmatprep.subr.mxu0 0.0
        %2896 = vmatpush1.xpose.msra.mxu0 0.0
        %2897 = vmatprep.subr.mxu0 0.0
        %2898 = vmatpush1.xpose.msra.mxu0 0.0
        %2899 = vmatprep.subr.mxu0 0.0
        %2900 = vmatpush1.xpose.msra.mxu0 0.0
        %2901 = vmatprep.subr.mxu0 0.0
        %2902 = vmatpush1.xpose.msra.mxu0 0.0
        %2903 = vmatprep.subr.mxu0 0.0
        %2904 = vmatpush1.xpose.msra.mxu0 0.0
        %2905 = vmatprep.subr.mxu0 0.0
        %2906 = vmatpush1.xpose.msra.mxu0 0.0
        %2907 = vmatprep.subr.mxu0 0.0
        %2908 = vmatpush1.xpose.msra.mxu0 0.0
        %2909 = vmatprep.subr.mxu0 0.0
        %2910 = vmatpush1.xpose.msra.mxu0 0.0
        %2911 = vmatprep.subr.mxu0 0.0
        %2912 = vmatpush1.xpose.msra.mxu0 0.0
        %2913 = vmatprep.subr.mxu0 0.0
        %2914 = vmatpush1.xpose.msra.mxu0 0.0
        %2915 = vmatprep.subr.mxu0 0.0
        %2916 = vmatpush1.xpose.msra.mxu0 0.0
        %2917 = vmatprep.subr.mxu0 0.0
        %2918 = vmatpush1.xpose.msra.mxu0 0.0
        %2919 = vmatprep.subr.mxu0 0.0
        %2920 = vmatpush1.xpose.msra.mxu0 0.0
        %2921 = vmatprep.subr.mxu0 0.0
        %2922 = vmatpush1.xpose.msra.mxu0 0.0
        %2923 = vmatprep.subr.mxu0 0.0
        %2924 = vmatpush1.xpose.msra.mxu0 0.0
        %2925 = vmatprep.subr.mxu0 0.0
        %2926 = vmatpush1.xpose.msra.mxu0 0.0
        %2927 = vmatprep.subr.mxu0 0.0
        %2928 = vmatpush1.xpose.msra.mxu0 0.0
        %2929 = vmatprep.subr.mxu0 0.0
        %2930 = vmatpush1.xpose.msra.mxu0 0.0
        %2931 = vmatprep.subr.mxu0 0.0
        %2932 = vmatpush1.xpose.msra.mxu0 0.0
        %2933 = vmatprep.subr.mxu0 0.0
        %2934 = vmatpush1.xpose.msra.mxu0 0.0
        %2935 = vmatprep.mubr.f32.mxu0 0.0
        %2936 = vmatmul.mubr.f32.gmra.mrb[0].mxu0 %v1585
        %v2937 = vpop.f32.mrb[0].mxu0
        %v2938 = vadd.f32 %v646, %v2937
        %v2939 = vpop.f32.mrb[0].mxu0
        %2940 = vdwg.mxu0
        %2943 = vrot.lane.b32.xlu0 %v1547, 96
        %v2944 = vpop.permute.xlu0 %2943
        %2945 = vrot.lane.b32.xlu0 %v1548, 96
        %v2946 = vpop.permute.xlu0 %2945
        %v2947 = vsel %vm851, %v2944, 0
        %v2949 = vsel %vm851, %v2946, 0
        %2951 = vmatprep.subr.mxu0 0.0
        %2952 = vmatpush1.xpose.msra.mxu0 %v2947
        %2953 = vmatprep.subr.mxu0 0.0
        %2954 = vmatpush1.xpose.msra.mxu0 %v2949
        %2955 = vmatprep.subr.mxu0 0.0
        %2956 = vmatpush1.xpose.msra.mxu0 0.0
        %2957 = vmatprep.subr.mxu0 0.0
        %2958 = vmatpush1.xpose.msra.mxu0 0.0
        %2959 = vmatprep.subr.mxu0 0.0
        %2960 = vmatpush1.xpose.msra.mxu0 0.0
        %2961 = vmatprep.subr.mxu0 0.0
        %2962 = vmatpush1.xpose.msra.mxu0 0.0
        %2963 = vmatprep.subr.mxu0 0.0
        %2964 = vmatpush1.xpose.msra.mxu0 0.0
        %2965 = vmatprep.subr.mxu0 0.0
        %2966 = vmatpush1.xpose.msra.mxu0 0.0
        %2967 = vmatprep.subr.mxu0 0.0
        %2968 = vmatpush1.xpose.msra.mxu0 0.0
        %2969 = vmatprep.subr.mxu0 0.0
        %2970 = vmatpush1.xpose.msra.mxu0 0.0
        %2971 = vmatprep.subr.mxu0 0.0
        %2972 = vmatpush1.xpose.msra.mxu0 0.0
        %2973 = vmatprep.subr.mxu0 0.0
        %2974 = vmatpush1.xpose.msra.mxu0 0.0
        %2975 = vmatprep.subr.mxu0 0.0
        %2976 = vmatpush1.xpose.msra.mxu0 0.0
        %2977 = vmatprep.subr.mxu0 0.0
        %2978 = vmatpush1.xpose.msra.mxu0 0.0
        %2979 = vmatprep.subr.mxu0 0.0
        %2980 = vmatpush1.xpose.msra.mxu0 0.0
        %2981 = vmatprep.subr.mxu0 0.0
        %2982 = vmatpush1.xpose.msra.mxu0 0.0
        %2983 = vmatprep.subr.mxu0 0.0
        %2984 = vmatpush1.xpose.msra.mxu0 0.0
        %2985 = vmatprep.subr.mxu0 0.0
        %2986 = vmatpush1.xpose.msra.mxu0 0.0
        %2987 = vmatprep.subr.mxu0 0.0
        %2988 = vmatpush1.xpose.msra.mxu0 0.0
        %2989 = vmatprep.subr.mxu0 0.0
        %2990 = vmatpush1.xpose.msra.mxu0 0.0
        %2991 = vmatprep.subr.mxu0 0.0
        %2992 = vmatpush1.xpose.msra.mxu0 0.0
        %2993 = vmatprep.subr.mxu0 0.0
        %2994 = vmatpush1.xpose.msra.mxu0 0.0
        %2995 = vmatprep.subr.mxu0 0.0
        %2996 = vmatpush1.xpose.msra.mxu0 0.0
        %2997 = vmatprep.subr.mxu0 0.0
        %2998 = vmatpush1.xpose.msra.mxu0 0.0
        %2999 = vmatprep.subr.mxu0 0.0
        %3000 = vmatpush1.xpose.msra.mxu0 0.0
        %3001 = vmatprep.subr.mxu0 0.0
        %3002 = vmatpush1.xpose.msra.mxu0 0.0
        %3003 = vmatprep.subr.mxu0 0.0
        %3004 = vmatpush1.xpose.msra.mxu0 0.0
        %3005 = vmatprep.subr.mxu0 0.0
        %3006 = vmatpush1.xpose.msra.mxu0 0.0
        %3007 = vmatprep.subr.mxu0 0.0
        %3008 = vmatpush1.xpose.msra.mxu0 0.0
        %3009 = vmatprep.subr.mxu0 0.0
        %3010 = vmatpush1.xpose.msra.mxu0 0.0
        %3011 = vmatprep.subr.mxu0 0.0
        %3012 = vmatpush1.xpose.msra.mxu0 0.0
        %3013 = vmatprep.subr.mxu0 0.0
        %3014 = vmatpush1.xpose.msra.mxu0 0.0
        %3015 = vmatprep.mubr.f32.mxu0 0.0
        %3016 = vmatmul.mubr.f32.gmra.mrb[0].mxu0 %v1585
        %v3017 = vpop.f32.mrb[0].mxu0
        %v3018 = vadd.f32 %v650, %v3017
        %v3019 = vpop.f32.mrb[0].mxu0
        %3020 = vdwg.mxu0
        %3023 = vrot.lane.b32.xlu0 %v1549, 96
        %v3024 = vpop.permute.xlu0 %3023
        %3025 = vrot.lane.b32.xlu0 %v1550, 96
        %v3026 = vpop.permute.xlu0 %3025
        %v3027 = vsel %vm851, %v3024, 0
        %v3029 = vsel %vm851, %v3026, 0
        %3031 = vmatprep.subr.mxu0 0.0
        %3032 = vmatpush1.xpose.msra.mxu0 %v3027
        %3033 = vmatprep.subr.mxu0 0.0
        %3034 = vmatpush1.xpose.msra.mxu0 %v3029
        %3035 = vmatprep.subr.mxu0 0.0
        %3036 = vmatpush1.xpose.msra.mxu0 0.0
        %3037 = vmatprep.subr.mxu0 0.0
        %3038 = vmatpush1.xpose.msra.mxu0 0.0
        %3039 = vmatprep.subr.mxu0 0.0
        %3040 = vmatpush1.xpose.msra.mxu0 0.0
        %3041 = vmatprep.subr.mxu0 0.0
        %3042 = vmatpush1.xpose.msra.mxu0 0.0
        %3043 = vmatprep.subr.mxu0 0.0
        %3044 = vmatpush1.xpose.msra.mxu0 0.0
        %3045 = vmatprep.subr.mxu0 0.0
        %3046 = vmatpush1.xpose.msra.mxu0 0.0
        %3047 = vmatprep.subr.mxu0 0.0
        %3048 = vmatpush1.xpose.msra.mxu0 0.0
        %3049 = vmatprep.subr.mxu0 0.0
        %3050 = vmatpush1.xpose.msra.mxu0 0.0
        %3051 = vmatprep.subr.mxu0 0.0
        %3052 = vmatpush1.xpose.msra.mxu0 0.0
        %3053 = vmatprep.subr.mxu0 0.0
        %3054 = vmatpush1.xpose.msra.mxu0 0.0
        %3055 = vmatprep.subr.mxu0 0.0
        %3056 = vmatpush1.xpose.msra.mxu0 0.0
        %3057 = vmatprep.subr.mxu0 0.0
        %3058 = vmatpush1.xpose.msra.mxu0 0.0
        %3059 = vmatprep.subr.mxu0 0.0
        %3060 = vmatpush1.xpose.msra.mxu0 0.0
        %3061 = vmatprep.subr.mxu0 0.0
        %3062 = vmatpush1.xpose.msra.mxu0 0.0
        %3063 = vmatprep.subr.mxu0 0.0
        %3064 = vmatpush1.xpose.msra.mxu0 0.0
        %3065 = vmatprep.subr.mxu0 0.0
        %3066 = vmatpush1.xpose.msra.mxu0 0.0
        %3067 = vmatprep.subr.mxu0 0.0
        %3068 = vmatpush1.xpose.msra.mxu0 0.0
        %3069 = vmatprep.subr.mxu0 0.0
        %3070 = vmatpush1.xpose.msra.mxu0 0.0
        %3071 = vmatprep.subr.mxu0 0.0
        %3072 = vmatpush1.xpose.msra.mxu0 0.0
        %3073 = vmatprep.subr.mxu0 0.0
        %3074 = vmatpush1.xpose.msra.mxu0 0.0
        %3075 = vmatprep.subr.mxu0 0.0
        %3076 = vmatpush1.xpose.msra.mxu0 0.0
        %3077 = vmatprep.subr.mxu0 0.0
        %3078 = vmatpush1.xpose.msra.mxu0 0.0
        %3079 = vmatprep.subr.mxu0 0.0
        %3080 = vmatpush1.xpose.msra.mxu0 0.0
        %3081 = vmatprep.subr.mxu0 0.0
        %3082 = vmatpush1.xpose.msra.mxu0 0.0
        %3083 = vmatprep.subr.mxu0 0.0
        %3084 = vmatpush1.xpose.msra.mxu0 0.0
        %3085 = vmatprep.subr.mxu0 0.0
        %3086 = vmatpush1.xpose.msra.mxu0 0.0
        %3087 = vmatprep.subr.mxu0 0.0
        %3088 = vmatpush1.xpose.msra.mxu0 0.0
        %3089 = vmatprep.subr.mxu0 0.0
        %3090 = vmatpush1.xpose.msra.mxu0 0.0
        %3091 = vmatprep.subr.mxu0 0.0
        %3092 = vmatpush1.xpose.msra.mxu0 0.0
        %3093 = vmatprep.subr.mxu0 0.0
        %3094 = vmatpush1.xpose.msra.mxu0 0.0
        %3095 = vmatprep.mubr.f32.mxu0 0.0
        %3096 = vmatmul.mubr.f32.gmra.mrb[0].mxu0 %v1585
        %v3097 = vpop.f32.mrb[0].mxu0
        %v3098 = vadd.f32 %v654, %v3097
        %v3099 = vpop.f32.mrb[0].mxu0
        %3100 = vdwg.mxu0
        %3103 = vrot.lane.b32.xlu0 %v1551, 96
        %v3104 = vpop.permute.xlu0 %3103
        %3105 = vrot.lane.b32.xlu0 %v1552, 96
        %v3106 = vpop.permute.xlu0 %3105
        %v3107 = vsel %vm851, %v3104, 0
        %v3109 = vsel %vm851, %v3106, 0
        %3111 = vmatprep.subr.mxu0 0.0
        %3112 = vmatpush1.xpose.msra.mxu0 %v3107
        %3113 = vmatprep.subr.mxu0 0.0
        %3114 = vmatpush1.xpose.msra.mxu0 %v3109
        %3115 = vmatprep.subr.mxu0 0.0
        %3116 = vmatpush1.xpose.msra.mxu0 0.0
        %3117 = vmatprep.subr.mxu0 0.0
        %3118 = vmatpush1.xpose.msra.mxu0 0.0
        %3119 = vmatprep.subr.mxu0 0.0
        %3120 = vmatpush1.xpose.msra.mxu0 0.0
        %3121 = vmatprep.subr.mxu0 0.0
        %3122 = vmatpush1.xpose.msra.mxu0 0.0
        %3123 = vmatprep.subr.mxu0 0.0
        %3124 = vmatpush1.xpose.msra.mxu0 0.0
        %3125 = vmatprep.subr.mxu0 0.0
        %3126 = vmatpush1.xpose.msra.mxu0 0.0
        %3127 = vmatprep.subr.mxu0 0.0
        %3128 = vmatpush1.xpose.msra.mxu0 0.0
        %3129 = vmatprep.subr.mxu0 0.0
        %3130 = vmatpush1.xpose.msra.mxu0 0.0
        %3131 = vmatprep.subr.mxu0 0.0
        %3132 = vmatpush1.xpose.msra.mxu0 0.0
        %3133 = vmatprep.subr.mxu0 0.0
        %3134 = vmatpush1.xpose.msra.mxu0 0.0
        %3135 = vmatprep.subr.mxu0 0.0
        %3136 = vmatpush1.xpose.msra.mxu0 0.0
        %3137 = vmatprep.subr.mxu0 0.0
        %3138 = vmatpush1.xpose.msra.mxu0 0.0
        %3139 = vmatprep.subr.mxu0 0.0
        %3140 = vmatpush1.xpose.msra.mxu0 0.0
        %3141 = vmatprep.subr.mxu0 0.0
        %3142 = vmatpush1.xpose.msra.mxu0 0.0
        %3143 = vmatprep.subr.mxu0 0.0
        %3144 = vmatpush1.xpose.msra.mxu0 0.0
        %3145 = vmatprep.subr.mxu0 0.0
        %3146 = vmatpush1.xpose.msra.mxu0 0.0
        %3147 = vmatprep.subr.mxu0 0.0
        %3148 = vmatpush1.xpose.msra.mxu0 0.0
        %3149 = vmatprep.subr.mxu0 0.0
        %3150 = vmatpush1.xpose.msra.mxu0 0.0
        %3151 = vmatprep.subr.mxu0 0.0
        %3152 = vmatpush1.xpose.msra.mxu0 0.0
        %3153 = vmatprep.subr.mxu0 0.0
        %3154 = vmatpush1.xpose.msra.mxu0 0.0
        %3155 = vmatprep.subr.mxu0 0.0
        %3156 = vmatpush1.xpose.msra.mxu0 0.0
        %3157 = vmatprep.subr.mxu0 0.0
        %3158 = vmatpush1.xpose.msra.mxu0 0.0
        %3159 = vmatprep.subr.mxu0 0.0
        %3160 = vmatpush1.xpose.msra.mxu0 0.0
        %3161 = vmatprep.subr.mxu0 0.0
        %3162 = vmatpush1.xpose.msra.mxu0 0.0
        %3163 = vmatprep.subr.mxu0 0.0
        %3164 = vmatpush1.xpose.msra.mxu0 0.0
        %3165 = vmatprep.subr.mxu0 0.0
        %3166 = vmatpush1.xpose.msra.mxu0 0.0
        %3167 = vmatprep.subr.mxu0 0.0
        %3168 = vmatpush1.xpose.msra.mxu0 0.0
        %3169 = vmatprep.subr.mxu0 0.0
        %3170 = vmatpush1.xpose.msra.mxu0 0.0
        %3171 = vmatprep.subr.mxu0 0.0
        %3172 = vmatpush1.xpose.msra.mxu0 0.0
        %3173 = vmatprep.subr.mxu0 0.0
        %3174 = vmatpush1.xpose.msra.mxu0 0.0
        %3175 = vmatprep.mubr.f32.mxu0 0.0
        %3176 = vmatmul.mubr.f32.gmra.mrb[0].mxu0 %v1585
        %v3177 = vpop.f32.mrb[0].mxu0
        %v3178 = vadd.f32 %v658, %v3177
        %v3179 = vpop.f32.mrb[0].mxu0
        %3180 = vdwg.mxu0
        %3183 = vrot.lane.b32.xlu0 %v1553, 96
        %v3184 = vpop.permute.xlu0 %3183
        %3185 = vrot.lane.b32.xlu0 %v1554, 96
        %v3186 = vpop.permute.xlu0 %3185
        %v3187 = vsel %vm851, %v3184, 0
        %v3189 = vsel %vm851, %v3186, 0
        %3191 = vmatprep.subr.mxu0 0.0
        %3192 = vmatpush1.xpose.msra.mxu0 %v3187
        %3193 = vmatprep.subr.mxu0 0.0
        %3194 = vmatpush1.xpose.msra.mxu0 %v3189
        %3195 = vmatprep.subr.mxu0 0.0
        %3196 = vmatpush1.xpose.msra.mxu0 0.0
        %3197 = vmatprep.subr.mxu0 0.0
        %3198 = vmatpush1.xpose.msra.mxu0 0.0
        %3199 = vmatprep.subr.mxu0 0.0
        %3200 = vmatpush1.xpose.msra.mxu0 0.0
        %3201 = vmatprep.subr.mxu0 0.0
        %3202 = vmatpush1.xpose.msra.mxu0 0.0
        %3203 = vmatprep.subr.mxu0 0.0
        %3204 = vmatpush1.xpose.msra.mxu0 0.0
        %3205 = vmatprep.subr.mxu0 0.0
        %3206 = vmatpush1.xpose.msra.mxu0 0.0
        %3207 = vmatprep.subr.mxu0 0.0
        %3208 = vmatpush1.xpose.msra.mxu0 0.0
        %3209 = vmatprep.subr.mxu0 0.0
        %3210 = vmatpush1.xpose.msra.mxu0 0.0
        %3211 = vmatprep.subr.mxu0 0.0
        %3212 = vmatpush1.xpose.msra.mxu0 0.0
        %3213 = vmatprep.subr.mxu0 0.0
        %3214 = vmatpush1.xpose.msra.mxu0 0.0
        %3215 = vmatprep.subr.mxu0 0.0
        %3216 = vmatpush1.xpose.msra.mxu0 0.0
        %3217 = vmatprep.subr.mxu0 0.0
        %3218 = vmatpush1.xpose.msra.mxu0 0.0
        %3219 = vmatprep.subr.mxu0 0.0
        %3220 = vmatpush1.xpose.msra.mxu0 0.0
        %3221 = vmatprep.subr.mxu0 0.0
        %3222 = vmatpush1.xpose.msra.mxu0 0.0
        %3223 = vmatprep.subr.mxu0 0.0
        %3224 = vmatpush1.xpose.msra.mxu0 0.0
        %3225 = vmatprep.subr.mxu0 0.0
        %3226 = vmatpush1.xpose.msra.mxu0 0.0
        %3227 = vmatprep.subr.mxu0 0.0
        %3228 = vmatpush1.xpose.msra.mxu0 0.0
        %3229 = vmatprep.subr.mxu0 0.0
        %3230 = vmatpush1.xpose.msra.mxu0 0.0
        %3231 = vmatprep.subr.mxu0 0.0
        %3232 = vmatpush1.xpose.msra.mxu0 0.0
        %3233 = vmatprep.subr.mxu0 0.0
        %3234 = vmatpush1.xpose.msra.mxu0 0.0
        %3235 = vmatprep.subr.mxu0 0.0
        %3236 = vmatpush1.xpose.msra.mxu0 0.0
        %3237 = vmatprep.subr.mxu0 0.0
        %3238 = vmatpush1.xpose.msra.mxu0 0.0
        %3239 = vmatprep.subr.mxu0 0.0
        %3240 = vmatpush1.xpose.msra.mxu0 0.0
        %3241 = vmatprep.subr.mxu0 0.0
        %3242 = vmatpush1.xpose.msra.mxu0 0.0
        %3243 = vmatprep.subr.mxu0 0.0
        %3244 = vmatpush1.xpose.msra.mxu0 0.0
        %3245 = vmatprep.subr.mxu0 0.0
        %3246 = vmatpush1.xpose.msra.mxu0 0.0
        %3247 = vmatprep.subr.mxu0 0.0
        %3248 = vmatpush1.xpose.msra.mxu0 0.0
        %3249 = vmatprep.subr.mxu0 0.0
        %3250 = vmatpush1.xpose.msra.mxu0 0.0
        %3251 = vmatprep.subr.mxu0 0.0
        %3252 = vmatpush1.xpose.msra.mxu0 0.0
        %3253 = vmatprep.subr.mxu0 0.0
        %3254 = vmatpush1.xpose.msra.mxu0 0.0
        %3255 = vmatprep.mubr.f32.mxu0 0.0
        %3256 = vmatmul.mubr.f32.gmra.mrb[0].mxu0 %v1585
        %v3257 = vpop.f32.mrb[0].mxu0
        %v3258 = vadd.f32 %v662, %v3257
        %v3259 = vpop.f32.mrb[0].mxu0
        %3260 = vdwg.mxu0
        %3263 = vrot.lane.b32.xlu0 %v1555, 96
        %v3264 = vpop.permute.xlu0 %3263
        %3265 = vrot.lane.b32.xlu0 %v1556, 96
        %v3266 = vpop.permute.xlu0 %3265
        %v3267 = vsel %vm851, %v3264, 0
        %v3269 = vsel %vm851, %v3266, 0
        %3271 = vmatprep.subr.mxu0 0.0
        %3272 = vmatpush1.xpose.msra.mxu0 %v3267
        %3273 = vmatprep.subr.mxu0 0.0
        %3274 = vmatpush1.xpose.msra.mxu0 %v3269
        %3275 = vmatprep.subr.mxu0 0.0
        %3276 = vmatpush1.xpose.msra.mxu0 0.0
        %3277 = vmatprep.subr.mxu0 0.0
        %3278 = vmatpush1.xpose.msra.mxu0 0.0
        %3279 = vmatprep.subr.mxu0 0.0
        %3280 = vmatpush1.xpose.msra.mxu0 0.0
        %3281 = vmatprep.subr.mxu0 0.0
        %3282 = vmatpush1.xpose.msra.mxu0 0.0
        %3283 = vmatprep.subr.mxu0 0.0
        %3284 = vmatpush1.xpose.msra.mxu0 0.0
        %3285 = vmatprep.subr.mxu0 0.0
        %3286 = vmatpush1.xpose.msra.mxu0 0.0
        %3287 = vmatprep.subr.mxu0 0.0
        %3288 = vmatpush1.xpose.msra.mxu0 0.0
        %3289 = vmatprep.subr.mxu0 0.0
        %3290 = vmatpush1.xpose.msra.mxu0 0.0
        %3291 = vmatprep.subr.mxu0 0.0
        %3292 = vmatpush1.xpose.msra.mxu0 0.0
        %3293 = vmatprep.subr.mxu0 0.0
        %3294 = vmatpush1.xpose.msra.mxu0 0.0
        %3295 = vmatprep.subr.mxu0 0.0
        %3296 = vmatpush1.xpose.msra.mxu0 0.0
        %3297 = vmatprep.subr.mxu0 0.0
        %3298 = vmatpush1.xpose.msra.mxu0 0.0
        %3299 = vmatprep.subr.mxu0 0.0
        %3300 = vmatpush1.xpose.msra.mxu0 0.0
        %3301 = vmatprep.subr.mxu0 0.0
        %3302 = vmatpush1.xpose.msra.mxu0 0.0
        %3303 = vmatprep.subr.mxu0 0.0
        %3304 = vmatpush1.xpose.msra.mxu0 0.0
        %3305 = vmatprep.subr.mxu0 0.0
        %3306 = vmatpush1.xpose.msra.mxu0 0.0
        %3307 = vmatprep.subr.mxu0 0.0
        %3308 = vmatpush1.xpose.msra.mxu0 0.0
        %3309 = vmatprep.subr.mxu0 0.0
        %3310 = vmatpush1.xpose.msra.mxu0 0.0
        %3311 = vmatprep.subr.mxu0 0.0
        %3312 = vmatpush1.xpose.msra.mxu0 0.0
        %3313 = vmatprep.subr.mxu0 0.0
        %3314 = vmatpush1.xpose.msra.mxu0 0.0
        %3315 = vmatprep.subr.mxu0 0.0
        %3316 = vmatpush1.xpose.msra.mxu0 0.0
        %3317 = vmatprep.subr.mxu0 0.0
        %3318 = vmatpush1.xpose.msra.mxu0 0.0
        %3319 = vmatprep.subr.mxu0 0.0
        %3320 = vmatpush1.xpose.msra.mxu0 0.0
        %3321 = vmatprep.subr.mxu0 0.0
        %3322 = vmatpush1.xpose.msra.mxu0 0.0
        %3323 = vmatprep.subr.mxu0 0.0
        %3324 = vmatpush1.xpose.msra.mxu0 0.0
        %3325 = vmatprep.subr.mxu0 0.0
        %3326 = vmatpush1.xpose.msra.mxu0 0.0
        %3327 = vmatprep.subr.mxu0 0.0
        %3328 = vmatpush1.xpose.msra.mxu0 0.0
        %3329 = vmatprep.subr.mxu0 0.0
        %3330 = vmatpush1.xpose.msra.mxu0 0.0
        %3331 = vmatprep.subr.mxu0 0.0
        %3332 = vmatpush1.xpose.msra.mxu0 0.0
        %3333 = vmatprep.subr.mxu0 0.0
        %3334 = vmatpush1.xpose.msra.mxu0 0.0
        %3335 = vmatprep.mubr.f32.mxu0 0.0
        %3336 = vmatmul.mubr.f32.gmra.mrb[0].mxu0 %v1585
        %v3337 = vpop.f32.mrb[0].mxu0
        %v3338 = vadd.f32 %v666, %v3337
        %v3339 = vpop.f32.mrb[0].mxu0
        %3340 = vdwg.mxu0
        %3343 = vrot.lane.b32.xlu0 %v1557, 96
        %v3344 = vpop.permute.xlu0 %3343
        %3345 = vrot.lane.b32.xlu0 %v1558, 96
        %v3346 = vpop.permute.xlu0 %3345
        %v3347 = vsel %vm851, %v3344, 0
        %v3349 = vsel %vm851, %v3346, 0
        %3351 = vmatprep.subr.mxu0 0.0
        %3352 = vmatpush1.xpose.msra.mxu0 %v3347
        %3353 = vmatprep.subr.mxu0 0.0
        %3354 = vmatpush1.xpose.msra.mxu0 %v3349
        %3355 = vmatprep.subr.mxu0 0.0
        %3356 = vmatpush1.xpose.msra.mxu0 0.0
        %3357 = vmatprep.subr.mxu0 0.0
        %3358 = vmatpush1.xpose.msra.mxu0 0.0
        %3359 = vmatprep.subr.mxu0 0.0
        %3360 = vmatpush1.xpose.msra.mxu0 0.0
        %3361 = vmatprep.subr.mxu0 0.0
        %3362 = vmatpush1.xpose.msra.mxu0 0.0
        %3363 = vmatprep.subr.mxu0 0.0
        %3364 = vmatpush1.xpose.msra.mxu0 0.0
        %3365 = vmatprep.subr.mxu0 0.0
        %3366 = vmatpush1.xpose.msra.mxu0 0.0
        %3367 = vmatprep.subr.mxu0 0.0
        %3368 = vmatpush1.xpose.msra.mxu0 0.0
        %3369 = vmatprep.subr.mxu0 0.0
        %3370 = vmatpush1.xpose.msra.mxu0 0.0
        %3371 = vmatprep.subr.mxu0 0.0
        %3372 = vmatpush1.xpose.msra.mxu0 0.0
        %3373 = vmatprep.subr.mxu0 0.0
        %3374 = vmatpush1.xpose.msra.mxu0 0.0
        %3375 = vmatprep.subr.mxu0 0.0
        %3376 = vmatpush1.xpose.msra.mxu0 0.0
        %3377 = vmatprep.subr.mxu0 0.0
        %3378 = vmatpush1.xpose.msra.mxu0 0.0
        %3379 = vmatprep.subr.mxu0 0.0
        %3380 = vmatpush1.xpose.msra.mxu0 0.0
        %3381 = vmatprep.subr.mxu0 0.0
        %3382 = vmatpush1.xpose.msra.mxu0 0.0
        %3383 = vmatprep.subr.mxu0 0.0
        %3384 = vmatpush1.xpose.msra.mxu0 0.0
        %3385 = vmatprep.subr.mxu0 0.0
        %3386 = vmatpush1.xpose.msra.mxu0 0.0
        %3387 = vmatprep.subr.mxu0 0.0
        %3388 = vmatpush1.xpose.msra.mxu0 0.0
        %3389 = vmatprep.subr.mxu0 0.0
        %3390 = vmatpush1.xpose.msra.mxu0 0.0
        %3391 = vmatprep.subr.mxu0 0.0
        %3392 = vmatpush1.xpose.msra.mxu0 0.0
        %3393 = vmatprep.subr.mxu0 0.0
        %3394 = vmatpush1.xpose.msra.mxu0 0.0
        %3395 = vmatprep.subr.mxu0 0.0
        %3396 = vmatpush1.xpose.msra.mxu0 0.0
        %3397 = vmatprep.subr.mxu0 0.0
        %3398 = vmatpush1.xpose.msra.mxu0 0.0
        %3399 = vmatprep.subr.mxu0 0.0
        %3400 = vmatpush1.xpose.msra.mxu0 0.0
        %3401 = vmatprep.subr.mxu0 0.0
        %3402 = vmatpush1.xpose.msra.mxu0 0.0
        %3403 = vmatprep.subr.mxu0 0.0
        %3404 = vmatpush1.xpose.msra.mxu0 0.0
        %3405 = vmatprep.subr.mxu0 0.0
        %3406 = vmatpush1.xpose.msra.mxu0 0.0
        %3407 = vmatprep.subr.mxu0 0.0
        %3408 = vmatpush1.xpose.msra.mxu0 0.0
        %3409 = vmatprep.subr.mxu0 0.0
        %3410 = vmatpush1.xpose.msra.mxu0 0.0
        %3411 = vmatprep.subr.mxu0 0.0
        %3412 = vmatpush1.xpose.msra.mxu0 0.0
        %3413 = vmatprep.subr.mxu0 0.0
        %3414 = vmatpush1.xpose.msra.mxu0 0.0
        %3415 = vmatprep.mubr.f32.mxu0 0.0
        %3416 = vmatmul.mubr.f32.gmra.mrb[0].mxu0 %v1585
        %v3417 = vpop.f32.mrb[0].mxu0
        %v3418 = vadd.f32 %v670, %v3417
        %v3419 = vpop.f32.mrb[0].mxu0
        %3420 = vdwg.mxu0
        %3423 = vrot.lane.b32.xlu0 %v1559, 96
        %v3424 = vpop.permute.xlu0 %3423
        %3425 = vrot.lane.b32.xlu0 %v1560, 96
        %v3426 = vpop.permute.xlu0 %3425
        %v3427 = vsel %vm851, %v3424, 0
        %v3429 = vsel %vm851, %v3426, 0
        %3431 = vmatprep.subr.mxu0 0.0
        %3432 = vmatpush1.xpose.msra.mxu0 %v3427
        %3433 = vmatprep.subr.mxu0 0.0
        %3434 = vmatpush1.xpose.msra.mxu0 %v3429
        %3435 = vmatprep.subr.mxu0 0.0
        %3436 = vmatpush1.xpose.msra.mxu0 0.0
        %3437 = vmatprep.subr.mxu0 0.0
        %3438 = vmatpush1.xpose.msra.mxu0 0.0
        %3439 = vmatprep.subr.mxu0 0.0
        %3440 = vmatpush1.xpose.msra.mxu0 0.0
        %3441 = vmatprep.subr.mxu0 0.0
        %3442 = vmatpush1.xpose.msra.mxu0 0.0
        %3443 = vmatprep.subr.mxu0 0.0
        %3444 = vmatpush1.xpose.msra.mxu0 0.0
        %3445 = vmatprep.subr.mxu0 0.0
        %3446 = vmatpush1.xpose.msra.mxu0 0.0
        %3447 = vmatprep.subr.mxu0 0.0
        %3448 = vmatpush1.xpose.msra.mxu0 0.0
        %3449 = vmatprep.subr.mxu0 0.0
        %3450 = vmatpush1.xpose.msra.mxu0 0.0
        %3451 = vmatprep.subr.mxu0 0.0
        %3452 = vmatpush1.xpose.msra.mxu0 0.0
        %3453 = vmatprep.subr.mxu0 0.0
        %3454 = vmatpush1.xpose.msra.mxu0 0.0
        %3455 = vmatprep.subr.mxu0 0.0
        %3456 = vmatpush1.xpose.msra.mxu0 0.0
        %3457 = vmatprep.subr.mxu0 0.0
        %3458 = vmatpush1.xpose.msra.mxu0 0.0
        %3459 = vmatprep.subr.mxu0 0.0
        %3460 = vmatpush1.xpose.msra.mxu0 0.0
        %3461 = vmatprep.subr.mxu0 0.0
        %3462 = vmatpush1.xpose.msra.mxu0 0.0
        %3463 = vmatprep.subr.mxu0 0.0
        %3464 = vmatpush1.xpose.msra.mxu0 0.0
        %3465 = vmatprep.subr.mxu0 0.0
        %3466 = vmatpush1.xpose.msra.mxu0 0.0
        %3467 = vmatprep.subr.mxu0 0.0
        %3468 = vmatpush1.xpose.msra.mxu0 0.0
        %3469 = vmatprep.subr.mxu0 0.0
        %3470 = vmatpush1.xpose.msra.mxu0 0.0
        %3471 = vmatprep.subr.mxu0 0.0
        %3472 = vmatpush1.xpose.msra.mxu0 0.0
        %3473 = vmatprep.subr.mxu0 0.0
        %3474 = vmatpush1.xpose.msra.mxu0 0.0
        %3475 = vmatprep.subr.mxu0 0.0
        %3476 = vmatpush1.xpose.msra.mxu0 0.0
        %3477 = vmatprep.subr.mxu0 0.0
        %3478 = vmatpush1.xpose.msra.mxu0 0.0
        %3479 = vmatprep.subr.mxu0 0.0
        %3480 = vmatpush1.xpose.msra.mxu0 0.0
        %3481 = vmatprep.subr.mxu0 0.0
        %3482 = vmatpush1.xpose.msra.mxu0 0.0
        %3483 = vmatprep.subr.mxu0 0.0
        %3484 = vmatpush1.xpose.msra.mxu0 0.0
        %3485 = vmatprep.subr.mxu0 0.0
        %3486 = vmatpush1.xpose.msra.mxu0 0.0
        %3487 = vmatprep.subr.mxu0 0.0
        %3488 = vmatpush1.xpose.msra.mxu0 0.0
        %3489 = vmatprep.subr.mxu0 0.0
        %3490 = vmatpush1.xpose.msra.mxu0 0.0
        %3491 = vmatprep.subr.mxu0 0.0
        %3492 = vmatpush1.xpose.msra.mxu0 0.0
        %3493 = vmatprep.subr.mxu0 0.0
        %3494 = vmatpush1.xpose.msra.mxu0 0.0
        %3495 = vmatprep.mubr.f32.mxu0 0.0
        %3496 = vmatmul.mubr.f32.gmra.mrb[0].mxu0 %v1585
        %v3497 = vpop.f32.mrb[0].mxu0
        %v3498 = vadd.f32 %v674, %v3497
        %v3499 = vpop.f32.mrb[0].mxu0
        %3500 = vdwg.mxu0
        %3503 = vrot.lane.b32.xlu0 %v1561, 96
        %v3504 = vpop.permute.xlu0 %3503
        %3505 = vrot.lane.b32.xlu0 %v1562, 96
        %v3506 = vpop.permute.xlu0 %3505
        %v3507 = vsel %vm851, %v3504, 0
        %v3509 = vsel %vm851, %v3506, 0
        %3511 = vmatprep.subr.mxu0 0.0
        %3512 = vmatpush1.xpose.msra.mxu0 %v3507
        %3513 = vmatprep.subr.mxu0 0.0
        %3514 = vmatpush1.xpose.msra.mxu0 %v3509
        %3515 = vmatprep.subr.mxu0 0.0
        %3516 = vmatpush1.xpose.msra.mxu0 0.0
        %3517 = vmatprep.subr.mxu0 0.0
        %3518 = vmatpush1.xpose.msra.mxu0 0.0
        %3519 = vmatprep.subr.mxu0 0.0
        %3520 = vmatpush1.xpose.msra.mxu0 0.0
        %3521 = vmatprep.subr.mxu0 0.0
        %3522 = vmatpush1.xpose.msra.mxu0 0.0
        %3523 = vmatprep.subr.mxu0 0.0
        %3524 = vmatpush1.xpose.msra.mxu0 0.0
        %3525 = vmatprep.subr.mxu0 0.0
        %3526 = vmatpush1.xpose.msra.mxu0 0.0
        %3527 = vmatprep.subr.mxu0 0.0
        %3528 = vmatpush1.xpose.msra.mxu0 0.0
        %3529 = vmatprep.subr.mxu0 0.0
        %3530 = vmatpush1.xpose.msra.mxu0 0.0
        %3531 = vmatprep.subr.mxu0 0.0
        %3532 = vmatpush1.xpose.msra.mxu0 0.0
        %3533 = vmatprep.subr.mxu0 0.0
        %3534 = vmatpush1.xpose.msra.mxu0 0.0
        %3535 = vmatprep.subr.mxu0 0.0
        %3536 = vmatpush1.xpose.msra.mxu0 0.0
        %3537 = vmatprep.subr.mxu0 0.0
        %3538 = vmatpush1.xpose.msra.mxu0 0.0
        %3539 = vmatprep.subr.mxu0 0.0
        %3540 = vmatpush1.xpose.msra.mxu0 0.0
        %3541 = vmatprep.subr.mxu0 0.0
        %3542 = vmatpush1.xpose.msra.mxu0 0.0
        %3543 = vmatprep.subr.mxu0 0.0
        %3544 = vmatpush1.xpose.msra.mxu0 0.0
        %3545 = vmatprep.subr.mxu0 0.0
        %3546 = vmatpush1.xpose.msra.mxu0 0.0
        %3547 = vmatprep.subr.mxu0 0.0
        %3548 = vmatpush1.xpose.msra.mxu0 0.0
        %3549 = vmatprep.subr.mxu0 0.0
        %3550 = vmatpush1.xpose.msra.mxu0 0.0
        %3551 = vmatprep.subr.mxu0 0.0
        %3552 = vmatpush1.xpose.msra.mxu0 0.0
        %3553 = vmatprep.subr.mxu0 0.0
        %3554 = vmatpush1.xpose.msra.mxu0 0.0
        %3555 = vmatprep.subr.mxu0 0.0
        %3556 = vmatpush1.xpose.msra.mxu0 0.0
        %3557 = vmatprep.subr.mxu0 0.0
        %3558 = vmatpush1.xpose.msra.mxu0 0.0
        %3559 = vmatprep.subr.mxu0 0.0
        %3560 = vmatpush1.xpose.msra.mxu0 0.0
        %3561 = vmatprep.subr.mxu0 0.0
        %3562 = vmatpush1.xpose.msra.mxu0 0.0
        %3563 = vmatprep.subr.mxu0 0.0
        %3564 = vmatpush1.xpose.msra.mxu0 0.0
        %3565 = vmatprep.subr.mxu0 0.0
        %3566 = vmatpush1.xpose.msra.mxu0 0.0
        %3567 = vmatprep.subr.mxu0 0.0
        %3568 = vmatpush1.xpose.msra.mxu0 0.0
        %3569 = vmatprep.subr.mxu0 0.0
        %3570 = vmatpush1.xpose.msra.mxu0 0.0
        %3571 = vmatprep.subr.mxu0 0.0
        %3572 = vmatpush1.xpose.msra.mxu0 0.0
        %3573 = vmatprep.subr.mxu0 0.0
        %3574 = vmatpush1.xpose.msra.mxu0 0.0
        %3575 = vmatprep.mubr.f32.mxu0 0.0
        %3576 = vmatmul.mubr.f32.gmra.mrb[0].mxu0 %v1585
        %v3577 = vpop.f32.mrb[0].mxu0
        %v3578 = vadd.f32 %v678, %v3577
        %v3579 = vpop.f32.mrb[0].mxu0
        %3580 = vdwg.mxu0
        %3583 = vrot.lane.b32.xlu0 %v1563, 96
        %v3584 = vpop.permute.xlu0 %3583
        %3585 = vrot.lane.b32.xlu0 %v1564, 96
        %v3586 = vpop.permute.xlu0 %3585
        %v3587 = vsel %vm851, %v3584, 0
        %v3589 = vsel %vm851, %v3586, 0
        %3591 = vmatprep.subr.mxu0 0.0
        %3592 = vmatpush1.xpose.msra.mxu0 %v3587
        %3593 = vmatprep.subr.mxu0 0.0
        %3594 = vmatpush1.xpose.msra.mxu0 %v3589
        %3595 = vmatprep.subr.mxu0 0.0
        %3596 = vmatpush1.xpose.msra.mxu0 0.0
        %3597 = vmatprep.subr.mxu0 0.0
        %3598 = vmatpush1.xpose.msra.mxu0 0.0
        %3599 = vmatprep.subr.mxu0 0.0
        %3600 = vmatpush1.xpose.msra.mxu0 0.0
        %3601 = vmatprep.subr.mxu0 0.0
        %3602 = vmatpush1.xpose.msra.mxu0 0.0
        %3603 = vmatprep.subr.mxu0 0.0
        %3604 = vmatpush1.xpose.msra.mxu0 0.0
        %3605 = vmatprep.subr.mxu0 0.0
        %3606 = vmatpush1.xpose.msra.mxu0 0.0
        %3607 = vmatprep.subr.mxu0 0.0
        %3608 = vmatpush1.xpose.msra.mxu0 0.0
        %3609 = vmatprep.subr.mxu0 0.0
        %3610 = vmatpush1.xpose.msra.mxu0 0.0
        %3611 = vmatprep.subr.mxu0 0.0
        %3612 = vmatpush1.xpose.msra.mxu0 0.0
        %3613 = vmatprep.subr.mxu0 0.0
        %3614 = vmatpush1.xpose.msra.mxu0 0.0
        %3615 = vmatprep.subr.mxu0 0.0
        %3616 = vmatpush1.xpose.msra.mxu0 0.0
        %3617 = vmatprep.subr.mxu0 0.0
        %3618 = vmatpush1.xpose.msra.mxu0 0.0
        %3619 = vmatprep.subr.mxu0 0.0
        %3620 = vmatpush1.xpose.msra.mxu0 0.0
        %3621 = vmatprep.subr.mxu0 0.0
        %3622 = vmatpush1.xpose.msra.mxu0 0.0
        %3623 = vmatprep.subr.mxu0 0.0
        %3624 = vmatpush1.xpose.msra.mxu0 0.0
        %3625 = vmatprep.subr.mxu0 0.0
        %3626 = vmatpush1.xpose.msra.mxu0 0.0
        %3627 = vmatprep.subr.mxu0 0.0
        %3628 = vmatpush1.xpose.msra.mxu0 0.0
        %3629 = vmatprep.subr.mxu0 0.0
        %3630 = vmatpush1.xpose.msra.mxu0 0.0
        %3631 = vmatprep.subr.mxu0 0.0
        %3632 = vmatpush1.xpose.msra.mxu0 0.0
        %3633 = vmatprep.subr.mxu0 0.0
        %3634 = vmatpush1.xpose.msra.mxu0 0.0
        %3635 = vmatprep.subr.mxu0 0.0
        %3636 = vmatpush1.xpose.msra.mxu0 0.0
        %3637 = vmatprep.subr.mxu0 0.0
        %3638 = vmatpush1.xpose.msra.mxu0 0.0
        %3639 = vmatprep.subr.mxu0 0.0
        %3640 = vmatpush1.xpose.msra.mxu0 0.0
        %3641 = vmatprep.subr.mxu0 0.0
        %3642 = vmatpush1.xpose.msra.mxu0 0.0
        %3643 = vmatprep.subr.mxu0 0.0
        %3644 = vmatpush1.xpose.msra.mxu0 0.0
        %3645 = vmatprep.subr.mxu0 0.0
        %3646 = vmatpush1.xpose.msra.mxu0 0.0
        %3647 = vmatprep.subr.mxu0 0.0
        %3648 = vmatpush1.xpose.msra.mxu0 0.0
        %3649 = vmatprep.subr.mxu0 0.0
        %3650 = vmatpush1.xpose.msra.mxu0 0.0
        %3651 = vmatprep.subr.mxu0 0.0
        %3652 = vmatpush1.xpose.msra.mxu0 0.0
        %3653 = vmatprep.subr.mxu0 0.0
        %3654 = vmatpush1.xpose.msra.mxu0 0.0
        %3655 = vmatprep.mubr.f32.mxu0 0.0
        %3656 = vmatmul.mubr.f32.gmra.mrb[0].mxu0 %v1585
        %v3657 = vpop.f32.mrb[0].mxu0
        %v3658 = vadd.f32 %v682, %v3657
        %v3659 = vpop.f32.mrb[0].mxu0
        %3660 = vdwg.mxu0
        %3663 = vrot.lane.b32.xlu0 %v1565, 96
        %v3664 = vpop.permute.xlu0 %3663
        %3665 = vrot.lane.b32.xlu0 %v1566, 96
        %v3666 = vpop.permute.xlu0 %3665
        %v3667 = vsel %vm851, %v3664, 0
        %v3669 = vsel %vm851, %v3666, 0
        %3671 = vmatprep.subr.mxu0 0.0
        %3672 = vmatpush1.xpose.msra.mxu0 %v3667
        %3673 = vmatprep.subr.mxu0 0.0
        %3674 = vmatpush1.xpose.msra.mxu0 %v3669
        %3675 = vmatprep.subr.mxu0 0.0
        %3676 = vmatpush1.xpose.msra.mxu0 0.0
        %3677 = vmatprep.subr.mxu0 0.0
        %3678 = vmatpush1.xpose.msra.mxu0 0.0
        %3679 = vmatprep.subr.mxu0 0.0
        %3680 = vmatpush1.xpose.msra.mxu0 0.0
        %3681 = vmatprep.subr.mxu0 0.0
        %3682 = vmatpush1.xpose.msra.mxu0 0.0
        %3683 = vmatprep.subr.mxu0 0.0
        %3684 = vmatpush1.xpose.msra.mxu0 0.0
        %3685 = vmatprep.subr.mxu0 0.0
        %3686 = vmatpush1.xpose.msra.mxu0 0.0
        %3687 = vmatprep.subr.mxu0 0.0
        %3688 = vmatpush1.xpose.msra.mxu0 0.0
        %3689 = vmatprep.subr.mxu0 0.0
        %3690 = vmatpush1.xpose.msra.mxu0 0.0
        %3691 = vmatprep.subr.mxu0 0.0
        %3692 = vmatpush1.xpose.msra.mxu0 0.0
        %3693 = vmatprep.subr.mxu0 0.0
        %3694 = vmatpush1.xpose.msra.mxu0 0.0
        %3695 = vmatprep.subr.mxu0 0.0
        %3696 = vmatpush1.xpose.msra.mxu0 0.0
        %3697 = vmatprep.subr.mxu0 0.0
        %3698 = vmatpush1.xpose.msra.mxu0 0.0
        %3699 = vmatprep.subr.mxu0 0.0
        %3700 = vmatpush1.xpose.msra.mxu0 0.0
        %3701 = vmatprep.subr.mxu0 0.0
        %3702 = vmatpush1.xpose.msra.mxu0 0.0
        %3703 = vmatprep.subr.mxu0 0.0
        %3704 = vmatpush1.xpose.msra.mxu0 0.0
        %3705 = vmatprep.subr.mxu0 0.0
        %3706 = vmatpush1.xpose.msra.mxu0 0.0
        %3707 = vmatprep.subr.mxu0 0.0
        %3708 = vmatpush1.xpose.msra.mxu0 0.0
        %3709 = vmatprep.subr.mxu0 0.0
        %3710 = vmatpush1.xpose.msra.mxu0 0.0
        %3711 = vmatprep.subr.mxu0 0.0
        %3712 = vmatpush1.xpose.msra.mxu0 0.0
        %3713 = vmatprep.subr.mxu0 0.0
        %3714 = vmatpush1.xpose.msra.mxu0 0.0
        %3715 = vmatprep.subr.mxu0 0.0
        %3716 = vmatpush1.xpose.msra.mxu0 0.0
        %3717 = vmatprep.subr.mxu0 0.0
        %3718 = vmatpush1.xpose.msra.mxu0 0.0
        %3719 = vmatprep.subr.mxu0 0.0
        %3720 = vmatpush1.xpose.msra.mxu0 0.0
        %3721 = vmatprep.subr.mxu0 0.0
        %3722 = vmatpush1.xpose.msra.mxu0 0.0
        %3723 = vmatprep.subr.mxu0 0.0
        %3724 = vmatpush1.xpose.msra.mxu0 0.0
        %3725 = vmatprep.subr.mxu0 0.0
        %3726 = vmatpush1.xpose.msra.mxu0 0.0
        %3727 = vmatprep.subr.mxu0 0.0
        %3728 = vmatpush1.xpose.msra.mxu0 0.0
        %3729 = vmatprep.subr.mxu0 0.0
        %3730 = vmatpush1.xpose.msra.mxu0 0.0
        %3731 = vmatprep.subr.mxu0 0.0
        %3732 = vmatpush1.xpose.msra.mxu0 0.0
        %3733 = vmatprep.subr.mxu0 0.0
        %3734 = vmatpush1.xpose.msra.mxu0 0.0
        %3735 = vmatprep.mubr.f32.mxu0 0.0
        %3736 = vmatmul.mubr.f32.gmra.mrb[0].mxu0 %v1585
        %v3737 = vpop.f32.mrb[0].mxu0
        %v3738 = vadd.f32 %v686, %v3737
        %v3739 = vpop.f32.mrb[0].mxu0
        %3740 = vdwg.mxu0
        %3743 = vrot.lane.b32.xlu0 %v1567, 96
        %v3744 = vpop.permute.xlu0 %3743
        %3745 = vrot.lane.b32.xlu0 %v1568, 96
        %v3746 = vpop.permute.xlu0 %3745
        %v3747 = vsel %vm851, %v3744, 0
        %v3749 = vsel %vm851, %v3746, 0
        %3751 = vmatprep.subr.mxu0 0.0
        %3752 = vmatpush1.xpose.msra.mxu0 %v3747
        %3753 = vmatprep.subr.mxu0 0.0
        %3754 = vmatpush1.xpose.msra.mxu0 %v3749
        %3755 = vmatprep.subr.mxu0 0.0
        %3756 = vmatpush1.xpose.msra.mxu0 0.0
        %3757 = vmatprep.subr.mxu0 0.0
        %3758 = vmatpush1.xpose.msra.mxu0 0.0
        %3759 = vmatprep.subr.mxu0 0.0
        %3760 = vmatpush1.xpose.msra.mxu0 0.0
        %3761 = vmatprep.subr.mxu0 0.0
        %3762 = vmatpush1.xpose.msra.mxu0 0.0
        %3763 = vmatprep.subr.mxu0 0.0
        %3764 = vmatpush1.xpose.msra.mxu0 0.0
        %3765 = vmatprep.subr.mxu0 0.0
        %3766 = vmatpush1.xpose.msra.mxu0 0.0
        %3767 = vmatprep.subr.mxu0 0.0
        %3768 = vmatpush1.xpose.msra.mxu0 0.0
        %3769 = vmatprep.subr.mxu0 0.0
        %3770 = vmatpush1.xpose.msra.mxu0 0.0
        %3771 = vmatprep.subr.mxu0 0.0
        %3772 = vmatpush1.xpose.msra.mxu0 0.0
        %3773 = vmatprep.subr.mxu0 0.0
        %3774 = vmatpush1.xpose.msra.mxu0 0.0
        %3775 = vmatprep.subr.mxu0 0.0
        %3776 = vmatpush1.xpose.msra.mxu0 0.0
        %3777 = vmatprep.subr.mxu0 0.0
        %3778 = vmatpush1.xpose.msra.mxu0 0.0
        %3779 = vmatprep.subr.mxu0 0.0
        %3780 = vmatpush1.xpose.msra.mxu0 0.0
        %3781 = vmatprep.subr.mxu0 0.0
        %3782 = vmatpush1.xpose.msra.mxu0 0.0
        %3783 = vmatprep.subr.mxu0 0.0
        %3784 = vmatpush1.xpose.msra.mxu0 0.0
        %3785 = vmatprep.subr.mxu0 0.0
        %3786 = vmatpush1.xpose.msra.mxu0 0.0
        %3787 = vmatprep.subr.mxu0 0.0
        %3788 = vmatpush1.xpose.msra.mxu0 0.0
        %3789 = vmatprep.subr.mxu0 0.0
        %3790 = vmatpush1.xpose.msra.mxu0 0.0
        %3791 = vmatprep.subr.mxu0 0.0
        %3792 = vmatpush1.xpose.msra.mxu0 0.0
        %3793 = vmatprep.subr.mxu0 0.0
        %3794 = vmatpush1.xpose.msra.mxu0 0.0
        %3795 = vmatprep.subr.mxu0 0.0
        %3796 = vmatpush1.xpose.msra.mxu0 0.0
        %3797 = vmatprep.subr.mxu0 0.0
        %3798 = vmatpush1.xpose.msra.mxu0 0.0
        %3799 = vmatprep.subr.mxu0 0.0
        %3800 = vmatpush1.xpose.msra.mxu0 0.0
        %3801 = vmatprep.subr.mxu0 0.0
        %3802 = vmatpush1.xpose.msra.mxu0 0.0
        %3803 = vmatprep.subr.mxu0 0.0
        %3804 = vmatpush1.xpose.msra.mxu0 0.0
        %3805 = vmatprep.subr.mxu0 0.0
        %3806 = vmatpush1.xpose.msra.mxu0 0.0
        %3807 = vmatprep.subr.mxu0 0.0
        %3808 = vmatpush1.xpose.msra.mxu0 0.0
        %3809 = vmatprep.subr.mxu0 0.0
        %3810 = vmatpush1.xpose.msra.mxu0 0.0
        %3811 = vmatprep.subr.mxu0 0.0
        %3812 = vmatpush1.xpose.msra.mxu0 0.0
        %3813 = vmatprep.subr.mxu0 0.0
        %3814 = vmatpush1.xpose.msra.mxu0 0.0
        %3815 = vmatprep.mubr.f32.mxu0 0.0
        %3816 = vmatmul.mubr.f32.gmra.mrb[0].mxu0 %v1585
        %v3817 = vpop.f32.mrb[0].mxu0
        %v3818 = vadd.f32 %v690, %v3817
        %v3819 = vpop.f32.mrb[0].mxu0
        %3820 = vdwg.mxu0
        %3823 = vrot.lane.b32.xlu0 %v1569, 96
        %v3824 = vpop.permute.xlu0 %3823
        %3825 = vrot.lane.b32.xlu0 %v1570, 96
        %v3826 = vpop.permute.xlu0 %3825
        %v3827 = vsel %vm851, %v3824, 0
        %v3829 = vsel %vm851, %v3826, 0
        %3831 = vmatprep.subr.mxu0 0.0
        %3832 = vmatpush1.xpose.msra.mxu0 %v3827
        %3833 = vmatprep.subr.mxu0 0.0
        %3834 = vmatpush1.xpose.msra.mxu0 %v3829
        %3835 = vmatprep.subr.mxu0 0.0
        %3836 = vmatpush1.xpose.msra.mxu0 0.0
        %3837 = vmatprep.subr.mxu0 0.0
        %3838 = vmatpush1.xpose.msra.mxu0 0.0
        %3839 = vmatprep.subr.mxu0 0.0
        %3840 = vmatpush1.xpose.msra.mxu0 0.0
        %3841 = vmatprep.subr.mxu0 0.0
        %3842 = vmatpush1.xpose.msra.mxu0 0.0
        %3843 = vmatprep.subr.mxu0 0.0
        %3844 = vmatpush1.xpose.msra.mxu0 0.0
        %3845 = vmatprep.subr.mxu0 0.0
        %3846 = vmatpush1.xpose.msra.mxu0 0.0
        %3847 = vmatprep.subr.mxu0 0.0
        %3848 = vmatpush1.xpose.msra.mxu0 0.0
        %3849 = vmatprep.subr.mxu0 0.0
        %3850 = vmatpush1.xpose.msra.mxu0 0.0
        %3851 = vmatprep.subr.mxu0 0.0
        %3852 = vmatpush1.xpose.msra.mxu0 0.0
        %3853 = vmatprep.subr.mxu0 0.0
        %3854 = vmatpush1.xpose.msra.mxu0 0.0
        %3855 = vmatprep.subr.mxu0 0.0
        %3856 = vmatpush1.xpose.msra.mxu0 0.0
        %3857 = vmatprep.subr.mxu0 0.0
        %3858 = vmatpush1.xpose.msra.mxu0 0.0
        %3859 = vmatprep.subr.mxu0 0.0
        %3860 = vmatpush1.xpose.msra.mxu0 0.0
        %3861 = vmatprep.subr.mxu0 0.0
        %3862 = vmatpush1.xpose.msra.mxu0 0.0
        %3863 = vmatprep.subr.mxu0 0.0
        %3864 = vmatpush1.xpose.msra.mxu0 0.0
        %3865 = vmatprep.subr.mxu0 0.0
        %3866 = vmatpush1.xpose.msra.mxu0 0.0
        %3867 = vmatprep.subr.mxu0 0.0
        %3868 = vmatpush1.xpose.msra.mxu0 0.0
        %3869 = vmatprep.subr.mxu0 0.0
        %3870 = vmatpush1.xpose.msra.mxu0 0.0
        %3871 = vmatprep.subr.mxu0 0.0
        %3872 = vmatpush1.xpose.msra.mxu0 0.0
        %3873 = vmatprep.subr.mxu0 0.0
        %3874 = vmatpush1.xpose.msra.mxu0 0.0
        %3875 = vmatprep.subr.mxu0 0.0
        %3876 = vmatpush1.xpose.msra.mxu0 0.0
        %3877 = vmatprep.subr.mxu0 0.0
        %3878 = vmatpush1.xpose.msra.mxu0 0.0
        %3879 = vmatprep.subr.mxu0 0.0
        %3880 = vmatpush1.xpose.msra.mxu0 0.0
        %3881 = vmatprep.subr.mxu0 0.0
        %3882 = vmatpush1.xpose.msra.mxu0 0.0
        %3883 = vmatprep.subr.mxu0 0.0
        %3884 = vmatpush1.xpose.msra.mxu0 0.0
        %3885 = vmatprep.subr.mxu0 0.0
        %3886 = vmatpush1.xpose.msra.mxu0 0.0
        %3887 = vmatprep.subr.mxu0 0.0
        %3888 = vmatpush1.xpose.msra.mxu0 0.0
        %3889 = vmatprep.subr.mxu0 0.0
        %3890 = vmatpush1.xpose.msra.mxu0 0.0
        %3891 = vmatprep.subr.mxu0 0.0
        %3892 = vmatpush1.xpose.msra.mxu0 0.0
        %3893 = vmatprep.subr.mxu0 0.0
        %3894 = vmatpush1.xpose.msra.mxu0 0.0
        %3895 = vmatprep.mubr.f32.mxu0 0.0
        %3896 = vmatmul.mubr.f32.gmra.mrb[0].mxu0 %v1585
        %v3897 = vpop.f32.mrb[0].mxu0
        %v3898 = vadd.f32 %v694, %v3897
        %v3899 = vpop.f32.mrb[0].mxu0
        %3900 = vdwg.mxu0
        %3903 = vrot.lane.b32.xlu0 %v1571, 96
        %v3904 = vpop.permute.xlu0 %3903
        %3905 = vrot.lane.b32.xlu0 %v1572, 96
        %v3906 = vpop.permute.xlu0 %3905
        %v3907 = vsel %vm851, %v3904, 0
        %v3909 = vsel %vm851, %v3906, 0
        %3911 = vmatprep.subr.mxu0 0.0
        %3912 = vmatpush1.xpose.msra.mxu0 %v3907
        %3913 = vmatprep.subr.mxu0 0.0
        %3914 = vmatpush1.xpose.msra.mxu0 %v3909
        %3915 = vmatprep.subr.mxu0 0.0
        %3916 = vmatpush1.xpose.msra.mxu0 0.0
        %3917 = vmatprep.subr.mxu0 0.0
        %3918 = vmatpush1.xpose.msra.mxu0 0.0
        %3919 = vmatprep.subr.mxu0 0.0
        %3920 = vmatpush1.xpose.msra.mxu0 0.0
        %3921 = vmatprep.subr.mxu0 0.0
        %3922 = vmatpush1.xpose.msra.mxu0 0.0
        %3923 = vmatprep.subr.mxu0 0.0
        %3924 = vmatpush1.xpose.msra.mxu0 0.0
        %3925 = vmatprep.subr.mxu0 0.0
        %3926 = vmatpush1.xpose.msra.mxu0 0.0
        %3927 = vmatprep.subr.mxu0 0.0
        %3928 = vmatpush1.xpose.msra.mxu0 0.0
        %3929 = vmatprep.subr.mxu0 0.0
        %3930 = vmatpush1.xpose.msra.mxu0 0.0
        %3931 = vmatprep.subr.mxu0 0.0
        %3932 = vmatpush1.xpose.msra.mxu0 0.0
        %3933 = vmatprep.subr.mxu0 0.0
        %3934 = vmatpush1.xpose.msra.mxu0 0.0
        %3935 = vmatprep.subr.mxu0 0.0
        %3936 = vmatpush1.xpose.msra.mxu0 0.0
        %3937 = vmatprep.subr.mxu0 0.0
        %3938 = vmatpush1.xpose.msra.mxu0 0.0
        %3939 = vmatprep.subr.mxu0 0.0
        %3940 = vmatpush1.xpose.msra.mxu0 0.0
        %3941 = vmatprep.subr.mxu0 0.0
        %3942 = vmatpush1.xpose.msra.mxu0 0.0
        %3943 = vmatprep.subr.mxu0 0.0
        %3944 = vmatpush1.xpose.msra.mxu0 0.0
        %3945 = vmatprep.subr.mxu0 0.0
        %3946 = vmatpush1.xpose.msra.mxu0 0.0
        %3947 = vmatprep.subr.mxu0 0.0
        %3948 = vmatpush1.xpose.msra.mxu0 0.0
        %3949 = vmatprep.subr.mxu0 0.0
        %3950 = vmatpush1.xpose.msra.mxu0 0.0
        %3951 = vmatprep.subr.mxu0 0.0
        %3952 = vmatpush1.xpose.msra.mxu0 0.0
        %3953 = vmatprep.subr.mxu0 0.0
        %3954 = vmatpush1.xpose.msra.mxu0 0.0
        %3955 = vmatprep.subr.mxu0 0.0
        %3956 = vmatpush1.xpose.msra.mxu0 0.0
        %3957 = vmatprep.subr.mxu0 0.0
        %3958 = vmatpush1.xpose.msra.mxu0 0.0
        %3959 = vmatprep.subr.mxu0 0.0
        %3960 = vmatpush1.xpose.msra.mxu0 0.0
        %3961 = vmatprep.subr.mxu0 0.0
        %3962 = vmatpush1.xpose.msra.mxu0 0.0
        %3963 = vmatprep.subr.mxu0 0.0
        %3964 = vmatpush1.xpose.msra.mxu0 0.0
        %3965 = vmatprep.subr.mxu0 0.0
        %3966 = vmatpush1.xpose.msra.mxu0 0.0
        %3967 = vmatprep.subr.mxu0 0.0
        %3968 = vmatpush1.xpose.msra.mxu0 0.0
        %3969 = vmatprep.subr.mxu0 0.0
        %3970 = vmatpush1.xpose.msra.mxu0 0.0
        %3971 = vmatprep.subr.mxu0 0.0
        %3972 = vmatpush1.xpose.msra.mxu0 0.0
        %3973 = vmatprep.subr.mxu0 0.0
        %3974 = vmatpush1.xpose.msra.mxu0 0.0
        %3975 = vmatprep.mubr.f32.mxu0 0.0
        %3976 = vmatmul.mubr.f32.gmra.mrb[0].mxu0 %v1585
        %v3977 = vpop.f32.mrb[0].mxu0
        %v3978 = vadd.f32 %v698, %v3977
        %v3979 = vpop.f32.mrb[0].mxu0
        %3980 = vdwg.mxu0
        %3983 = vrot.lane.b32.xlu0 %v1573, 96
        %v3984 = vpop.permute.xlu0 %3983
        %3985 = vrot.lane.b32.xlu0 %v1574, 96
        %v3986 = vpop.permute.xlu0 %3985
        %v3987 = vsel %vm851, %v3984, 0
        %v3989 = vsel %vm851, %v3986, 0
        %3991 = vmatprep.subr.mxu0 0.0
        %3992 = vmatpush1.xpose.msra.mxu0 %v3987
        %3993 = vmatprep.subr.mxu0 0.0
        %3994 = vmatpush1.xpose.msra.mxu0 %v3989
        %3995 = vmatprep.subr.mxu0 0.0
        %3996 = vmatpush1.xpose.msra.mxu0 0.0
        %3997 = vmatprep.subr.mxu0 0.0
        %3998 = vmatpush1.xpose.msra.mxu0 0.0
        %3999 = vmatprep.subr.mxu0 0.0
        %4000 = vmatpush1.xpose.msra.mxu0 0.0
        %4001 = vmatprep.subr.mxu0 0.0
        %4002 = vmatpush1.xpose.msra.mxu0 0.0
        %4003 = vmatprep.subr.mxu0 0.0
        %4004 = vmatpush1.xpose.msra.mxu0 0.0
        %4005 = vmatprep.subr.mxu0 0.0
        %4006 = vmatpush1.xpose.msra.mxu0 0.0
        %4007 = vmatprep.subr.mxu0 0.0
        %4008 = vmatpush1.xpose.msra.mxu0 0.0
        %4009 = vmatprep.subr.mxu0 0.0
        %4010 = vmatpush1.xpose.msra.mxu0 0.0
        %4011 = vmatprep.subr.mxu0 0.0
        %4012 = vmatpush1.xpose.msra.mxu0 0.0
        %4013 = vmatprep.subr.mxu0 0.0
        %4014 = vmatpush1.xpose.msra.mxu0 0.0
        %4015 = vmatprep.subr.mxu0 0.0
        %4016 = vmatpush1.xpose.msra.mxu0 0.0
        %4017 = vmatprep.subr.mxu0 0.0
        %4018 = vmatpush1.xpose.msra.mxu0 0.0
        %4019 = vmatprep.subr.mxu0 0.0
        %4020 = vmatpush1.xpose.msra.mxu0 0.0
        %4021 = vmatprep.subr.mxu0 0.0
        %4022 = vmatpush1.xpose.msra.mxu0 0.0
        %4023 = vmatprep.subr.mxu0 0.0
        %4024 = vmatpush1.xpose.msra.mxu0 0.0
        %4025 = vmatprep.subr.mxu0 0.0
        %4026 = vmatpush1.xpose.msra.mxu0 0.0
        %4027 = vmatprep.subr.mxu0 0.0
        %4028 = vmatpush1.xpose.msra.mxu0 0.0
        %4029 = vmatprep.subr.mxu0 0.0
        %4030 = vmatpush1.xpose.msra.mxu0 0.0
        %4031 = vmatprep.subr.mxu0 0.0
        %4032 = vmatpush1.xpose.msra.mxu0 0.0
        %4033 = vmatprep.subr.mxu0 0.0
        %4034 = vmatpush1.xpose.msra.mxu0 0.0
        %4035 = vmatprep.subr.mxu0 0.0
        %4036 = vmatpush1.xpose.msra.mxu0 0.0
        %4037 = vmatprep.subr.mxu0 0.0
        %4038 = vmatpush1.xpose.msra.mxu0 0.0
        %4039 = vmatprep.subr.mxu0 0.0
        %4040 = vmatpush1.xpose.msra.mxu0 0.0
        %4041 = vmatprep.subr.mxu0 0.0
        %4042 = vmatpush1.xpose.msra.mxu0 0.0
        %4043 = vmatprep.subr.mxu0 0.0
        %4044 = vmatpush1.xpose.msra.mxu0 0.0
        %4045 = vmatprep.subr.mxu0 0.0
        %4046 = vmatpush1.xpose.msra.mxu0 0.0
        %4047 = vmatprep.subr.mxu0 0.0
        %4048 = vmatpush1.xpose.msra.mxu0 0.0
        %4049 = vmatprep.subr.mxu0 0.0
        %4050 = vmatpush1.xpose.msra.mxu0 0.0
        %4051 = vmatprep.subr.mxu0 0.0
        %4052 = vmatpush1.xpose.msra.mxu0 0.0
        %4053 = vmatprep.subr.mxu0 0.0
        %4054 = vmatpush1.xpose.msra.mxu0 0.0
        %4055 = vmatprep.mubr.f32.mxu0 0.0
        %4056 = vmatmul.mubr.f32.gmra.mrb[0].mxu0 %v1585
        %v4057 = vpop.f32.mrb[0].mxu0
        %v4058 = vadd.f32 %v702, %v4057
        %v4059 = vpop.f32.mrb[0].mxu0
        %4060 = vdwg.mxu0
        %4063 = vrot.lane.b32.xlu0 %v1575, 96
        %v4064 = vpop.permute.xlu0 %4063
        %4065 = vrot.lane.b32.xlu0 %v1576, 96
        %v4066 = vpop.permute.xlu0 %4065
        %v4067 = vsel %vm851, %v4064, 0
        %v4069 = vsel %vm851, %v4066, 0
        %4071 = vmatprep.subr.mxu0 0.0
        %4072 = vmatpush1.xpose.msra.mxu0 %v4067
        %4073 = vmatprep.subr.mxu0 0.0
        %4074 = vmatpush1.xpose.msra.mxu0 %v4069
        %4075 = vmatprep.subr.mxu0 0.0
        %4076 = vmatpush1.xpose.msra.mxu0 0.0
        %4077 = vmatprep.subr.mxu0 0.0
        %4078 = vmatpush1.xpose.msra.mxu0 0.0
        %4079 = vmatprep.subr.mxu0 0.0
        %4080 = vmatpush1.xpose.msra.mxu0 0.0
        %4081 = vmatprep.subr.mxu0 0.0
        %4082 = vmatpush1.xpose.msra.mxu0 0.0
        %4083 = vmatprep.subr.mxu0 0.0
        %4084 = vmatpush1.xpose.msra.mxu0 0.0
        %4085 = vmatprep.subr.mxu0 0.0
        %4086 = vmatpush1.xpose.msra.mxu0 0.0
        %4087 = vmatprep.subr.mxu0 0.0
        %4088 = vmatpush1.xpose.msra.mxu0 0.0
        %4089 = vmatprep.subr.mxu0 0.0
        %4090 = vmatpush1.xpose.msra.mxu0 0.0
        %4091 = vmatprep.subr.mxu0 0.0
        %4092 = vmatpush1.xpose.msra.mxu0 0.0
        %4093 = vmatprep.subr.mxu0 0.0
        %4094 = vmatpush1.xpose.msra.mxu0 0.0
        %4095 = vmatprep.subr.mxu0 0.0
        %4096 = vmatpush1.xpose.msra.mxu0 0.0
        %4097 = vmatprep.subr.mxu0 0.0
        %4098 = vmatpush1.xpose.msra.mxu0 0.0
        %4099 = vmatprep.subr.mxu0 0.0
        %4100 = vmatpush1.xpose.msra.mxu0 0.0
        %4101 = vmatprep.subr.mxu0 0.0
        %4102 = vmatpush1.xpose.msra.mxu0 0.0
        %4103 = vmatprep.subr.mxu0 0.0
        %4104 = vmatpush1.xpose.msra.mxu0 0.0
        %4105 = vmatprep.subr.mxu0 0.0
        %4106 = vmatpush1.xpose.msra.mxu0 0.0
        %4107 = vmatprep.subr.mxu0 0.0
        %4108 = vmatpush1.xpose.msra.mxu0 0.0
        %4109 = vmatprep.subr.mxu0 0.0
        %4110 = vmatpush1.xpose.msra.mxu0 0.0
        %4111 = vmatprep.subr.mxu0 0.0
        %4112 = vmatpush1.xpose.msra.mxu0 0.0
        %4113 = vmatprep.subr.mxu0 0.0
        %4114 = vmatpush1.xpose.msra.mxu0 0.0
        %4115 = vmatprep.subr.mxu0 0.0
        %4116 = vmatpush1.xpose.msra.mxu0 0.0
        %4117 = vmatprep.subr.mxu0 0.0
        %4118 = vmatpush1.xpose.msra.mxu0 0.0
        %4119 = vmatprep.subr.mxu0 0.0
        %4120 = vmatpush1.xpose.msra.mxu0 0.0
        %4121 = vmatprep.subr.mxu0 0.0
        %4122 = vmatpush1.xpose.msra.mxu0 0.0
        %4123 = vmatprep.subr.mxu0 0.0
        %4124 = vmatpush1.xpose.msra.mxu0 0.0
        %4125 = vmatprep.subr.mxu0 0.0
        %4126 = vmatpush1.xpose.msra.mxu0 0.0
        %4127 = vmatprep.subr.mxu0 0.0
        %4128 = vmatpush1.xpose.msra.mxu0 0.0
        %4129 = vmatprep.subr.mxu0 0.0
        %4130 = vmatpush1.xpose.msra.mxu0 0.0
        %4131 = vmatprep.subr.mxu0 0.0
        %4132 = vmatpush1.xpose.msra.mxu0 0.0
        %4133 = vmatprep.subr.mxu0 0.0
        %4134 = vmatpush1.xpose.msra.mxu0 0.0
        %4135 = vmatprep.mubr.f32.mxu0 0.0
        %4136 = vmatmul.mubr.f32.gmra.mrb[0].mxu0 %v1585
        %v4137 = vpop.f32.mrb[0].mxu0
        %v4138 = vadd.f32 %v706, %v4137
        %v4139 = vpop.f32.mrb[0].mxu0
        %4140 = vdwg.mxu0
        %vm4141 = vcmask 125952
        %v4142 = vsel %vm4141, %v1658, -inf
        %4143 = vmax.xlane.f32.xlu0 %v4142
        %v4144 = vpop.xlane.xlu0 %4143
        %v4145 = vsel %vm4141, %v1738, -inf
        %4146 = vmax.xlane.f32.xlu0 %v4145
        %v4147 = vpop.xlane.xlu0 %4146
        %v4148 = vsel %vm4141, %v1818, -inf
        %4149 = vmax.xlane.f32.xlu0 %v4148
        %v4150 = vpop.xlane.xlu0 %4149
        %v4151 = vsel %vm4141, %v1898, -inf
        %4152 = vmax.xlane.f32.xlu0 %v4151
        %v4153 = vpop.xlane.xlu0 %4152
        %v4154 = vsel %vm4141, %v1978, -inf
        %4155 = vmax.xlane.f32.xlu0 %v4154
        %v4156 = vpop.xlane.xlu0 %4155
        %v4157 = vsel %vm4141, %v2058, -inf
        %4158 = vmax.xlane.f32.xlu0 %v4157
        %v4159 = vpop.xlane.xlu0 %4158
        %v4160 = vsel %vm4141, %v2138, -inf
        %4161 = vmax.xlane.f32.xlu0 %v4160
        %v4162 = vpop.xlane.xlu0 %4161
        %v4163 = vsel %vm4141, %v2218, -inf
        %4164 = vmax.xlane.f32.xlu0 %v4163
        %v4165 = vpop.xlane.xlu0 %4164
        %v4166 = vsel %vm4141, %v2298, -inf
        %4167 = vmax.xlane.f32.xlu0 %v4166
        %v4168 = vpop.xlane.xlu0 %4167
        %v4169 = vsel %vm4141, %v2378, -inf
        %4170 = vmax.xlane.f32.xlu0 %v4169
        %v4171 = vpop.xlane.xlu0 %4170
        %v4172 = vsel %vm4141, %v2458, -inf
        %4173 = vmax.xlane.f32.xlu0 %v4172
        %v4174 = vpop.xlane.xlu0 %4173
        %v4175 = vsel %vm4141, %v2538, -inf
        %4176 = vmax.xlane.f32.xlu0 %v4175
        %v4177 = vpop.xlane.xlu0 %4176
        %v4178 = vsel %vm4141, %v2618, -inf
        %4179 = vmax.xlane.f32.xlu0 %v4178
        %v4180 = vpop.xlane.xlu0 %4179
        %v4181 = vsel %vm4141, %v2698, -inf
        %4182 = vmax.xlane.f32.xlu0 %v4181
        %v4183 = vpop.xlane.xlu0 %4182
        %v4184 = vsel %vm4141, %v2778, -inf
        %4185 = vmax.xlane.f32.xlu0 %v4184
        %v4186 = vpop.xlane.xlu0 %4185
        %v4187 = vsel %vm4141, %v2858, -inf
        %4188 = vmax.xlane.f32.xlu0 %v4187
        %v4189 = vpop.xlane.xlu0 %4188
        %v4190 = vsel %vm4141, %v2938, -inf
        %4191 = vmax.xlane.f32.xlu0 %v4190
        %v4192 = vpop.xlane.xlu0 %4191
        %v4193 = vsel %vm4141, %v3018, -inf
        %4194 = vmax.xlane.f32.xlu0 %v4193
        %v4195 = vpop.xlane.xlu0 %4194
        %v4196 = vsel %vm4141, %v3098, -inf
        %4197 = vmax.xlane.f32.xlu0 %v4196
        %v4198 = vpop.xlane.xlu0 %4197
        %v4199 = vsel %vm4141, %v3178, -inf
        %4200 = vmax.xlane.f32.xlu0 %v4199
        %v4201 = vpop.xlane.xlu0 %4200
        %v4202 = vsel %vm4141, %v3258, -inf
        %4203 = vmax.xlane.f32.xlu0 %v4202
        %v4204 = vpop.xlane.xlu0 %4203
        %v4205 = vsel %vm4141, %v3338, -inf
        %4206 = vmax.xlane.f32.xlu0 %v4205
        %v4207 = vpop.xlane.xlu0 %4206
        %v4208 = vsel %vm4141, %v3418, -inf
        %4209 = vmax.xlane.f32.xlu0 %v4208
        %v4210 = vpop.xlane.xlu0 %4209
        %v4211 = vsel %vm4141, %v3498, -inf
        %4212 = vmax.xlane.f32.xlu0 %v4211
        %v4213 = vpop.xlane.xlu0 %4212
        %v4214 = vsel %vm4141, %v3578, -inf
        %4215 = vmax.xlane.f32.xlu0 %v4214
        %v4216 = vpop.xlane.xlu0 %4215
        %v4217 = vsel %vm4141, %v3658, -inf
        %4218 = vmax.xlane.f32.xlu0 %v4217
        %v4219 = vpop.xlane.xlu0 %4218
        %v4220 = vsel %vm4141, %v3738, -inf
        %4221 = vmax.xlane.f32.xlu0 %v4220
        %v4222 = vpop.xlane.xlu0 %4221
        %v4223 = vsel %vm4141, %v3818, -inf
        %4224 = vmax.xlane.f32.xlu0 %v4223
        %v4225 = vpop.xlane.xlu0 %4224
        %v4226 = vsel %vm4141, %v3898, -inf
        %4227 = vmax.xlane.f32.xlu0 %v4226
        %v4228 = vpop.xlane.xlu0 %4227
        %v4229 = vsel %vm4141, %v3978, -inf
        %4230 = vmax.xlane.f32.xlu0 %v4229
        %v4231 = vpop.xlane.xlu0 %4230
        %v4232 = vsel %vm4141, %v4058, -inf
        %4233 = vmax.xlane.f32.xlu0 %v4232
        %v4234 = vpop.xlane.xlu0 %4233
        %v4235 = vsel %vm4141, %v4138, -inf
        %4236 = vmax.xlane.f32.xlu0 %v4235
        %v4237 = vpop.xlane.xlu0 %4236
        %v4238 = vsub.f32 %v1658, %v4144
        %v4239 = vsub.f32 %v1738, %v4147
        %v4240 = vsub.f32 %v1818, %v4150
        %v4241 = vsub.f32 %v1898, %v4153
        %v4242 = vsub.f32 %v1978, %v4156
        %v4243 = vsub.f32 %v2058, %v4159
        %v4244 = vsub.f32 %v2138, %v4162
        %v4245 = vsub.f32 %v2218, %v4165
        %v4246 = vsub.f32 %v2298, %v4168
        %v4247 = vsub.f32 %v2378, %v4171
        %v4248 = vsub.f32 %v2458, %v4174
        %v4249 = vsub.f32 %v2538, %v4177
        %v4250 = vsub.f32 %v2618, %v4180
        %v4251 = vsub.f32 %v2698, %v4183
        %v4252 = vsub.f32 %v2778, %v4186
        %v4253 = vsub.f32 %v2858, %v4189
        %v4254 = vsub.f32 %v2938, %v4192
        %v4255 = vsub.f32 %v3018, %v4195
        %v4256 = vsub.f32 %v3098, %v4198
        %v4257 = vsub.f32 %v3178, %v4201
        %v4258 = vsub.f32 %v3258, %v4204
        %v4259 = vsub.f32 %v3338, %v4207
        %v4260 = vsub.f32 %v3418, %v4210
        %v4261 = vsub.f32 %v3498, %v4213
        %v4262 = vsub.f32 %v3578, %v4216
        %v4263 = vsub.f32 %v3658, %v4219
        %v4264 = vsub.f32 %v3738, %v4222
        %v4265 = vsub.f32 %v3818, %v4225
        %v4266 = vsub.f32 %v3898, %v4228
        %v4267 = vsub.f32 %v3978, %v4231
        %v4268 = vsub.f32 %v4058, %v4234
        %v4269 = vsub.f32 %v4138, %v4237
        %v4270 = vmul.f32 %v4238, 1.442695
        %v4271 = vpow.pop %v4270
        %v4272 = vmul.f32 %v4239, 1.442695
        %v4273 = vpow.pop %v4272
        %v4274 = vmul.f32 %v4240, 1.442695
        %v4275 = vpow.pop %v4274
        %v4276 = vmul.f32 %v4241, 1.442695
        %v4277 = vpow.pop %v4276
        %v4278 = vmul.f32 %v4242, 1.442695
        %v4279 = vpow.pop %v4278
        %v4280 = vmul.f32 %v4243, 1.442695
        %v4281 = vpow.pop %v4280
        %v4282 = vmul.f32 %v4244, 1.442695
        %v4283 = vpow.pop %v4282
        %v4284 = vmul.f32 %v4245, 1.442695
        %v4285 = vpow.pop %v4284
        %v4286 = vmul.f32 %v4246, 1.442695
        %v4287 = vpow.pop %v4286
        %v4288 = vmul.f32 %v4247, 1.442695
        %v4289 = vpow.pop %v4288
        %v4290 = vmul.f32 %v4248, 1.442695
        %v4291 = vpow.pop %v4290
        %v4292 = vmul.f32 %v4249, 1.442695
        %v4293 = vpow.pop %v4292
        %v4294 = vmul.f32 %v4250, 1.442695
        %v4295 = vpow.pop %v4294
        %v4296 = vmul.f32 %v4251, 1.442695
        %v4297 = vpow.pop %v4296
        %v4298 = vmul.f32 %v4252, 1.442695
        %v4299 = vpow.pop %v4298
        %v4300 = vmul.f32 %v4253, 1.442695
        %v4301 = vpow.pop %v4300
        %v4302 = vmul.f32 %v4254, 1.442695
        %v4303 = vpow.pop %v4302
        %v4304 = vmul.f32 %v4255, 1.442695
        %v4305 = vpow.pop %v4304
        %v4306 = vmul.f32 %v4256, 1.442695
        %v4307 = vpow.pop %v4306
        %v4308 = vmul.f32 %v4257, 1.442695
        %v4309 = vpow.pop %v4308
        %v4310 = vmul.f32 %v4258, 1.442695
        %v4311 = vpow.pop %v4310
        %v4312 = vmul.f32 %v4259, 1.442695
        %v4313 = vpow.pop %v4312
        %v4314 = vmul.f32 %v4260, 1.442695
        %v4315 = vpow.pop %v4314
        %v4316 = vmul.f32 %v4261, 1.442695
        %v4317 = vpow.pop %v4316
        %v4318 = vmul.f32 %v4262, 1.442695
        %v4319 = vpow.pop %v4318
        %v4320 = vmul.f32 %v4263, 1.442695
        %v4321 = vpow.pop %v4320
        %v4322 = vmul.f32 %v4264, 1.442695
        %v4323 = vpow.pop %v4322
        %v4324 = vmul.f32 %v4265, 1.442695
        %v4325 = vpow.pop %v4324
        %v4326 = vmul.f32 %v4266, 1.442695
        %v4327 = vpow.pop %v4326
        %v4328 = vmul.f32 %v4267, 1.442695
        %v4329 = vpow.pop %v4328
        %v4330 = vmul.f32 %v4268, 1.442695
        %v4331 = vpow.pop %v4330
        %v4332 = vmul.f32 %v4269, 1.442695
        %v4333 = vpow.pop %v4332
        %v4334 = vsel %vm4141, %v4271, 0.0
        %4335 = vadd.xlane.f32.xlu0 %v4334
        %v4336 = vpop.xlane.xlu0 %4335
        %v4337 = vsel %vm4141, %v4273, 0.0
        %4338 = vadd.xlane.f32.xlu0 %v4337
        %v4339 = vpop.xlane.xlu0 %4338
        %v4340 = vsel %vm4141, %v4275, 0.0
        %4341 = vadd.xlane.f32.xlu0 %v4340
        %v4342 = vpop.xlane.xlu0 %4341
        %v4343 = vsel %vm4141, %v4277, 0.0
        %4344 = vadd.xlane.f32.xlu0 %v4343
        %v4345 = vpop.xlane.xlu0 %4344
        %v4346 = vsel %vm4141, %v4279, 0.0
        %4347 = vadd.xlane.f32.xlu0 %v4346
        %v4348 = vpop.xlane.xlu0 %4347
        %v4349 = vsel %vm4141, %v4281, 0.0
        %4350 = vadd.xlane.f32.xlu0 %v4349
        %v4351 = vpop.xlane.xlu0 %4350
        %v4352 = vsel %vm4141, %v4283, 0.0
        %4353 = vadd.xlane.f32.xlu0 %v4352
        %v4354 = vpop.xlane.xlu0 %4353
        %v4355 = vsel %vm4141, %v4285, 0.0
        %4356 = vadd.xlane.f32.xlu0 %v4355
        %v4357 = vpop.xlane.xlu0 %4356
        %v4358 = vsel %vm4141, %v4287, 0.0
        %4359 = vadd.xlane.f32.xlu0 %v4358
        %v4360 = vpop.xlane.xlu0 %4359
        %v4361 = vsel %vm4141, %v4289, 0.0
        %4362 = vadd.xlane.f32.xlu0 %v4361
        %v4363 = vpop.xlane.xlu0 %4362
        %v4364 = vsel %vm4141, %v4291, 0.0
        %4365 = vadd.xlane.f32.xlu0 %v4364
        %v4366 = vpop.xlane.xlu0 %4365
        %v4367 = vsel %vm4141, %v4293, 0.0
        %4368 = vadd.xlane.f32.xlu0 %v4367
        %v4369 = vpop.xlane.xlu0 %4368
        %v4370 = vsel %vm4141, %v4295, 0.0
        %4371 = vadd.xlane.f32.xlu0 %v4370
        %v4372 = vpop.xlane.xlu0 %4371
        %v4373 = vsel %vm4141, %v4297, 0.0
        %4374 = vadd.xlane.f32.xlu0 %v4373
        %v4375 = vpop.xlane.xlu0 %4374
        %v4376 = vsel %vm4141, %v4299, 0.0
        %4377 = vadd.xlane.f32.xlu0 %v4376
        %v4378 = vpop.xlane.xlu0 %4377
        %v4379 = vsel %vm4141, %v4301, 0.0
        %4380 = vadd.xlane.f32.xlu0 %v4379
        %v4381 = vpop.xlane.xlu0 %4380
        %v4382 = vsel %vm4141, %v4303, 0.0
        %4383 = vadd.xlane.f32.xlu0 %v4382
        %v4384 = vpop.xlane.xlu0 %4383
        %v4385 = vsel %vm4141, %v4305, 0.0
        %4386 = vadd.xlane.f32.xlu0 %v4385
        %v4387 = vpop.xlane.xlu0 %4386
        %v4388 = vsel %vm4141, %v4307, 0.0
        %4389 = vadd.xlane.f32.xlu0 %v4388
        %v4390 = vpop.xlane.xlu0 %4389
        %v4391 = vsel %vm4141, %v4309, 0.0
        %4392 = vadd.xlane.f32.xlu0 %v4391
        %v4393 = vpop.xlane.xlu0 %4392
        %v4394 = vsel %vm4141, %v4311, 0.0
        %4395 = vadd.xlane.f32.xlu0 %v4394
        %v4396 = vpop.xlane.xlu0 %4395
        %v4397 = vsel %vm4141, %v4313, 0.0
        %4398 = vadd.xlane.f32.xlu0 %v4397
        %v4399 = vpop.xlane.xlu0 %4398
        %v4400 = vsel %vm4141, %v4315, 0.0
        %4401 = vadd.xlane.f32.xlu0 %v4400
        %v4402 = vpop.xlane.xlu0 %4401
        %v4403 = vsel %vm4141, %v4317, 0.0
        %4404 = vadd.xlane.f32.xlu0 %v4403
        %v4405 = vpop.xlane.xlu0 %4404
        %v4406 = vsel %vm4141, %v4319, 0.0
        %4407 = vadd.xlane.f32.xlu0 %v4406
        %v4408 = vpop.xlane.xlu0 %4407
        %v4409 = vsel %vm4141, %v4321, 0.0
        %4410 = vadd.xlane.f32.xlu0 %v4409
        %v4411 = vpop.xlane.xlu0 %4410
        %v4412 = vsel %vm4141, %v4323, 0.0
        %4413 = vadd.xlane.f32.xlu0 %v4412
        %v4414 = vpop.xlane.xlu0 %4413
        %v4415 = vsel %vm4141, %v4325, 0.0
        %4416 = vadd.xlane.f32.xlu0 %v4415
        %v4417 = vpop.xlane.xlu0 %4416
        %v4418 = vsel %vm4141, %v4327, 0.0
        %4419 = vadd.xlane.f32.xlu0 %v4418
        %v4420 = vpop.xlane.xlu0 %4419
        %v4421 = vsel %vm4141, %v4329, 0.0
        %4422 = vadd.xlane.f32.xlu0 %v4421
        %v4423 = vpop.xlane.xlu0 %4422
        %v4424 = vsel %vm4141, %v4331, 0.0
        %4425 = vadd.xlane.f32.xlu0 %v4424
        %v4426 = vpop.xlane.xlu0 %4425
        %v4427 = vsel %vm4141, %v4333, 0.0
        %4428 = vadd.xlane.f32.xlu0 %v4427
        %v4429 = vpop.xlane.xlu0 %4428
        %v4430 = vrcp.pop %v4336
        %v4431 = vrcp.pop %v4339
        %v4432 = vrcp.pop %v4342
        %v4433 = vrcp.pop %v4345
        %v4434 = vrcp.pop %v4348
        %v4435 = vrcp.pop %v4351
        %v4436 = vrcp.pop %v4354
        %v4437 = vrcp.pop %v4357
        %v4438 = vrcp.pop %v4360
        %v4439 = vrcp.pop %v4363
        %v4440 = vrcp.pop %v4366
        %v4441 = vrcp.pop %v4369
        %v4442 = vrcp.pop %v4372
        %v4443 = vrcp.pop %v4375
        %v4444 = vrcp.pop %v4378
        %v4445 = vrcp.pop %v4381
        %v4446 = vrcp.pop %v4384
        %v4447 = vrcp.pop %v4387
        %v4448 = vrcp.pop %v4390
        %v4449 = vrcp.pop %v4393
        %v4450 = vrcp.pop %v4396
        %v4451 = vrcp.pop %v4399
        %v4452 = vrcp.pop %v4402
        %v4453 = vrcp.pop %v4405
        %v4454 = vrcp.pop %v4408
        %v4455 = vrcp.pop %v4411
        %v4456 = vrcp.pop %v4414
        %v4457 = vrcp.pop %v4417
        %v4458 = vrcp.pop %v4420
        %v4459 = vrcp.pop %v4423
        %v4460 = vrcp.pop %v4426
        %v4461 = vrcp.pop %v4429
        %v4462 = vmul.f32 %v4271, %v4430
        %v4463 = vmul.f32 %v4273, %v4431
        %v4464 = vmul.f32 %v4275, %v4432
        %v4465 = vmul.f32 %v4277, %v4433
        %v4466 = vmul.f32 %v4279, %v4434
        %v4467 = vmul.f32 %v4281, %v4435
        %v4468 = vmul.f32 %v4283, %v4436
        %v4469 = vmul.f32 %v4285, %v4437
        %v4470 = vmul.f32 %v4287, %v4438
        %v4471 = vmul.f32 %v4289, %v4439
        %v4472 = vmul.f32 %v4291, %v4440
        %v4473 = vmul.f32 %v4293, %v4441
        %v4474 = vmul.f32 %v4295, %v4442
        %v4475 = vmul.f32 %v4297, %v4443
        %v4476 = vmul.f32 %v4299, %v4444
        %v4477 = vmul.f32 %v4301, %v4445
        %v4478 = vmul.f32 %v4303, %v4446
        %v4479 = vmul.f32 %v4305, %v4447
        %v4480 = vmul.f32 %v4307, %v4448
        %v4481 = vmul.f32 %v4309, %v4449
        %v4482 = vmul.f32 %v4311, %v4450
        %v4483 = vmul.f32 %v4313, %v4451
        %v4484 = vmul.f32 %v4315, %v4452
        %v4485 = vmul.f32 %v4317, %v4453
        %v4486 = vmul.f32 %v4319, %v4454
        %v4487 = vmul.f32 %v4321, %v4455
        %v4488 = vmul.f32 %v4323, %v4456
        %v4489 = vmul.f32 %v4325, %v4457
        %v4490 = vmul.f32 %v4327, %v4458
        %v4491 = vmul.f32 %v4329, %v4459
        %v4492 = vmul.f32 %v4331, %v4460
        %v4493 = vmul.f32 %v4333, %v4461
        %v4494 = vlaneseq
        %v4495 = vshrl.u32 %v4494, 7
        %v4496 = vsub.s32 0, %v4495
        %v4497 = vrot.slane %v739, %v4496
        %4499 = vrot.lane.b32.xlu0 %v4497, 32
        %v4500 = vpop.permute.xlu0 %4499
        %v4502 = vmul.f32 %v931, %v4500
        %v4503 = vmul.f32 %v936, %v4500
        %v4504 = vmul.f32 %v941, %v4500
        %v4505 = vmul.f32 %v946, %v4500
        %v4506 = vlaneseq
        %v4507 = vshrl.u32 %v4506, 7
        %v4508 = vsub.s32 1, %v4507
        %v4509 = vrot.slane %v739, %v4508
        %4511 = vrot.lane.b32.xlu0 %v4509, 32
        %v4512 = vpop.permute.xlu0 %4511
        %v4514 = vmul.f32 %v931, %v4512
        %v4515 = vmul.f32 %v936, %v4512
        %v4516 = vmul.f32 %v941, %v4512
        %v4517 = vmul.f32 %v946, %v4512
        %v4534 = vrot.slane %v4462, 1
        %vm4535 = vcmask 1041409
        %v4536 = vsel %vm4535, %v4463, %v4534
        %v4537 = vrot.slane %v4464, 7
        %vm4538 = vcmask 1042434
        %v4539 = vsel %vm4538, %v4537, %v4536
        %v4540 = vrot.slane %v4465, 6
        %vm4541 = vcmask 1043459
        %v4542 = vsel %vm4541, %v4540, %v4539
        %v4543 = vrot.slane %v4466, 5
        %vm4544 = vcmask 1044484
        %v4545 = vsel %vm4544, %v4543, %v4542
        %v4546 = vrot.slane %v4467, 4
        %vm4547 = vcmask 1045509
        %v4548 = vsel %vm4547, %v4546, %v4545
        %v4549 = vrot.slane %v4468, 3
        %vm4550 = vcmask 1046534
        %v4551 = vsel %vm4550, %v4549, %v4548
        %v4552 = vrot.slane %v4469, 2
        %vm4553 = vcmask 1047559
        %v4554 = vsel %vm4553, %v4552, %v4551
        %v4555 = vrot.slane %v4470, 1
        %v4556 = vsel %vm4535, %v4471, %v4555
        %v4557 = vrot.slane %v4472, 7
        %v4558 = vsel %vm4538, %v4557, %v4556
        %v4559 = vrot.slane %v4473, 6
        %v4560 = vsel %vm4541, %v4559, %v4558
        %v4561 = vrot.slane %v4474, 5
        %v4562 = vsel %vm4544, %v4561, %v4560
        %v4563 = vrot.slane %v4475, 4
        %v4564 = vsel %vm4547, %v4563, %v4562
        %v4565 = vrot.slane %v4476, 3
        %v4566 = vsel %vm4550, %v4565, %v4564
        %v4567 = vrot.slane %v4477, 2
        %v4568 = vsel %vm4553, %v4567, %v4566
        %4571 = vrot.lane.b32.xlu0 %v4514, 96
        %v4572 = vpop.permute.xlu0 %4571
        %4573 = vrot.lane.b32.xlu0 %v4515, 96
        %v4574 = vpop.permute.xlu0 %4573
        %vm4577 = vcmask 130048
        %v4578 = vsel %vm4577, %v4554, 0
        %v4580 = vsel %vm4577, %v4568, 0
        %4582 = vmatprep.subr.mxu0 0.0
        %4583 = vmatpush1.msra.mxu0 %v4572
        %4584 = vmatprep.subr.mxu0 0.0
        %4585 = vmatpush1.msra.mxu0 %v4574
        %4586 = vmatprep.subr.mxu0 0.0
        %4587 = vmatpush1.msra.mxu0 0.0
        %4588 = vmatprep.subr.mxu0 0.0
        %4589 = vmatpush1.msra.mxu0 0.0
        %4590 = vmatprep.subr.mxu0 0.0
        %4591 = vmatpush1.msra.mxu0 0.0
        %4592 = vmatprep.subr.mxu0 0.0
        %4593 = vmatpush1.msra.mxu0 0.0
        %4594 = vmatprep.subr.mxu0 0.0
        %4595 = vmatpush1.msra.mxu0 0.0
        %4596 = vmatprep.subr.mxu0 0.0
        %4597 = vmatpush1.msra.mxu0 0.0
        %4598 = vmatprep.subr.mxu0 0.0
        %4599 = vmatpush1.msra.mxu0 0.0
        %4600 = vmatprep.subr.mxu0 0.0
        %4601 = vmatpush1.msra.mxu0 0.0
        %4602 = vmatprep.subr.mxu0 0.0
        %4603 = vmatpush1.msra.mxu0 0.0
        %4604 = vmatprep.subr.mxu0 0.0
        %4605 = vmatpush1.msra.mxu0 0.0
        %4606 = vmatprep.subr.mxu0 0.0
        %4607 = vmatpush1.msra.mxu0 0.0
        %4608 = vmatprep.subr.mxu0 0.0
        %4609 = vmatpush1.msra.mxu0 0.0
        %4610 = vmatprep.subr.mxu0 0.0
        %4611 = vmatpush1.msra.mxu0 0.0
        %4612 = vmatprep.subr.mxu0 0.0
        %4613 = vmatpush1.msra.mxu0 0.0
        %4614 = vmatprep.subr.mxu0 0.0
        %4615 = vmatpush1.msra.mxu0 0.0
        %4616 = vmatprep.subr.mxu0 0.0
        %4617 = vmatpush1.msra.mxu0 0.0
        %4618 = vmatprep.subr.mxu0 0.0
        %4619 = vmatpush1.msra.mxu0 0.0
        %4620 = vmatprep.subr.mxu0 0.0
        %4621 = vmatpush1.msra.mxu0 0.0
        %4622 = vmatprep.subr.mxu0 0.0
        %4623 = vmatpush1.msra.mxu0 0.0
        %4624 = vmatprep.subr.mxu0 0.0
        %4625 = vmatpush1.msra.mxu0 0.0
        %4626 = vmatprep.subr.mxu0 0.0
        %4627 = vmatpush1.msra.mxu0 0.0
        %4628 = vmatprep.subr.mxu0 0.0
        %4629 = vmatpush1.msra.mxu0 0.0
        %4630 = vmatprep.subr.mxu0 0.0
        %4631 = vmatpush1.msra.mxu0 0.0
        %4632 = vmatprep.subr.mxu0 0.0
        %4633 = vmatpush1.msra.mxu0 0.0
        %4634 = vmatprep.subr.mxu0 0.0
        %4635 = vmatpush1.msra.mxu0 0.0
        %4636 = vmatprep.subr.mxu0 0.0
        %4637 = vmatpush1.msra.mxu0 0.0
        %4638 = vmatprep.subr.mxu0 0.0
        %4639 = vmatpush1.msra.mxu0 0.0
        %4640 = vmatprep.subr.mxu0 0.0
        %4641 = vmatpush1.msra.mxu0 0.0
        %4642 = vmatprep.subr.mxu0 0.0
        %4643 = vmatpush1.msra.mxu0 0.0
        %4644 = vmatprep.subr.mxu0 0.0
        %4645 = vmatpush1.msra.mxu0 0.0
        %4646 = vmatprep.mubr.f32.mxu0 0.0
        %4647 = vmatmul.mubr.f32.gmra.mrb[0].mxu0 %v4578
        %v4648 = vpop.f32.mrb[0].mxu0
        %v4649 = vadd.f32 0.0, %v4648
        %v4650 = vpop.f32.mrb[0].mxu0
        %4651 = vmatprep.mubr.f32.mxu0 0.0
        %4652 = vmatmul.mubr.f32.gmra.mrb[0].mxu0 %v4580
        %v4653 = vpop.f32.mrb[0].mxu0
        %v4654 = vadd.f32 0.0, %v4653
        %v4655 = vpop.f32.mrb[0].mxu0
        %4656 = vdwg.mxu0
        %v4673 = vrot.slane %v4478, 1
        %v4674 = vsel %vm4535, %v4479, %v4673
        %v4675 = vrot.slane %v4480, 7
        %v4676 = vsel %vm4538, %v4675, %v4674
        %v4677 = vrot.slane %v4481, 6
        %v4678 = vsel %vm4541, %v4677, %v4676
        %v4679 = vrot.slane %v4482, 5
        %v4680 = vsel %vm4544, %v4679, %v4678
        %v4681 = vrot.slane %v4483, 4
        %v4682 = vsel %vm4547, %v4681, %v4680
        %v4683 = vrot.slane %v4484, 3
        %v4684 = vsel %vm4550, %v4683, %v4682
        %v4685 = vrot.slane %v4485, 2
        %v4686 = vsel %vm4553, %v4685, %v4684
        %v4687 = vrot.slane %v4486, 1
        %v4688 = vsel %vm4535, %v4487, %v4687
        %v4689 = vrot.slane %v4488, 7
        %v4690 = vsel %vm4538, %v4689, %v4688
        %v4691 = vrot.slane %v4489, 6
        %v4692 = vsel %vm4541, %v4691, %v4690
        %v4693 = vrot.slane %v4490, 5
        %v4694 = vsel %vm4544, %v4693, %v4692
        %v4695 = vrot.slane %v4491, 4
        %v4696 = vsel %vm4547, %v4695, %v4694
        %v4697 = vrot.slane %v4492, 3
        %v4698 = vsel %vm4550, %v4697, %v4696
        %v4699 = vrot.slane %v4493, 2
        %v4700 = vsel %vm4553, %v4699, %v4698
        %4703 = vrot.lane.b32.xlu0 %v4516, 96
        %v4704 = vpop.permute.xlu0 %4703
        %4705 = vrot.lane.b32.xlu0 %v4517, 96
        %v4706 = vpop.permute.xlu0 %4705
        %v4709 = vsel %vm4577, %v4686, 0
        %v4711 = vsel %vm4577, %v4700, 0
        %4713 = vmatprep.subr.mxu0 0.0
        %4714 = vmatpush1.msra.mxu0 %v4704
        %4715 = vmatprep.subr.mxu0 0.0
        %4716 = vmatpush1.msra.mxu0 %v4706
        %4717 = vmatprep.subr.mxu0 0.0
        %4718 = vmatpush1.msra.mxu0 0.0
        %4719 = vmatprep.subr.mxu0 0.0
        %4720 = vmatpush1.msra.mxu0 0.0
        %4721 = vmatprep.subr.mxu0 0.0
        %4722 = vmatpush1.msra.mxu0 0.0
        %4723 = vmatprep.subr.mxu0 0.0
        %4724 = vmatpush1.msra.mxu0 0.0
        %4725 = vmatprep.subr.mxu0 0.0
        %4726 = vmatpush1.msra.mxu0 0.0
        %4727 = vmatprep.subr.mxu0 0.0
        %4728 = vmatpush1.msra.mxu0 0.0
        %4729 = vmatprep.subr.mxu0 0.0
        %4730 = vmatpush1.msra.mxu0 0.0
        %4731 = vmatprep.subr.mxu0 0.0
        %4732 = vmatpush1.msra.mxu0 0.0
        %4733 = vmatprep.subr.mxu0 0.0
        %4734 = vmatpush1.msra.mxu0 0.0
        %4735 = vmatprep.subr.mxu0 0.0
        %4736 = vmatpush1.msra.mxu0 0.0
        %4737 = vmatprep.subr.mxu0 0.0
        %4738 = vmatpush1.msra.mxu0 0.0
        %4739 = vmatprep.subr.mxu0 0.0
        %4740 = vmatpush1.msra.mxu0 0.0
        %4741 = vmatprep.subr.mxu0 0.0
        %4742 = vmatpush1.msra.mxu0 0.0
        %4743 = vmatprep.subr.mxu0 0.0
        %4744 = vmatpush1.msra.mxu0 0.0
        %4745 = vmatprep.subr.mxu0 0.0
        %4746 = vmatpush1.msra.mxu0 0.0
        %4747 = vmatprep.subr.mxu0 0.0
        %4748 = vmatpush1.msra.mxu0 0.0
        %4749 = vmatprep.subr.mxu0 0.0
        %4750 = vmatpush1.msra.mxu0 0.0
        %4751 = vmatprep.subr.mxu0 0.0
        %4752 = vmatpush1.msra.mxu0 0.0
        %4753 = vmatprep.subr.mxu0 0.0
        %4754 = vmatpush1.msra.mxu0 0.0
        %4755 = vmatprep.subr.mxu0 0.0
        %4756 = vmatpush1.msra.mxu0 0.0
        %4757 = vmatprep.subr.mxu0 0.0
        %4758 = vmatpush1.msra.mxu0 0.0
        %4759 = vmatprep.subr.mxu0 0.0
        %4760 = vmatpush1.msra.mxu0 0.0
        %4761 = vmatprep.subr.mxu0 0.0
        %4762 = vmatpush1.msra.mxu0 0.0
        %4763 = vmatprep.subr.mxu0 0.0
        %4764 = vmatpush1.msra.mxu0 0.0
        %4765 = vmatprep.subr.mxu0 0.0
        %4766 = vmatpush1.msra.mxu0 0.0
        %4767 = vmatprep.subr.mxu0 0.0
        %4768 = vmatpush1.msra.mxu0 0.0
        %4769 = vmatprep.subr.mxu0 0.0
        %4770 = vmatpush1.msra.mxu0 0.0
        %4771 = vmatprep.subr.mxu0 0.0
        %4772 = vmatpush1.msra.mxu0 0.0
        %4773 = vmatprep.subr.mxu0 0.0
        %4774 = vmatpush1.msra.mxu0 0.0
        %4775 = vmatprep.subr.mxu0 0.0
        %4776 = vmatpush1.msra.mxu0 0.0
        %4777 = vmatprep.mubr.f32.mxu0 0.0
        %4778 = vmatmul.mubr.f32.gmra.mrb[0].mxu0 %v4709
        %v4779 = vpop.f32.mrb[0].mxu0
        %v4780 = vadd.f32 0.0, %v4779
        %v4781 = vpop.f32.mrb[0].mxu0
        %4782 = vmatprep.mubr.f32.mxu0 0.0
        %4783 = vmatmul.mubr.f32.gmra.mrb[0].mxu0 %v4711
        %v4784 = vpop.f32.mrb[0].mxu0
        %v4785 = vadd.f32 0.0, %v4784
        %v4786 = vpop.f32.mrb[0].mxu0
        %4787 = vdwg.mxu0
        %v4788 = vrot.slane %v4463, 7
        %v4789 = vsel %vm4535, %v4788, %v4462
        %v4790 = vrot.slane %v4464, 6
        %v4791 = vsel %vm4538, %v4790, %v4789
        %v4792 = vrot.slane %v4465, 5
        %v4793 = vsel %vm4541, %v4792, %v4791
        %v4794 = vrot.slane %v4466, 4
        %v4795 = vsel %vm4544, %v4794, %v4793
        %v4796 = vrot.slane %v4467, 3
        %v4797 = vsel %vm4547, %v4796, %v4795
        %v4798 = vrot.slane %v4468, 2
        %v4799 = vsel %vm4550, %v4798, %v4797
        %v4800 = vrot.slane %v4469, 1
        %v4801 = vsel %vm4553, %v4800, %v4799
        %v4802 = vrot.slane %v4471, 7
        %v4803 = vsel %vm4535, %v4802, %v4470
        %v4804 = vrot.slane %v4472, 6
        %v4805 = vsel %vm4538, %v4804, %v4803
        %v4806 = vrot.slane %v4473, 5
        %v4807 = vsel %vm4541, %v4806, %v4805
        %v4808 = vrot.slane %v4474, 4
        %v4809 = vsel %vm4544, %v4808, %v4807
        %v4810 = vrot.slane %v4475, 3
        %v4811 = vsel %vm4547, %v4810, %v4809
        %v4812 = vrot.slane %v4476, 2
        %v4813 = vsel %vm4550, %v4812, %v4811
        %v4814 = vrot.slane %v4477, 1
        %v4815 = vsel %vm4553, %v4814, %v4813
        %4818 = vrot.lane.b32.xlu0 %v4502, 96
        %v4819 = vpop.permute.xlu0 %4818
        %4820 = vrot.lane.b32.xlu0 %v4503, 96
        %v4821 = vpop.permute.xlu0 %4820
        %v4824 = vsel %vm4577, %v4801, 0
        %v4826 = vsel %vm4577, %v4815, 0
        %4828 = vmatprep.subr.mxu0 0.0
        %4829 = vmatpush1.msra.mxu0 %v4819
        %4830 = vmatprep.subr.mxu0 0.0
        %4831 = vmatpush1.msra.mxu0 %v4821
        %4832 = vmatprep.subr.mxu0 0.0
        %4833 = vmatpush1.msra.mxu0 0.0
        %4834 = vmatprep.subr.mxu0 0.0
        %4835 = vmatpush1.msra.mxu0 0.0
        %4836 = vmatprep.subr.mxu0 0.0
        %4837 = vmatpush1.msra.mxu0 0.0
        %4838 = vmatprep.subr.mxu0 0.0
        %4839 = vmatpush1.msra.mxu0 0.0
        %4840 = vmatprep.subr.mxu0 0.0
        %4841 = vmatpush1.msra.mxu0 0.0
        %4842 = vmatprep.subr.mxu0 0.0
        %4843 = vmatpush1.msra.mxu0 0.0
        %4844 = vmatprep.subr.mxu0 0.0
        %4845 = vmatpush1.msra.mxu0 0.0
        %4846 = vmatprep.subr.mxu0 0.0
        %4847 = vmatpush1.msra.mxu0 0.0
        %4848 = vmatprep.subr.mxu0 0.0
        %4849 = vmatpush1.msra.mxu0 0.0
        %4850 = vmatprep.subr.mxu0 0.0
        %4851 = vmatpush1.msra.mxu0 0.0
        %4852 = vmatprep.subr.mxu0 0.0
        %4853 = vmatpush1.msra.mxu0 0.0
        %4854 = vmatprep.subr.mxu0 0.0
        %4855 = vmatpush1.msra.mxu0 0.0
        %4856 = vmatprep.subr.mxu0 0.0
        %4857 = vmatpush1.msra.mxu0 0.0
        %4858 = vmatprep.subr.mxu0 0.0
        %4859 = vmatpush1.msra.mxu0 0.0
        %4860 = vmatprep.subr.mxu0 0.0
        %4861 = vmatpush1.msra.mxu0 0.0
        %4862 = vmatprep.subr.mxu0 0.0
        %4863 = vmatpush1.msra.mxu0 0.0
        %4864 = vmatprep.subr.mxu0 0.0
        %4865 = vmatpush1.msra.mxu0 0.0
        %4866 = vmatprep.subr.mxu0 0.0
        %4867 = vmatpush1.msra.mxu0 0.0
        %4868 = vmatprep.subr.mxu0 0.0
        %4869 = vmatpush1.msra.mxu0 0.0
        %4870 = vmatprep.subr.mxu0 0.0
        %4871 = vmatpush1.msra.mxu0 0.0
        %4872 = vmatprep.subr.mxu0 0.0
        %4873 = vmatpush1.msra.mxu0 0.0
        %4874 = vmatprep.subr.mxu0 0.0
        %4875 = vmatpush1.msra.mxu0 0.0
        %4876 = vmatprep.subr.mxu0 0.0
        %4877 = vmatpush1.msra.mxu0 0.0
        %4878 = vmatprep.subr.mxu0 0.0
        %4879 = vmatpush1.msra.mxu0 0.0
        %4880 = vmatprep.subr.mxu0 0.0
        %4881 = vmatpush1.msra.mxu0 0.0
        %4882 = vmatprep.subr.mxu0 0.0
        %4883 = vmatpush1.msra.mxu0 0.0
        %4884 = vmatprep.subr.mxu0 0.0
        %4885 = vmatpush1.msra.mxu0 0.0
        %4886 = vmatprep.subr.mxu0 0.0
        %4887 = vmatpush1.msra.mxu0 0.0
        %4888 = vmatprep.subr.mxu0 0.0
        %4889 = vmatpush1.msra.mxu0 0.0
        %4890 = vmatprep.subr.mxu0 0.0
        %4891 = vmatpush1.msra.mxu0 0.0
        %4892 = vmatprep.mubr.f32.mxu0 0.0
        %4893 = vmatmul.mubr.f32.gmra.mrb[0].mxu0 %v4824
        %v4894 = vpop.f32.mrb[0].mxu0
        %v4895 = vadd.f32 %v4649, %v4894
        %v4896 = vpop.f32.mrb[0].mxu0
        %4897 = vmatprep.mubr.f32.mxu0 0.0
        %4898 = vmatmul.mubr.f32.gmra.mrb[0].mxu0 %v4826
        %v4899 = vpop.f32.mrb[0].mxu0
        %v4900 = vadd.f32 %v4654, %v4899
        %v4901 = vpop.f32.mrb[0].mxu0
        %4902 = vdwg.mxu0
        %v4903 = vrot.slane %v4479, 7
        %v4904 = vsel %vm4535, %v4903, %v4478
        %v4905 = vrot.slane %v4480, 6
        %v4906 = vsel %vm4538, %v4905, %v4904
        %v4907 = vrot.slane %v4481, 5
        %v4908 = vsel %vm4541, %v4907, %v4906
        %v4909 = vrot.slane %v4482, 4
        %v4910 = vsel %vm4544, %v4909, %v4908
        %v4911 = vrot.slane %v4483, 3
        %v4912 = vsel %vm4547, %v4911, %v4910
        %v4913 = vrot.slane %v4484, 2
        %v4914 = vsel %vm4550, %v4913, %v4912
        %v4915 = vrot.slane %v4485, 1
        %v4916 = vsel %vm4553, %v4915, %v4914
        %v4917 = vrot.slane %v4487, 7
        %v4918 = vsel %vm4535, %v4917, %v4486
        %v4919 = vrot.slane %v4488, 6
        %v4920 = vsel %vm4538, %v4919, %v4918
        %v4921 = vrot.slane %v4489, 5
        %v4922 = vsel %vm4541, %v4921, %v4920
        %v4923 = vrot.slane %v4490, 4
        %v4924 = vsel %vm4544, %v4923, %v4922
        %v4925 = vrot.slane %v4491, 3
        %v4926 = vsel %vm4547, %v4925, %v4924
        %v4927 = vrot.slane %v4492, 2
        %v4928 = vsel %vm4550, %v4927, %v4926
        %v4929 = vrot.slane %v4493, 1
        %v4930 = vsel %vm4553, %v4929, %v4928
        %4933 = vrot.lane.b32.xlu0 %v4504, 96
        %v4934 = vpop.permute.xlu0 %4933
        %4935 = vrot.lane.b32.xlu0 %v4505, 96
        %v4936 = vpop.permute.xlu0 %4935
        %v4939 = vsel %vm4577, %v4916, 0
        %v4941 = vsel %vm4577, %v4930, 0
        %4943 = vmatprep.subr.mxu0 0.0
        %4944 = vmatpush1.msra.mxu0 %v4934
        %4945 = vmatprep.subr.mxu0 0.0
        %4946 = vmatpush1.msra.mxu0 %v4936
        %4947 = vmatprep.subr.mxu0 0.0
        %4948 = vmatpush1.msra.mxu0 0.0
        %4949 = vmatprep.subr.mxu0 0.0
        %4950 = vmatpush1.msra.mxu0 0.0
        %4951 = vmatprep.subr.mxu0 0.0
        %4952 = vmatpush1.msra.mxu0 0.0
        %4953 = vmatprep.subr.mxu0 0.0
        %4954 = vmatpush1.msra.mxu0 0.0
        %4955 = vmatprep.subr.mxu0 0.0
        %4956 = vmatpush1.msra.mxu0 0.0
        %4957 = vmatprep.subr.mxu0 0.0
        %4958 = vmatpush1.msra.mxu0 0.0
        %4959 = vmatprep.subr.mxu0 0.0
        %4960 = vmatpush1.msra.mxu0 0.0
        %4961 = vmatprep.subr.mxu0 0.0
        %4962 = vmatpush1.msra.mxu0 0.0
        %4963 = vmatprep.subr.mxu0 0.0
        %4964 = vmatpush1.msra.mxu0 0.0
        %4965 = vmatprep.subr.mxu0 0.0
        %4966 = vmatpush1.msra.mxu0 0.0
        %4967 = vmatprep.subr.mxu0 0.0
        %4968 = vmatpush1.msra.mxu0 0.0
        %4969 = vmatprep.subr.mxu0 0.0
        %4970 = vmatpush1.msra.mxu0 0.0
        %4971 = vmatprep.subr.mxu0 0.0
        %4972 = vmatpush1.msra.mxu0 0.0
        %4973 = vmatprep.subr.mxu0 0.0
        %4974 = vmatpush1.msra.mxu0 0.0
        %4975 = vmatprep.subr.mxu0 0.0
        %4976 = vmatpush1.msra.mxu0 0.0
        %4977 = vmatprep.subr.mxu0 0.0
        %4978 = vmatpush1.msra.mxu0 0.0
        %4979 = vmatprep.subr.mxu0 0.0
        %4980 = vmatpush1.msra.mxu0 0.0
        %4981 = vmatprep.subr.mxu0 0.0
        %4982 = vmatpush1.msra.mxu0 0.0
        %4983 = vmatprep.subr.mxu0 0.0
        %4984 = vmatpush1.msra.mxu0 0.0
        %4985 = vmatprep.subr.mxu0 0.0
        %4986 = vmatpush1.msra.mxu0 0.0
        %4987 = vmatprep.subr.mxu0 0.0
        %4988 = vmatpush1.msra.mxu0 0.0
        %4989 = vmatprep.subr.mxu0 0.0
        %4990 = vmatpush1.msra.mxu0 0.0
        %4991 = vmatprep.subr.mxu0 0.0
        %4992 = vmatpush1.msra.mxu0 0.0
        %4993 = vmatprep.subr.mxu0 0.0
        %4994 = vmatpush1.msra.mxu0 0.0
        %4995 = vmatprep.subr.mxu0 0.0
        %4996 = vmatpush1.msra.mxu0 0.0
        %4997 = vmatprep.subr.mxu0 0.0
        %4998 = vmatpush1.msra.mxu0 0.0
        %4999 = vmatprep.subr.mxu0 0.0
        %5000 = vmatpush1.msra.mxu0 0.0
        %5001 = vmatprep.subr.mxu0 0.0
        %5002 = vmatpush1.msra.mxu0 0.0
        %5003 = vmatprep.subr.mxu0 0.0
        %5004 = vmatpush1.msra.mxu0 0.0
        %5005 = vmatprep.subr.mxu0 0.0
        %5006 = vmatpush1.msra.mxu0 0.0
        %5007 = vmatprep.mubr.f32.mxu0 0.0
        %5008 = vmatmul.mubr.f32.gmra.mrb[0].mxu0 %v4939
        %v5009 = vpop.f32.mrb[0].mxu0
        %v5010 = vadd.f32 %v4780, %v5009
        %v5011 = vpop.f32.mrb[0].mxu0
        %5012 = vmatprep.mubr.f32.mxu0 0.0
        %5013 = vmatmul.mubr.f32.gmra.mrb[0].mxu0 %v4941
        %v5014 = vpop.f32.mrb[0].mxu0
        %v5015 = vadd.f32 %v4785, %v5014
        %v5016 = vpop.f32.mrb[0].mxu0
        %5017 = vdwg.mxu0
        %v5018 = vlaneseq
        %v5019 = vshrl.u32 %v5018, 7
        %v5020 = vsub.s32 2, %v5019
        %v5021 = vrot.slane %v739, %v5020
        %5023 = vrot.lane.b32.xlu0 %v5021, 32
        %v5024 = vpop.permute.xlu0 %5023
        %v5026 = vmul.f32 %v931, %v5024
        %v5027 = vmul.f32 %v936, %v5024
        %v5028 = vmul.f32 %v941, %v5024
        %v5029 = vmul.f32 %v946, %v5024
        %v5030 = vrot.slane %v4462, 2
        %v5031 = vrot.slane %v4463, 1
        %v5032 = vsel %vm4535, %v5031, %v5030
        %v5033 = vsel %vm4538, %v4464, %v5032
        %v5034 = vrot.slane %v4465, 7
        %v5035 = vsel %vm4541, %v5034, %v5033
        %v5036 = vrot.slane %v4466, 6
        %v5037 = vsel %vm4544, %v5036, %v5035
        %v5038 = vrot.slane %v4467, 5
        %v5039 = vsel %vm4547, %v5038, %v5037
        %v5040 = vrot.slane %v4468, 4
        %v5041 = vsel %vm4550, %v5040, %v5039
        %v5042 = vrot.slane %v4469, 3
        %v5043 = vsel %vm4553, %v5042, %v5041
        %v5044 = vrot.slane %v4470, 2
        %v5045 = vrot.slane %v4471, 1
        %v5046 = vsel %vm4535, %v5045, %v5044
        %v5047 = vsel %vm4538, %v4472, %v5046
        %v5048 = vrot.slane %v4473, 7
        %v5049 = vsel %vm4541, %v5048, %v5047
        %v5050 = vrot.slane %v4474, 6
        %v5051 = vsel %vm4544, %v5050, %v5049
        %v5052 = vrot.slane %v4475, 5
        %v5053 = vsel %vm4547, %v5052, %v5051
        %v5054 = vrot.slane %v4476, 4
        %v5055 = vsel %vm4550, %v5054, %v5053
        %v5056 = vrot.slane %v4477, 3
        %v5057 = vsel %vm4553, %v5056, %v5055
        %5060 = vrot.lane.b32.xlu0 %v5026, 96
        %v5061 = vpop.permute.xlu0 %5060
        %5062 = vrot.lane.b32.xlu0 %v5027, 96
        %v5063 = vpop.permute.xlu0 %5062
        %v5066 = vsel %vm4577, %v5043, 0
        %v5068 = vsel %vm4577, %v5057, 0
        %5070 = vmatprep.subr.mxu0 0.0
        %5071 = vmatpush1.msra.mxu0 %v5061
        %5072 = vmatprep.subr.mxu0 0.0
        %5073 = vmatpush1.msra.mxu0 %v5063
        %5074 = vmatprep.subr.mxu0 0.0
        %5075 = vmatpush1.msra.mxu0 0.0
        %5076 = vmatprep.subr.mxu0 0.0
        %5077 = vmatpush1.msra.mxu0 0.0
        %5078 = vmatprep.subr.mxu0 0.0
        %5079 = vmatpush1.msra.mxu0 0.0
        %5080 = vmatprep.subr.mxu0 0.0
        %5081 = vmatpush1.msra.mxu0 0.0
        %5082 = vmatprep.subr.mxu0 0.0
        %5083 = vmatpush1.msra.mxu0 0.0
        %5084 = vmatprep.subr.mxu0 0.0
        %5085 = vmatpush1.msra.mxu0 0.0
        %5086 = vmatprep.subr.mxu0 0.0
        %5087 = vmatpush1.msra.mxu0 0.0
        %5088 = vmatprep.subr.mxu0 0.0
        %5089 = vmatpush1.msra.mxu0 0.0
        %5090 = vmatprep.subr.mxu0 0.0
        %5091 = vmatpush1.msra.mxu0 0.0
        %5092 = vmatprep.subr.mxu0 0.0
        %5093 = vmatpush1.msra.mxu0 0.0
        %5094 = vmatprep.subr.mxu0 0.0
        %5095 = vmatpush1.msra.mxu0 0.0
        %5096 = vmatprep.subr.mxu0 0.0
        %5097 = vmatpush1.msra.mxu0 0.0
        %5098 = vmatprep.subr.mxu0 0.0
        %5099 = vmatpush1.msra.mxu0 0.0
        %5100 = vmatprep.subr.mxu0 0.0
        %5101 = vmatpush1.msra.mxu0 0.0
        %5102 = vmatprep.subr.mxu0 0.0
        %5103 = vmatpush1.msra.mxu0 0.0
        %5104 = vmatprep.subr.mxu0 0.0
        %5105 = vmatpush1.msra.mxu0 0.0
        %5106 = vmatprep.subr.mxu0 0.0
        %5107 = vmatpush1.msra.mxu0 0.0
        %5108 = vmatprep.subr.mxu0 0.0
        %5109 = vmatpush1.msra.mxu0 0.0
        %5110 = vmatprep.subr.mxu0 0.0
        %5111 = vmatpush1.msra.mxu0 0.0
        %5112 = vmatprep.subr.mxu0 0.0
        %5113 = vmatpush1.msra.mxu0 0.0
        %5114 = vmatprep.subr.mxu0 0.0
        %5115 = vmatpush1.msra.mxu0 0.0
        %5116 = vmatprep.subr.mxu0 0.0
        %5117 = vmatpush1.msra.mxu0 0.0
        %5118 = vmatprep.subr.mxu0 0.0
        %5119 = vmatpush1.msra.mxu0 0.0
        %5120 = vmatprep.subr.mxu0 0.0
        %5121 = vmatpush1.msra.mxu0 0.0
        %5122 = vmatprep.subr.mxu0 0.0
        %5123 = vmatpush1.msra.mxu0 0.0
        %5124 = vmatprep.subr.mxu0 0.0
        %5125 = vmatpush1.msra.mxu0 0.0
        %5126 = vmatprep.subr.mxu0 0.0
        %5127 = vmatpush1.msra.mxu0 0.0
        %5128 = vmatprep.subr.mxu0 0.0
        %5129 = vmatpush1.msra.mxu0 0.0
        %5130 = vmatprep.subr.mxu0 0.0
        %5131 = vmatpush1.msra.mxu0 0.0
        %5132 = vmatprep.subr.mxu0 0.0
        %5133 = vmatpush1.msra.mxu0 0.0
        %5134 = vmatprep.mubr.f32.mxu0 0.0
        %5135 = vmatmul.mubr.f32.gmra.mrb[0].mxu0 %v5066
        %v5136 = vpop.f32.mrb[0].mxu0
        %v5137 = vadd.f32 0.0, %v5136
        %v5138 = vpop.f32.mrb[0].mxu0
        %5139 = vmatprep.mubr.f32.mxu0 0.0
        %5140 = vmatmul.mubr.f32.gmra.mrb[0].mxu0 %v5068
        %v5141 = vpop.f32.mrb[0].mxu0
        %v5142 = vadd.f32 0.0, %v5141
        %v5143 = vpop.f32.mrb[0].mxu0
        %5144 = vdwg.mxu0
        %v5145 = vrot.slane %v4478, 2
        %v5146 = vrot.slane %v4479, 1
        %v5147 = vsel %vm4535, %v5146, %v5145
        %v5148 = vsel %vm4538, %v4480, %v5147
        %v5149 = vrot.slane %v4481, 7
        %v5150 = vsel %vm4541, %v5149, %v5148
        %v5151 = vrot.slane %v4482, 6
        %v5152 = vsel %vm4544, %v5151, %v5150
        %v5153 = vrot.slane %v4483, 5
        %v5154 = vsel %vm4547, %v5153, %v5152
        %v5155 = vrot.slane %v4484, 4
        %v5156 = vsel %vm4550, %v5155, %v5154
        %v5157 = vrot.slane %v4485, 3
        %v5158 = vsel %vm4553, %v5157, %v5156
        %v5159 = vrot.slane %v4486, 2
        %v5160 = vrot.slane %v4487, 1
        %v5161 = vsel %vm4535, %v5160, %v5159
        %v5162 = vsel %vm4538, %v4488, %v5161
        %v5163 = vrot.slane %v4489, 7
        %v5164 = vsel %vm4541, %v5163, %v5162
        %v5165 = vrot.slane %v4490, 6
        %v5166 = vsel %vm4544, %v5165, %v5164
        %v5167 = vrot.slane %v4491, 5
        %v5168 = vsel %vm4547, %v5167, %v5166
        %v5169 = vrot.slane %v4492, 4
        %v5170 = vsel %vm4550, %v5169, %v5168
        %v5171 = vrot.slane %v4493, 3
        %v5172 = vsel %vm4553, %v5171, %v5170
        %5175 = vrot.lane.b32.xlu0 %v5028, 96
        %v5176 = vpop.permute.xlu0 %5175
        %5177 = vrot.lane.b32.xlu0 %v5029, 96
        %v5178 = vpop.permute.xlu0 %5177
        %v5181 = vsel %vm4577, %v5158, 0
        %v5183 = vsel %vm4577, %v5172, 0
        %5185 = vmatprep.subr.mxu0 0.0
        %5186 = vmatpush1.msra.mxu0 %v5176
        %5187 = vmatprep.subr.mxu0 0.0
        %5188 = vmatpush1.msra.mxu0 %v5178
        %5189 = vmatprep.subr.mxu0 0.0
        %5190 = vmatpush1.msra.mxu0 0.0
        %5191 = vmatprep.subr.mxu0 0.0
        %5192 = vmatpush1.msra.mxu0 0.0
        %5193 = vmatprep.subr.mxu0 0.0
        %5194 = vmatpush1.msra.mxu0 0.0
        %5195 = vmatprep.subr.mxu0 0.0
        %5196 = vmatpush1.msra.mxu0 0.0
        %5197 = vmatprep.subr.mxu0 0.0
        %5198 = vmatpush1.msra.mxu0 0.0
        %5199 = vmatprep.subr.mxu0 0.0
        %5200 = vmatpush1.msra.mxu0 0.0
        %5201 = vmatprep.subr.mxu0 0.0
        %5202 = vmatpush1.msra.mxu0 0.0
        %5203 = vmatprep.subr.mxu0 0.0
        %5204 = vmatpush1.msra.mxu0 0.0
        %5205 = vmatprep.subr.mxu0 0.0
        %5206 = vmatpush1.msra.mxu0 0.0
        %5207 = vmatprep.subr.mxu0 0.0
        %5208 = vmatpush1.msra.mxu0 0.0
        %5209 = vmatprep.subr.mxu0 0.0
        %5210 = vmatpush1.msra.mxu0 0.0
        %5211 = vmatprep.subr.mxu0 0.0
        %5212 = vmatpush1.msra.mxu0 0.0
        %5213 = vmatprep.subr.mxu0 0.0
        %5214 = vmatpush1.msra.mxu0 0.0
        %5215 = vmatprep.subr.mxu0 0.0
        %5216 = vmatpush1.msra.mxu0 0.0
        %5217 = vmatprep.subr.mxu0 0.0
        %5218 = vmatpush1.msra.mxu0 0.0
        %5219 = vmatprep.subr.mxu0 0.0
        %5220 = vmatpush1.msra.mxu0 0.0
        %5221 = vmatprep.subr.mxu0 0.0
        %5222 = vmatpush1.msra.mxu0 0.0
        %5223 = vmatprep.subr.mxu0 0.0
        %5224 = vmatpush1.msra.mxu0 0.0
        %5225 = vmatprep.subr.mxu0 0.0
        %5226 = vmatpush1.msra.mxu0 0.0
        %5227 = vmatprep.subr.mxu0 0.0
        %5228 = vmatpush1.msra.mxu0 0.0
        %5229 = vmatprep.subr.mxu0 0.0
        %5230 = vmatpush1.msra.mxu0 0.0
        %5231 = vmatprep.subr.mxu0 0.0
        %5232 = vmatpush1.msra.mxu0 0.0
        %5233 = vmatprep.subr.mxu0 0.0
        %5234 = vmatpush1.msra.mxu0 0.0
        %5235 = vmatprep.subr.mxu0 0.0
        %5236 = vmatpush1.msra.mxu0 0.0
        %5237 = vmatprep.subr.mxu0 0.0
        %5238 = vmatpush1.msra.mxu0 0.0
        %5239 = vmatprep.subr.mxu0 0.0
        %5240 = vmatpush1.msra.mxu0 0.0
        %5241 = vmatprep.subr.mxu0 0.0
        %5242 = vmatpush1.msra.mxu0 0.0
        %5243 = vmatprep.subr.mxu0 0.0
        %5244 = vmatpush1.msra.mxu0 0.0
        %5245 = vmatprep.subr.mxu0 0.0
        %5246 = vmatpush1.msra.mxu0 0.0
        %5247 = vmatprep.subr.mxu0 0.0
        %5248 = vmatpush1.msra.mxu0 0.0
        %5249 = vmatprep.mubr.f32.mxu0 0.0
        %5250 = vmatmul.mubr.f32.gmra.mrb[0].mxu0 %v5181
        %v5251 = vpop.f32.mrb[0].mxu0
        %v5252 = vadd.f32 0.0, %v5251
        %v5253 = vpop.f32.mrb[0].mxu0
        %5254 = vmatprep.mubr.f32.mxu0 0.0
        %5255 = vmatmul.mubr.f32.gmra.mrb[0].mxu0 %v5183
        %v5256 = vpop.f32.mrb[0].mxu0
        %v5257 = vadd.f32 0.0, %v5256
        %v5258 = vpop.f32.mrb[0].mxu0
        %5259 = vdwg.mxu0
        %v5260 = vadd.f32 %v4895, %v5137
        %v5261 = vadd.f32 %v4900, %v5142
        %v5262 = vadd.f32 %v5010, %v5252
        %v5263 = vadd.f32 %v5015, %v5257
        %v5264 = vlaneseq
        %v5265 = vshrl.u32 %v5264, 7
        %v5266 = vsub.s32 3, %v5265
        %v5267 = vrot.slane %v739, %v5266
        %5269 = vrot.lane.b32.xlu0 %v5267, 32
        %v5270 = vpop.permute.xlu0 %5269
        %v5272 = vmul.f32 %v931, %v5270
        %v5273 = vmul.f32 %v936, %v5270
        %v5274 = vmul.f32 %v941, %v5270
        %v5275 = vmul.f32 %v946, %v5270
        %v5276 = vrot.slane %v4462, 3
        %v5277 = vrot.slane %v4463, 2
        %v5278 = vsel %vm4535, %v5277, %v5276
        %v5279 = vrot.slane %v4464, 1
        %v5280 = vsel %vm4538, %v5279, %v5278
        %v5281 = vsel %vm4541, %v4465, %v5280
        %v5282 = vrot.slane %v4466, 7
        %v5283 = vsel %vm4544, %v5282, %v5281
        %v5284 = vrot.slane %v4467, 6
        %v5285 = vsel %vm4547, %v5284, %v5283
        %v5286 = vrot.slane %v4468, 5
        %v5287 = vsel %vm4550, %v5286, %v5285
        %v5288 = vrot.slane %v4469, 4
        %v5289 = vsel %vm4553, %v5288, %v5287
        %v5290 = vrot.slane %v4470, 3
        %v5291 = vrot.slane %v4471, 2
        %v5292 = vsel %vm4535, %v5291, %v5290
        %v5293 = vrot.slane %v4472, 1
        %v5294 = vsel %vm4538, %v5293, %v5292
        %v5295 = vsel %vm4541, %v4473, %v5294
        %v5296 = vrot.slane %v4474, 7
        %v5297 = vsel %vm4544, %v5296, %v5295
        %v5298 = vrot.slane %v4475, 6
        %v5299 = vsel %vm4547, %v5298, %v5297
        %v5300 = vrot.slane %v4476, 5
        %v5301 = vsel %vm4550, %v5300, %v5299
        %v5302 = vrot.slane %v4477, 4
        %v5303 = vsel %vm4553, %v5302, %v5301
        %5306 = vrot.lane.b32.xlu0 %v5272, 96
        %v5307 = vpop.permute.xlu0 %5306
        %5308 = vrot.lane.b32.xlu0 %v5273, 96
        %v5309 = vpop.permute.xlu0 %5308
        %v5312 = vsel %vm4577, %v5289, 0
        %v5314 = vsel %vm4577, %v5303, 0
        %5316 = vmatprep.subr.mxu0 0.0
        %5317 = vmatpush1.msra.mxu0 %v5307
        %5318 = vmatprep.subr.mxu0 0.0
        %5319 = vmatpush1.msra.mxu0 %v5309
        %5320 = vmatprep.subr.mxu0 0.0
        %5321 = vmatpush1.msra.mxu0 0.0
        %5322 = vmatprep.subr.mxu0 0.0
        %5323 = vmatpush1.msra.mxu0 0.0
        %5324 = vmatprep.subr.mxu0 0.0
        %5325 = vmatpush1.msra.mxu0 0.0
        %5326 = vmatprep.subr.mxu0 0.0
        %5327 = vmatpush1.msra.mxu0 0.0
        %5328 = vmatprep.subr.mxu0 0.0
        %5329 = vmatpush1.msra.mxu0 0.0
        %5330 = vmatprep.subr.mxu0 0.0
        %5331 = vmatpush1.msra.mxu0 0.0
        %5332 = vmatprep.subr.mxu0 0.0
        %5333 = vmatpush1.msra.mxu0 0.0
        %5334 = vmatprep.subr.mxu0 0.0
        %5335 = vmatpush1.msra.mxu0 0.0
        %5336 = vmatprep.subr.mxu0 0.0
        %5337 = vmatpush1.msra.mxu0 0.0
        %5338 = vmatprep.subr.mxu0 0.0
        %5339 = vmatpush1.msra.mxu0 0.0
        %5340 = vmatprep.subr.mxu0 0.0
        %5341 = vmatpush1.msra.mxu0 0.0
        %5342 = vmatprep.subr.mxu0 0.0
        %5343 = vmatpush1.msra.mxu0 0.0
        %5344 = vmatprep.subr.mxu0 0.0
        %5345 = vmatpush1.msra.mxu0 0.0
        %5346 = vmatprep.subr.mxu0 0.0
        %5347 = vmatpush1.msra.mxu0 0.0
        %5348 = vmatprep.subr.mxu0 0.0
        %5349 = vmatpush1.msra.mxu0 0.0
        %5350 = vmatprep.subr.mxu0 0.0
        %5351 = vmatpush1.msra.mxu0 0.0
        %5352 = vmatprep.subr.mxu0 0.0
        %5353 = vmatpush1.msra.mxu0 0.0
        %5354 = vmatprep.subr.mxu0 0.0
        %5355 = vmatpush1.msra.mxu0 0.0
        %5356 = vmatprep.subr.mxu0 0.0
        %5357 = vmatpush1.msra.mxu0 0.0
        %5358 = vmatprep.subr.mxu0 0.0
        %5359 = vmatpush1.msra.mxu0 0.0
        %5360 = vmatprep.subr.mxu0 0.0
        %5361 = vmatpush1.msra.mxu0 0.0
        %5362 = vmatprep.subr.mxu0 0.0
        %5363 = vmatpush1.msra.mxu0 0.0
        %5364 = vmatprep.subr.mxu0 0.0
        %5365 = vmatpush1.msra.mxu0 0.0
        %5366 = vmatprep.subr.mxu0 0.0
        %5367 = vmatpush1.msra.mxu0 0.0
        %5368 = vmatprep.subr.mxu0 0.0
        %5369 = vmatpush1.msra.mxu0 0.0
        %5370 = vmatprep.subr.mxu0 0.0
        %5371 = vmatpush1.msra.mxu0 0.0
        %5372 = vmatprep.subr.mxu0 0.0
        %5373 = vmatpush1.msra.mxu0 0.0
        %5374 = vmatprep.subr.mxu0 0.0
        %5375 = vmatpush1.msra.mxu0 0.0
        %5376 = vmatprep.subr.mxu0 0.0
        %5377 = vmatpush1.msra.mxu0 0.0
        %5378 = vmatprep.subr.mxu0 0.0
        %5379 = vmatpush1.msra.mxu0 0.0
        %5380 = vmatprep.mubr.f32.mxu0 0.0
        %5381 = vmatmul.mubr.f32.gmra.mrb[0].mxu0 %v5312
        %v5382 = vpop.f32.mrb[0].mxu0
        %v5383 = vadd.f32 0.0, %v5382
        %v5384 = vpop.f32.mrb[0].mxu0
        %5385 = vmatprep.mubr.f32.mxu0 0.0
        %5386 = vmatmul.mubr.f32.gmra.mrb[0].mxu0 %v5314
        %v5387 = vpop.f32.mrb[0].mxu0
        %v5388 = vadd.f32 0.0, %v5387
        %v5389 = vpop.f32.mrb[0].mxu0
        %5390 = vdwg.mxu0
        %v5391 = vrot.slane %v4478, 3
        %v5392 = vrot.slane %v4479, 2
        %v5393 = vsel %vm4535, %v5392, %v5391
        %v5394 = vrot.slane %v4480, 1
        %v5395 = vsel %vm4538, %v5394, %v5393
        %v5396 = vsel %vm4541, %v4481, %v5395
        %v5397 = vrot.slane %v4482, 7
        %v5398 = vsel %vm4544, %v5397, %v5396
        %v5399 = vrot.slane %v4483, 6
        %v5400 = vsel %vm4547, %v5399, %v5398
        %v5401 = vrot.slane %v4484, 5
        %v5402 = vsel %vm4550, %v5401, %v5400
        %v5403 = vrot.slane %v4485, 4
        %v5404 = vsel %vm4553, %v5403, %v5402
        %v5405 = vrot.slane %v4486, 3
        %v5406 = vrot.slane %v4487, 2
        %v5407 = vsel %vm4535, %v5406, %v5405
        %v5408 = vrot.slane %v4488, 1
        %v5409 = vsel %vm4538, %v5408, %v5407
        %v5410 = vsel %vm4541, %v4489, %v5409
        %v5411 = vrot.slane %v4490, 7
        %v5412 = vsel %vm4544, %v5411, %v5410
        %v5413 = vrot.slane %v4491, 6
        %v5414 = vsel %vm4547, %v5413, %v5412
        %v5415 = vrot.slane %v4492, 5
        %v5416 = vsel %vm4550, %v5415, %v5414
        %v5417 = vrot.slane %v4493, 4
        %v5418 = vsel %vm4553, %v5417, %v5416
        %5421 = vrot.lane.b32.xlu0 %v5274, 96
        %v5422 = vpop.permute.xlu0 %5421
        %5423 = vrot.lane.b32.xlu0 %v5275, 96
        %v5424 = vpop.permute.xlu0 %5423
        %v5427 = vsel %vm4577, %v5404, 0
        %v5429 = vsel %vm4577, %v5418, 0
        %5431 = vmatprep.subr.mxu0 0.0
        %5432 = vmatpush1.msra.mxu0 %v5422
        %5433 = vmatprep.subr.mxu0 0.0
        %5434 = vmatpush1.msra.mxu0 %v5424
        %5435 = vmatprep.subr.mxu0 0.0
        %5436 = vmatpush1.msra.mxu0 0.0
        %5437 = vmatprep.subr.mxu0 0.0
        %5438 = vmatpush1.msra.mxu0 0.0
        %5439 = vmatprep.subr.mxu0 0.0
        %5440 = vmatpush1.msra.mxu0 0.0
        %5441 = vmatprep.subr.mxu0 0.0
        %5442 = vmatpush1.msra.mxu0 0.0
        %5443 = vmatprep.subr.mxu0 0.0
        %5444 = vmatpush1.msra.mxu0 0.0
        %5445 = vmatprep.subr.mxu0 0.0
        %5446 = vmatpush1.msra.mxu0 0.0
        %5447 = vmatprep.subr.mxu0 0.0
        %5448 = vmatpush1.msra.mxu0 0.0
        %5449 = vmatprep.subr.mxu0 0.0
        %5450 = vmatpush1.msra.mxu0 0.0
        %5451 = vmatprep.subr.mxu0 0.0
        %5452 = vmatpush1.msra.mxu0 0.0
        %5453 = vmatprep.subr.mxu0 0.0
        %5454 = vmatpush1.msra.mxu0 0.0
        %5455 = vmatprep.subr.mxu0 0.0
        %5456 = vmatpush1.msra.mxu0 0.0
        %5457 = vmatprep.subr.mxu0 0.0
        %5458 = vmatpush1.msra.mxu0 0.0
        %5459 = vmatprep.subr.mxu0 0.0
        %5460 = vmatpush1.msra.mxu0 0.0
        %5461 = vmatprep.subr.mxu0 0.0
        %5462 = vmatpush1.msra.mxu0 0.0
        %5463 = vmatprep.subr.mxu0 0.0
        %5464 = vmatpush1.msra.mxu0 0.0
        %5465 = vmatprep.subr.mxu0 0.0
        %5466 = vmatpush1.msra.mxu0 0.0
        %5467 = vmatprep.subr.mxu0 0.0
        %5468 = vmatpush1.msra.mxu0 0.0
        %5469 = vmatprep.subr.mxu0 0.0
        %5470 = vmatpush1.msra.mxu0 0.0
        %5471 = vmatprep.subr.mxu0 0.0
        %5472 = vmatpush1.msra.mxu0 0.0
        %5473 = vmatprep.subr.mxu0 0.0
        %5474 = vmatpush1.msra.mxu0 0.0
        %5475 = vmatprep.subr.mxu0 0.0
        %5476 = vmatpush1.msra.mxu0 0.0
        %5477 = vmatprep.subr.mxu0 0.0
        %5478 = vmatpush1.msra.mxu0 0.0
        %5479 = vmatprep.subr.mxu0 0.0
        %5480 = vmatpush1.msra.mxu0 0.0
        %5481 = vmatprep.subr.mxu0 0.0
        %5482 = vmatpush1.msra.mxu0 0.0
        %5483 = vmatprep.subr.mxu0 0.0
        %5484 = vmatpush1.msra.mxu0 0.0
        %5485 = vmatprep.subr.mxu0 0.0
        %5486 = vmatpush1.msra.mxu0 0.0
        %5487 = vmatprep.subr.mxu0 0.0
        %5488 = vmatpush1.msra.mxu0 0.0
        %5489 = vmatprep.subr.mxu0 0.0
        %5490 = vmatpush1.msra.mxu0 0.0
        %5491 = vmatprep.subr.mxu0 0.0
        %5492 = vmatpush1.msra.mxu0 0.0
        %5493 = vmatprep.subr.mxu0 0.0
        %5494 = vmatpush1.msra.mxu0 0.0
        %5495 = vmatprep.mubr.f32.mxu0 0.0
        %5496 = vmatmul.mubr.f32.gmra.mrb[0].mxu0 %v5427
        %v5497 = vpop.f32.mrb[0].mxu0
        %v5498 = vadd.f32 0.0, %v5497
        %v5499 = vpop.f32.mrb[0].mxu0
        %5500 = vmatprep.mubr.f32.mxu0 0.0
        %5501 = vmatmul.mubr.f32.gmra.mrb[0].mxu0 %v5429
        %v5502 = vpop.f32.mrb[0].mxu0
        %v5503 = vadd.f32 0.0, %v5502
        %v5504 = vpop.f32.mrb[0].mxu0
        %5505 = vdwg.mxu0
        %v5506 = vadd.f32 %v5260, %v5383
        %v5507 = vadd.f32 %v5261, %v5388
        %v5508 = vadd.f32 %v5262, %v5498
        %v5509 = vadd.f32 %v5263, %v5503
        %s5510 = scalar_lea.vmem [#allocation4], 32
        %v5511 = vld [vmem:[%s5510] sm:$0xff]
        %v5512 = vld [vmem:[%s5510 + $0x8] sm:$0xff]
        %v5513 = vld [vmem:[%s5510 + $0x10] sm:$0xff]
        %v5514 = vld [vmem:[%s5510 + $0x18] sm:$0xff]
        %v5516 = vsel %vm851, %v5506, 0
        %v5519 = vsel %vm851, %v5507, 0
        %v5522 = vsel %vm851, %v5508, 0
        %v5525 = vsel %vm851, %v5509, 0
        %5527 = vmatprep.subr.mxu0 0.0
        %5528 = vmatpush1.msra.mxu0 %v5511
        %5529 = vmatprep.subr.mxu0 0.0
        %5530 = vmatpush1.msra.mxu0 %v5512
        %5531 = vmatprep.subr.mxu0 0.0
        %5532 = vmatpush1.msra.mxu0 %v5513
        %5533 = vmatprep.subr.mxu0 0.0
        %5534 = vmatpush1.msra.mxu0 %v5514
        %5535 = vmatprep.subr.mxu0 0.0
        %5536 = vmatpush1.msra.mxu0 0.0
        %5537 = vmatprep.subr.mxu0 0.0
        %5538 = vmatpush1.msra.mxu0 0.0
        %5539 = vmatprep.subr.mxu0 0.0
        %5540 = vmatpush1.msra.mxu0 0.0
        %5541 = vmatprep.subr.mxu0 0.0
        %5542 = vmatpush1.msra.mxu0 0.0
        %5543 = vmatprep.subr.mxu0 0.0
        %5544 = vmatpush1.msra.mxu0 0.0
        %5545 = vmatprep.subr.mxu0 0.0
        %5546 = vmatpush1.msra.mxu0 0.0
        %5547 = vmatprep.subr.mxu0 0.0
        %5548 = vmatpush1.msra.mxu0 0.0
        %5549 = vmatprep.subr.mxu0 0.0
        %5550 = vmatpush1.msra.mxu0 0.0
        %5551 = vmatprep.subr.mxu0 0.0
        %5552 = vmatpush1.msra.mxu0 0.0
        %5553 = vmatprep.subr.mxu0 0.0
        %5554 = vmatpush1.msra.mxu0 0.0
        %5555 = vmatprep.subr.mxu0 0.0
        %5556 = vmatpush1.msra.mxu0 0.0
        %5557 = vmatprep.subr.mxu0 0.0
        %5558 = vmatpush1.msra.mxu0 0.0
        %5559 = vmatprep.subr.mxu0 0.0
        %5560 = vmatpush1.msra.mxu0 0.0
        %5561 = vmatprep.subr.mxu0 0.0
        %5562 = vmatpush1.msra.mxu0 0.0
        %5563 = vmatprep.subr.mxu0 0.0
        %5564 = vmatpush1.msra.mxu0 0.0
        %5565 = vmatprep.subr.mxu0 0.0
        %5566 = vmatpush1.msra.mxu0 0.0
        %5567 = vmatprep.subr.mxu0 0.0
        %5568 = vmatpush1.msra.mxu0 0.0
        %5569 = vmatprep.subr.mxu0 0.0
        %5570 = vmatpush1.msra.mxu0 0.0
        %5571 = vmatprep.subr.mxu0 0.0
        %5572 = vmatpush1.msra.mxu0 0.0
        %5573 = vmatprep.subr.mxu0 0.0
        %5574 = vmatpush1.msra.mxu0 0.0
        %5575 = vmatprep.subr.mxu0 0.0
        %5576 = vmatpush1.msra.mxu0 0.0
        %5577 = vmatprep.subr.mxu0 0.0
        %5578 = vmatpush1.msra.mxu0 0.0
        %5579 = vmatprep.subr.mxu0 0.0
        %5580 = vmatpush1.msra.mxu0 0.0
        %5581 = vmatprep.subr.mxu0 0.0
        %5582 = vmatpush1.msra.mxu0 0.0
        %5583 = vmatprep.subr.mxu0 0.0
        %5584 = vmatpush1.msra.mxu0 0.0
        %5585 = vmatprep.subr.mxu0 0.0
        %5586 = vmatpush1.msra.mxu0 0.0
        %5587 = vmatprep.subr.mxu0 0.0
        %5588 = vmatpush1.msra.mxu0 0.0
        %5589 = vmatprep.subr.mxu0 0.0
        %5590 = vmatpush1.msra.mxu0 0.0
        %5591 = vmatprep.mubr.f32.mxu0 0.0
        %5592 = vmatmul.mubr.f32.gmra.mrb[0].mxu0 %v5516
        %v5593 = vpop.f32.mrb[0].mxu0
        %v5594 = vadd.f32 0.0, %v5593
        %v5595 = vpop.f32.mrb[0].mxu0
        %5596 = vmatprep.mubr.f32.mxu0 0.0
        %5597 = vmatmul.mubr.f32.gmra.mrb[0].mxu0 %v5519
        %v5598 = vpop.f32.mrb[0].mxu0
        %v5599 = vadd.f32 0.0, %v5598
        %v5600 = vpop.f32.mrb[0].mxu0
        %5601 = vmatprep.mubr.f32.mxu0 0.0
        %5602 = vmatmul.mubr.f32.gmra.mrb[0].mxu0 %v5522
        %v5603 = vpop.f32.mrb[0].mxu0
        %v5604 = vadd.f32 0.0, %v5603
        %v5605 = vpop.f32.mrb[0].mxu0
        %5606 = vmatprep.mubr.f32.mxu0 0.0
        %5607 = vmatmul.mubr.f32.gmra.mrb[0].mxu0 %v5525
        %v5608 = vpop.f32.mrb[0].mxu0
        %v5609 = vadd.f32 0.0, %v5608
        %v5610 = vpop.f32.mrb[0].mxu0
        %5611 = vdwg.mxu0
        %v5616 = vcombine.high %v5594, %v5594
        %v5618 = vunpack.c.l.s4 1966171168
        %v5619 = vunpack.c.0.s8 %v5618
        %v5620 = vlaneseq
        %v5621 = vshrl.u32 %v5620, 7
        %v5622 = vsub.s32 %v5619, %v5621
        %v5623 = vrot.slane %v5594, %v5622
        %v5625 = vunpack.c.l.s4 1966171168
        %v5626 = vunpack.c.0.s8 %v5625
        %v5627 = vlaneseq
        %v5628 = vshrl.u32 %v5627, 7
        %v5629 = vsub.s32 %v5626, %v5628
        %v5630 = vrot.slane %v5616, %v5629
        %v5631 = vcombine.high %v5623, %v5623
        %v5632 = vcombine.high %v5630, %v5630
        %v5634 = vunpack.c.l.s4 1966171168
        %v5635 = vunpack.c.0.s8 %v5634
        %v5636 = vlaneseq
        %v5637 = vshrl.u32 %v5636, 7
        %v5638 = vsub.s32 %v5635, %v5637
        %v5639 = vrot.slane %v5623, %v5638
        %v5641 = vunpack.c.l.s4 1966171168
        %v5642 = vunpack.c.0.s8 %v5641
        %v5643 = vlaneseq
        %v5644 = vshrl.u32 %v5643, 7
        %v5645 = vsub.s32 %v5642, %v5644
        %v5646 = vrot.slane %v5630, %v5645
        %v5648 = vunpack.c.l.s4 1966171168
        %v5649 = vunpack.c.0.s8 %v5648
        %v5650 = vlaneseq
        %v5651 = vshrl.u32 %v5650, 7
        %v5652 = vsub.s32 %v5649, %v5651
        %v5653 = vrot.slane %v5631, %v5652
        %v5655 = vunpack.c.l.s4 1966171168
        %v5656 = vunpack.c.0.s8 %v5655
        %v5657 = vlaneseq
        %v5658 = vshrl.u32 %v5657, 7
        %v5659 = vsub.s32 %v5656, %v5658
        %v5660 = vrot.slane %v5632, %v5659
        %v5661 = vcombine.high %v5639, %v5639
        %v5662 = vcombine.high %v5646, %v5646
        %v5663 = vcombine.high %v5653, %v5653
        %v5664 = vcombine.high %v5660, %v5660
        %v5665 = vcombine.high %v5599, %v5599
        %v5667 = vunpack.c.l.s4 1966171168
        %v5668 = vunpack.c.0.s8 %v5667
        %v5669 = vlaneseq
        %v5670 = vshrl.u32 %v5669, 7
        %v5671 = vsub.s32 %v5668, %v5670
        %v5672 = vrot.slane %v5599, %v5671
        %v5674 = vunpack.c.l.s4 1966171168
        %v5675 = vunpack.c.0.s8 %v5674
        %v5676 = vlaneseq
        %v5677 = vshrl.u32 %v5676, 7
        %v5678 = vsub.s32 %v5675, %v5677
        %v5679 = vrot.slane %v5665, %v5678
        %v5680 = vcombine.high %v5672, %v5672
        %v5681 = vcombine.high %v5679, %v5679
        %v5683 = vunpack.c.l.s4 1966171168
        %v5684 = vunpack.c.0.s8 %v5683
        %v5685 = vlaneseq
        %v5686 = vshrl.u32 %v5685, 7
        %v5687 = vsub.s32 %v5684, %v5686
        %v5688 = vrot.slane %v5672, %v5687
        %v5690 = vunpack.c.l.s4 1966171168
        %v5691 = vunpack.c.0.s8 %v5690
        %v5692 = vlaneseq
        %v5693 = vshrl.u32 %v5692, 7
        %v5694 = vsub.s32 %v5691, %v5693
        %v5695 = vrot.slane %v5679, %v5694
        %v5697 = vunpack.c.l.s4 1966171168
        %v5698 = vunpack.c.0.s8 %v5697
        %v5699 = vlaneseq
        %v5700 = vshrl.u32 %v5699, 7
        %v5701 = vsub.s32 %v5698, %v5700
        %v5702 = vrot.slane %v5680, %v5701
        %v5704 = vunpack.c.l.s4 1966171168
        %v5705 = vunpack.c.0.s8 %v5704
        %v5706 = vlaneseq
        %v5707 = vshrl.u32 %v5706, 7
        %v5708 = vsub.s32 %v5705, %v5707
        %v5709 = vrot.slane %v5681, %v5708
        %v5710 = vcombine.high %v5688, %v5688
        %v5711 = vcombine.high %v5695, %v5695
        %v5712 = vcombine.high %v5702, %v5702
        %v5713 = vcombine.high %v5709, %v5709
        %v5714 = vcombine.high %v5604, %v5604
        %v5716 = vunpack.c.l.s4 1966171168
        %v5717 = vunpack.c.0.s8 %v5716
        %v5718 = vlaneseq
        %v5719 = vshrl.u32 %v5718, 7
        %v5720 = vsub.s32 %v5717, %v5719
        %v5721 = vrot.slane %v5604, %v5720
        %v5723 = vunpack.c.l.s4 1966171168
        %v5724 = vunpack.c.0.s8 %v5723
        %v5725 = vlaneseq
        %v5726 = vshrl.u32 %v5725, 7
        %v5727 = vsub.s32 %v5724, %v5726
        %v5728 = vrot.slane %v5714, %v5727
        %v5729 = vcombine.high %v5721, %v5721
        %v5730 = vcombine.high %v5728, %v5728
        %v5732 = vunpack.c.l.s4 1966171168
        %v5733 = vunpack.c.0.s8 %v5732
        %v5734 = vlaneseq
        %v5735 = vshrl.u32 %v5734, 7
        %v5736 = vsub.s32 %v5733, %v5735
        %v5737 = vrot.slane %v5721, %v5736
        %v5739 = vunpack.c.l.s4 1966171168
        %v5740 = vunpack.c.0.s8 %v5739
        %v5741 = vlaneseq
        %v5742 = vshrl.u32 %v5741, 7
        %v5743 = vsub.s32 %v5740, %v5742
        %v5744 = vrot.slane %v5728, %v5743
        %v5746 = vunpack.c.l.s4 1966171168
        %v5747 = vunpack.c.0.s8 %v5746
        %v5748 = vlaneseq
        %v5749 = vshrl.u32 %v5748, 7
        %v5750 = vsub.s32 %v5747, %v5749
        %v5751 = vrot.slane %v5729, %v5750
        %v5753 = vunpack.c.l.s4 1966171168
        %v5754 = vunpack.c.0.s8 %v5753
        %v5755 = vlaneseq
        %v5756 = vshrl.u32 %v5755, 7
        %v5757 = vsub.s32 %v5754, %v5756
        %v5758 = vrot.slane %v5730, %v5757
        %v5759 = vcombine.high %v5737, %v5737
        %v5760 = vcombine.high %v5744, %v5744
        %v5761 = vcombine.high %v5751, %v5751
        %v5762 = vcombine.high %v5758, %v5758
        %v5763 = vcombine.high %v5609, %v5609
        %v5765 = vunpack.c.l.s4 1966171168
        %v5766 = vunpack.c.0.s8 %v5765
        %v5767 = vlaneseq
        %v5768 = vshrl.u32 %v5767, 7
        %v5769 = vsub.s32 %v5766, %v5768
        %v5770 = vrot.slane %v5609, %v5769
        %v5772 = vunpack.c.l.s4 1966171168
        %v5773 = vunpack.c.0.s8 %v5772
        %v5774 = vlaneseq
        %v5775 = vshrl.u32 %v5774, 7
        %v5776 = vsub.s32 %v5773, %v5775
        %v5777 = vrot.slane %v5763, %v5776
        %v5778 = vcombine.high %v5770, %v5770
        %v5779 = vcombine.high %v5777, %v5777
        %v5781 = vunpack.c.l.s4 1966171168
        %v5782 = vunpack.c.0.s8 %v5781
        %v5783 = vlaneseq
        %v5784 = vshrl.u32 %v5783, 7
        %v5785 = vsub.s32 %v5782, %v5784
        %v5786 = vrot.slane %v5770, %v5785
        %v5788 = vunpack.c.l.s4 1966171168
        %v5789 = vunpack.c.0.s8 %v5788
        %v5790 = vlaneseq
        %v5791 = vshrl.u32 %v5790, 7
        %v5792 = vsub.s32 %v5789, %v5791
        %v5793 = vrot.slane %v5777, %v5792
        %v5795 = vunpack.c.l.s4 1966171168
        %v5796 = vunpack.c.0.s8 %v5795
        %v5797 = vlaneseq
        %v5798 = vshrl.u32 %v5797, 7
        %v5799 = vsub.s32 %v5796, %v5798
        %v5800 = vrot.slane %v5778, %v5799
        %v5802 = vunpack.c.l.s4 1966171168
        %v5803 = vunpack.c.0.s8 %v5802
        %v5804 = vlaneseq
        %v5805 = vshrl.u32 %v5804, 7
        %v5806 = vsub.s32 %v5803, %v5805
        %v5807 = vrot.slane %v5779, %v5806
        %v5808 = vcombine.high %v5786, %v5786
        %v5809 = vcombine.high %v5793, %v5793
        %v5810 = vcombine.high %v5800, %v5800
        %v5811 = vcombine.high %v5807, %v5807
        %v5812 = vlaneseq
        %v5813 = vshrl.u32 %v5812, 7
        %v5814 = vsub.s32 0, %v5813
        %v5815 = vrot.slane %v5639, %v5814
        %v5816 = vlaneseq
        %v5817 = vshrl.u32 %v5816, 7
        %v5818 = vsub.s32 0, %v5817
        %v5819 = vrot.slane %v5653, %v5818
        %v5820 = vlaneseq
        %v5821 = vshrl.u32 %v5820, 7
        %v5822 = vsub.s32 0, %v5821
        %v5823 = vrot.slane %v5661, %v5822
        %v5824 = vlaneseq
        %v5825 = vshrl.u32 %v5824, 7
        %v5826 = vsub.s32 0, %v5825
        %v5827 = vrot.slane %v5663, %v5826
        %v5828 = vlaneseq
        %v5829 = vshrl.u32 %v5828, 7
        %v5830 = vsub.s32 0, %v5829
        %v5831 = vrot.slane %v5646, %v5830
        %v5832 = vlaneseq
        %v5833 = vshrl.u32 %v5832, 7
        %v5834 = vsub.s32 0, %v5833
        %v5835 = vrot.slane %v5660, %v5834
        %v5836 = vlaneseq
        %v5837 = vshrl.u32 %v5836, 7
        %v5838 = vsub.s32 0, %v5837
        %v5839 = vrot.slane %v5662, %v5838
        %v5840 = vlaneseq
        %v5841 = vshrl.u32 %v5840, 7
        %v5842 = vsub.s32 0, %v5841
        %v5843 = vrot.slane %v5664, %v5842
        %v5844 = vlaneseq
        %v5845 = vshrl.u32 %v5844, 7
        %v5846 = vsub.s32 0, %v5845
        %v5847 = vrot.slane %v5688, %v5846
        %v5848 = vlaneseq
        %v5849 = vshrl.u32 %v5848, 7
        %v5850 = vsub.s32 0, %v5849
        %v5851 = vrot.slane %v5702, %v5850
        %v5852 = vlaneseq
        %v5853 = vshrl.u32 %v5852, 7
        %v5854 = vsub.s32 0, %v5853
        %v5855 = vrot.slane %v5710, %v5854
        %v5856 = vlaneseq
        %v5857 = vshrl.u32 %v5856, 7
        %v5858 = vsub.s32 0, %v5857
        %v5859 = vrot.slane %v5712, %v5858
        %v5860 = vlaneseq
        %v5861 = vshrl.u32 %v5860, 7
        %v5862 = vsub.s32 0, %v5861
        %v5863 = vrot.slane %v5695, %v5862
        %v5864 = vlaneseq
        %v5865 = vshrl.u32 %v5864, 7
        %v5866 = vsub.s32 0, %v5865
        %v5867 = vrot.slane %v5709, %v5866
        %v5868 = vlaneseq
        %v5869 = vshrl.u32 %v5868, 7
        %v5870 = vsub.s32 0, %v5869
        %v5871 = vrot.slane %v5711, %v5870
        %v5872 = vlaneseq
        %v5873 = vshrl.u32 %v5872, 7
        %v5874 = vsub.s32 0, %v5873
        %v5875 = vrot.slane %v5713, %v5874
        %v5876 = vlaneseq
        %v5877 = vshrl.u32 %v5876, 7
        %v5878 = vsub.s32 0, %v5877
        %v5879 = vrot.slane %v5737, %v5878
        %v5880 = vlaneseq
        %v5881 = vshrl.u32 %v5880, 7
        %v5882 = vsub.s32 0, %v5881
        %v5883 = vrot.slane %v5751, %v5882
        %v5884 = vlaneseq
        %v5885 = vshrl.u32 %v5884, 7
        %v5886 = vsub.s32 0, %v5885
        %v5887 = vrot.slane %v5759, %v5886
        %v5888 = vlaneseq
        %v5889 = vshrl.u32 %v5888, 7
        %v5890 = vsub.s32 0, %v5889
        %v5891 = vrot.slane %v5761, %v5890
        %v5892 = vlaneseq
        %v5893 = vshrl.u32 %v5892, 7
        %v5894 = vsub.s32 0, %v5893
        %v5895 = vrot.slane %v5744, %v5894
        %v5896 = vlaneseq
        %v5897 = vshrl.u32 %v5896, 7
        %v5898 = vsub.s32 0, %v5897
        %v5899 = vrot.slane %v5758, %v5898
        %v5900 = vlaneseq
        %v5901 = vshrl.u32 %v5900, 7
        %v5902 = vsub.s32 0, %v5901
        %v5903 = vrot.slane %v5760, %v5902
        %v5904 = vlaneseq
        %v5905 = vshrl.u32 %v5904, 7
        %v5906 = vsub.s32 0, %v5905
        %v5907 = vrot.slane %v5762, %v5906
        %v5908 = vlaneseq
        %v5909 = vshrl.u32 %v5908, 7
        %v5910 = vsub.s32 0, %v5909
        %v5911 = vrot.slane %v5786, %v5910
        %v5912 = vlaneseq
        %v5913 = vshrl.u32 %v5912, 7
        %v5914 = vsub.s32 0, %v5913
        %v5915 = vrot.slane %v5800, %v5914
        %v5916 = vlaneseq
        %v5917 = vshrl.u32 %v5916, 7
        %v5918 = vsub.s32 0, %v5917
        %v5919 = vrot.slane %v5808, %v5918
        %v5920 = vlaneseq
        %v5921 = vshrl.u32 %v5920, 7
        %v5922 = vsub.s32 0, %v5921
        %v5923 = vrot.slane %v5810, %v5922
        %v5924 = vlaneseq
        %v5925 = vshrl.u32 %v5924, 7
        %v5926 = vsub.s32 0, %v5925
        %v5927 = vrot.slane %v5793, %v5926
        %v5928 = vlaneseq
        %v5929 = vshrl.u32 %v5928, 7
        %v5930 = vsub.s32 0, %v5929
        %v5931 = vrot.slane %v5807, %v5930
        %v5932 = vlaneseq
        %v5933 = vshrl.u32 %v5932, 7
        %v5934 = vsub.s32 0, %v5933
        %v5935 = vrot.slane %v5809, %v5934
        %v5936 = vlaneseq
        %v5937 = vshrl.u32 %v5936, 7
        %v5938 = vsub.s32 0, %v5937
        %v5939 = vrot.slane %v5811, %v5938
        %5972 = vrot.lane.b32.xlu0 %v5594, 32
        %v5973 = vpop.permute.xlu0 %5972
        %5974 = vrot.lane.b32.xlu0 %v5599, 32
        %v5975 = vpop.permute.xlu0 %5974
        %5976 = vrot.lane.b32.xlu0 %v5604, 32
        %v5977 = vpop.permute.xlu0 %5976
        %5978 = vrot.lane.b32.xlu0 %v5609, 32
        %v5979 = vpop.permute.xlu0 %5978
        %v5984 = vadd.f32 %v5815, %v5973
        %v5985 = vadd.f32 %v5815, %v5975
        %v5986 = vadd.f32 %v5819, %v5973
        %v5987 = vadd.f32 %v5819, %v5975
        %v5988 = vadd.f32 %v5823, %v5973
        %v5989 = vadd.f32 %v5823, %v5975
        %v5990 = vadd.f32 %v5827, %v5973
        %v5991 = vadd.f32 %v5827, %v5975
        %v5992 = vadd.f32 %v5831, %v5973
        %v5993 = vadd.f32 %v5831, %v5975
        %v5994 = vadd.f32 %v5835, %v5973
        %v5995 = vadd.f32 %v5835, %v5975
        %v5996 = vadd.f32 %v5839, %v5973
        %v5997 = vadd.f32 %v5839, %v5975
        %v5998 = vadd.f32 %v5843, %v5973
        %v5999 = vadd.f32 %v5843, %v5975
        %v6000 = vadd.f32 %v5847, %v5973
        %v6001 = vadd.f32 %v5847, %v5975
        %v6002 = vadd.f32 %v5851, %v5973
        %v6003 = vadd.f32 %v5851, %v5975
        %v6004 = vadd.f32 %v5855, %v5973
        %v6005 = vadd.f32 %v5855, %v5975
        %v6006 = vadd.f32 %v5859, %v5973
        %v6007 = vadd.f32 %v5859, %v5975
        %v6008 = vadd.f32 %v5863, %v5973
        %v6009 = vadd.f32 %v5863, %v5975
        %v6010 = vadd.f32 %v5867, %v5973
        %v6011 = vadd.f32 %v5867, %v5975
        %v6012 = vadd.f32 %v5871, %v5973
        %v6013 = vadd.f32 %v5871, %v5975
        %v6014 = vadd.f32 %v5875, %v5973
        %v6015 = vadd.f32 %v5875, %v5975
        %v6016 = vadd.f32 %v5879, %v5977
        %v6017 = vadd.f32 %v5879, %v5979
        %v6018 = vadd.f32 %v5883, %v5977
        %v6019 = vadd.f32 %v5883, %v5979
        %v6020 = vadd.f32 %v5887, %v5977
        %v6021 = vadd.f32 %v5887, %v5979
        %v6022 = vadd.f32 %v5891, %v5977
        %v6023 = vadd.f32 %v5891, %v5979
        %v6024 = vadd.f32 %v5895, %v5977
        %v6025 = vadd.f32 %v5895, %v5979
        %v6026 = vadd.f32 %v5899, %v5977
        %v6027 = vadd.f32 %v5899, %v5979
        %v6028 = vadd.f32 %v5903, %v5977
        %v6029 = vadd.f32 %v5903, %v5979
        %v6030 = vadd.f32 %v5907, %v5977
        %v6031 = vadd.f32 %v5907, %v5979
        %v6032 = vadd.f32 %v5911, %v5977
        %v6033 = vadd.f32 %v5911, %v5979
        %v6034 = vadd.f32 %v5915, %v5977
        %v6035 = vadd.f32 %v5915, %v5979
        %v6036 = vadd.f32 %v5919, %v5977
        %v6037 = vadd.f32 %v5919, %v5979
        %v6038 = vadd.f32 %v5923, %v5977
        %v6039 = vadd.f32 %v5923, %v5979
        %v6040 = vadd.f32 %v5927, %v5977
        %v6041 = vadd.f32 %v5927, %v5979
        %v6042 = vadd.f32 %v5931, %v5977
        %v6043 = vadd.f32 %v5931, %v5979
        %v6044 = vadd.f32 %v5935, %v5977
        %v6045 = vadd.f32 %v5935, %v5979
        %v6046 = vadd.f32 %v5939, %v5977
        %v6047 = vadd.f32 %v5939, %v5979
        %vm6048 = vcmp.ge.f32.partialorder %v5984, 0.0
        %vm6049 = vcmp.ge.f32.partialorder %v5985, 0.0
        %vm6050 = vcmp.ge.f32.partialorder %v5986, 0.0
        %vm6051 = vcmp.ge.f32.partialorder %v5987, 0.0
        %vm6052 = vcmp.ge.f32.partialorder %v5988, 0.0
        %vm6053 = vcmp.ge.f32.partialorder %v5989, 0.0
        %vm6054 = vcmp.ge.f32.partialorder %v5990, 0.0
        %vm6055 = vcmp.ge.f32.partialorder %v5991, 0.0
        %vm6056 = vcmp.ge.f32.partialorder %v5992, 0.0
        %vm6057 = vcmp.ge.f32.partialorder %v5993, 0.0
        %vm6058 = vcmp.ge.f32.partialorder %v5994, 0.0
        %vm6059 = vcmp.ge.f32.partialorder %v5995, 0.0
        %vm6060 = vcmp.ge.f32.partialorder %v5996, 0.0
        %vm6061 = vcmp.ge.f32.partialorder %v5997, 0.0
        %vm6062 = vcmp.ge.f32.partialorder %v5998, 0.0
        %vm6063 = vcmp.ge.f32.partialorder %v5999, 0.0
        %vm6064 = vcmp.ge.f32.partialorder %v6000, 0.0
        %vm6065 = vcmp.ge.f32.partialorder %v6001, 0.0
        %vm6066 = vcmp.ge.f32.partialorder %v6002, 0.0
        %vm6067 = vcmp.ge.f32.partialorder %v6003, 0.0
        %vm6068 = vcmp.ge.f32.partialorder %v6004, 0.0
        %vm6069 = vcmp.ge.f32.partialorder %v6005, 0.0
        %vm6070 = vcmp.ge.f32.partialorder %v6006, 0.0
        %vm6071 = vcmp.ge.f32.partialorder %v6007, 0.0
        %vm6072 = vcmp.ge.f32.partialorder %v6008, 0.0
        %vm6073 = vcmp.ge.f32.partialorder %v6009, 0.0
        %vm6074 = vcmp.ge.f32.partialorder %v6010, 0.0
        %vm6075 = vcmp.ge.f32.partialorder %v6011, 0.0
        %vm6076 = vcmp.ge.f32.partialorder %v6012, 0.0
        %vm6077 = vcmp.ge.f32.partialorder %v6013, 0.0
        %vm6078 = vcmp.ge.f32.partialorder %v6014, 0.0
        %vm6079 = vcmp.ge.f32.partialorder %v6015, 0.0
        %vm6080 = vcmp.ge.f32.partialorder %v6016, 0.0
        %vm6081 = vcmp.ge.f32.partialorder %v6017, 0.0
        %vm6082 = vcmp.ge.f32.partialorder %v6018, 0.0
        %vm6083 = vcmp.ge.f32.partialorder %v6019, 0.0
        %vm6084 = vcmp.ge.f32.partialorder %v6020, 0.0
        %vm6085 = vcmp.ge.f32.partialorder %v6021, 0.0
        %vm6086 = vcmp.ge.f32.partialorder %v6022, 0.0
        %vm6087 = vcmp.ge.f32.partialorder %v6023, 0.0
        %vm6088 = vcmp.ge.f32.partialorder %v6024, 0.0
        %vm6089 = vcmp.ge.f32.partialorder %v6025, 0.0
        %vm6090 = vcmp.ge.f32.partialorder %v6026, 0.0
        %vm6091 = vcmp.ge.f32.partialorder %v6027, 0.0
        %vm6092 = vcmp.ge.f32.partialorder %v6028, 0.0
        %vm6093 = vcmp.ge.f32.partialorder %v6029, 0.0
        %vm6094 = vcmp.ge.f32.partialorder %v6030, 0.0
        %vm6095 = vcmp.ge.f32.partialorder %v6031, 0.0
        %vm6096 = vcmp.ge.f32.partialorder %v6032, 0.0
        %vm6097 = vcmp.ge.f32.partialorder %v6033, 0.0
        %vm6098 = vcmp.ge.f32.partialorder %v6034, 0.0
        %vm6099 = vcmp.ge.f32.partialorder %v6035, 0.0
        %vm6100 = vcmp.ge.f32.partialorder %v6036, 0.0
        %vm6101 = vcmp.ge.f32.partialorder %v6037, 0.0
        %vm6102 = vcmp.ge.f32.partialorder %v6038, 0.0
        %vm6103 = vcmp.ge.f32.partialorder %v6039, 0.0
        %vm6104 = vcmp.ge.f32.partialorder %v6040, 0.0
        %vm6105 = vcmp.ge.f32.partialorder %v6041, 0.0
        %vm6106 = vcmp.ge.f32.partialorder %v6042, 0.0
        %vm6107 = vcmp.ge.f32.partialorder %v6043, 0.0
        %vm6108 = vcmp.ge.f32.partialorder %v6044, 0.0
        %vm6109 = vcmp.ge.f32.partialorder %v6045, 0.0
        %vm6110 = vcmp.ge.f32.partialorder %v6046, 0.0
        %vm6111 = vcmp.ge.f32.partialorder %v6047, 0.0
        %v6112 = vmul.f32 %v5984, 0.2
        %v6113 = vmul.f32 %v5985, 0.2
        %v6114 = vmul.f32 %v5986, 0.2
        %v6115 = vmul.f32 %v5987, 0.2
        %v6116 = vmul.f32 %v5988, 0.2
        %v6117 = vmul.f32 %v5989, 0.2
        %v6118 = vmul.f32 %v5990, 0.2
        %v6119 = vmul.f32 %v5991, 0.2
        %v6120 = vmul.f32 %v5992, 0.2
        %v6121 = vmul.f32 %v5993, 0.2
        %v6122 = vmul.f32 %v5994, 0.2
        %v6123 = vmul.f32 %v5995, 0.2
        %v6124 = vmul.f32 %v5996, 0.2
        %v6125 = vmul.f32 %v5997, 0.2
        %v6126 = vmul.f32 %v5998, 0.2
        %v6127 = vmul.f32 %v5999, 0.2
        %v6128 = vmul.f32 %v6000, 0.2
        %v6129 = vmul.f32 %v6001, 0.2
        %v6130 = vmul.f32 %v6002, 0.2
        %v6131 = vmul.f32 %v6003, 0.2
        %v6132 = vmul.f32 %v6004, 0.2
        %v6133 = vmul.f32 %v6005, 0.2
        %v6134 = vmul.f32 %v6006, 0.2
        %v6135 = vmul.f32 %v6007, 0.2
        %v6136 = vmul.f32 %v6008, 0.2
        %v6137 = vmul.f32 %v6009, 0.2
        %v6138 = vmul.f32 %v6010, 0.2
        %v6139 = vmul.f32 %v6011, 0.2
        %v6140 = vmul.f32 %v6012, 0.2
        %v6141 = vmul.f32 %v6013, 0.2
        %v6142 = vmul.f32 %v6014, 0.2
        %v6143 = vmul.f32 %v6015, 0.2
        %v6144 = vmul.f32 %v6016, 0.2
        %v6145 = vmul.f32 %v6017, 0.2
        %v6146 = vmul.f32 %v6018, 0.2
        %v6147 = vmul.f32 %v6019, 0.2
        %v6148 = vmul.f32 %v6020, 0.2
        %v6149 = vmul.f32 %v6021, 0.2
        %v6150 = vmul.f32 %v6022, 0.2
        %v6151 = vmul.f32 %v6023, 0.2
        %v6152 = vmul.f32 %v6024, 0.2
        %v6153 = vmul.f32 %v6025, 0.2
        %v6154 = vmul.f32 %v6026, 0.2
        %v6155 = vmul.f32 %v6027, 0.2
        %v6156 = vmul.f32 %v6028, 0.2
        %v6157 = vmul.f32 %v6029, 0.2
        %v6158 = vmul.f32 %v6030, 0.2
        %v6159 = vmul.f32 %v6031, 0.2
        %v6160 = vmul.f32 %v6032, 0.2
        %v6161 = vmul.f32 %v6033, 0.2
        %v6162 = vmul.f32 %v6034, 0.2
        %v6163 = vmul.f32 %v6035, 0.2
        %v6164 = vmul.f32 %v6036, 0.2
        %v6165 = vmul.f32 %v6037, 0.2
        %v6166 = vmul.f32 %v6038, 0.2
        %v6167 = vmul.f32 %v6039, 0.2
        %v6168 = vmul.f32 %v6040, 0.2
        %v6169 = vmul.f32 %v6041, 0.2
        %v6170 = vmul.f32 %v6042, 0.2
        %v6171 = vmul.f32 %v6043, 0.2
        %v6172 = vmul.f32 %v6044, 0.2
        %v6173 = vmul.f32 %v6045, 0.2
        %v6174 = vmul.f32 %v6046, 0.2
        %v6175 = vmul.f32 %v6047, 0.2
        %v6176 = vsel %vm6048, %v5984, %v6112
        %v6177 = vsel %vm6049, %v5985, %v6113
        %v6178 = vsel %vm6050, %v5986, %v6114
        %v6179 = vsel %vm6051, %v5987, %v6115
        %v6180 = vsel %vm6052, %v5988, %v6116
        %v6181 = vsel %vm6053, %v5989, %v6117
        %v6182 = vsel %vm6054, %v5990, %v6118
        %v6183 = vsel %vm6055, %v5991, %v6119
        %v6184 = vsel %vm6056, %v5992, %v6120
        %v6185 = vsel %vm6057, %v5993, %v6121
        %v6186 = vsel %vm6058, %v5994, %v6122
        %v6187 = vsel %vm6059, %v5995, %v6123
        %v6188 = vsel %vm6060, %v5996, %v6124
        %v6189 = vsel %vm6061, %v5997, %v6125
        %v6190 = vsel %vm6062, %v5998, %v6126
        %v6191 = vsel %vm6063, %v5999, %v6127
        %v6192 = vsel %vm6064, %v6000, %v6128
        %v6193 = vsel %vm6065, %v6001, %v6129
        %v6194 = vsel %vm6066, %v6002, %v6130
        %v6195 = vsel %vm6067, %v6003, %v6131
        %v6196 = vsel %vm6068, %v6004, %v6132
        %v6197 = vsel %vm6069, %v6005, %v6133
        %v6198 = vsel %vm6070, %v6006, %v6134
        %v6199 = vsel %vm6071, %v6007, %v6135
        %v6200 = vsel %vm6072, %v6008, %v6136
        %v6201 = vsel %vm6073, %v6009, %v6137
        %v6202 = vsel %vm6074, %v6010, %v6138
        %v6203 = vsel %vm6075, %v6011, %v6139
        %v6204 = vsel %vm6076, %v6012, %v6140
        %v6205 = vsel %vm6077, %v6013, %v6141
        %v6206 = vsel %vm6078, %v6014, %v6142
        %v6207 = vsel %vm6079, %v6015, %v6143
        %v6208 = vsel %vm6080, %v6016, %v6144
        %v6209 = vsel %vm6081, %v6017, %v6145
        %v6210 = vsel %vm6082, %v6018, %v6146
        %v6211 = vsel %vm6083, %v6019, %v6147
        %v6212 = vsel %vm6084, %v6020, %v6148
        %v6213 = vsel %vm6085, %v6021, %v6149
        %v6214 = vsel %vm6086, %v6022, %v6150
        %v6215 = vsel %vm6087, %v6023, %v6151
        %v6216 = vsel %vm6088, %v6024, %v6152
        %v6217 = vsel %vm6089, %v6025, %v6153
        %v6218 = vsel %vm6090, %v6026, %v6154
        %v6219 = vsel %vm6091, %v6027, %v6155
        %v6220 = vsel %vm6092, %v6028, %v6156
        %v6221 = vsel %vm6093, %v6029, %v6157
        %v6222 = vsel %vm6094, %v6030, %v6158
        %v6223 = vsel %vm6095, %v6031, %v6159
        %v6224 = vsel %vm6096, %v6032, %v6160
        %v6225 = vsel %vm6097, %v6033, %v6161
        %v6226 = vsel %vm6098, %v6034, %v6162
        %v6227 = vsel %vm6099, %v6035, %v6163
        %v6228 = vsel %vm6100, %v6036, %v6164
        %v6229 = vsel %vm6101, %v6037, %v6165
        %v6230 = vsel %vm6102, %v6038, %v6166
        %v6231 = vsel %vm6103, %v6039, %v6167
        %v6232 = vsel %vm6104, %v6040, %v6168
        %v6233 = vsel %vm6105, %v6041, %v6169
        %v6234 = vsel %vm6106, %v6042, %v6170
        %v6235 = vsel %vm6107, %v6043, %v6171
        %v6236 = vsel %vm6108, %v6044, %v6172
        %v6237 = vsel %vm6109, %v6045, %v6173
        %v6238 = vsel %vm6110, %v6046, %v6174
        %v6239 = vsel %vm6111, %v6047, %v6175
        %s6240 = scalar_lea.vmem [#allocation6], 4
        %v6241 = vld [vmem:[%s6240] sm:$0xf]
        %6244 = vrot.lane.b32.xlu0 %v6176, 96
        %v6245 = vpop.permute.xlu0 %6244
        %6246 = vrot.lane.b32.xlu0 %v6177, 96
        %v6247 = vpop.permute.xlu0 %6246
        %v6249 = vsel %vm851, %v6241, 0
        %v6251 = vsel %vm851, %v6245, 0
        %v6253 = vsel %vm851, %v6247, 0
        %6255 = vmatprep.subr.mxu0 0.0
        %6256 = vmatpush1.xpose.msra.mxu0 %v6251
        %6257 = vmatprep.subr.mxu0 0.0
        %6258 = vmatpush1.xpose.msra.mxu0 %v6253
        %6259 = vmatprep.subr.mxu0 0.0
        %6260 = vmatpush1.xpose.msra.mxu0 0.0
        %6261 = vmatprep.subr.mxu0 0.0
        %6262 = vmatpush1.xpose.msra.mxu0 0.0
        %6263 = vmatprep.subr.mxu0 0.0
        %6264 = vmatpush1.xpose.msra.mxu0 0.0
        %6265 = vmatprep.subr.mxu0 0.0
        %6266 = vmatpush1.xpose.msra.mxu0 0.0
        %6267 = vmatprep.subr.mxu0 0.0
        %6268 = vmatpush1.xpose.msra.mxu0 0.0
        %6269 = vmatprep.subr.mxu0 0.0
        %6270 = vmatpush1.xpose.msra.mxu0 0.0
        %6271 = vmatprep.subr.mxu0 0.0
        %6272 = vmatpush1.xpose.msra.mxu0 0.0
        %6273 = vmatprep.subr.mxu0 0.0
        %6274 = vmatpush1.xpose.msra.mxu0 0.0
        %6275 = vmatprep.subr.mxu0 0.0
        %6276 = vmatpush1.xpose.msra.mxu0 0.0
        %6277 = vmatprep.subr.mxu0 0.0
        %6278 = vmatpush1.xpose.msra.mxu0 0.0
        %6279 = vmatprep.subr.mxu0 0.0
        %6280 = vmatpush1.xpose.msra.mxu0 0.0
        %6281 = vmatprep.subr.mxu0 0.0
        %6282 = vmatpush1.xpose.msra.mxu0 0.0
        %6283 = vmatprep.subr.mxu0 0.0
        %6284 = vmatpush1.xpose.msra.mxu0 0.0
        %6285 = vmatprep.subr.mxu0 0.0
        %6286 = vmatpush1.xpose.msra.mxu0 0.0
        %6287 = vmatprep.subr.mxu0 0.0
        %6288 = vmatpush1.xpose.msra.mxu0 0.0
        %6289 = vmatprep.subr.mxu0 0.0
        %6290 = vmatpush1.xpose.msra.mxu0 0.0
        %6291 = vmatprep.subr.mxu0 0.0
        %6292 = vmatpush1.xpose.msra.mxu0 0.0
        %6293 = vmatprep.subr.mxu0 0.0
        %6294 = vmatpush1.xpose.msra.mxu0 0.0
        %6295 = vmatprep.subr.mxu0 0.0
        %6296 = vmatpush1.xpose.msra.mxu0 0.0
        %6297 = vmatprep.subr.mxu0 0.0
        %6298 = vmatpush1.xpose.msra.mxu0 0.0
        %6299 = vmatprep.subr.mxu0 0.0
        %6300 = vmatpush1.xpose.msra.mxu0 0.0
        %6301 = vmatprep.subr.mxu0 0.0
        %6302 = vmatpush1.xpose.msra.mxu0 0.0
        %6303 = vmatprep.subr.mxu0 0.0
        %6304 = vmatpush1.xpose.msra.mxu0 0.0
        %6305 = vmatprep.subr.mxu0 0.0
        %6306 = vmatpush1.xpose.msra.mxu0 0.0
        %6307 = vmatprep.subr.mxu0 0.0
        %6308 = vmatpush1.xpose.msra.mxu0 0.0
        %6309 = vmatprep.subr.mxu0 0.0
        %6310 = vmatpush1.xpose.msra.mxu0 0.0
        %6311 = vmatprep.subr.mxu0 0.0
        %6312 = vmatpush1.xpose.msra.mxu0 0.0
        %6313 = vmatprep.subr.mxu0 0.0
        %6314 = vmatpush1.xpose.msra.mxu0 0.0
        %6315 = vmatprep.subr.mxu0 0.0
        %6316 = vmatpush1.xpose.msra.mxu0 0.0
        %6317 = vmatprep.subr.mxu0 0.0
        %6318 = vmatpush1.xpose.msra.mxu0 0.0
        %6319 = vmatprep.mubr.f32.mxu0 0.0
        %6320 = vmatmul.mubr.f32.gmra.mrb[0].mxu0 %v6249
        %v6321 = vpop.f32.mrb[0].mxu0
        %v6322 = vadd.f32 %v582, %v6321
        %v6323 = vpop.f32.mrb[0].mxu0
        %6324 = vdwg.mxu0
        %6327 = vrot.lane.b32.xlu0 %v6178, 96
        %v6328 = vpop.permute.xlu0 %6327
        %6329 = vrot.lane.b32.xlu0 %v6179, 96
        %v6330 = vpop.permute.xlu0 %6329
        %v6331 = vsel %vm851, %v6328, 0
        %v6333 = vsel %vm851, %v6330, 0
        %6335 = vmatprep.subr.mxu0 0.0
        %6336 = vmatpush1.xpose.msra.mxu0 %v6331
        %6337 = vmatprep.subr.mxu0 0.0
        %6338 = vmatpush1.xpose.msra.mxu0 %v6333
        %6339 = vmatprep.subr.mxu0 0.0
        %6340 = vmatpush1.xpose.msra.mxu0 0.0
        %6341 = vmatprep.subr.mxu0 0.0
        %6342 = vmatpush1.xpose.msra.mxu0 0.0
        %6343 = vmatprep.subr.mxu0 0.0
        %6344 = vmatpush1.xpose.msra.mxu0 0.0
        %6345 = vmatprep.subr.mxu0 0.0
        %6346 = vmatpush1.xpose.msra.mxu0 0.0
        %6347 = vmatprep.subr.mxu0 0.0
        %6348 = vmatpush1.xpose.msra.mxu0 0.0
        %6349 = vmatprep.subr.mxu0 0.0
        %6350 = vmatpush1.xpose.msra.mxu0 0.0
        %6351 = vmatprep.subr.mxu0 0.0
        %6352 = vmatpush1.xpose.msra.mxu0 0.0
        %6353 = vmatprep.subr.mxu0 0.0
        %6354 = vmatpush1.xpose.msra.mxu0 0.0
        %6355 = vmatprep.subr.mxu0 0.0
        %6356 = vmatpush1.xpose.msra.mxu0 0.0
        %6357 = vmatprep.subr.mxu0 0.0
        %6358 = vmatpush1.xpose.msra.mxu0 0.0
        %6359 = vmatprep.subr.mxu0 0.0
        %6360 = vmatpush1.xpose.msra.mxu0 0.0
        %6361 = vmatprep.subr.mxu0 0.0
        %6362 = vmatpush1.xpose.msra.mxu0 0.0
        %6363 = vmatprep.subr.mxu0 0.0
        %6364 = vmatpush1.xpose.msra.mxu0 0.0
        %6365 = vmatprep.subr.mxu0 0.0
        %6366 = vmatpush1.xpose.msra.mxu0 0.0
        %6367 = vmatprep.subr.mxu0 0.0
        %6368 = vmatpush1.xpose.msra.mxu0 0.0
        %6369 = vmatprep.subr.mxu0 0.0
        %6370 = vmatpush1.xpose.msra.mxu0 0.0
        %6371 = vmatprep.subr.mxu0 0.0
        %6372 = vmatpush1.xpose.msra.mxu0 0.0
        %6373 = vmatprep.subr.mxu0 0.0
        %6374 = vmatpush1.xpose.msra.mxu0 0.0
        %6375 = vmatprep.subr.mxu0 0.0
        %6376 = vmatpush1.xpose.msra.mxu0 0.0
        %6377 = vmatprep.subr.mxu0 0.0
        %6378 = vmatpush1.xpose.msra.mxu0 0.0
        %6379 = vmatprep.subr.mxu0 0.0
        %6380 = vmatpush1.xpose.msra.mxu0 0.0
        %6381 = vmatprep.subr.mxu0 0.0
        %6382 = vmatpush1.xpose.msra.mxu0 0.0
        %6383 = vmatprep.subr.mxu0 0.0
        %6384 = vmatpush1.xpose.msra.mxu0 0.0
        %6385 = vmatprep.subr.mxu0 0.0
        %6386 = vmatpush1.xpose.msra.mxu0 0.0
        %6387 = vmatprep.subr.mxu0 0.0
        %6388 = vmatpush1.xpose.msra.mxu0 0.0
        %6389 = vmatprep.subr.mxu0 0.0
        %6390 = vmatpush1.xpose.msra.mxu0 0.0
        %6391 = vmatprep.subr.mxu0 0.0
        %6392 = vmatpush1.xpose.msra.mxu0 0.0
        %6393 = vmatprep.subr.mxu0 0.0
        %6394 = vmatpush1.xpose.msra.mxu0 0.0
        %6395 = vmatprep.subr.mxu0 0.0
        %6396 = vmatpush1.xpose.msra.mxu0 0.0
        %6397 = vmatprep.subr.mxu0 0.0
        %6398 = vmatpush1.xpose.msra.mxu0 0.0
        %6399 = vmatprep.mubr.f32.mxu0 0.0
        %6400 = vmatmul.mubr.f32.gmra.mrb[0].mxu0 %v6249
        %v6401 = vpop.f32.mrb[0].mxu0
        %v6402 = vadd.f32 %v586, %v6401
        %v6403 = vpop.f32.mrb[0].mxu0
        %6404 = vdwg.mxu0
        %6407 = vrot.lane.b32.xlu0 %v6180, 96
        %v6408 = vpop.permute.xlu0 %6407
        %6409 = vrot.lane.b32.xlu0 %v6181, 96
        %v6410 = vpop.permute.xlu0 %6409
        %v6411 = vsel %vm851, %v6408, 0
        %v6413 = vsel %vm851, %v6410, 0
        %6415 = vmatprep.subr.mxu0 0.0
        %6416 = vmatpush1.xpose.msra.mxu0 %v6411
        %6417 = vmatprep.subr.mxu0 0.0
        %6418 = vmatpush1.xpose.msra.mxu0 %v6413
        %6419 = vmatprep.subr.mxu0 0.0
        %6420 = vmatpush1.xpose.msra.mxu0 0.0
        %6421 = vmatprep.subr.mxu0 0.0
        %6422 = vmatpush1.xpose.msra.mxu0 0.0
        %6423 = vmatprep.subr.mxu0 0.0
        %6424 = vmatpush1.xpose.msra.mxu0 0.0
        %6425 = vmatprep.subr.mxu0 0.0
        %6426 = vmatpush1.xpose.msra.mxu0 0.0
        %6427 = vmatprep.subr.mxu0 0.0
        %6428 = vmatpush1.xpose.msra.mxu0 0.0
        %6429 = vmatprep.subr.mxu0 0.0
        %6430 = vmatpush1.xpose.msra.mxu0 0.0
        %6431 = vmatprep.subr.mxu0 0.0
        %6432 = vmatpush1.xpose.msra.mxu0 0.0
        %6433 = vmatprep.subr.mxu0 0.0
        %6434 = vmatpush1.xpose.msra.mxu0 0.0
        %6435 = vmatprep.subr.mxu0 0.0
        %6436 = vmatpush1.xpose.msra.mxu0 0.0
        %6437 = vmatprep.subr.mxu0 0.0
        %6438 = vmatpush1.xpose.msra.mxu0 0.0
        %6439 = vmatprep.subr.mxu0 0.0
        %6440 = vmatpush1.xpose.msra.mxu0 0.0
        %6441 = vmatprep.subr.mxu0 0.0
        %6442 = vmatpush1.xpose.msra.mxu0 0.0
        %6443 = vmatprep.subr.mxu0 0.0
        %6444 = vmatpush1.xpose.msra.mxu0 0.0
        %6445 = vmatprep.subr.mxu0 0.0
        %6446 = vmatpush1.xpose.msra.mxu0 0.0
        %6447 = vmatprep.subr.mxu0 0.0
        %6448 = vmatpush1.xpose.msra.mxu0 0.0
        %6449 = vmatprep.subr.mxu0 0.0
        %6450 = vmatpush1.xpose.msra.mxu0 0.0
        %6451 = vmatprep.subr.mxu0 0.0
        %6452 = vmatpush1.xpose.msra.mxu0 0.0
        %6453 = vmatprep.subr.mxu0 0.0
        %6454 = vmatpush1.xpose.msra.mxu0 0.0
        %6455 = vmatprep.subr.mxu0 0.0
        %6456 = vmatpush1.xpose.msra.mxu0 0.0
        %6457 = vmatprep.subr.mxu0 0.0
        %6458 = vmatpush1.xpose.msra.mxu0 0.0
        %6459 = vmatprep.subr.mxu0 0.0
        %6460 = vmatpush1.xpose.msra.mxu0 0.0
        %6461 = vmatprep.subr.mxu0 0.0
        %6462 = vmatpush1.xpose.msra.mxu0 0.0
        %6463 = vmatprep.subr.mxu0 0.0
        %6464 = vmatpush1.xpose.msra.mxu0 0.0
        %6465 = vmatprep.subr.mxu0 0.0
        %6466 = vmatpush1.xpose.msra.mxu0 0.0
        %6467 = vmatprep.subr.mxu0 0.0
        %6468 = vmatpush1.xpose.msra.mxu0 0.0
        %6469 = vmatprep.subr.mxu0 0.0
        %6470 = vmatpush1.xpose.msra.mxu0 0.0
        %6471 = vmatprep.subr.mxu0 0.0
        %6472 = vmatpush1.xpose.msra.mxu0 0.0
        %6473 = vmatprep.subr.mxu0 0.0
        %6474 = vmatpush1.xpose.msra.mxu0 0.0
        %6475 = vmatprep.subr.mxu0 0.0
        %6476 = vmatpush1.xpose.msra.mxu0 0.0
        %6477 = vmatprep.subr.mxu0 0.0
        %6478 = vmatpush1.xpose.msra.mxu0 0.0
        %6479 = vmatprep.mubr.f32.mxu0 0.0
        %6480 = vmatmul.mubr.f32.gmra.mrb[0].mxu0 %v6249
        %v6481 = vpop.f32.mrb[0].mxu0
        %v6482 = vadd.f32 %v590, %v6481
        %v6483 = vpop.f32.mrb[0].mxu0
        %6484 = vdwg.mxu0
        %6487 = vrot.lane.b32.xlu0 %v6182, 96
        %v6488 = vpop.permute.xlu0 %6487
        %6489 = vrot.lane.b32.xlu0 %v6183, 96
        %v6490 = vpop.permute.xlu0 %6489
        %v6491 = vsel %vm851, %v6488, 0
        %v6493 = vsel %vm851, %v6490, 0
        %6495 = vmatprep.subr.mxu0 0.0
        %6496 = vmatpush1.xpose.msra.mxu0 %v6491
        %6497 = vmatprep.subr.mxu0 0.0
        %6498 = vmatpush1.xpose.msra.mxu0 %v6493
        %6499 = vmatprep.subr.mxu0 0.0
        %6500 = vmatpush1.xpose.msra.mxu0 0.0
        %6501 = vmatprep.subr.mxu0 0.0
        %6502 = vmatpush1.xpose.msra.mxu0 0.0
        %6503 = vmatprep.subr.mxu0 0.0
        %6504 = vmatpush1.xpose.msra.mxu0 0.0
        %6505 = vmatprep.subr.mxu0 0.0
        %6506 = vmatpush1.xpose.msra.mxu0 0.0
        %6507 = vmatprep.subr.mxu0 0.0
        %6508 = vmatpush1.xpose.msra.mxu0 0.0
        %6509 = vmatprep.subr.mxu0 0.0
        %6510 = vmatpush1.xpose.msra.mxu0 0.0
        %6511 = vmatprep.subr.mxu0 0.0
        %6512 = vmatpush1.xpose.msra.mxu0 0.0
        %6513 = vmatprep.subr.mxu0 0.0
        %6514 = vmatpush1.xpose.msra.mxu0 0.0
        %6515 = vmatprep.subr.mxu0 0.0
        %6516 = vmatpush1.xpose.msra.mxu0 0.0
        %6517 = vmatprep.subr.mxu0 0.0
        %6518 = vmatpush1.xpose.msra.mxu0 0.0
        %6519 = vmatprep.subr.mxu0 0.0
        %6520 = vmatpush1.xpose.msra.mxu0 0.0
        %6521 = vmatprep.subr.mxu0 0.0
        %6522 = vmatpush1.xpose.msra.mxu0 0.0
        %6523 = vmatprep.subr.mxu0 0.0
        %6524 = vmatpush1.xpose.msra.mxu0 0.0
        %6525 = vmatprep.subr.mxu0 0.0
        %6526 = vmatpush1.xpose.msra.mxu0 0.0
        %6527 = vmatprep.subr.mxu0 0.0
        %6528 = vmatpush1.xpose.msra.mxu0 0.0
        %6529 = vmatprep.subr.mxu0 0.0
        %6530 = vmatpush1.xpose.msra.mxu0 0.0
        %6531 = vmatprep.subr.mxu0 0.0
        %6532 = vmatpush1.xpose.msra.mxu0 0.0
        %6533 = vmatprep.subr.mxu0 0.0
        %6534 = vmatpush1.xpose.msra.mxu0 0.0
        %6535 = vmatprep.subr.mxu0 0.0
        %6536 = vmatpush1.xpose.msra.mxu0 0.0
        %6537 = vmatprep.subr.mxu0 0.0
        %6538 = vmatpush1.xpose.msra.mxu0 0.0
        %6539 = vmatprep.subr.mxu0 0.0
        %6540 = vmatpush1.xpose.msra.mxu0 0.0
        %6541 = vmatprep.subr.mxu0 0.0
        %6542 = vmatpush1.xpose.msra.mxu0 0.0
        %6543 = vmatprep.subr.mxu0 0.0
        %6544 = vmatpush1.xpose.msra.mxu0 0.0
        %6545 = vmatprep.subr.mxu0 0.0
        %6546 = vmatpush1.xpose.msra.mxu0 0.0
        %6547 = vmatprep.subr.mxu0 0.0
        %6548 = vmatpush1.xpose.msra.mxu0 0.0
        %6549 = vmatprep.subr.mxu0 0.0
        %6550 = vmatpush1.xpose.msra.mxu0 0.0
        %6551 = vmatprep.subr.mxu0 0.0
        %6552 = vmatpush1.xpose.msra.mxu0 0.0
        %6553 = vmatprep.subr.mxu0 0.0
        %6554 = vmatpush1.xpose.msra.mxu0 0.0
        %6555 = vmatprep.subr.mxu0 0.0
        %6556 = vmatpush1.xpose.msra.mxu0 0.0
        %6557 = vmatprep.subr.mxu0 0.0
        %6558 = vmatpush1.xpose.msra.mxu0 0.0
        %6559 = vmatprep.mubr.f32.mxu0 0.0
        %6560 = vmatmul.mubr.f32.gmra.mrb[0].mxu0 %v6249
        %v6561 = vpop.f32.mrb[0].mxu0
        %v6562 = vadd.f32 %v594, %v6561
        %v6563 = vpop.f32.mrb[0].mxu0
        %6564 = vdwg.mxu0
        %6567 = vrot.lane.b32.xlu0 %v6184, 96
        %v6568 = vpop.permute.xlu0 %6567
        %6569 = vrot.lane.b32.xlu0 %v6185, 96
        %v6570 = vpop.permute.xlu0 %6569
        %v6571 = vsel %vm851, %v6568, 0
        %v6573 = vsel %vm851, %v6570, 0
        %6575 = vmatprep.subr.mxu0 0.0
        %6576 = vmatpush1.xpose.msra.mxu0 %v6571
        %6577 = vmatprep.subr.mxu0 0.0
        %6578 = vmatpush1.xpose.msra.mxu0 %v6573
        %6579 = vmatprep.subr.mxu0 0.0
        %6580 = vmatpush1.xpose.msra.mxu0 0.0
        %6581 = vmatprep.subr.mxu0 0.0
        %6582 = vmatpush1.xpose.msra.mxu0 0.0
        %6583 = vmatprep.subr.mxu0 0.0
        %6584 = vmatpush1.xpose.msra.mxu0 0.0
        %6585 = vmatprep.subr.mxu0 0.0
        %6586 = vmatpush1.xpose.msra.mxu0 0.0
        %6587 = vmatprep.subr.mxu0 0.0
        %6588 = vmatpush1.xpose.msra.mxu0 0.0
        %6589 = vmatprep.subr.mxu0 0.0
        %6590 = vmatpush1.xpose.msra.mxu0 0.0
        %6591 = vmatprep.subr.mxu0 0.0
        %6592 = vmatpush1.xpose.msra.mxu0 0.0
        %6593 = vmatprep.subr.mxu0 0.0
        %6594 = vmatpush1.xpose.msra.mxu0 0.0
        %6595 = vmatprep.subr.mxu0 0.0
        %6596 = vmatpush1.xpose.msra.mxu0 0.0
        %6597 = vmatprep.subr.mxu0 0.0
        %6598 = vmatpush1.xpose.msra.mxu0 0.0
        %6599 = vmatprep.subr.mxu0 0.0
        %6600 = vmatpush1.xpose.msra.mxu0 0.0
        %6601 = vmatprep.subr.mxu0 0.0
        %6602 = vmatpush1.xpose.msra.mxu0 0.0
        %6603 = vmatprep.subr.mxu0 0.0
        %6604 = vmatpush1.xpose.msra.mxu0 0.0
        %6605 = vmatprep.subr.mxu0 0.0
        %6606 = vmatpush1.xpose.msra.mxu0 0.0
        %6607 = vmatprep.subr.mxu0 0.0
        %6608 = vmatpush1.xpose.msra.mxu0 0.0
        %6609 = vmatprep.subr.mxu0 0.0
        %6610 = vmatpush1.xpose.msra.mxu0 0.0
        %6611 = vmatprep.subr.mxu0 0.0
        %6612 = vmatpush1.xpose.msra.mxu0 0.0
        %6613 = vmatprep.subr.mxu0 0.0
        %6614 = vmatpush1.xpose.msra.mxu0 0.0
        %6615 = vmatprep.subr.mxu0 0.0
        %6616 = vmatpush1.xpose.msra.mxu0 0.0
        %6617 = vmatprep.subr.mxu0 0.0
        %6618 = vmatpush1.xpose.msra.mxu0 0.0
        %6619 = vmatprep.subr.mxu0 0.0
        %6620 = vmatpush1.xpose.msra.mxu0 0.0
        %6621 = vmatprep.subr.mxu0 0.0
        %6622 = vmatpush1.xpose.msra.mxu0 0.0
        %6623 = vmatprep.subr.mxu0 0.0
        %6624 = vmatpush1.xpose.msra.mxu0 0.0
        %6625 = vmatprep.subr.mxu0 0.0
        %6626 = vmatpush1.xpose.msra.mxu0 0.0
        %6627 = vmatprep.subr.mxu0 0.0
        %6628 = vmatpush1.xpose.msra.mxu0 0.0
        %6629 = vmatprep.subr.mxu0 0.0
        %6630 = vmatpush1.xpose.msra.mxu0 0.0
        %6631 = vmatprep.subr.mxu0 0.0
        %6632 = vmatpush1.xpose.msra.mxu0 0.0
        %6633 = vmatprep.subr.mxu0 0.0
        %6634 = vmatpush1.xpose.msra.mxu0 0.0
        %6635 = vmatprep.subr.mxu0 0.0
        %6636 = vmatpush1.xpose.msra.mxu0 0.0
        %6637 = vmatprep.subr.mxu0 0.0
        %6638 = vmatpush1.xpose.msra.mxu0 0.0
        %6639 = vmatprep.mubr.f32.mxu0 0.0
        %6640 = vmatmul.mubr.f32.gmra.mrb[0].mxu0 %v6249
        %v6641 = vpop.f32.mrb[0].mxu0
        %v6642 = vadd.f32 %v598, %v6641
        %v6643 = vpop.f32.mrb[0].mxu0
        %6644 = vdwg.mxu0
        %6647 = vrot.lane.b32.xlu0 %v6186, 96
        %v6648 = vpop.permute.xlu0 %6647
        %6649 = vrot.lane.b32.xlu0 %v6187, 96
        %v6650 = vpop.permute.xlu0 %6649
        %v6651 = vsel %vm851, %v6648, 0
        %v6653 = vsel %vm851, %v6650, 0
        %6655 = vmatprep.subr.mxu0 0.0
        %6656 = vmatpush1.xpose.msra.mxu0 %v6651
        %6657 = vmatprep.subr.mxu0 0.0
        %6658 = vmatpush1.xpose.msra.mxu0 %v6653
        %6659 = vmatprep.subr.mxu0 0.0
        %6660 = vmatpush1.xpose.msra.mxu0 0.0
        %6661 = vmatprep.subr.mxu0 0.0
        %6662 = vmatpush1.xpose.msra.mxu0 0.0
        %6663 = vmatprep.subr.mxu0 0.0
        %6664 = vmatpush1.xpose.msra.mxu0 0.0
        %6665 = vmatprep.subr.mxu0 0.0
        %6666 = vmatpush1.xpose.msra.mxu0 0.0
        %6667 = vmatprep.subr.mxu0 0.0
        %6668 = vmatpush1.xpose.msra.mxu0 0.0
        %6669 = vmatprep.subr.mxu0 0.0
        %6670 = vmatpush1.xpose.msra.mxu0 0.0
        %6671 = vmatprep.subr.mxu0 0.0
        %6672 = vmatpush1.xpose.msra.mxu0 0.0
        %6673 = vmatprep.subr.mxu0 0.0
        %6674 = vmatpush1.xpose.msra.mxu0 0.0
        %6675 = vmatprep.subr.mxu0 0.0
        %6676 = vmatpush1.xpose.msra.mxu0 0.0
        %6677 = vmatprep.subr.mxu0 0.0
        %6678 = vmatpush1.xpose.msra.mxu0 0.0
        %6679 = vmatprep.subr.mxu0 0.0
        %6680 = vmatpush1.xpose.msra.mxu0 0.0
        %6681 = vmatprep.subr.mxu0 0.0
        %6682 = vmatpush1.xpose.msra.mxu0 0.0
        %6683 = vmatprep.subr.mxu0 0.0
        %6684 = vmatpush1.xpose.msra.mxu0 0.0
        %6685 = vmatprep.subr.mxu0 0.0
        %6686 = vmatpush1.xpose.msra.mxu0 0.0
        %6687 = vmatprep.subr.mxu0 0.0
        %6688 = vmatpush1.xpose.msra.mxu0 0.0
        %6689 = vmatprep.subr.mxu0 0.0
        %6690 = vmatpush1.xpose.msra.mxu0 0.0
        %6691 = vmatprep.subr.mxu0 0.0
        %6692 = vmatpush1.xpose.msra.mxu0 0.0
        %6693 = vmatprep.subr.mxu0 0.0
        %6694 = vmatpush1.xpose.msra.mxu0 0.0
        %6695 = vmatprep.subr.mxu0 0.0
        %6696 = vmatpush1.xpose.msra.mxu0 0.0
        %6697 = vmatprep.subr.mxu0 0.0
        %6698 = vmatpush1.xpose.msra.mxu0 0.0
        %6699 = vmatprep.subr.mxu0 0.0
        %6700 = vmatpush1.xpose.msra.mxu0 0.0
        %6701 = vmatprep.subr.mxu0 0.0
        %6702 = vmatpush1.xpose.msra.mxu0 0.0
        %6703 = vmatprep.subr.mxu0 0.0
        %6704 = vmatpush1.xpose.msra.mxu0 0.0
        %6705 = vmatprep.subr.mxu0 0.0
        %6706 = vmatpush1.xpose.msra.mxu0 0.0
        %6707 = vmatprep.subr.mxu0 0.0
        %6708 = vmatpush1.xpose.msra.mxu0 0.0
        %6709 = vmatprep.subr.mxu0 0.0
        %6710 = vmatpush1.xpose.msra.mxu0 0.0
        %6711 = vmatprep.subr.mxu0 0.0
        %6712 = vmatpush1.xpose.msra.mxu0 0.0
        %6713 = vmatprep.subr.mxu0 0.0
        %6714 = vmatpush1.xpose.msra.mxu0 0.0
        %6715 = vmatprep.subr.mxu0 0.0
        %6716 = vmatpush1.xpose.msra.mxu0 0.0
        %6717 = vmatprep.subr.mxu0 0.0
        %6718 = vmatpush1.xpose.msra.mxu0 0.0
        %6719 = vmatprep.mubr.f32.mxu0 0.0
        %6720 = vmatmul.mubr.f32.gmra.mrb[0].mxu0 %v6249
        %v6721 = vpop.f32.mrb[0].mxu0
        %v6722 = vadd.f32 %v602, %v6721
        %v6723 = vpop.f32.mrb[0].mxu0
        %6724 = vdwg.mxu0
        %6727 = vrot.lane.b32.xlu0 %v6188, 96
        %v6728 = vpop.permute.xlu0 %6727
        %6729 = vrot.lane.b32.xlu0 %v6189, 96
        %v6730 = vpop.permute.xlu0 %6729
        %v6731 = vsel %vm851, %v6728, 0
        %v6733 = vsel %vm851, %v6730, 0
        %6735 = vmatprep.subr.mxu0 0.0
        %6736 = vmatpush1.xpose.msra.mxu0 %v6731
        %6737 = vmatprep.subr.mxu0 0.0
        %6738 = vmatpush1.xpose.msra.mxu0 %v6733
        %6739 = vmatprep.subr.mxu0 0.0
        %6740 = vmatpush1.xpose.msra.mxu0 0.0
        %6741 = vmatprep.subr.mxu0 0.0
        %6742 = vmatpush1.xpose.msra.mxu0 0.0
        %6743 = vmatprep.subr.mxu0 0.0
        %6744 = vmatpush1.xpose.msra.mxu0 0.0
        %6745 = vmatprep.subr.mxu0 0.0
        %6746 = vmatpush1.xpose.msra.mxu0 0.0
        %6747 = vmatprep.subr.mxu0 0.0
        %6748 = vmatpush1.xpose.msra.mxu0 0.0
        %6749 = vmatprep.subr.mxu0 0.0
        %6750 = vmatpush1.xpose.msra.mxu0 0.0
        %6751 = vmatprep.subr.mxu0 0.0
        %6752 = vmatpush1.xpose.msra.mxu0 0.0
        %6753 = vmatprep.subr.mxu0 0.0
        %6754 = vmatpush1.xpose.msra.mxu0 0.0
        %6755 = vmatprep.subr.mxu0 0.0
        %6756 = vmatpush1.xpose.msra.mxu0 0.0
        %6757 = vmatprep.subr.mxu0 0.0
        %6758 = vmatpush1.xpose.msra.mxu0 0.0
        %6759 = vmatprep.subr.mxu0 0.0
        %6760 = vmatpush1.xpose.msra.mxu0 0.0
        %6761 = vmatprep.subr.mxu0 0.0
        %6762 = vmatpush1.xpose.msra.mxu0 0.0
        %6763 = vmatprep.subr.mxu0 0.0
        %6764 = vmatpush1.xpose.msra.mxu0 0.0
        %6765 = vmatprep.subr.mxu0 0.0
        %6766 = vmatpush1.xpose.msra.mxu0 0.0
        %6767 = vmatprep.subr.mxu0 0.0
        %6768 = vmatpush1.xpose.msra.mxu0 0.0
        %6769 = vmatprep.subr.mxu0 0.0
        %6770 = vmatpush1.xpose.msra.mxu0 0.0
        %6771 = vmatprep.subr.mxu0 0.0
        %6772 = vmatpush1.xpose.msra.mxu0 0.0
        %6773 = vmatprep.subr.mxu0 0.0
        %6774 = vmatpush1.xpose.msra.mxu0 0.0
        %6775 = vmatprep.subr.mxu0 0.0
        %6776 = vmatpush1.xpose.msra.mxu0 0.0
        %6777 = vmatprep.subr.mxu0 0.0
        %6778 = vmatpush1.xpose.msra.mxu0 0.0
        %6779 = vmatprep.subr.mxu0 0.0
        %6780 = vmatpush1.xpose.msra.mxu0 0.0
        %6781 = vmatprep.subr.mxu0 0.0
        %6782 = vmatpush1.xpose.msra.mxu0 0.0
        %6783 = vmatprep.subr.mxu0 0.0
        %6784 = vmatpush1.xpose.msra.mxu0 0.0
        %6785 = vmatprep.subr.mxu0 0.0
        %6786 = vmatpush1.xpose.msra.mxu0 0.0
        %6787 = vmatprep.subr.mxu0 0.0
        %6788 = vmatpush1.xpose.msra.mxu0 0.0
        %6789 = vmatprep.subr.mxu0 0.0
        %6790 = vmatpush1.xpose.msra.mxu0 0.0
        %6791 = vmatprep.subr.mxu0 0.0
        %6792 = vmatpush1.xpose.msra.mxu0 0.0
        %6793 = vmatprep.subr.mxu0 0.0
        %6794 = vmatpush1.xpose.msra.mxu0 0.0
        %6795 = vmatprep.subr.mxu0 0.0
        %6796 = vmatpush1.xpose.msra.mxu0 0.0
        %6797 = vmatprep.subr.mxu0 0.0
        %6798 = vmatpush1.xpose.msra.mxu0 0.0
        %6799 = vmatprep.mubr.f32.mxu0 0.0
        %6800 = vmatmul.mubr.f32.gmra.mrb[0].mxu0 %v6249
        %v6801 = vpop.f32.mrb[0].mxu0
        %v6802 = vadd.f32 %v606, %v6801
        %v6803 = vpop.f32.mrb[0].mxu0
        %6804 = vdwg.mxu0
        %6807 = vrot.lane.b32.xlu0 %v6190, 96
        %v6808 = vpop.permute.xlu0 %6807
        %6809 = vrot.lane.b32.xlu0 %v6191, 96
        %v6810 = vpop.permute.xlu0 %6809
        %v6811 = vsel %vm851, %v6808, 0
        %v6813 = vsel %vm851, %v6810, 0
        %6815 = vmatprep.subr.mxu0 0.0
        %6816 = vmatpush1.xpose.msra.mxu0 %v6811
        %6817 = vmatprep.subr.mxu0 0.0
        %6818 = vmatpush1.xpose.msra.mxu0 %v6813
        %6819 = vmatprep.subr.mxu0 0.0
        %6820 = vmatpush1.xpose.msra.mxu0 0.0
        %6821 = vmatprep.subr.mxu0 0.0
        %6822 = vmatpush1.xpose.msra.mxu0 0.0
        %6823 = vmatprep.subr.mxu0 0.0
        %6824 = vmatpush1.xpose.msra.mxu0 0.0
        %6825 = vmatprep.subr.mxu0 0.0
        %6826 = vmatpush1.xpose.msra.mxu0 0.0
        %6827 = vmatprep.subr.mxu0 0.0
        %6828 = vmatpush1.xpose.msra.mxu0 0.0
        %6829 = vmatprep.subr.mxu0 0.0
        %6830 = vmatpush1.xpose.msra.mxu0 0.0
        %6831 = vmatprep.subr.mxu0 0.0
        %6832 = vmatpush1.xpose.msra.mxu0 0.0
        %6833 = vmatprep.subr.mxu0 0.0
        %6834 = vmatpush1.xpose.msra.mxu0 0.0
        %6835 = vmatprep.subr.mxu0 0.0
        %6836 = vmatpush1.xpose.msra.mxu0 0.0
        %6837 = vmatprep.subr.mxu0 0.0
        %6838 = vmatpush1.xpose.msra.mxu0 0.0
        %6839 = vmatprep.subr.mxu0 0.0
        %6840 = vmatpush1.xpose.msra.mxu0 0.0
        %6841 = vmatprep.subr.mxu0 0.0
        %6842 = vmatpush1.xpose.msra.mxu0 0.0
        %6843 = vmatprep.subr.mxu0 0.0
        %6844 = vmatpush1.xpose.msra.mxu0 0.0
        %6845 = vmatprep.subr.mxu0 0.0
        %6846 = vmatpush1.xpose.msra.mxu0 0.0
        %6847 = vmatprep.subr.mxu0 0.0
        %6848 = vmatpush1.xpose.msra.mxu0 0.0
        %6849 = vmatprep.subr.mxu0 0.0
        %6850 = vmatpush1.xpose.msra.mxu0 0.0
        %6851 = vmatprep.subr.mxu0 0.0
        %6852 = vmatpush1.xpose.msra.mxu0 0.0
        %6853 = vmatprep.subr.mxu0 0.0
        %6854 = vmatpush1.xpose.msra.mxu0 0.0
        %6855 = vmatprep.subr.mxu0 0.0
        %6856 = vmatpush1.xpose.msra.mxu0 0.0
        %6857 = vmatprep.subr.mxu0 0.0
        %6858 = vmatpush1.xpose.msra.mxu0 0.0
        %6859 = vmatprep.subr.mxu0 0.0
        %6860 = vmatpush1.xpose.msra.mxu0 0.0
        %6861 = vmatprep.subr.mxu0 0.0
        %6862 = vmatpush1.xpose.msra.mxu0 0.0
        %6863 = vmatprep.subr.mxu0 0.0
        %6864 = vmatpush1.xpose.msra.mxu0 0.0
        %6865 = vmatprep.subr.mxu0 0.0
        %6866 = vmatpush1.xpose.msra.mxu0 0.0
        %6867 = vmatprep.subr.mxu0 0.0
        %6868 = vmatpush1.xpose.msra.mxu0 0.0
        %6869 = vmatprep.subr.mxu0 0.0
        %6870 = vmatpush1.xpose.msra.mxu0 0.0
        %6871 = vmatprep.subr.mxu0 0.0
        %6872 = vmatpush1.xpose.msra.mxu0 0.0
        %6873 = vmatprep.subr.mxu0 0.0
        %6874 = vmatpush1.xpose.msra.mxu0 0.0
        %6875 = vmatprep.subr.mxu0 0.0
        %6876 = vmatpush1.xpose.msra.mxu0 0.0
        %6877 = vmatprep.subr.mxu0 0.0
        %6878 = vmatpush1.xpose.msra.mxu0 0.0
        %6879 = vmatprep.mubr.f32.mxu0 0.0
        %6880 = vmatmul.mubr.f32.gmra.mrb[0].mxu0 %v6249
        %v6881 = vpop.f32.mrb[0].mxu0
        %v6882 = vadd.f32 %v610, %v6881
        %v6883 = vpop.f32.mrb[0].mxu0
        %6884 = vdwg.mxu0
        %6887 = vrot.lane.b32.xlu0 %v6192, 96
        %v6888 = vpop.permute.xlu0 %6887
        %6889 = vrot.lane.b32.xlu0 %v6193, 96
        %v6890 = vpop.permute.xlu0 %6889
        %v6891 = vsel %vm851, %v6888, 0
        %v6893 = vsel %vm851, %v6890, 0
        %6895 = vmatprep.subr.mxu0 0.0
        %6896 = vmatpush1.xpose.msra.mxu0 %v6891
        %6897 = vmatprep.subr.mxu0 0.0
        %6898 = vmatpush1.xpose.msra.mxu0 %v6893
        %6899 = vmatprep.subr.mxu0 0.0
        %6900 = vmatpush1.xpose.msra.mxu0 0.0
        %6901 = vmatprep.subr.mxu0 0.0
        %6902 = vmatpush1.xpose.msra.mxu0 0.0
        %6903 = vmatprep.subr.mxu0 0.0
        %6904 = vmatpush1.xpose.msra.mxu0 0.0
        %6905 = vmatprep.subr.mxu0 0.0
        %6906 = vmatpush1.xpose.msra.mxu0 0.0
        %6907 = vmatprep.subr.mxu0 0.0
        %6908 = vmatpush1.xpose.msra.mxu0 0.0
        %6909 = vmatprep.subr.mxu0 0.0
        %6910 = vmatpush1.xpose.msra.mxu0 0.0
        %6911 = vmatprep.subr.mxu0 0.0
        %6912 = vmatpush1.xpose.msra.mxu0 0.0
        %6913 = vmatprep.subr.mxu0 0.0
        %6914 = vmatpush1.xpose.msra.mxu0 0.0
        %6915 = vmatprep.subr.mxu0 0.0
        %6916 = vmatpush1.xpose.msra.mxu0 0.0
        %6917 = vmatprep.subr.mxu0 0.0
        %6918 = vmatpush1.xpose.msra.mxu0 0.0
        %6919 = vmatprep.subr.mxu0 0.0
        %6920 = vmatpush1.xpose.msra.mxu0 0.0
        %6921 = vmatprep.subr.mxu0 0.0
        %6922 = vmatpush1.xpose.msra.mxu0 0.0
        %6923 = vmatprep.subr.mxu0 0.0
        %6924 = vmatpush1.xpose.msra.mxu0 0.0
        %6925 = vmatprep.subr.mxu0 0.0
        %6926 = vmatpush1.xpose.msra.mxu0 0.0
        %6927 = vmatprep.subr.mxu0 0.0
        %6928 = vmatpush1.xpose.msra.mxu0 0.0
        %6929 = vmatprep.subr.mxu0 0.0
        %6930 = vmatpush1.xpose.msra.mxu0 0.0
        %6931 = vmatprep.subr.mxu0 0.0
        %6932 = vmatpush1.xpose.msra.mxu0 0.0
        %6933 = vmatprep.subr.mxu0 0.0
        %6934 = vmatpush1.xpose.msra.mxu0 0.0
        %6935 = vmatprep.subr.mxu0 0.0
        %6936 = vmatpush1.xpose.msra.mxu0 0.0
        %6937 = vmatprep.subr.mxu0 0.0
        %6938 = vmatpush1.xpose.msra.mxu0 0.0
        %6939 = vmatprep.subr.mxu0 0.0
        %6940 = vmatpush1.xpose.msra.mxu0 0.0
        %6941 = vmatprep.subr.mxu0 0.0
        %6942 = vmatpush1.xpose.msra.mxu0 0.0
        %6943 = vmatprep.subr.mxu0 0.0
        %6944 = vmatpush1.xpose.msra.mxu0 0.0
        %6945 = vmatprep.subr.mxu0 0.0
        %6946 = vmatpush1.xpose.msra.mxu0 0.0
        %6947 = vmatprep.subr.mxu0 0.0
        %6948 = vmatpush1.xpose.msra.mxu0 0.0
        %6949 = vmatprep.subr.mxu0 0.0
        %6950 = vmatpush1.xpose.msra.mxu0 0.0
        %6951 = vmatprep.subr.mxu0 0.0
        %6952 = vmatpush1.xpose.msra.mxu0 0.0
        %6953 = vmatprep.subr.mxu0 0.0
        %6954 = vmatpush1.xpose.msra.mxu0 0.0
        %6955 = vmatprep.subr.mxu0 0.0
        %6956 = vmatpush1.xpose.msra.mxu0 0.0
        %6957 = vmatprep.subr.mxu0 0.0
        %6958 = vmatpush1.xpose.msra.mxu0 0.0
        %6959 = vmatprep.mubr.f32.mxu0 0.0
        %6960 = vmatmul.mubr.f32.gmra.mrb[0].mxu0 %v6249
        %v6961 = vpop.f32.mrb[0].mxu0
        %v6962 = vadd.f32 %v614, %v6961
        %v6963 = vpop.f32.mrb[0].mxu0
        %6964 = vdwg.mxu0
        %6967 = vrot.lane.b32.xlu0 %v6194, 96
        %v6968 = vpop.permute.xlu0 %6967
        %6969 = vrot.lane.b32.xlu0 %v6195, 96
        %v6970 = vpop.permute.xlu0 %6969
        %v6971 = vsel %vm851, %v6968, 0
        %v6973 = vsel %vm851, %v6970, 0
        %6975 = vmatprep.subr.mxu0 0.0
        %6976 = vmatpush1.xpose.msra.mxu0 %v6971
        %6977 = vmatprep.subr.mxu0 0.0
        %6978 = vmatpush1.xpose.msra.mxu0 %v6973
        %6979 = vmatprep.subr.mxu0 0.0
        %6980 = vmatpush1.xpose.msra.mxu0 0.0
        %6981 = vmatprep.subr.mxu0 0.0
        %6982 = vmatpush1.xpose.msra.mxu0 0.0
        %6983 = vmatprep.subr.mxu0 0.0
        %6984 = vmatpush1.xpose.msra.mxu0 0.0
        %6985 = vmatprep.subr.mxu0 0.0
        %6986 = vmatpush1.xpose.msra.mxu0 0.0
        %6987 = vmatprep.subr.mxu0 0.0
        %6988 = vmatpush1.xpose.msra.mxu0 0.0
        %6989 = vmatprep.subr.mxu0 0.0
        %6990 = vmatpush1.xpose.msra.mxu0 0.0
        %6991 = vmatprep.subr.mxu0 0.0
        %6992 = vmatpush1.xpose.msra.mxu0 0.0
        %6993 = vmatprep.subr.mxu0 0.0
        %6994 = vmatpush1.xpose.msra.mxu0 0.0
        %6995 = vmatprep.subr.mxu0 0.0
        %6996 = vmatpush1.xpose.msra.mxu0 0.0
        %6997 = vmatprep.subr.mxu0 0.0
        %6998 = vmatpush1.xpose.msra.mxu0 0.0
        %6999 = vmatprep.subr.mxu0 0.0
        %7000 = vmatpush1.xpose.msra.mxu0 0.0
        %7001 = vmatprep.subr.mxu0 0.0
        %7002 = vmatpush1.xpose.msra.mxu0 0.0
        %7003 = vmatprep.subr.mxu0 0.0
        %7004 = vmatpush1.xpose.msra.mxu0 0.0
        %7005 = vmatprep.subr.mxu0 0.0
        %7006 = vmatpush1.xpose.msra.mxu0 0.0
        %7007 = vmatprep.subr.mxu0 0.0
        %7008 = vmatpush1.xpose.msra.mxu0 0.0
        %7009 = vmatprep.subr.mxu0 0.0
        %7010 = vmatpush1.xpose.msra.mxu0 0.0
        %7011 = vmatprep.subr.mxu0 0.0
        %7012 = vmatpush1.xpose.msra.mxu0 0.0
        %7013 = vmatprep.subr.mxu0 0.0
        %7014 = vmatpush1.xpose.msra.mxu0 0.0
        %7015 = vmatprep.subr.mxu0 0.0
        %7016 = vmatpush1.xpose.msra.mxu0 0.0
        %7017 = vmatprep.subr.mxu0 0.0
        %7018 = vmatpush1.xpose.msra.mxu0 0.0
        %7019 = vmatprep.subr.mxu0 0.0
        %7020 = vmatpush1.xpose.msra.mxu0 0.0
        %7021 = vmatprep.subr.mxu0 0.0
        %7022 = vmatpush1.xpose.msra.mxu0 0.0
        %7023 = vmatprep.subr.mxu0 0.0
        %7024 = vmatpush1.xpose.msra.mxu0 0.0
        %7025 = vmatprep.subr.mxu0 0.0
        %7026 = vmatpush1.xpose.msra.mxu0 0.0
        %7027 = vmatprep.subr.mxu0 0.0
        %7028 = vmatpush1.xpose.msra.mxu0 0.0
        %7029 = vmatprep.subr.mxu0 0.0
        %7030 = vmatpush1.xpose.msra.mxu0 0.0
        %7031 = vmatprep.subr.mxu0 0.0
        %7032 = vmatpush1.xpose.msra.mxu0 0.0
        %7033 = vmatprep.subr.mxu0 0.0
        %7034 = vmatpush1.xpose.msra.mxu0 0.0
        %7035 = vmatprep.subr.mxu0 0.0
        %7036 = vmatpush1.xpose.msra.mxu0 0.0
        %7037 = vmatprep.subr.mxu0 0.0
        %7038 = vmatpush1.xpose.msra.mxu0 0.0
        %7039 = vmatprep.mubr.f32.mxu0 0.0
        %7040 = vmatmul.mubr.f32.gmra.mrb[0].mxu0 %v6249
        %v7041 = vpop.f32.mrb[0].mxu0
        %v7042 = vadd.f32 %v618, %v7041
        %v7043 = vpop.f32.mrb[0].mxu0
        %7044 = vdwg.mxu0
        %7047 = vrot.lane.b32.xlu0 %v6196, 96
        %v7048 = vpop.permute.xlu0 %7047
        %7049 = vrot.lane.b32.xlu0 %v6197, 96
        %v7050 = vpop.permute.xlu0 %7049
        %v7051 = vsel %vm851, %v7048, 0
        %v7053 = vsel %vm851, %v7050, 0
        %7055 = vmatprep.subr.mxu0 0.0
        %7056 = vmatpush1.xpose.msra.mxu0 %v7051
        %7057 = vmatprep.subr.mxu0 0.0
        %7058 = vmatpush1.xpose.msra.mxu0 %v7053
        %7059 = vmatprep.subr.mxu0 0.0
        %7060 = vmatpush1.xpose.msra.mxu0 0.0
        %7061 = vmatprep.subr.mxu0 0.0
        %7062 = vmatpush1.xpose.msra.mxu0 0.0
        %7063 = vmatprep.subr.mxu0 0.0
        %7064 = vmatpush1.xpose.msra.mxu0 0.0
        %7065 = vmatprep.subr.mxu0 0.0
        %7066 = vmatpush1.xpose.msra.mxu0 0.0
        %7067 = vmatprep.subr.mxu0 0.0
        %7068 = vmatpush1.xpose.msra.mxu0 0.0
        %7069 = vmatprep.subr.mxu0 0.0
        %7070 = vmatpush1.xpose.msra.mxu0 0.0
        %7071 = vmatprep.subr.mxu0 0.0
        %7072 = vmatpush1.xpose.msra.mxu0 0.0
        %7073 = vmatprep.subr.mxu0 0.0
        %7074 = vmatpush1.xpose.msra.mxu0 0.0
        %7075 = vmatprep.subr.mxu0 0.0
        %7076 = vmatpush1.xpose.msra.mxu0 0.0
        %7077 = vmatprep.subr.mxu0 0.0
        %7078 = vmatpush1.xpose.msra.mxu0 0.0
        %7079 = vmatprep.subr.mxu0 0.0
        %7080 = vmatpush1.xpose.msra.mxu0 0.0
        %7081 = vmatprep.subr.mxu0 0.0
        %7082 = vmatpush1.xpose.msra.mxu0 0.0
        %7083 = vmatprep.subr.mxu0 0.0
        %7084 = vmatpush1.xpose.msra.mxu0 0.0
        %7085 = vmatprep.subr.mxu0 0.0
        %7086 = vmatpush1.xpose.msra.mxu0 0.0
        %7087 = vmatprep.subr.mxu0 0.0
        %7088 = vmatpush1.xpose.msra.mxu0 0.0
        %7089 = vmatprep.subr.mxu0 0.0
        %7090 = vmatpush1.xpose.msra.mxu0 0.0
        %7091 = vmatprep.subr.mxu0 0.0
        %7092 = vmatpush1.xpose.msra.mxu0 0.0
        %7093 = vmatprep.subr.mxu0 0.0
        %7094 = vmatpush1.xpose.msra.mxu0 0.0
        %7095 = vmatprep.subr.mxu0 0.0
        %7096 = vmatpush1.xpose.msra.mxu0 0.0
        %7097 = vmatprep.subr.mxu0 0.0
        %7098 = vmatpush1.xpose.msra.mxu0 0.0
        %7099 = vmatprep.subr.mxu0 0.0
        %7100 = vmatpush1.xpose.msra.mxu0 0.0
        %7101 = vmatprep.subr.mxu0 0.0
        %7102 = vmatpush1.xpose.msra.mxu0 0.0
        %7103 = vmatprep.subr.mxu0 0.0
        %7104 = vmatpush1.xpose.msra.mxu0 0.0
        %7105 = vmatprep.subr.mxu0 0.0
        %7106 = vmatpush1.xpose.msra.mxu0 0.0
        %7107 = vmatprep.subr.mxu0 0.0
        %7108 = vmatpush1.xpose.msra.mxu0 0.0
        %7109 = vmatprep.subr.mxu0 0.0
        %7110 = vmatpush1.xpose.msra.mxu0 0.0
        %7111 = vmatprep.subr.mxu0 0.0
        %7112 = vmatpush1.xpose.msra.mxu0 0.0
        %7113 = vmatprep.subr.mxu0 0.0
        %7114 = vmatpush1.xpose.msra.mxu0 0.0
        %7115 = vmatprep.subr.mxu0 0.0
        %7116 = vmatpush1.xpose.msra.mxu0 0.0
        %7117 = vmatprep.subr.mxu0 0.0
        %7118 = vmatpush1.xpose.msra.mxu0 0.0
        %7119 = vmatprep.mubr.f32.mxu0 0.0
        %7120 = vmatmul.mubr.f32.gmra.mrb[0].mxu0 %v6249
        %v7121 = vpop.f32.mrb[0].mxu0
        %v7122 = vadd.f32 %v622, %v7121
        %v7123 = vpop.f32.mrb[0].mxu0
        %7124 = vdwg.mxu0
        %7127 = vrot.lane.b32.xlu0 %v6198, 96
        %v7128 = vpop.permute.xlu0 %7127
        %7129 = vrot.lane.b32.xlu0 %v6199, 96
        %v7130 = vpop.permute.xlu0 %7129
        %v7131 = vsel %vm851, %v7128, 0
        %v7133 = vsel %vm851, %v7130, 0
        %7135 = vmatprep.subr.mxu0 0.0
        %7136 = vmatpush1.xpose.msra.mxu0 %v7131
        %7137 = vmatprep.subr.mxu0 0.0
        %7138 = vmatpush1.xpose.msra.mxu0 %v7133
        %7139 = vmatprep.subr.mxu0 0.0
        %7140 = vmatpush1.xpose.msra.mxu0 0.0
        %7141 = vmatprep.subr.mxu0 0.0
        %7142 = vmatpush1.xpose.msra.mxu0 0.0
        %7143 = vmatprep.subr.mxu0 0.0
        %7144 = vmatpush1.xpose.msra.mxu0 0.0
        %7145 = vmatprep.subr.mxu0 0.0
        %7146 = vmatpush1.xpose.msra.mxu0 0.0
        %7147 = vmatprep.subr.mxu0 0.0
        %7148 = vmatpush1.xpose.msra.mxu0 0.0
        %7149 = vmatprep.subr.mxu0 0.0
        %7150 = vmatpush1.xpose.msra.mxu0 0.0
        %7151 = vmatprep.subr.mxu0 0.0
        %7152 = vmatpush1.xpose.msra.mxu0 0.0
        %7153 = vmatprep.subr.mxu0 0.0
        %7154 = vmatpush1.xpose.msra.mxu0 0.0
        %7155 = vmatprep.subr.mxu0 0.0
        %7156 = vmatpush1.xpose.msra.mxu0 0.0
        %7157 = vmatprep.subr.mxu0 0.0
        %7158 = vmatpush1.xpose.msra.mxu0 0.0
        %7159 = vmatprep.subr.mxu0 0.0
        %7160 = vmatpush1.xpose.msra.mxu0 0.0
        %7161 = vmatprep.subr.mxu0 0.0
        %7162 = vmatpush1.xpose.msra.mxu0 0.0
        %7163 = vmatprep.subr.mxu0 0.0
        %7164 = vmatpush1.xpose.msra.mxu0 0.0
        %7165 = vmatprep.subr.mxu0 0.0
        %7166 = vmatpush1.xpose.msra.mxu0 0.0
        %7167 = vmatprep.subr.mxu0 0.0
        %7168 = vmatpush1.xpose.msra.mxu0 0.0
        %7169 = vmatprep.subr.mxu0 0.0
        %7170 = vmatpush1.xpose.msra.mxu0 0.0
        %7171 = vmatprep.subr.mxu0 0.0
        %7172 = vmatpush1.xpose.msra.mxu0 0.0
        %7173 = vmatprep.subr.mxu0 0.0
        %7174 = vmatpush1.xpose.msra.mxu0 0.0
        %7175 = vmatprep.subr.mxu0 0.0
        %7176 = vmatpush1.xpose.msra.mxu0 0.0
        %7177 = vmatprep.subr.mxu0 0.0
        %7178 = vmatpush1.xpose.msra.mxu0 0.0
        %7179 = vmatprep.subr.mxu0 0.0
        %7180 = vmatpush1.xpose.msra.mxu0 0.0
        %7181 = vmatprep.subr.mxu0 0.0
        %7182 = vmatpush1.xpose.msra.mxu0 0.0
        %7183 = vmatprep.subr.mxu0 0.0
        %7184 = vmatpush1.xpose.msra.mxu0 0.0
        %7185 = vmatprep.subr.mxu0 0.0
        %7186 = vmatpush1.xpose.msra.mxu0 0.0
        %7187 = vmatprep.subr.mxu0 0.0
        %7188 = vmatpush1.xpose.msra.mxu0 0.0
        %7189 = vmatprep.subr.mxu0 0.0
        %7190 = vmatpush1.xpose.msra.mxu0 0.0
        %7191 = vmatprep.subr.mxu0 0.0
        %7192 = vmatpush1.xpose.msra.mxu0 0.0
        %7193 = vmatprep.subr.mxu0 0.0
        %7194 = vmatpush1.xpose.msra.mxu0 0.0
        %7195 = vmatprep.subr.mxu0 0.0
        %7196 = vmatpush1.xpose.msra.mxu0 0.0
        %7197 = vmatprep.subr.mxu0 0.0
        %7198 = vmatpush1.xpose.msra.mxu0 0.0
        %7199 = vmatprep.mubr.f32.mxu0 0.0
        %7200 = vmatmul.mubr.f32.gmra.mrb[0].mxu0 %v6249
        %v7201 = vpop.f32.mrb[0].mxu0
        %v7202 = vadd.f32 %v626, %v7201
        %v7203 = vpop.f32.mrb[0].mxu0
        %7204 = vdwg.mxu0
        %7207 = vrot.lane.b32.xlu0 %v6200, 96
        %v7208 = vpop.permute.xlu0 %7207
        %7209 = vrot.lane.b32.xlu0 %v6201, 96
        %v7210 = vpop.permute.xlu0 %7209
        %v7211 = vsel %vm851, %v7208, 0
        %v7213 = vsel %vm851, %v7210, 0
        %7215 = vmatprep.subr.mxu0 0.0
        %7216 = vmatpush1.xpose.msra.mxu0 %v7211
        %7217 = vmatprep.subr.mxu0 0.0
        %7218 = vmatpush1.xpose.msra.mxu0 %v7213
        %7219 = vmatprep.subr.mxu0 0.0
        %7220 = vmatpush1.xpose.msra.mxu0 0.0
        %7221 = vmatprep.subr.mxu0 0.0
        %7222 = vmatpush1.xpose.msra.mxu0 0.0
        %7223 = vmatprep.subr.mxu0 0.0
        %7224 = vmatpush1.xpose.msra.mxu0 0.0
        %7225 = vmatprep.subr.mxu0 0.0
        %7226 = vmatpush1.xpose.msra.mxu0 0.0
        %7227 = vmatprep.subr.mxu0 0.0
        %7228 = vmatpush1.xpose.msra.mxu0 0.0
        %7229 = vmatprep.subr.mxu0 0.0
        %7230 = vmatpush1.xpose.msra.mxu0 0.0
        %7231 = vmatprep.subr.mxu0 0.0
        %7232 = vmatpush1.xpose.msra.mxu0 0.0
        %7233 = vmatprep.subr.mxu0 0.0
        %7234 = vmatpush1.xpose.msra.mxu0 0.0
        %7235 = vmatprep.subr.mxu0 0.0
        %7236 = vmatpush1.xpose.msra.mxu0 0.0
        %7237 = vmatprep.subr.mxu0 0.0
        %7238 = vmatpush1.xpose.msra.mxu0 0.0
        %7239 = vmatprep.subr.mxu0 0.0
        %7240 = vmatpush1.xpose.msra.mxu0 0.0
        %7241 = vmatprep.subr.mxu0 0.0
        %7242 = vmatpush1.xpose.msra.mxu0 0.0
        %7243 = vmatprep.subr.mxu0 0.0
        %7244 = vmatpush1.xpose.msra.mxu0 0.0
        %7245 = vmatprep.subr.mxu0 0.0
        %7246 = vmatpush1.xpose.msra.mxu0 0.0
        %7247 = vmatprep.subr.mxu0 0.0
        %7248 = vmatpush1.xpose.msra.mxu0 0.0
        %7249 = vmatprep.subr.mxu0 0.0
        %7250 = vmatpush1.xpose.msra.mxu0 0.0
        %7251 = vmatprep.subr.mxu0 0.0
        %7252 = vmatpush1.xpose.msra.mxu0 0.0
        %7253 = vmatprep.subr.mxu0 0.0
        %7254 = vmatpush1.xpose.msra.mxu0 0.0
        %7255 = vmatprep.subr.mxu0 0.0
        %7256 = vmatpush1.xpose.msra.mxu0 0.0
        %7257 = vmatprep.subr.mxu0 0.0
        %7258 = vmatpush1.xpose.msra.mxu0 0.0
        %7259 = vmatprep.subr.mxu0 0.0
        %7260 = vmatpush1.xpose.msra.mxu0 0.0
        %7261 = vmatprep.subr.mxu0 0.0
        %7262 = vmatpush1.xpose.msra.mxu0 0.0
        %7263 = vmatprep.subr.mxu0 0.0
        %7264 = vmatpush1.xpose.msra.mxu0 0.0
        %7265 = vmatprep.subr.mxu0 0.0
        %7266 = vmatpush1.xpose.msra.mxu0 0.0
        %7267 = vmatprep.subr.mxu0 0.0
        %7268 = vmatpush1.xpose.msra.mxu0 0.0
        %7269 = vmatprep.subr.mxu0 0.0
        %7270 = vmatpush1.xpose.msra.mxu0 0.0
        %7271 = vmatprep.subr.mxu0 0.0
        %7272 = vmatpush1.xpose.msra.mxu0 0.0
        %7273 = vmatprep.subr.mxu0 0.0
        %7274 = vmatpush1.xpose.msra.mxu0 0.0
        %7275 = vmatprep.subr.mxu0 0.0
        %7276 = vmatpush1.xpose.msra.mxu0 0.0
        %7277 = vmatprep.subr.mxu0 0.0
        %7278 = vmatpush1.xpose.msra.mxu0 0.0
        %7279 = vmatprep.mubr.f32.mxu0 0.0
        %7280 = vmatmul.mubr.f32.gmra.mrb[0].mxu0 %v6249
        %v7281 = vpop.f32.mrb[0].mxu0
        %v7282 = vadd.f32 %v630, %v7281
        %v7283 = vpop.f32.mrb[0].mxu0
        %7284 = vdwg.mxu0
        %7287 = vrot.lane.b32.xlu0 %v6202, 96
        %v7288 = vpop.permute.xlu0 %7287
        %7289 = vrot.lane.b32.xlu0 %v6203, 96
        %v7290 = vpop.permute.xlu0 %7289
        %v7291 = vsel %vm851, %v7288, 0
        %v7293 = vsel %vm851, %v7290, 0
        %7295 = vmatprep.subr.mxu0 0.0
        %7296 = vmatpush1.xpose.msra.mxu0 %v7291
        %7297 = vmatprep.subr.mxu0 0.0
        %7298 = vmatpush1.xpose.msra.mxu0 %v7293
        %7299 = vmatprep.subr.mxu0 0.0
        %7300 = vmatpush1.xpose.msra.mxu0 0.0
        %7301 = vmatprep.subr.mxu0 0.0
        %7302 = vmatpush1.xpose.msra.mxu0 0.0
        %7303 = vmatprep.subr.mxu0 0.0
        %7304 = vmatpush1.xpose.msra.mxu0 0.0
        %7305 = vmatprep.subr.mxu0 0.0
        %7306 = vmatpush1.xpose.msra.mxu0 0.0
        %7307 = vmatprep.subr.mxu0 0.0
        %7308 = vmatpush1.xpose.msra.mxu0 0.0
        %7309 = vmatprep.subr.mxu0 0.0
        %7310 = vmatpush1.xpose.msra.mxu0 0.0
        %7311 = vmatprep.subr.mxu0 0.0
        %7312 = vmatpush1.xpose.msra.mxu0 0.0
        %7313 = vmatprep.subr.mxu0 0.0
        %7314 = vmatpush1.xpose.msra.mxu0 0.0
        %7315 = vmatprep.subr.mxu0 0.0
        %7316 = vmatpush1.xpose.msra.mxu0 0.0
        %7317 = vmatprep.subr.mxu0 0.0
        %7318 = vmatpush1.xpose.msra.mxu0 0.0
        %7319 = vmatprep.subr.mxu0 0.0
        %7320 = vmatpush1.xpose.msra.mxu0 0.0
        %7321 = vmatprep.subr.mxu0 0.0
        %7322 = vmatpush1.xpose.msra.mxu0 0.0
        %7323 = vmatprep.subr.mxu0 0.0
        %7324 = vmatpush1.xpose.msra.mxu0 0.0
        %7325 = vmatprep.subr.mxu0 0.0
        %7326 = vmatpush1.xpose.msra.mxu0 0.0
        %7327 = vmatprep.subr.mxu0 0.0
        %7328 = vmatpush1.xpose.msra.mxu0 0.0
        %7329 = vmatprep.subr.mxu0 0.0
        %7330 = vmatpush1.xpose.msra.mxu0 0.0
        %7331 = vmatprep.subr.mxu0 0.0
        %7332 = vmatpush1.xpose.msra.mxu0 0.0
        %7333 = vmatprep.subr.mxu0 0.0
        %7334 = vmatpush1.xpose.msra.mxu0 0.0
        %7335 = vmatprep.subr.mxu0 0.0
        %7336 = vmatpush1.xpose.msra.mxu0 0.0
        %7337 = vmatprep.subr.mxu0 0.0
        %7338 = vmatpush1.xpose.msra.mxu0 0.0
        %7339 = vmatprep.subr.mxu0 0.0
        %7340 = vmatpush1.xpose.msra.mxu0 0.0
        %7341 = vmatprep.subr.mxu0 0.0
        %7342 = vmatpush1.xpose.msra.mxu0 0.0
        %7343 = vmatprep.subr.mxu0 0.0
        %7344 = vmatpush1.xpose.msra.mxu0 0.0
        %7345 = vmatprep.subr.mxu0 0.0
        %7346 = vmatpush1.xpose.msra.mxu0 0.0
        %7347 = vmatprep.subr.mxu0 0.0
        %7348 = vmatpush1.xpose.msra.mxu0 0.0
        %7349 = vmatprep.subr.mxu0 0.0
        %7350 = vmatpush1.xpose.msra.mxu0 0.0
        %7351 = vmatprep.subr.mxu0 0.0
        %7352 = vmatpush1.xpose.msra.mxu0 0.0
        %7353 = vmatprep.subr.mxu0 0.0
        %7354 = vmatpush1.xpose.msra.mxu0 0.0
        %7355 = vmatprep.subr.mxu0 0.0
        %7356 = vmatpush1.xpose.msra.mxu0 0.0
        %7357 = vmatprep.subr.mxu0 0.0
        %7358 = vmatpush1.xpose.msra.mxu0 0.0
        %7359 = vmatprep.mubr.f32.mxu0 0.0
        %7360 = vmatmul.mubr.f32.gmra.mrb[0].mxu0 %v6249
        %v7361 = vpop.f32.mrb[0].mxu0
        %v7362 = vadd.f32 %v634, %v7361
        %v7363 = vpop.f32.mrb[0].mxu0
        %7364 = vdwg.mxu0
        %7367 = vrot.lane.b32.xlu0 %v6204, 96
        %v7368 = vpop.permute.xlu0 %7367
        %7369 = vrot.lane.b32.xlu0 %v6205, 96
        %v7370 = vpop.permute.xlu0 %7369
        %v7371 = vsel %vm851, %v7368, 0
        %v7373 = vsel %vm851, %v7370, 0
        %7375 = vmatprep.subr.mxu0 0.0
        %7376 = vmatpush1.xpose.msra.mxu0 %v7371
        %7377 = vmatprep.subr.mxu0 0.0
        %7378 = vmatpush1.xpose.msra.mxu0 %v7373
        %7379 = vmatprep.subr.mxu0 0.0
        %7380 = vmatpush1.xpose.msra.mxu0 0.0
        %7381 = vmatprep.subr.mxu0 0.0
        %7382 = vmatpush1.xpose.msra.mxu0 0.0
        %7383 = vmatprep.subr.mxu0 0.0
        %7384 = vmatpush1.xpose.msra.mxu0 0.0
        %7385 = vmatprep.subr.mxu0 0.0
        %7386 = vmatpush1.xpose.msra.mxu0 0.0
        %7387 = vmatprep.subr.mxu0 0.0
        %7388 = vmatpush1.xpose.msra.mxu0 0.0
        %7389 = vmatprep.subr.mxu0 0.0
        %7390 = vmatpush1.xpose.msra.mxu0 0.0
        %7391 = vmatprep.subr.mxu0 0.0
        %7392 = vmatpush1.xpose.msra.mxu0 0.0
        %7393 = vmatprep.subr.mxu0 0.0
        %7394 = vmatpush1.xpose.msra.mxu0 0.0
        %7395 = vmatprep.subr.mxu0 0.0
        %7396 = vmatpush1.xpose.msra.mxu0 0.0
        %7397 = vmatprep.subr.mxu0 0.0
        %7398 = vmatpush1.xpose.msra.mxu0 0.0
        %7399 = vmatprep.subr.mxu0 0.0
        %7400 = vmatpush1.xpose.msra.mxu0 0.0
        %7401 = vmatprep.subr.mxu0 0.0
        %7402 = vmatpush1.xpose.msra.mxu0 0.0
        %7403 = vmatprep.subr.mxu0 0.0
        %7404 = vmatpush1.xpose.msra.mxu0 0.0
        %7405 = vmatprep.subr.mxu0 0.0
        %7406 = vmatpush1.xpose.msra.mxu0 0.0
        %7407 = vmatprep.subr.mxu0 0.0
        %7408 = vmatpush1.xpose.msra.mxu0 0.0
        %7409 = vmatprep.subr.mxu0 0.0
        %7410 = vmatpush1.xpose.msra.mxu0 0.0
        %7411 = vmatprep.subr.mxu0 0.0
        %7412 = vmatpush1.xpose.msra.mxu0 0.0
        %7413 = vmatprep.subr.mxu0 0.0
        %7414 = vmatpush1.xpose.msra.mxu0 0.0
        %7415 = vmatprep.subr.mxu0 0.0
        %7416 = vmatpush1.xpose.msra.mxu0 0.0
        %7417 = vmatprep.subr.mxu0 0.0
        %7418 = vmatpush1.xpose.msra.mxu0 0.0
        %7419 = vmatprep.subr.mxu0 0.0
        %7420 = vmatpush1.xpose.msra.mxu0 0.0
        %7421 = vmatprep.subr.mxu0 0.0
        %7422 = vmatpush1.xpose.msra.mxu0 0.0
        %7423 = vmatprep.subr.mxu0 0.0
        %7424 = vmatpush1.xpose.msra.mxu0 0.0
        %7425 = vmatprep.subr.mxu0 0.0
        %7426 = vmatpush1.xpose.msra.mxu0 0.0
        %7427 = vmatprep.subr.mxu0 0.0
        %7428 = vmatpush1.xpose.msra.mxu0 0.0
        %7429 = vmatprep.subr.mxu0 0.0
        %7430 = vmatpush1.xpose.msra.mxu0 0.0
        %7431 = vmatprep.subr.mxu0 0.0
        %7432 = vmatpush1.xpose.msra.mxu0 0.0
        %7433 = vmatprep.subr.mxu0 0.0
        %7434 = vmatpush1.xpose.msra.mxu0 0.0
        %7435 = vmatprep.subr.mxu0 0.0
        %7436 = vmatpush1.xpose.msra.mxu0 0.0
        %7437 = vmatprep.subr.mxu0 0.0
        %7438 = vmatpush1.xpose.msra.mxu0 0.0
        %7439 = vmatprep.mubr.f32.mxu0 0.0
        %7440 = vmatmul.mubr.f32.gmra.mrb[0].mxu0 %v6249
        %v7441 = vpop.f32.mrb[0].mxu0
        %v7442 = vadd.f32 %v638, %v7441
        %v7443 = vpop.f32.mrb[0].mxu0
        %7444 = vdwg.mxu0
        %7447 = vrot.lane.b32.xlu0 %v6206, 96
        %v7448 = vpop.permute.xlu0 %7447
        %7449 = vrot.lane.b32.xlu0 %v6207, 96
        %v7450 = vpop.permute.xlu0 %7449
        %v7451 = vsel %vm851, %v7448, 0
        %v7453 = vsel %vm851, %v7450, 0
        %7455 = vmatprep.subr.mxu0 0.0
        %7456 = vmatpush1.xpose.msra.mxu0 %v7451
        %7457 = vmatprep.subr.mxu0 0.0
        %7458 = vmatpush1.xpose.msra.mxu0 %v7453
        %7459 = vmatprep.subr.mxu0 0.0
        %7460 = vmatpush1.xpose.msra.mxu0 0.0
        %7461 = vmatprep.subr.mxu0 0.0
        %7462 = vmatpush1.xpose.msra.mxu0 0.0
        %7463 = vmatprep.subr.mxu0 0.0
        %7464 = vmatpush1.xpose.msra.mxu0 0.0
        %7465 = vmatprep.subr.mxu0 0.0
        %7466 = vmatpush1.xpose.msra.mxu0 0.0
        %7467 = vmatprep.subr.mxu0 0.0
        %7468 = vmatpush1.xpose.msra.mxu0 0.0
        %7469 = vmatprep.subr.mxu0 0.0
        %7470 = vmatpush1.xpose.msra.mxu0 0.0
        %7471 = vmatprep.subr.mxu0 0.0
        %7472 = vmatpush1.xpose.msra.mxu0 0.0
        %7473 = vmatprep.subr.mxu0 0.0
        %7474 = vmatpush1.xpose.msra.mxu0 0.0
        %7475 = vmatprep.subr.mxu0 0.0
        %7476 = vmatpush1.xpose.msra.mxu0 0.0
        %7477 = vmatprep.subr.mxu0 0.0
        %7478 = vmatpush1.xpose.msra.mxu0 0.0
        %7479 = vmatprep.subr.mxu0 0.0
        %7480 = vmatpush1.xpose.msra.mxu0 0.0
        %7481 = vmatprep.subr.mxu0 0.0
        %7482 = vmatpush1.xpose.msra.mxu0 0.0
        %7483 = vmatprep.subr.mxu0 0.0
        %7484 = vmatpush1.xpose.msra.mxu0 0.0
        %7485 = vmatprep.subr.mxu0 0.0
        %7486 = vmatpush1.xpose.msra.mxu0 0.0
        %7487 = vmatprep.subr.mxu0 0.0
        %7488 = vmatpush1.xpose.msra.mxu0 0.0
        %7489 = vmatprep.subr.mxu0 0.0
        %7490 = vmatpush1.xpose.msra.mxu0 0.0
        %7491 = vmatprep.subr.mxu0 0.0
        %7492 = vmatpush1.xpose.msra.mxu0 0.0
        %7493 = vmatprep.subr.mxu0 0.0
        %7494 = vmatpush1.xpose.msra.mxu0 0.0
        %7495 = vmatprep.subr.mxu0 0.0
        %7496 = vmatpush1.xpose.msra.mxu0 0.0
        %7497 = vmatprep.subr.mxu0 0.0
        %7498 = vmatpush1.xpose.msra.mxu0 0.0
        %7499 = vmatprep.subr.mxu0 0.0
        %7500 = vmatpush1.xpose.msra.mxu0 0.0
        %7501 = vmatprep.subr.mxu0 0.0
        %7502 = vmatpush1.xpose.msra.mxu0 0.0
        %7503 = vmatprep.subr.mxu0 0.0
        %7504 = vmatpush1.xpose.msra.mxu0 0.0
        %7505 = vmatprep.subr.mxu0 0.0
        %7506 = vmatpush1.xpose.msra.mxu0 0.0
        %7507 = vmatprep.subr.mxu0 0.0
        %7508 = vmatpush1.xpose.msra.mxu0 0.0
        %7509 = vmatprep.subr.mxu0 0.0
        %7510 = vmatpush1.xpose.msra.mxu0 0.0
        %7511 = vmatprep.subr.mxu0 0.0
        %7512 = vmatpush1.xpose.msra.mxu0 0.0
        %7513 = vmatprep.subr.mxu0 0.0
        %7514 = vmatpush1.xpose.msra.mxu0 0.0
        %7515 = vmatprep.subr.mxu0 0.0
        %7516 = vmatpush1.xpose.msra.mxu0 0.0
        %7517 = vmatprep.subr.mxu0 0.0
        %7518 = vmatpush1.xpose.msra.mxu0 0.0
        %7519 = vmatprep.mubr.f32.mxu0 0.0
        %7520 = vmatmul.mubr.f32.gmra.mrb[0].mxu0 %v6249
        %v7521 = vpop.f32.mrb[0].mxu0
        %v7522 = vadd.f32 %v642, %v7521
        %v7523 = vpop.f32.mrb[0].mxu0
        %7524 = vdwg.mxu0
        %7527 = vrot.lane.b32.xlu0 %v6208, 96
        %v7528 = vpop.permute.xlu0 %7527
        %7529 = vrot.lane.b32.xlu0 %v6209, 96
        %v7530 = vpop.permute.xlu0 %7529
        %v7531 = vsel %vm851, %v7528, 0
        %v7533 = vsel %vm851, %v7530, 0
        %7535 = vmatprep.subr.mxu0 0.0
        %7536 = vmatpush1.xpose.msra.mxu0 %v7531
        %7537 = vmatprep.subr.mxu0 0.0
        %7538 = vmatpush1.xpose.msra.mxu0 %v7533
        %7539 = vmatprep.subr.mxu0 0.0
        %7540 = vmatpush1.xpose.msra.mxu0 0.0
        %7541 = vmatprep.subr.mxu0 0.0
        %7542 = vmatpush1.xpose.msra.mxu0 0.0
        %7543 = vmatprep.subr.mxu0 0.0
        %7544 = vmatpush1.xpose.msra.mxu0 0.0
        %7545 = vmatprep.subr.mxu0 0.0
        %7546 = vmatpush1.xpose.msra.mxu0 0.0
        %7547 = vmatprep.subr.mxu0 0.0
        %7548 = vmatpush1.xpose.msra.mxu0 0.0
        %7549 = vmatprep.subr.mxu0 0.0
        %7550 = vmatpush1.xpose.msra.mxu0 0.0
        %7551 = vmatprep.subr.mxu0 0.0
        %7552 = vmatpush1.xpose.msra.mxu0 0.0
        %7553 = vmatprep.subr.mxu0 0.0
        %7554 = vmatpush1.xpose.msra.mxu0 0.0
        %7555 = vmatprep.subr.mxu0 0.0
        %7556 = vmatpush1.xpose.msra.mxu0 0.0
        %7557 = vmatprep.subr.mxu0 0.0
        %7558 = vmatpush1.xpose.msra.mxu0 0.0
        %7559 = vmatprep.subr.mxu0 0.0
        %7560 = vmatpush1.xpose.msra.mxu0 0.0
        %7561 = vmatprep.subr.mxu0 0.0
        %7562 = vmatpush1.xpose.msra.mxu0 0.0
        %7563 = vmatprep.subr.mxu0 0.0
        %7564 = vmatpush1.xpose.msra.mxu0 0.0
        %7565 = vmatprep.subr.mxu0 0.0
        %7566 = vmatpush1.xpose.msra.mxu0 0.0
        %7567 = vmatprep.subr.mxu0 0.0
        %7568 = vmatpush1.xpose.msra.mxu0 0.0
        %7569 = vmatprep.subr.mxu0 0.0
        %7570 = vmatpush1.xpose.msra.mxu0 0.0
        %7571 = vmatprep.subr.mxu0 0.0
        %7572 = vmatpush1.xpose.msra.mxu0 0.0
        %7573 = vmatprep.subr.mxu0 0.0
        %7574 = vmatpush1.xpose.msra.mxu0 0.0
        %7575 = vmatprep.subr.mxu0 0.0
        %7576 = vmatpush1.xpose.msra.mxu0 0.0
        %7577 = vmatprep.subr.mxu0 0.0
        %7578 = vmatpush1.xpose.msra.mxu0 0.0
        %7579 = vmatprep.subr.mxu0 0.0
        %7580 = vmatpush1.xpose.msra.mxu0 0.0
        %7581 = vmatprep.subr.mxu0 0.0
        %7582 = vmatpush1.xpose.msra.mxu0 0.0
        %7583 = vmatprep.subr.mxu0 0.0
        %7584 = vmatpush1.xpose.msra.mxu0 0.0
        %7585 = vmatprep.subr.mxu0 0.0
        %7586 = vmatpush1.xpose.msra.mxu0 0.0
        %7587 = vmatprep.subr.mxu0 0.0
        %7588 = vmatpush1.xpose.msra.mxu0 0.0
        %7589 = vmatprep.subr.mxu0 0.0
        %7590 = vmatpush1.xpose.msra.mxu0 0.0
        %7591 = vmatprep.subr.mxu0 0.0
        %7592 = vmatpush1.xpose.msra.mxu0 0.0
        %7593 = vmatprep.subr.mxu0 0.0
        %7594 = vmatpush1.xpose.msra.mxu0 0.0
        %7595 = vmatprep.subr.mxu0 0.0
        %7596 = vmatpush1.xpose.msra.mxu0 0.0
        %7597 = vmatprep.subr.mxu0 0.0
        %7598 = vmatpush1.xpose.msra.mxu0 0.0
        %7599 = vmatprep.mubr.f32.mxu0 0.0
        %7600 = vmatmul.mubr.f32.gmra.mrb[0].mxu0 %v6249
        %v7601 = vpop.f32.mrb[0].mxu0
        %v7602 = vadd.f32 %v646, %v7601
        %v7603 = vpop.f32.mrb[0].mxu0
        %7604 = vdwg.mxu0
        %7607 = vrot.lane.b32.xlu0 %v6210, 96
        %v7608 = vpop.permute.xlu0 %7607
        %7609 = vrot.lane.b32.xlu0 %v6211, 96
        %v7610 = vpop.permute.xlu0 %7609
        %v7611 = vsel %vm851, %v7608, 0
        %v7613 = vsel %vm851, %v7610, 0
        %7615 = vmatprep.subr.mxu0 0.0
        %7616 = vmatpush1.xpose.msra.mxu0 %v7611
        %7617 = vmatprep.subr.mxu0 0.0
        %7618 = vmatpush1.xpose.msra.mxu0 %v7613
        %7619 = vmatprep.subr.mxu0 0.0
        %7620 = vmatpush1.xpose.msra.mxu0 0.0
        %7621 = vmatprep.subr.mxu0 0.0
        %7622 = vmatpush1.xpose.msra.mxu0 0.0
        %7623 = vmatprep.subr.mxu0 0.0
        %7624 = vmatpush1.xpose.msra.mxu0 0.0
        %7625 = vmatprep.subr.mxu0 0.0
        %7626 = vmatpush1.xpose.msra.mxu0 0.0
        %7627 = vmatprep.subr.mxu0 0.0
        %7628 = vmatpush1.xpose.msra.mxu0 0.0
        %7629 = vmatprep.subr.mxu0 0.0
        %7630 = vmatpush1.xpose.msra.mxu0 0.0
        %7631 = vmatprep.subr.mxu0 0.0
        %7632 = vmatpush1.xpose.msra.mxu0 0.0
        %7633 = vmatprep.subr.mxu0 0.0
        %7634 = vmatpush1.xpose.msra.mxu0 0.0
        %7635 = vmatprep.subr.mxu0 0.0
        %7636 = vmatpush1.xpose.msra.mxu0 0.0
        %7637 = vmatprep.subr.mxu0 0.0
        %7638 = vmatpush1.xpose.msra.mxu0 0.0
        %7639 = vmatprep.subr.mxu0 0.0
        %7640 = vmatpush1.xpose.msra.mxu0 0.0
        %7641 = vmatprep.subr.mxu0 0.0
        %7642 = vmatpush1.xpose.msra.mxu0 0.0
        %7643 = vmatprep.subr.mxu0 0.0
        %7644 = vmatpush1.xpose.msra.mxu0 0.0
        %7645 = vmatprep.subr.mxu0 0.0
        %7646 = vmatpush1.xpose.msra.mxu0 0.0
        %7647 = vmatprep.subr.mxu0 0.0
        %7648 = vmatpush1.xpose.msra.mxu0 0.0
        %7649 = vmatprep.subr.mxu0 0.0
        %7650 = vmatpush1.xpose.msra.mxu0 0.0
        %7651 = vmatprep.subr.mxu0 0.0
        %7652 = vmatpush1.xpose.msra.mxu0 0.0
        %7653 = vmatprep.subr.mxu0 0.0
        %7654 = vmatpush1.xpose.msra.mxu0 0.0
        %7655 = vmatprep.subr.mxu0 0.0
        %7656 = vmatpush1.xpose.msra.mxu0 0.0
        %7657 = vmatprep.subr.mxu0 0.0
        %7658 = vmatpush1.xpose.msra.mxu0 0.0
        %7659 = vmatprep.subr.mxu0 0.0
        %7660 = vmatpush1.xpose.msra.mxu0 0.0
        %7661 = vmatprep.subr.mxu0 0.0
        %7662 = vmatpush1.xpose.msra.mxu0 0.0
        %7663 = vmatprep.subr.mxu0 0.0
        %7664 = vmatpush1.xpose.msra.mxu0 0.0
        %7665 = vmatprep.subr.mxu0 0.0
        %7666 = vmatpush1.xpose.msra.mxu0 0.0
        %7667 = vmatprep.subr.mxu0 0.0
        %7668 = vmatpush1.xpose.msra.mxu0 0.0
        %7669 = vmatprep.subr.mxu0 0.0
        %7670 = vmatpush1.xpose.msra.mxu0 0.0
        %7671 = vmatprep.subr.mxu0 0.0
        %7672 = vmatpush1.xpose.msra.mxu0 0.0
        %7673 = vmatprep.subr.mxu0 0.0
        %7674 = vmatpush1.xpose.msra.mxu0 0.0
        %7675 = vmatprep.subr.mxu0 0.0
        %7676 = vmatpush1.xpose.msra.mxu0 0.0
        %7677 = vmatprep.subr.mxu0 0.0
        %7678 = vmatpush1.xpose.msra.mxu0 0.0
        %7679 = vmatprep.mubr.f32.mxu0 0.0
        %7680 = vmatmul.mubr.f32.gmra.mrb[0].mxu0 %v6249
        %v7681 = vpop.f32.mrb[0].mxu0
        %v7682 = vadd.f32 %v650, %v7681
        %v7683 = vpop.f32.mrb[0].mxu0
        %7684 = vdwg.mxu0
        %7687 = vrot.lane.b32.xlu0 %v6212, 96
        %v7688 = vpop.permute.xlu0 %7687
        %7689 = vrot.lane.b32.xlu0 %v6213, 96
        %v7690 = vpop.permute.xlu0 %7689
        %v7691 = vsel %vm851, %v7688, 0
        %v7693 = vsel %vm851, %v7690, 0
        %7695 = vmatprep.subr.mxu0 0.0
        %7696 = vmatpush1.xpose.msra.mxu0 %v7691
        %7697 = vmatprep.subr.mxu0 0.0
        %7698 = vmatpush1.xpose.msra.mxu0 %v7693
        %7699 = vmatprep.subr.mxu0 0.0
        %7700 = vmatpush1.xpose.msra.mxu0 0.0
        %7701 = vmatprep.subr.mxu0 0.0
        %7702 = vmatpush1.xpose.msra.mxu0 0.0
        %7703 = vmatprep.subr.mxu0 0.0
        %7704 = vmatpush1.xpose.msra.mxu0 0.0
        %7705 = vmatprep.subr.mxu0 0.0
        %7706 = vmatpush1.xpose.msra.mxu0 0.0
        %7707 = vmatprep.subr.mxu0 0.0
        %7708 = vmatpush1.xpose.msra.mxu0 0.0
        %7709 = vmatprep.subr.mxu0 0.0
        %7710 = vmatpush1.xpose.msra.mxu0 0.0
        %7711 = vmatprep.subr.mxu0 0.0
        %7712 = vmatpush1.xpose.msra.mxu0 0.0
        %7713 = vmatprep.subr.mxu0 0.0
        %7714 = vmatpush1.xpose.msra.mxu0 0.0
        %7715 = vmatprep.subr.mxu0 0.0
        %7716 = vmatpush1.xpose.msra.mxu0 0.0
        %7717 = vmatprep.subr.mxu0 0.0
        %7718 = vmatpush1.xpose.msra.mxu0 0.0
        %7719 = vmatprep.subr.mxu0 0.0
        %7720 = vmatpush1.xpose.msra.mxu0 0.0
        %7721 = vmatprep.subr.mxu0 0.0
        %7722 = vmatpush1.xpose.msra.mxu0 0.0
        %7723 = vmatprep.subr.mxu0 0.0
        %7724 = vmatpush1.xpose.msra.mxu0 0.0
        %7725 = vmatprep.subr.mxu0 0.0
        %7726 = vmatpush1.xpose.msra.mxu0 0.0
        %7727 = vmatprep.subr.mxu0 0.0
        %7728 = vmatpush1.xpose.msra.mxu0 0.0
        %7729 = vmatprep.subr.mxu0 0.0
        %7730 = vmatpush1.xpose.msra.mxu0 0.0
        %7731 = vmatprep.subr.mxu0 0.0
        %7732 = vmatpush1.xpose.msra.mxu0 0.0
        %7733 = vmatprep.subr.mxu0 0.0
        %7734 = vmatpush1.xpose.msra.mxu0 0.0
        %7735 = vmatprep.subr.mxu0 0.0
        %7736 = vmatpush1.xpose.msra.mxu0 0.0
        %7737 = vmatprep.subr.mxu0 0.0
        %7738 = vmatpush1.xpose.msra.mxu0 0.0
        %7739 = vmatprep.subr.mxu0 0.0
        %7740 = vmatpush1.xpose.msra.mxu0 0.0
        %7741 = vmatprep.subr.mxu0 0.0
        %7742 = vmatpush1.xpose.msra.mxu0 0.0
        %7743 = vmatprep.subr.mxu0 0.0
        %7744 = vmatpush1.xpose.msra.mxu0 0.0
        %7745 = vmatprep.subr.mxu0 0.0
        %7746 = vmatpush1.xpose.msra.mxu0 0.0
        %7747 = vmatprep.subr.mxu0 0.0
        %7748 = vmatpush1.xpose.msra.mxu0 0.0
        %7749 = vmatprep.subr.mxu0 0.0
        %7750 = vmatpush1.xpose.msra.mxu0 0.0
        %7751 = vmatprep.subr.mxu0 0.0
        %7752 = vmatpush1.xpose.msra.mxu0 0.0
        %7753 = vmatprep.subr.mxu0 0.0
        %7754 = vmatpush1.xpose.msra.mxu0 0.0
        %7755 = vmatprep.subr.mxu0 0.0
        %7756 = vmatpush1.xpose.msra.mxu0 0.0
        %7757 = vmatprep.subr.mxu0 0.0
        %7758 = vmatpush1.xpose.msra.mxu0 0.0
        %7759 = vmatprep.mubr.f32.mxu0 0.0
        %7760 = vmatmul.mubr.f32.gmra.mrb[0].mxu0 %v6249
        %v7761 = vpop.f32.mrb[0].mxu0
        %v7762 = vadd.f32 %v654, %v7761
        %v7763 = vpop.f32.mrb[0].mxu0
        %7764 = vdwg.mxu0
        %7767 = vrot.lane.b32.xlu0 %v6214, 96
        %v7768 = vpop.permute.xlu0 %7767
        %7769 = vrot.lane.b32.xlu0 %v6215, 96
        %v7770 = vpop.permute.xlu0 %7769
        %v7771 = vsel %vm851, %v7768, 0
        %v7773 = vsel %vm851, %v7770, 0
        %7775 = vmatprep.subr.mxu0 0.0
        %7776 = vmatpush1.xpose.msra.mxu0 %v7771
        %7777 = vmatprep.subr.mxu0 0.0
        %7778 = vmatpush1.xpose.msra.mxu0 %v7773
        %7779 = vmatprep.subr.mxu0 0.0
        %7780 = vmatpush1.xpose.msra.mxu0 0.0
        %7781 = vmatprep.subr.mxu0 0.0
        %7782 = vmatpush1.xpose.msra.mxu0 0.0
        %7783 = vmatprep.subr.mxu0 0.0
        %7784 = vmatpush1.xpose.msra.mxu0 0.0
        %7785 = vmatprep.subr.mxu0 0.0
        %7786 = vmatpush1.xpose.msra.mxu0 0.0
        %7787 = vmatprep.subr.mxu0 0.0
        %7788 = vmatpush1.xpose.msra.mxu0 0.0
        %7789 = vmatprep.subr.mxu0 0.0
        %7790 = vmatpush1.xpose.msra.mxu0 0.0
        %7791 = vmatprep.subr.mxu0 0.0
        %7792 = vmatpush1.xpose.msra.mxu0 0.0
        %7793 = vmatprep.subr.mxu0 0.0
        %7794 = vmatpush1.xpose.msra.mxu0 0.0
        %7795 = vmatprep.subr.mxu0 0.0
        %7796 = vmatpush1.xpose.msra.mxu0 0.0
        %7797 = vmatprep.subr.mxu0 0.0
        %7798 = vmatpush1.xpose.msra.mxu0 0.0
        %7799 = vmatprep.subr.mxu0 0.0
        %7800 = vmatpush1.xpose.msra.mxu0 0.0
        %7801 = vmatprep.subr.mxu0 0.0
        %7802 = vmatpush1.xpose.msra.mxu0 0.0
        %7803 = vmatprep.subr.mxu0 0.0
        %7804 = vmatpush1.xpose.msra.mxu0 0.0
        %7805 = vmatprep.subr.mxu0 0.0
        %7806 = vmatpush1.xpose.msra.mxu0 0.0
        %7807 = vmatprep.subr.mxu0 0.0
        %7808 = vmatpush1.xpose.msra.mxu0 0.0
        %7809 = vmatprep.subr.mxu0 0.0
        %7810 = vmatpush1.xpose.msra.mxu0 0.0
        %7811 = vmatprep.subr.mxu0 0.0
        %7812 = vmatpush1.xpose.msra.mxu0 0.0
        %7813 = vmatprep.subr.mxu0 0.0
        %7814 = vmatpush1.xpose.msra.mxu0 0.0
        %7815 = vmatprep.subr.mxu0 0.0
        %7816 = vmatpush1.xpose.msra.mxu0 0.0
        %7817 = vmatprep.subr.mxu0 0.0
        %7818 = vmatpush1.xpose.msra.mxu0 0.0
        %7819 = vmatprep.subr.mxu0 0.0
        %7820 = vmatpush1.xpose.msra.mxu0 0.0
        %7821 = vmatprep.subr.mxu0 0.0
        %7822 = vmatpush1.xpose.msra.mxu0 0.0
        %7823 = vmatprep.subr.mxu0 0.0
        %7824 = vmatpush1.xpose.msra.mxu0 0.0
        %7825 = vmatprep.subr.mxu0 0.0
        %7826 = vmatpush1.xpose.msra.mxu0 0.0
        %7827 = vmatprep.subr.mxu0 0.0
        %7828 = vmatpush1.xpose.msra.mxu0 0.0
        %7829 = vmatprep.subr.mxu0 0.0
        %7830 = vmatpush1.xpose.msra.mxu0 0.0
        %7831 = vmatprep.subr.mxu0 0.0
        %7832 = vmatpush1.xpose.msra.mxu0 0.0
        %7833 = vmatprep.subr.mxu0 0.0
        %7834 = vmatpush1.xpose.msra.mxu0 0.0
        %7835 = vmatprep.subr.mxu0 0.0
        %7836 = vmatpush1.xpose.msra.mxu0 0.0
        %7837 = vmatprep.subr.mxu0 0.0
        %7838 = vmatpush1.xpose.msra.mxu0 0.0
        %7839 = vmatprep.mubr.f32.mxu0 0.0
        %7840 = vmatmul.mubr.f32.gmra.mrb[0].mxu0 %v6249
        %v7841 = vpop.f32.mrb[0].mxu0
        %v7842 = vadd.f32 %v658, %v7841
        %v7843 = vpop.f32.mrb[0].mxu0
        %7844 = vdwg.mxu0
        %7847 = vrot.lane.b32.xlu0 %v6216, 96
        %v7848 = vpop.permute.xlu0 %7847
        %7849 = vrot.lane.b32.xlu0 %v6217, 96
        %v7850 = vpop.permute.xlu0 %7849
        %v7851 = vsel %vm851, %v7848, 0
        %v7853 = vsel %vm851, %v7850, 0
        %7855 = vmatprep.subr.mxu0 0.0
        %7856 = vmatpush1.xpose.msra.mxu0 %v7851
        %7857 = vmatprep.subr.mxu0 0.0
        %7858 = vmatpush1.xpose.msra.mxu0 %v7853
        %7859 = vmatprep.subr.mxu0 0.0
        %7860 = vmatpush1.xpose.msra.mxu0 0.0
        %7861 = vmatprep.subr.mxu0 0.0
        %7862 = vmatpush1.xpose.msra.mxu0 0.0
        %7863 = vmatprep.subr.mxu0 0.0
        %7864 = vmatpush1.xpose.msra.mxu0 0.0
        %7865 = vmatprep.subr.mxu0 0.0
        %7866 = vmatpush1.xpose.msra.mxu0 0.0
        %7867 = vmatprep.subr.mxu0 0.0
        %7868 = vmatpush1.xpose.msra.mxu0 0.0
        %7869 = vmatprep.subr.mxu0 0.0
        %7870 = vmatpush1.xpose.msra.mxu0 0.0
        %7871 = vmatprep.subr.mxu0 0.0
        %7872 = vmatpush1.xpose.msra.mxu0 0.0
        %7873 = vmatprep.subr.mxu0 0.0
        %7874 = vmatpush1.xpose.msra.mxu0 0.0
        %7875 = vmatprep.subr.mxu0 0.0
        %7876 = vmatpush1.xpose.msra.mxu0 0.0
        %7877 = vmatprep.subr.mxu0 0.0
        %7878 = vmatpush1.xpose.msra.mxu0 0.0
        %7879 = vmatprep.subr.mxu0 0.0
        %7880 = vmatpush1.xpose.msra.mxu0 0.0
        %7881 = vmatprep.subr.mxu0 0.0
        %7882 = vmatpush1.xpose.msra.mxu0 0.0
        %7883 = vmatprep.subr.mxu0 0.0
        %7884 = vmatpush1.xpose.msra.mxu0 0.0
        %7885 = vmatprep.subr.mxu0 0.0
        %7886 = vmatpush1.xpose.msra.mxu0 0.0
        %7887 = vmatprep.subr.mxu0 0.0
        %7888 = vmatpush1.xpose.msra.mxu0 0.0
        %7889 = vmatprep.subr.mxu0 0.0
        %7890 = vmatpush1.xpose.msra.mxu0 0.0
        %7891 = vmatprep.subr.mxu0 0.0
        %7892 = vmatpush1.xpose.msra.mxu0 0.0
        %7893 = vmatprep.subr.mxu0 0.0
        %7894 = vmatpush1.xpose.msra.mxu0 0.0
        %7895 = vmatprep.subr.mxu0 0.0
        %7896 = vmatpush1.xpose.msra.mxu0 0.0
        %7897 = vmatprep.subr.mxu0 0.0
        %7898 = vmatpush1.xpose.msra.mxu0 0.0
        %7899 = vmatprep.subr.mxu0 0.0
        %7900 = vmatpush1.xpose.msra.mxu0 0.0
        %7901 = vmatprep.subr.mxu0 0.0
        %7902 = vmatpush1.xpose.msra.mxu0 0.0
        %7903 = vmatprep.subr.mxu0 0.0
        %7904 = vmatpush1.xpose.msra.mxu0 0.0
        %7905 = vmatprep.subr.mxu0 0.0
        %7906 = vmatpush1.xpose.msra.mxu0 0.0
        %7907 = vmatprep.subr.mxu0 0.0
        %7908 = vmatpush1.xpose.msra.mxu0 0.0
        %7909 = vmatprep.subr.mxu0 0.0
        %7910 = vmatpush1.xpose.msra.mxu0 0.0
        %7911 = vmatprep.subr.mxu0 0.0
        %7912 = vmatpush1.xpose.msra.mxu0 0.0
        %7913 = vmatprep.subr.mxu0 0.0
        %7914 = vmatpush1.xpose.msra.mxu0 0.0
        %7915 = vmatprep.subr.mxu0 0.0
        %7916 = vmatpush1.xpose.msra.mxu0 0.0
        %7917 = vmatprep.subr.mxu0 0.0
        %7918 = vmatpush1.xpose.msra.mxu0 0.0
        %7919 = vmatprep.mubr.f32.mxu0 0.0
        %7920 = vmatmul.mubr.f32.gmra.mrb[0].mxu0 %v6249
        %v7921 = vpop.f32.mrb[0].mxu0
        %v7922 = vadd.f32 %v662, %v7921
        %v7923 = vpop.f32.mrb[0].mxu0
        %7924 = vdwg.mxu0
        %7927 = vrot.lane.b32.xlu0 %v6218, 96
        %v7928 = vpop.permute.xlu0 %7927
        %7929 = vrot.lane.b32.xlu0 %v6219, 96
        %v7930 = vpop.permute.xlu0 %7929
        %v7931 = vsel %vm851, %v7928, 0
        %v7933 = vsel %vm851, %v7930, 0
        %7935 = vmatprep.subr.mxu0 0.0
        %7936 = vmatpush1.xpose.msra.mxu0 %v7931
        %7937 = vmatprep.subr.mxu0 0.0
        %7938 = vmatpush1.xpose.msra.mxu0 %v7933
        %7939 = vmatprep.subr.mxu0 0.0
        %7940 = vmatpush1.xpose.msra.mxu0 0.0
        %7941 = vmatprep.subr.mxu0 0.0
        %7942 = vmatpush1.xpose.msra.mxu0 0.0
        %7943 = vmatprep.subr.mxu0 0.0
        %7944 = vmatpush1.xpose.msra.mxu0 0.0
        %7945 = vmatprep.subr.mxu0 0.0
        %7946 = vmatpush1.xpose.msra.mxu0 0.0
        %7947 = vmatprep.subr.mxu0 0.0
        %7948 = vmatpush1.xpose.msra.mxu0 0.0
        %7949 = vmatprep.subr.mxu0 0.0
        %7950 = vmatpush1.xpose.msra.mxu0 0.0
        %7951 = vmatprep.subr.mxu0 0.0
        %7952 = vmatpush1.xpose.msra.mxu0 0.0
        %7953 = vmatprep.subr.mxu0 0.0
        %7954 = vmatpush1.xpose.msra.mxu0 0.0
        %7955 = vmatprep.subr.mxu0 0.0
        %7956 = vmatpush1.xpose.msra.mxu0 0.0
        %7957 = vmatprep.subr.mxu0 0.0
        %7958 = vmatpush1.xpose.msra.mxu0 0.0
        %7959 = vmatprep.subr.mxu0 0.0
        %7960 = vmatpush1.xpose.msra.mxu0 0.0
        %7961 = vmatprep.subr.mxu0 0.0
        %7962 = vmatpush1.xpose.msra.mxu0 0.0
        %7963 = vmatprep.subr.mxu0 0.0
        %7964 = vmatpush1.xpose.msra.mxu0 0.0
        %7965 = vmatprep.subr.mxu0 0.0
        %7966 = vmatpush1.xpose.msra.mxu0 0.0
        %7967 = vmatprep.subr.mxu0 0.0
        %7968 = vmatpush1.xpose.msra.mxu0 0.0
        %7969 = vmatprep.subr.mxu0 0.0
        %7970 = vmatpush1.xpose.msra.mxu0 0.0
        %7971 = vmatprep.subr.mxu0 0.0
        %7972 = vmatpush1.xpose.msra.mxu0 0.0
        %7973 = vmatprep.subr.mxu0 0.0
        %7974 = vmatpush1.xpose.msra.mxu0 0.0
        %7975 = vmatprep.subr.mxu0 0.0
        %7976 = vmatpush1.xpose.msra.mxu0 0.0
        %7977 = vmatprep.subr.mxu0 0.0
        %7978 = vmatpush1.xpose.msra.mxu0 0.0
        %7979 = vmatprep.subr.mxu0 0.0
        %7980 = vmatpush1.xpose.msra.mxu0 0.0
        %7981 = vmatprep.subr.mxu0 0.0
        %7982 = vmatpush1.xpose.msra.mxu0 0.0
        %7983 = vmatprep.subr.mxu0 0.0
        %7984 = vmatpush1.xpose.msra.mxu0 0.0
        %7985 = vmatprep.subr.mxu0 0.0
        %7986 = vmatpush1.xpose.msra.mxu0 0.0
        %7987 = vmatprep.subr.mxu0 0.0
        %7988 = vmatpush1.xpose.msra.mxu0 0.0
        %7989 = vmatprep.subr.mxu0 0.0
        %7990 = vmatpush1.xpose.msra.mxu0 0.0
        %7991 = vmatprep.subr.mxu0 0.0
        %7992 = vmatpush1.xpose.msra.mxu0 0.0
        %7993 = vmatprep.subr.mxu0 0.0
        %7994 = vmatpush1.xpose.msra.mxu0 0.0
        %7995 = vmatprep.subr.mxu0 0.0
        %7996 = vmatpush1.xpose.msra.mxu0 0.0
        %7997 = vmatprep.subr.mxu0 0.0
        %7998 = vmatpush1.xpose.msra.mxu0 0.0
        %7999 = vmatprep.mubr.f32.mxu0 0.0
        %8000 = vmatmul.mubr.f32.gmra.mrb[0].mxu0 %v6249
        %v8001 = vpop.f32.mrb[0].mxu0
        %v8002 = vadd.f32 %v666, %v8001
        %v8003 = vpop.f32.mrb[0].mxu0
        %8004 = vdwg.mxu0
        %8007 = vrot.lane.b32.xlu0 %v6220, 96
        %v8008 = vpop.permute.xlu0 %8007
        %8009 = vrot.lane.b32.xlu0 %v6221, 96
        %v8010 = vpop.permute.xlu0 %8009
        %v8011 = vsel %vm851, %v8008, 0
        %v8013 = vsel %vm851, %v8010, 0
        %8015 = vmatprep.subr.mxu0 0.0
        %8016 = vmatpush1.xpose.msra.mxu0 %v8011
        %8017 = vmatprep.subr.mxu0 0.0
        %8018 = vmatpush1.xpose.msra.mxu0 %v8013
        %8019 = vmatprep.subr.mxu0 0.0
        %8020 = vmatpush1.xpose.msra.mxu0 0.0
        %8021 = vmatprep.subr.mxu0 0.0
        %8022 = vmatpush1.xpose.msra.mxu0 0.0
        %8023 = vmatprep.subr.mxu0 0.0
        %8024 = vmatpush1.xpose.msra.mxu0 0.0
        %8025 = vmatprep.subr.mxu0 0.0
        %8026 = vmatpush1.xpose.msra.mxu0 0.0
        %8027 = vmatprep.subr.mxu0 0.0
        %8028 = vmatpush1.xpose.msra.mxu0 0.0
        %8029 = vmatprep.subr.mxu0 0.0
        %8030 = vmatpush1.xpose.msra.mxu0 0.0
        %8031 = vmatprep.subr.mxu0 0.0
        %8032 = vmatpush1.xpose.msra.mxu0 0.0
        %8033 = vmatprep.subr.mxu0 0.0
        %8034 = vmatpush1.xpose.msra.mxu0 0.0
        %8035 = vmatprep.subr.mxu0 0.0
        %8036 = vmatpush1.xpose.msra.mxu0 0.0
        %8037 = vmatprep.subr.mxu0 0.0
        %8038 = vmatpush1.xpose.msra.mxu0 0.0
        %8039 = vmatprep.subr.mxu0 0.0
        %8040 = vmatpush1.xpose.msra.mxu0 0.0
        %8041 = vmatprep.subr.mxu0 0.0
        %8042 = vmatpush1.xpose.msra.mxu0 0.0
        %8043 = vmatprep.subr.mxu0 0.0
        %8044 = vmatpush1.xpose.msra.mxu0 0.0
        %8045 = vmatprep.subr.mxu0 0.0
        %8046 = vmatpush1.xpose.msra.mxu0 0.0
        %8047 = vmatprep.subr.mxu0 0.0
        %8048 = vmatpush1.xpose.msra.mxu0 0.0
        %8049 = vmatprep.subr.mxu0 0.0
        %8050 = vmatpush1.xpose.msra.mxu0 0.0
        %8051 = vmatprep.subr.mxu0 0.0
        %8052 = vmatpush1.xpose.msra.mxu0 0.0
        %8053 = vmatprep.subr.mxu0 0.0
        %8054 = vmatpush1.xpose.msra.mxu0 0.0
        %8055 = vmatprep.subr.mxu0 0.0
        %8056 = vmatpush1.xpose.msra.mxu0 0.0
        %8057 = vmatprep.subr.mxu0 0.0
        %8058 = vmatpush1.xpose.msra.mxu0 0.0
        %8059 = vmatprep.subr.mxu0 0.0
        %8060 = vmatpush1.xpose.msra.mxu0 0.0
        %8061 = vmatprep.subr.mxu0 0.0
        %8062 = vmatpush1.xpose.msra.mxu0 0.0
        %8063 = vmatprep.subr.mxu0 0.0
        %8064 = vmatpush1.xpose.msra.mxu0 0.0
        %8065 = vmatprep.subr.mxu0 0.0
        %8066 = vmatpush1.xpose.msra.mxu0 0.0
        %8067 = vmatprep.subr.mxu0 0.0
        %8068 = vmatpush1.xpose.msra.mxu0 0.0
        %8069 = vmatprep.subr.mxu0 0.0
        %8070 = vmatpush1.xpose.msra.mxu0 0.0
        %8071 = vmatprep.subr.mxu0 0.0
        %8072 = vmatpush1.xpose.msra.mxu0 0.0
        %8073 = vmatprep.subr.mxu0 0.0
        %8074 = vmatpush1.xpose.msra.mxu0 0.0
        %8075 = vmatprep.subr.mxu0 0.0
        %8076 = vmatpush1.xpose.msra.mxu0 0.0
        %8077 = vmatprep.subr.mxu0 0.0
        %8078 = vmatpush1.xpose.msra.mxu0 0.0
        %8079 = vmatprep.mubr.f32.mxu0 0.0
        %8080 = vmatmul.mubr.f32.gmra.mrb[0].mxu0 %v6249
        %v8081 = vpop.f32.mrb[0].mxu0
        %v8082 = vadd.f32 %v670, %v8081
        %v8083 = vpop.f32.mrb[0].mxu0
        %8084 = vdwg.mxu0
        %8087 = vrot.lane.b32.xlu0 %v6222, 96
        %v8088 = vpop.permute.xlu0 %8087
        %8089 = vrot.lane.b32.xlu0 %v6223, 96
        %v8090 = vpop.permute.xlu0 %8089
        %v8091 = vsel %vm851, %v8088, 0
        %v8093 = vsel %vm851, %v8090, 0
        %8095 = vmatprep.subr.mxu0 0.0
        %8096 = vmatpush1.xpose.msra.mxu0 %v8091
        %8097 = vmatprep.subr.mxu0 0.0
        %8098 = vmatpush1.xpose.msra.mxu0 %v8093
        %8099 = vmatprep.subr.mxu0 0.0
        %8100 = vmatpush1.xpose.msra.mxu0 0.0
        %8101 = vmatprep.subr.mxu0 0.0
        %8102 = vmatpush1.xpose.msra.mxu0 0.0
        %8103 = vmatprep.subr.mxu0 0.0
        %8104 = vmatpush1.xpose.msra.mxu0 0.0
        %8105 = vmatprep.subr.mxu0 0.0
        %8106 = vmatpush1.xpose.msra.mxu0 0.0
        %8107 = vmatprep.subr.mxu0 0.0
        %8108 = vmatpush1.xpose.msra.mxu0 0.0
        %8109 = vmatprep.subr.mxu0 0.0
        %8110 = vmatpush1.xpose.msra.mxu0 0.0
        %8111 = vmatprep.subr.mxu0 0.0
        %8112 = vmatpush1.xpose.msra.mxu0 0.0
        %8113 = vmatprep.subr.mxu0 0.0
        %8114 = vmatpush1.xpose.msra.mxu0 0.0
        %8115 = vmatprep.subr.mxu0 0.0
        %8116 = vmatpush1.xpose.msra.mxu0 0.0
        %8117 = vmatprep.subr.mxu0 0.0
        %8118 = vmatpush1.xpose.msra.mxu0 0.0
        %8119 = vmatprep.subr.mxu0 0.0
        %8120 = vmatpush1.xpose.msra.mxu0 0.0
        %8121 = vmatprep.subr.mxu0 0.0
        %8122 = vmatpush1.xpose.msra.mxu0 0.0
        %8123 = vmatprep.subr.mxu0 0.0
        %8124 = vmatpush1.xpose.msra.mxu0 0.0
        %8125 = vmatprep.subr.mxu0 0.0
        %8126 = vmatpush1.xpose.msra.mxu0 0.0
        %8127 = vmatprep.subr.mxu0 0.0
        %8128 = vmatpush1.xpose.msra.mxu0 0.0
        %8129 = vmatprep.subr.mxu0 0.0
        %8130 = vmatpush1.xpose.msra.mxu0 0.0
        %8131 = vmatprep.subr.mxu0 0.0
        %8132 = vmatpush1.xpose.msra.mxu0 0.0
        %8133 = vmatprep.subr.mxu0 0.0
        %8134 = vmatpush1.xpose.msra.mxu0 0.0
        %8135 = vmatprep.subr.mxu0 0.0
        %8136 = vmatpush1.xpose.msra.mxu0 0.0
        %8137 = vmatprep.subr.mxu0 0.0
        %8138 = vmatpush1.xpose.msra.mxu0 0.0
        %8139 = vmatprep.subr.mxu0 0.0
        %8140 = vmatpush1.xpose.msra.mxu0 0.0
        %8141 = vmatprep.subr.mxu0 0.0
        %8142 = vmatpush1.xpose.msra.mxu0 0.0
        %8143 = vmatprep.subr.mxu0 0.0
        %8144 = vmatpush1.xpose.msra.mxu0 0.0
        %8145 = vmatprep.subr.mxu0 0.0
        %8146 = vmatpush1.xpose.msra.mxu0 0.0
        %8147 = vmatprep.subr.mxu0 0.0
        %8148 = vmatpush1.xpose.msra.mxu0 0.0
        %8149 = vmatprep.subr.mxu0 0.0
        %8150 = vmatpush1.xpose.msra.mxu0 0.0
        %8151 = vmatprep.subr.mxu0 0.0
        %8152 = vmatpush1.xpose.msra.mxu0 0.0
        %8153 = vmatprep.subr.mxu0 0.0
        %8154 = vmatpush1.xpose.msra.mxu0 0.0
        %8155 = vmatprep.subr.mxu0 0.0
        %8156 = vmatpush1.xpose.msra.mxu0 0.0
        %8157 = vmatprep.subr.mxu0 0.0
        %8158 = vmatpush1.xpose.msra.mxu0 0.0
        %8159 = vmatprep.mubr.f32.mxu0 0.0
        %8160 = vmatmul.mubr.f32.gmra.mrb[0].mxu0 %v6249
        %v8161 = vpop.f32.mrb[0].mxu0
        %v8162 = vadd.f32 %v674, %v8161
        %v8163 = vpop.f32.mrb[0].mxu0
        %8164 = vdwg.mxu0
        %8167 = vrot.lane.b32.xlu0 %v6224, 96
        %v8168 = vpop.permute.xlu0 %8167
        %8169 = vrot.lane.b32.xlu0 %v6225, 96
        %v8170 = vpop.permute.xlu0 %8169
        %v8171 = vsel %vm851, %v8168, 0
        %v8173 = vsel %vm851, %v8170, 0
        %8175 = vmatprep.subr.mxu0 0.0
        %8176 = vmatpush1.xpose.msra.mxu0 %v8171
        %8177 = vmatprep.subr.mxu0 0.0
        %8178 = vmatpush1.xpose.msra.mxu0 %v8173
        %8179 = vmatprep.subr.mxu0 0.0
        %8180 = vmatpush1.xpose.msra.mxu0 0.0
        %8181 = vmatprep.subr.mxu0 0.0
        %8182 = vmatpush1.xpose.msra.mxu0 0.0
        %8183 = vmatprep.subr.mxu0 0.0
        %8184 = vmatpush1.xpose.msra.mxu0 0.0
        %8185 = vmatprep.subr.mxu0 0.0
        %8186 = vmatpush1.xpose.msra.mxu0 0.0
        %8187 = vmatprep.subr.mxu0 0.0
        %8188 = vmatpush1.xpose.msra.mxu0 0.0
        %8189 = vmatprep.subr.mxu0 0.0
        %8190 = vmatpush1.xpose.msra.mxu0 0.0
        %8191 = vmatprep.subr.mxu0 0.0
        %8192 = vmatpush1.xpose.msra.mxu0 0.0
        %8193 = vmatprep.subr.mxu0 0.0
        %8194 = vmatpush1.xpose.msra.mxu0 0.0
        %8195 = vmatprep.subr.mxu0 0.0
        %8196 = vmatpush1.xpose.msra.mxu0 0.0
        %8197 = vmatprep.subr.mxu0 0.0
        %8198 = vmatpush1.xpose.msra.mxu0 0.0
        %8199 = vmatprep.subr.mxu0 0.0
        %8200 = vmatpush1.xpose.msra.mxu0 0.0
        %8201 = vmatprep.subr.mxu0 0.0
        %8202 = vmatpush1.xpose.msra.mxu0 0.0
        %8203 = vmatprep.subr.mxu0 0.0
        %8204 = vmatpush1.xpose.msra.mxu0 0.0
        %8205 = vmatprep.subr.mxu0 0.0
        %8206 = vmatpush1.xpose.msra.mxu0 0.0
        %8207 = vmatprep.subr.mxu0 0.0
        %8208 = vmatpush1.xpose.msra.mxu0 0.0
        %8209 = vmatprep.subr.mxu0 0.0
        %8210 = vmatpush1.xpose.msra.mxu0 0.0
        %8211 = vmatprep.subr.mxu0 0.0
        %8212 = vmatpush1.xpose.msra.mxu0 0.0
        %8213 = vmatprep.subr.mxu0 0.0
        %8214 = vmatpush1.xpose.msra.mxu0 0.0
        %8215 = vmatprep.subr.mxu0 0.0
        %8216 = vmatpush1.xpose.msra.mxu0 0.0
        %8217 = vmatprep.subr.mxu0 0.0
        %8218 = vmatpush1.xpose.msra.mxu0 0.0
        %8219 = vmatprep.subr.mxu0 0.0
        %8220 = vmatpush1.xpose.msra.mxu0 0.0
        %8221 = vmatprep.subr.mxu0 0.0
        %8222 = vmatpush1.xpose.msra.mxu0 0.0
        %8223 = vmatprep.subr.mxu0 0.0
        %8224 = vmatpush1.xpose.msra.mxu0 0.0
        %8225 = vmatprep.subr.mxu0 0.0
        %8226 = vmatpush1.xpose.msra.mxu0 0.0
        %8227 = vmatprep.subr.mxu0 0.0
        %8228 = vmatpush1.xpose.msra.mxu0 0.0
        %8229 = vmatprep.subr.mxu0 0.0
        %8230 = vmatpush1.xpose.msra.mxu0 0.0
        %8231 = vmatprep.subr.mxu0 0.0
        %8232 = vmatpush1.xpose.msra.mxu0 0.0
        %8233 = vmatprep.subr.mxu0 0.0
        %8234 = vmatpush1.xpose.msra.mxu0 0.0
        %8235 = vmatprep.subr.mxu0 0.0
        %8236 = vmatpush1.xpose.msra.mxu0 0.0
        %8237 = vmatprep.subr.mxu0 0.0
        %8238 = vmatpush1.xpose.msra.mxu0 0.0
        %8239 = vmatprep.mubr.f32.mxu0 0.0
        %8240 = vmatmul.mubr.f32.gmra.mrb[0].mxu0 %v6249
        %v8241 = vpop.f32.mrb[0].mxu0
        %v8242 = vadd.f32 %v678, %v8241
        %v8243 = vpop.f32.mrb[0].mxu0
        %8244 = vdwg.mxu0
        %8247 = vrot.lane.b32.xlu0 %v6226, 96
        %v8248 = vpop.permute.xlu0 %8247
        %8249 = vrot.lane.b32.xlu0 %v6227, 96
        %v8250 = vpop.permute.xlu0 %8249
        %v8251 = vsel %vm851, %v8248, 0
        %v8253 = vsel %vm851, %v8250, 0
        %8255 = vmatprep.subr.mxu0 0.0
        %8256 = vmatpush1.xpose.msra.mxu0 %v8251
        %8257 = vmatprep.subr.mxu0 0.0
        %8258 = vmatpush1.xpose.msra.mxu0 %v8253
        %8259 = vmatprep.subr.mxu0 0.0
        %8260 = vmatpush1.xpose.msra.mxu0 0.0
        %8261 = vmatprep.subr.mxu0 0.0
        %8262 = vmatpush1.xpose.msra.mxu0 0.0
        %8263 = vmatprep.subr.mxu0 0.0
        %8264 = vmatpush1.xpose.msra.mxu0 0.0
        %8265 = vmatprep.subr.mxu0 0.0
        %8266 = vmatpush1.xpose.msra.mxu0 0.0
        %8267 = vmatprep.subr.mxu0 0.0
        %8268 = vmatpush1.xpose.msra.mxu0 0.0
        %8269 = vmatprep.subr.mxu0 0.0
        %8270 = vmatpush1.xpose.msra.mxu0 0.0
        %8271 = vmatprep.subr.mxu0 0.0
        %8272 = vmatpush1.xpose.msra.mxu0 0.0
        %8273 = vmatprep.subr.mxu0 0.0
        %8274 = vmatpush1.xpose.msra.mxu0 0.0
        %8275 = vmatprep.subr.mxu0 0.0
        %8276 = vmatpush1.xpose.msra.mxu0 0.0
        %8277 = vmatprep.subr.mxu0 0.0
        %8278 = vmatpush1.xpose.msra.mxu0 0.0
        %8279 = vmatprep.subr.mxu0 0.0
        %8280 = vmatpush1.xpose.msra.mxu0 0.0
        %8281 = vmatprep.subr.mxu0 0.0
        %8282 = vmatpush1.xpose.msra.mxu0 0.0
        %8283 = vmatprep.subr.mxu0 0.0
        %8284 = vmatpush1.xpose.msra.mxu0 0.0
        %8285 = vmatprep.subr.mxu0 0.0
        %8286 = vmatpush1.xpose.msra.mxu0 0.0
        %8287 = vmatprep.subr.mxu0 0.0
        %8288 = vmatpush1.xpose.msra.mxu0 0.0
        %8289 = vmatprep.subr.mxu0 0.0
        %8290 = vmatpush1.xpose.msra.mxu0 0.0
        %8291 = vmatprep.subr.mxu0 0.0
        %8292 = vmatpush1.xpose.msra.mxu0 0.0
        %8293 = vmatprep.subr.mxu0 0.0
        %8294 = vmatpush1.xpose.msra.mxu0 0.0
        %8295 = vmatprep.subr.mxu0 0.0
        %8296 = vmatpush1.xpose.msra.mxu0 0.0
        %8297 = vmatprep.subr.mxu0 0.0
        %8298 = vmatpush1.xpose.msra.mxu0 0.0
        %8299 = vmatprep.subr.mxu0 0.0
        %8300 = vmatpush1.xpose.msra.mxu0 0.0
        %8301 = vmatprep.subr.mxu0 0.0
        %8302 = vmatpush1.xpose.msra.mxu0 0.0
        %8303 = vmatprep.subr.mxu0 0.0
        %8304 = vmatpush1.xpose.msra.mxu0 0.0
        %8305 = vmatprep.subr.mxu0 0.0
        %8306 = vmatpush1.xpose.msra.mxu0 0.0
        %8307 = vmatprep.subr.mxu0 0.0
        %8308 = vmatpush1.xpose.msra.mxu0 0.0
        %8309 = vmatprep.subr.mxu0 0.0
        %8310 = vmatpush1.xpose.msra.mxu0 0.0
        %8311 = vmatprep.subr.mxu0 0.0
        %8312 = vmatpush1.xpose.msra.mxu0 0.0
        %8313 = vmatprep.subr.mxu0 0.0
        %8314 = vmatpush1.xpose.msra.mxu0 0.0
        %8315 = vmatprep.subr.mxu0 0.0
        %8316 = vmatpush1.xpose.msra.mxu0 0.0
        %8317 = vmatprep.subr.mxu0 0.0
        %8318 = vmatpush1.xpose.msra.mxu0 0.0
        %8319 = vmatprep.mubr.f32.mxu0 0.0
        %8320 = vmatmul.mubr.f32.gmra.mrb[0].mxu0 %v6249
        %v8321 = vpop.f32.mrb[0].mxu0
        %v8322 = vadd.f32 %v682, %v8321
        %v8323 = vpop.f32.mrb[0].mxu0
        %8324 = vdwg.mxu0
        %8327 = vrot.lane.b32.xlu0 %v6228, 96
        %v8328 = vpop.permute.xlu0 %8327
        %8329 = vrot.lane.b32.xlu0 %v6229, 96
        %v8330 = vpop.permute.xlu0 %8329
        %v8331 = vsel %vm851, %v8328, 0
        %v8333 = vsel %vm851, %v8330, 0
        %8335 = vmatprep.subr.mxu0 0.0
        %8336 = vmatpush1.xpose.msra.mxu0 %v8331
        %8337 = vmatprep.subr.mxu0 0.0
        %8338 = vmatpush1.xpose.msra.mxu0 %v8333
        %8339 = vmatprep.subr.mxu0 0.0
        %8340 = vmatpush1.xpose.msra.mxu0 0.0
        %8341 = vmatprep.subr.mxu0 0.0
        %8342 = vmatpush1.xpose.msra.mxu0 0.0
        %8343 = vmatprep.subr.mxu0 0.0
        %8344 = vmatpush1.xpose.msra.mxu0 0.0
        %8345 = vmatprep.subr.mxu0 0.0
        %8346 = vmatpush1.xpose.msra.mxu0 0.0
        %8347 = vmatprep.subr.mxu0 0.0
        %8348 = vmatpush1.xpose.msra.mxu0 0.0
        %8349 = vmatprep.subr.mxu0 0.0
        %8350 = vmatpush1.xpose.msra.mxu0 0.0
        %8351 = vmatprep.subr.mxu0 0.0
        %8352 = vmatpush1.xpose.msra.mxu0 0.0
        %8353 = vmatprep.subr.mxu0 0.0
        %8354 = vmatpush1.xpose.msra.mxu0 0.0
        %8355 = vmatprep.subr.mxu0 0.0
        %8356 = vmatpush1.xpose.msra.mxu0 0.0
        %8357 = vmatprep.subr.mxu0 0.0
        %8358 = vmatpush1.xpose.msra.mxu0 0.0
        %8359 = vmatprep.subr.mxu0 0.0
        %8360 = vmatpush1.xpose.msra.mxu0 0.0
        %8361 = vmatprep.subr.mxu0 0.0
        %8362 = vmatpush1.xpose.msra.mxu0 0.0
        %8363 = vmatprep.subr.mxu0 0.0
        %8364 = vmatpush1.xpose.msra.mxu0 0.0
        %8365 = vmatprep.subr.mxu0 0.0
        %8366 = vmatpush1.xpose.msra.mxu0 0.0
        %8367 = vmatprep.subr.mxu0 0.0
        %8368 = vmatpush1.xpose.msra.mxu0 0.0
        %8369 = vmatprep.subr.mxu0 0.0
        %8370 = vmatpush1.xpose.msra.mxu0 0.0
        %8371 = vmatprep.subr.mxu0 0.0
        %8372 = vmatpush1.xpose.msra.mxu0 0.0
        %8373 = vmatprep.subr.mxu0 0.0
        %8374 = vmatpush1.xpose.msra.mxu0 0.0
        %8375 = vmatprep.subr.mxu0 0.0
        %8376 = vmatpush1.xpose.msra.mxu0 0.0
        %8377 = vmatprep.subr.mxu0 0.0
        %8378 = vmatpush1.xpose.msra.mxu0 0.0
        %8379 = vmatprep.subr.mxu0 0.0
        %8380 = vmatpush1.xpose.msra.mxu0 0.0
        %8381 = vmatprep.subr.mxu0 0.0
        %8382 = vmatpush1.xpose.msra.mxu0 0.0
        %8383 = vmatprep.subr.mxu0 0.0
        %8384 = vmatpush1.xpose.msra.mxu0 0.0
        %8385 = vmatprep.subr.mxu0 0.0
        %8386 = vmatpush1.xpose.msra.mxu0 0.0
        %8387 = vmatprep.subr.mxu0 0.0
        %8388 = vmatpush1.xpose.msra.mxu0 0.0
        %8389 = vmatprep.subr.mxu0 0.0
        %8390 = vmatpush1.xpose.msra.mxu0 0.0
        %8391 = vmatprep.subr.mxu0 0.0
        %8392 = vmatpush1.xpose.msra.mxu0 0.0
        %8393 = vmatprep.subr.mxu0 0.0
        %8394 = vmatpush1.xpose.msra.mxu0 0.0
        %8395 = vmatprep.subr.mxu0 0.0
        %8396 = vmatpush1.xpose.msra.mxu0 0.0
        %8397 = vmatprep.subr.mxu0 0.0
        %8398 = vmatpush1.xpose.msra.mxu0 0.0
        %8399 = vmatprep.mubr.f32.mxu0 0.0
        %8400 = vmatmul.mubr.f32.gmra.mrb[0].mxu0 %v6249
        %v8401 = vpop.f32.mrb[0].mxu0
        %v8402 = vadd.f32 %v686, %v8401
        %v8403 = vpop.f32.mrb[0].mxu0
        %8404 = vdwg.mxu0
        %8407 = vrot.lane.b32.xlu0 %v6230, 96
        %v8408 = vpop.permute.xlu0 %8407
        %8409 = vrot.lane.b32.xlu0 %v6231, 96
        %v8410 = vpop.permute.xlu0 %8409
        %v8411 = vsel %vm851, %v8408, 0
        %v8413 = vsel %vm851, %v8410, 0
        %8415 = vmatprep.subr.mxu0 0.0
        %8416 = vmatpush1.xpose.msra.mxu0 %v8411
        %8417 = vmatprep.subr.mxu0 0.0
        %8418 = vmatpush1.xpose.msra.mxu0 %v8413
        %8419 = vmatprep.subr.mxu0 0.0
        %8420 = vmatpush1.xpose.msra.mxu0 0.0
        %8421 = vmatprep.subr.mxu0 0.0
        %8422 = vmatpush1.xpose.msra.mxu0 0.0
        %8423 = vmatprep.subr.mxu0 0.0
        %8424 = vmatpush1.xpose.msra.mxu0 0.0
        %8425 = vmatprep.subr.mxu0 0.0
        %8426 = vmatpush1.xpose.msra.mxu0 0.0
        %8427 = vmatprep.subr.mxu0 0.0
        %8428 = vmatpush1.xpose.msra.mxu0 0.0
        %8429 = vmatprep.subr.mxu0 0.0
        %8430 = vmatpush1.xpose.msra.mxu0 0.0
        %8431 = vmatprep.subr.mxu0 0.0
        %8432 = vmatpush1.xpose.msra.mxu0 0.0
        %8433 = vmatprep.subr.mxu0 0.0
        %8434 = vmatpush1.xpose.msra.mxu0 0.0
        %8435 = vmatprep.subr.mxu0 0.0
        %8436 = vmatpush1.xpose.msra.mxu0 0.0
        %8437 = vmatprep.subr.mxu0 0.0
        %8438 = vmatpush1.xpose.msra.mxu0 0.0
        %8439 = vmatprep.subr.mxu0 0.0
        %8440 = vmatpush1.xpose.msra.mxu0 0.0
        %8441 = vmatprep.subr.mxu0 0.0
        %8442 = vmatpush1.xpose.msra.mxu0 0.0
        %8443 = vmatprep.subr.mxu0 0.0
        %8444 = vmatpush1.xpose.msra.mxu0 0.0
        %8445 = vmatprep.subr.mxu0 0.0
        %8446 = vmatpush1.xpose.msra.mxu0 0.0
        %8447 = vmatprep.subr.mxu0 0.0
        %8448 = vmatpush1.xpose.msra.mxu0 0.0
        %8449 = vmatprep.subr.mxu0 0.0
        %8450 = vmatpush1.xpose.msra.mxu0 0.0
        %8451 = vmatprep.subr.mxu0 0.0
        %8452 = vmatpush1.xpose.msra.mxu0 0.0
        %8453 = vmatprep.subr.mxu0 0.0
        %8454 = vmatpush1.xpose.msra.mxu0 0.0
        %8455 = vmatprep.subr.mxu0 0.0
        %8456 = vmatpush1.xpose.msra.mxu0 0.0
        %8457 = vmatprep.subr.mxu0 0.0
        %8458 = vmatpush1.xpose.msra.mxu0 0.0
        %8459 = vmatprep.subr.mxu0 0.0
        %8460 = vmatpush1.xpose.msra.mxu0 0.0
        %8461 = vmatprep.subr.mxu0 0.0
        %8462 = vmatpush1.xpose.msra.mxu0 0.0
        %8463 = vmatprep.subr.mxu0 0.0
        %8464 = vmatpush1.xpose.msra.mxu0 0.0
        %8465 = vmatprep.subr.mxu0 0.0
        %8466 = vmatpush1.xpose.msra.mxu0 0.0
        %8467 = vmatprep.subr.mxu0 0.0
        %8468 = vmatpush1.xpose.msra.mxu0 0.0
        %8469 = vmatprep.subr.mxu0 0.0
        %8470 = vmatpush1.xpose.msra.mxu0 0.0
        %8471 = vmatprep.subr.mxu0 0.0
        %8472 = vmatpush1.xpose.msra.mxu0 0.0
        %8473 = vmatprep.subr.mxu0 0.0
        %8474 = vmatpush1.xpose.msra.mxu0 0.0
        %8475 = vmatprep.subr.mxu0 0.0
        %8476 = vmatpush1.xpose.msra.mxu0 0.0
        %8477 = vmatprep.subr.mxu0 0.0
        %8478 = vmatpush1.xpose.msra.mxu0 0.0
        %8479 = vmatprep.mubr.f32.mxu0 0.0
        %8480 = vmatmul.mubr.f32.gmra.mrb[0].mxu0 %v6249
        %v8481 = vpop.f32.mrb[0].mxu0
        %v8482 = vadd.f32 %v690, %v8481
        %v8483 = vpop.f32.mrb[0].mxu0
        %8484 = vdwg.mxu0
        %8487 = vrot.lane.b32.xlu0 %v6232, 96
        %v8488 = vpop.permute.xlu0 %8487
        %8489 = vrot.lane.b32.xlu0 %v6233, 96
        %v8490 = vpop.permute.xlu0 %8489
        %v8491 = vsel %vm851, %v8488, 0
        %v8493 = vsel %vm851, %v8490, 0
        %8495 = vmatprep.subr.mxu0 0.0
        %8496 = vmatpush1.xpose.msra.mxu0 %v8491
        %8497 = vmatprep.subr.mxu0 0.0
        %8498 = vmatpush1.xpose.msra.mxu0 %v8493
        %8499 = vmatprep.subr.mxu0 0.0
        %8500 = vmatpush1.xpose.msra.mxu0 0.0
        %8501 = vmatprep.subr.mxu0 0.0
        %8502 = vmatpush1.xpose.msra.mxu0 0.0
        %8503 = vmatprep.subr.mxu0 0.0
        %8504 = vmatpush1.xpose.msra.mxu0 0.0
        %8505 = vmatprep.subr.mxu0 0.0
        %8506 = vmatpush1.xpose.msra.mxu0 0.0
        %8507 = vmatprep.subr.mxu0 0.0
        %8508 = vmatpush1.xpose.msra.mxu0 0.0
        %8509 = vmatprep.subr.mxu0 0.0
        %8510 = vmatpush1.xpose.msra.mxu0 0.0
        %8511 = vmatprep.subr.mxu0 0.0
        %8512 = vmatpush1.xpose.msra.mxu0 0.0
        %8513 = vmatprep.subr.mxu0 0.0
        %8514 = vmatpush1.xpose.msra.mxu0 0.0
        %8515 = vmatprep.subr.mxu0 0.0
        %8516 = vmatpush1.xpose.msra.mxu0 0.0
        %8517 = vmatprep.subr.mxu0 0.0
        %8518 = vmatpush1.xpose.msra.mxu0 0.0
        %8519 = vmatprep.subr.mxu0 0.0
        %8520 = vmatpush1.xpose.msra.mxu0 0.0
        %8521 = vmatprep.subr.mxu0 0.0
        %8522 = vmatpush1.xpose.msra.mxu0 0.0
        %8523 = vmatprep.subr.mxu0 0.0
        %8524 = vmatpush1.xpose.msra.mxu0 0.0
        %8525 = vmatprep.subr.mxu0 0.0
        %8526 = vmatpush1.xpose.msra.mxu0 0.0
        %8527 = vmatprep.subr.mxu0 0.0
        %8528 = vmatpush1.xpose.msra.mxu0 0.0
        %8529 = vmatprep.subr.mxu0 0.0
        %8530 = vmatpush1.xpose.msra.mxu0 0.0
        %8531 = vmatprep.subr.mxu0 0.0
        %8532 = vmatpush1.xpose.msra.mxu0 0.0
        %8533 = vmatprep.subr.mxu0 0.0
        %8534 = vmatpush1.xpose.msra.mxu0 0.0
        %8535 = vmatprep.subr.mxu0 0.0
        %8536 = vmatpush1.xpose.msra.mxu0 0.0
        %8537 = vmatprep.subr.mxu0 0.0
        %8538 = vmatpush1.xpose.msra.mxu0 0.0
        %8539 = vmatprep.subr.mxu0 0.0
        %8540 = vmatpush1.xpose.msra.mxu0 0.0
        %8541 = vmatprep.subr.mxu0 0.0
        %8542 = vmatpush1.xpose.msra.mxu0 0.0
        %8543 = vmatprep.subr.mxu0 0.0
        %8544 = vmatpush1.xpose.msra.mxu0 0.0
        %8545 = vmatprep.subr.mxu0 0.0
        %8546 = vmatpush1.xpose.msra.mxu0 0.0
        %8547 = vmatprep.subr.mxu0 0.0
        %8548 = vmatpush1.xpose.msra.mxu0 0.0
        %8549 = vmatprep.subr.mxu0 0.0
        %8550 = vmatpush1.xpose.msra.mxu0 0.0
        %8551 = vmatprep.subr.mxu0 0.0
        %8552 = vmatpush1.xpose.msra.mxu0 0.0
        %8553 = vmatprep.subr.mxu0 0.0
        %8554 = vmatpush1.xpose.msra.mxu0 0.0
        %8555 = vmatprep.subr.mxu0 0.0
        %8556 = vmatpush1.xpose.msra.mxu0 0.0
        %8557 = vmatprep.subr.mxu0 0.0
        %8558 = vmatpush1.xpose.msra.mxu0 0.0
        %8559 = vmatprep.mubr.f32.mxu0 0.0
        %8560 = vmatmul.mubr.f32.gmra.mrb[0].mxu0 %v6249
        %v8561 = vpop.f32.mrb[0].mxu0
        %v8562 = vadd.f32 %v694, %v8561
        %v8563 = vpop.f32.mrb[0].mxu0
        %8564 = vdwg.mxu0
        %8567 = vrot.lane.b32.xlu0 %v6234, 96
        %v8568 = vpop.permute.xlu0 %8567
        %8569 = vrot.lane.b32.xlu0 %v6235, 96
        %v8570 = vpop.permute.xlu0 %8569
        %v8571 = vsel %vm851, %v8568, 0
        %v8573 = vsel %vm851, %v8570, 0
        %8575 = vmatprep.subr.mxu0 0.0
        %8576 = vmatpush1.xpose.msra.mxu0 %v8571
        %8577 = vmatprep.subr.mxu0 0.0
        %8578 = vmatpush1.xpose.msra.mxu0 %v8573
        %8579 = vmatprep.subr.mxu0 0.0
        %8580 = vmatpush1.xpose.msra.mxu0 0.0
        %8581 = vmatprep.subr.mxu0 0.0
        %8582 = vmatpush1.xpose.msra.mxu0 0.0
        %8583 = vmatprep.subr.mxu0 0.0
        %8584 = vmatpush1.xpose.msra.mxu0 0.0
        %8585 = vmatprep.subr.mxu0 0.0
        %8586 = vmatpush1.xpose.msra.mxu0 0.0
        %8587 = vmatprep.subr.mxu0 0.0
        %8588 = vmatpush1.xpose.msra.mxu0 0.0
        %8589 = vmatprep.subr.mxu0 0.0
        %8590 = vmatpush1.xpose.msra.mxu0 0.0
        %8591 = vmatprep.subr.mxu0 0.0
        %8592 = vmatpush1.xpose.msra.mxu0 0.0
        %8593 = vmatprep.subr.mxu0 0.0
        %8594 = vmatpush1.xpose.msra.mxu0 0.0
        %8595 = vmatprep.subr.mxu0 0.0
        %8596 = vmatpush1.xpose.msra.mxu0 0.0
        %8597 = vmatprep.subr.mxu0 0.0
        %8598 = vmatpush1.xpose.msra.mxu0 0.0
        %8599 = vmatprep.subr.mxu0 0.0
        %8600 = vmatpush1.xpose.msra.mxu0 0.0
        %8601 = vmatprep.subr.mxu0 0.0
        %8602 = vmatpush1.xpose.msra.mxu0 0.0
        %8603 = vmatprep.subr.mxu0 0.0
        %8604 = vmatpush1.xpose.msra.mxu0 0.0
        %8605 = vmatprep.subr.mxu0 0.0
        %8606 = vmatpush1.xpose.msra.mxu0 0.0
        %8607 = vmatprep.subr.mxu0 0.0
        %8608 = vmatpush1.xpose.msra.mxu0 0.0
        %8609 = vmatprep.subr.mxu0 0.0
        %8610 = vmatpush1.xpose.msra.mxu0 0.0
        %8611 = vmatprep.subr.mxu0 0.0
        %8612 = vmatpush1.xpose.msra.mxu0 0.0
        %8613 = vmatprep.subr.mxu0 0.0
        %8614 = vmatpush1.xpose.msra.mxu0 0.0
        %8615 = vmatprep.subr.mxu0 0.0
        %8616 = vmatpush1.xpose.msra.mxu0 0.0
        %8617 = vmatprep.subr.mxu0 0.0
        %8618 = vmatpush1.xpose.msra.mxu0 0.0
        %8619 = vmatprep.subr.mxu0 0.0
        %8620 = vmatpush1.xpose.msra.mxu0 0.0
        %8621 = vmatprep.subr.mxu0 0.0
        %8622 = vmatpush1.xpose.msra.mxu0 0.0
        %8623 = vmatprep.subr.mxu0 0.0
        %8624 = vmatpush1.xpose.msra.mxu0 0.0
        %8625 = vmatprep.subr.mxu0 0.0
        %8626 = vmatpush1.xpose.msra.mxu0 0.0
        %8627 = vmatprep.subr.mxu0 0.0
        %8628 = vmatpush1.xpose.msra.mxu0 0.0
        %8629 = vmatprep.subr.mxu0 0.0
        %8630 = vmatpush1.xpose.msra.mxu0 0.0
        %8631 = vmatprep.subr.mxu0 0.0
        %8632 = vmatpush1.xpose.msra.mxu0 0.0
        %8633 = vmatprep.subr.mxu0 0.0
        %8634 = vmatpush1.xpose.msra.mxu0 0.0
        %8635 = vmatprep.subr.mxu0 0.0
        %8636 = vmatpush1.xpose.msra.mxu0 0.0
        %8637 = vmatprep.subr.mxu0 0.0
        %8638 = vmatpush1.xpose.msra.mxu0 0.0
        %8639 = vmatprep.mubr.f32.mxu0 0.0
        %8640 = vmatmul.mubr.f32.gmra.mrb[0].mxu0 %v6249
        %v8641 = vpop.f32.mrb[0].mxu0
        %v8642 = vadd.f32 %v698, %v8641
        %v8643 = vpop.f32.mrb[0].mxu0
        %8644 = vdwg.mxu0
        %8647 = vrot.lane.b32.xlu0 %v6236, 96
        %v8648 = vpop.permute.xlu0 %8647
        %8649 = vrot.lane.b32.xlu0 %v6237, 96
        %v8650 = vpop.permute.xlu0 %8649
        %v8651 = vsel %vm851, %v8648, 0
        %v8653 = vsel %vm851, %v8650, 0
        %8655 = vmatprep.subr.mxu0 0.0
        %8656 = vmatpush1.xpose.msra.mxu0 %v8651
        %8657 = vmatprep.subr.mxu0 0.0
        %8658 = vmatpush1.xpose.msra.mxu0 %v8653
        %8659 = vmatprep.subr.mxu0 0.0
        %8660 = vmatpush1.xpose.msra.mxu0 0.0
        %8661 = vmatprep.subr.mxu0 0.0
        %8662 = vmatpush1.xpose.msra.mxu0 0.0
        %8663 = vmatprep.subr.mxu0 0.0
        %8664 = vmatpush1.xpose.msra.mxu0 0.0
        %8665 = vmatprep.subr.mxu0 0.0
        %8666 = vmatpush1.xpose.msra.mxu0 0.0
        %8667 = vmatprep.subr.mxu0 0.0
        %8668 = vmatpush1.xpose.msra.mxu0 0.0
        %8669 = vmatprep.subr.mxu0 0.0
        %8670 = vmatpush1.xpose.msra.mxu0 0.0
        %8671 = vmatprep.subr.mxu0 0.0
        %8672 = vmatpush1.xpose.msra.mxu0 0.0
        %8673 = vmatprep.subr.mxu0 0.0
        %8674 = vmatpush1.xpose.msra.mxu0 0.0
        %8675 = vmatprep.subr.mxu0 0.0
        %8676 = vmatpush1.xpose.msra.mxu0 0.0
        %8677 = vmatprep.subr.mxu0 0.0
        %8678 = vmatpush1.xpose.msra.mxu0 0.0
        %8679 = vmatprep.subr.mxu0 0.0
        %8680 = vmatpush1.xpose.msra.mxu0 0.0
        %8681 = vmatprep.subr.mxu0 0.0
        %8682 = vmatpush1.xpose.msra.mxu0 0.0
        %8683 = vmatprep.subr.mxu0 0.0
        %8684 = vmatpush1.xpose.msra.mxu0 0.0
        %8685 = vmatprep.subr.mxu0 0.0
        %8686 = vmatpush1.xpose.msra.mxu0 0.0
        %8687 = vmatprep.subr.mxu0 0.0
        %8688 = vmatpush1.xpose.msra.mxu0 0.0
        %8689 = vmatprep.subr.mxu0 0.0
        %8690 = vmatpush1.xpose.msra.mxu0 0.0
        %8691 = vmatprep.subr.mxu0 0.0
        %8692 = vmatpush1.xpose.msra.mxu0 0.0
        %8693 = vmatprep.subr.mxu0 0.0
        %8694 = vmatpush1.xpose.msra.mxu0 0.0
        %8695 = vmatprep.subr.mxu0 0.0
        %8696 = vmatpush1.xpose.msra.mxu0 0.0
        %8697 = vmatprep.subr.mxu0 0.0
        %8698 = vmatpush1.xpose.msra.mxu0 0.0
        %8699 = vmatprep.subr.mxu0 0.0
        %8700 = vmatpush1.xpose.msra.mxu0 0.0
        %8701 = vmatprep.subr.mxu0 0.0
        %8702 = vmatpush1.xpose.msra.mxu0 0.0
        %8703 = vmatprep.subr.mxu0 0.0
        %8704 = vmatpush1.xpose.msra.mxu0 0.0
        %8705 = vmatprep.subr.mxu0 0.0
        %8706 = vmatpush1.xpose.msra.mxu0 0.0
        %8707 = vmatprep.subr.mxu0 0.0
        %8708 = vmatpush1.xpose.msra.mxu0 0.0
        %8709 = vmatprep.subr.mxu0 0.0
        %8710 = vmatpush1.xpose.msra.mxu0 0.0
        %8711 = vmatprep.subr.mxu0 0.0
        %8712 = vmatpush1.xpose.msra.mxu0 0.0
        %8713 = vmatprep.subr.mxu0 0.0
        %8714 = vmatpush1.xpose.msra.mxu0 0.0
        %8715 = vmatprep.subr.mxu0 0.0
        %8716 = vmatpush1.xpose.msra.mxu0 0.0
        %8717 = vmatprep.subr.mxu0 0.0
        %8718 = vmatpush1.xpose.msra.mxu0 0.0
        %8719 = vmatprep.mubr.f32.mxu0 0.0
        %8720 = vmatmul.mubr.f32.gmra.mrb[0].mxu0 %v6249
        %v8721 = vpop.f32.mrb[0].mxu0
        %v8722 = vadd.f32 %v702, %v8721
        %v8723 = vpop.f32.mrb[0].mxu0
        %8724 = vdwg.mxu0
        %8727 = vrot.lane.b32.xlu0 %v6238, 96
        %v8728 = vpop.permute.xlu0 %8727
        %8729 = vrot.lane.b32.xlu0 %v6239, 96
        %v8730 = vpop.permute.xlu0 %8729
        %v8731 = vsel %vm851, %v8728, 0
        %v8733 = vsel %vm851, %v8730, 0
        %8735 = vmatprep.subr.mxu0 0.0
        %8736 = vmatpush1.xpose.msra.mxu0 %v8731
        %8737 = vmatprep.subr.mxu0 0.0
        %8738 = vmatpush1.xpose.msra.mxu0 %v8733
        %8739 = vmatprep.subr.mxu0 0.0
        %8740 = vmatpush1.xpose.msra.mxu0 0.0
        %8741 = vmatprep.subr.mxu0 0.0
        %8742 = vmatpush1.xpose.msra.mxu0 0.0
        %8743 = vmatprep.subr.mxu0 0.0
        %8744 = vmatpush1.xpose.msra.mxu0 0.0
        %8745 = vmatprep.subr.mxu0 0.0
        %8746 = vmatpush1.xpose.msra.mxu0 0.0
        %8747 = vmatprep.subr.mxu0 0.0
        %8748 = vmatpush1.xpose.msra.mxu0 0.0
        %8749 = vmatprep.subr.mxu0 0.0
        %8750 = vmatpush1.xpose.msra.mxu0 0.0
        %8751 = vmatprep.subr.mxu0 0.0
        %8752 = vmatpush1.xpose.msra.mxu0 0.0
        %8753 = vmatprep.subr.mxu0 0.0
        %8754 = vmatpush1.xpose.msra.mxu0 0.0
        %8755 = vmatprep.subr.mxu0 0.0
        %8756 = vmatpush1.xpose.msra.mxu0 0.0
        %8757 = vmatprep.subr.mxu0 0.0
        %8758 = vmatpush1.xpose.msra.mxu0 0.0
        %8759 = vmatprep.subr.mxu0 0.0
        %8760 = vmatpush1.xpose.msra.mxu0 0.0
        %8761 = vmatprep.subr.mxu0 0.0
        %8762 = vmatpush1.xpose.msra.mxu0 0.0
        %8763 = vmatprep.subr.mxu0 0.0
        %8764 = vmatpush1.xpose.msra.mxu0 0.0
        %8765 = vmatprep.subr.mxu0 0.0
        %8766 = vmatpush1.xpose.msra.mxu0 0.0
        %8767 = vmatprep.subr.mxu0 0.0
        %8768 = vmatpush1.xpose.msra.mxu0 0.0
        %8769 = vmatprep.subr.mxu0 0.0
        %8770 = vmatpush1.xpose.msra.mxu0 0.0
        %8771 = vmatprep.subr.mxu0 0.0
        %8772 = vmatpush1.xpose.msra.mxu0 0.0
        %8773 = vmatprep.subr.mxu0 0.0
        %8774 = vmatpush1.xpose.msra.mxu0 0.0
        %8775 = vmatprep.subr.mxu0 0.0
        %8776 = vmatpush1.xpose.msra.mxu0 0.0
        %8777 = vmatprep.subr.mxu0 0.0
        %8778 = vmatpush1.xpose.msra.mxu0 0.0
        %8779 = vmatprep.subr.mxu0 0.0
        %8780 = vmatpush1.xpose.msra.mxu0 0.0
        %8781 = vmatprep.subr.mxu0 0.0
        %8782 = vmatpush1.xpose.msra.mxu0 0.0
        %8783 = vmatprep.subr.mxu0 0.0
        %8784 = vmatpush1.xpose.msra.mxu0 0.0
        %8785 = vmatprep.subr.mxu0 0.0
        %8786 = vmatpush1.xpose.msra.mxu0 0.0
        %8787 = vmatprep.subr.mxu0 0.0
        %8788 = vmatpush1.xpose.msra.mxu0 0.0
        %8789 = vmatprep.subr.mxu0 0.0
        %8790 = vmatpush1.xpose.msra.mxu0 0.0
        %8791 = vmatprep.subr.mxu0 0.0
        %8792 = vmatpush1.xpose.msra.mxu0 0.0
        %8793 = vmatprep.subr.mxu0 0.0
        %8794 = vmatpush1.xpose.msra.mxu0 0.0
        %8795 = vmatprep.subr.mxu0 0.0
        %8796 = vmatpush1.xpose.msra.mxu0 0.0
        %8797 = vmatprep.subr.mxu0 0.0
        %8798 = vmatpush1.xpose.msra.mxu0 0.0
        %8799 = vmatprep.mubr.f32.mxu0 0.0
        %8800 = vmatmul.mubr.f32.gmra.mrb[0].mxu0 %v6249
        %v8801 = vpop.f32.mrb[0].mxu0
        %v8802 = vadd.f32 %v706, %v8801
        %v8803 = vpop.f32.mrb[0].mxu0
        %8804 = vdwg.mxu0
        %v8805 = vsel %vm4141, %v6322, -inf
        %8806 = vmax.xlane.f32.xlu0 %v8805
        %v8807 = vpop.xlane.xlu0 %8806
        %v8808 = vsel %vm4141, %v6402, -inf
        %8809 = vmax.xlane.f32.xlu0 %v8808
        %v8810 = vpop.xlane.xlu0 %8809
        %v8811 = vsel %vm4141, %v6482, -inf
        %8812 = vmax.xlane.f32.xlu0 %v8811
        %v8813 = vpop.xlane.xlu0 %8812
        %v8814 = vsel %vm4141, %v6562, -inf
        %8815 = vmax.xlane.f32.xlu0 %v8814
        %v8816 = vpop.xlane.xlu0 %8815
        %v8817 = vsel %vm4141, %v6642, -inf
        %8818 = vmax.xlane.f32.xlu0 %v8817
        %v8819 = vpop.xlane.xlu0 %8818
        %v8820 = vsel %vm4141, %v6722, -inf
        %8821 = vmax.xlane.f32.xlu0 %v8820
        %v8822 = vpop.xlane.xlu0 %8821
        %v8823 = vsel %vm4141, %v6802, -inf
        %8824 = vmax.xlane.f32.xlu0 %v8823
        %v8825 = vpop.xlane.xlu0 %8824
        %v8826 = vsel %vm4141, %v6882, -inf
        %8827 = vmax.xlane.f32.xlu0 %v8826
        %v8828 = vpop.xlane.xlu0 %8827
        %v8829 = vsel %vm4141, %v6962, -inf
        %8830 = vmax.xlane.f32.xlu0 %v8829
        %v8831 = vpop.xlane.xlu0 %8830
        %v8832 = vsel %vm4141, %v7042, -inf
        %8833 = vmax.xlane.f32.xlu0 %v8832
        %v8834 = vpop.xlane.xlu0 %8833
        %v8835 = vsel %vm4141, %v7122, -inf
        %8836 = vmax.xlane.f32.xlu0 %v8835
        %v8837 = vpop.xlane.xlu0 %8836
        %v8838 = vsel %vm4141, %v7202, -inf
        %8839 = vmax.xlane.f32.xlu0 %v8838
        %v8840 = vpop.xlane.xlu0 %8839
        %v8841 = vsel %vm4141, %v7282, -inf
        %8842 = vmax.xlane.f32.xlu0 %v8841
        %v8843 = vpop.xlane.xlu0 %8842
        %v8844 = vsel %vm4141, %v7362, -inf
        %8845 = vmax.xlane.f32.xlu0 %v8844
        %v8846 = vpop.xlane.xlu0 %8845
        %v8847 = vsel %vm4141, %v7442, -inf
        %8848 = vmax.xlane.f32.xlu0 %v8847
        %v8849 = vpop.xlane.xlu0 %8848
        %v8850 = vsel %vm4141, %v7522, -inf
        %8851 = vmax.xlane.f32.xlu0 %v8850
        %v8852 = vpop.xlane.xlu0 %8851
        %v8853 = vsel %vm4141, %v7602, -inf
        %8854 = vmax.xlane.f32.xlu0 %v8853
        %v8855 = vpop.xlane.xlu0 %8854
        %v8856 = vsel %vm4141, %v7682, -inf
        %8857 = vmax.xlane.f32.xlu0 %v8856
        %v8858 = vpop.xlane.xlu0 %8857
        %v8859 = vsel %vm4141, %v7762, -inf
        %8860 = vmax.xlane.f32.xlu0 %v8859
        %v8861 = vpop.xlane.xlu0 %8860
        %v8862 = vsel %vm4141, %v7842, -inf
        %8863 = vmax.xlane.f32.xlu0 %v8862
        %v8864 = vpop.xlane.xlu0 %8863
        %v8865 = vsel %vm4141, %v7922, -inf
        %8866 = vmax.xlane.f32.xlu0 %v8865
        %v8867 = vpop.xlane.xlu0 %8866
        %v8868 = vsel %vm4141, %v8002, -inf
        %8869 = vmax.xlane.f32.xlu0 %v8868
        %v8870 = vpop.xlane.xlu0 %8869
        %v8871 = vsel %vm4141, %v8082, -inf
        %8872 = vmax.xlane.f32.xlu0 %v8871
        %v8873 = vpop.xlane.xlu0 %8872
        %v8874 = vsel %vm4141, %v8162, -inf
        %8875 = vmax.xlane.f32.xlu0 %v8874
        %v8876 = vpop.xlane.xlu0 %8875
        %v8877 = vsel %vm4141, %v8242, -inf
        %8878 = vmax.xlane.f32.xlu0 %v8877
        %v8879 = vpop.xlane.xlu0 %8878
        %v8880 = vsel %vm4141, %v8322, -inf
        %8881 = vmax.xlane.f32.xlu0 %v8880
        %v8882 = vpop.xlane.xlu0 %8881
        %v8883 = vsel %vm4141, %v8402, -inf
        %8884 = vmax.xlane.f32.xlu0 %v8883
        %v8885 = vpop.xlane.xlu0 %8884
        %v8886 = vsel %vm4141, %v8482, -inf
        %8887 = vmax.xlane.f32.xlu0 %v8886
        %v8888 = vpop.xlane.xlu0 %8887
        %v8889 = vsel %vm4141, %v8562, -inf
        %8890 = vmax.xlane.f32.xlu0 %v8889
        %v8891 = vpop.xlane.xlu0 %8890
        %v8892 = vsel %vm4141, %v8642, -inf
        %8893 = vmax.xlane.f32.xlu0 %v8892
        %v8894 = vpop.xlane.xlu0 %8893
        %v8895 = vsel %vm4141, %v8722, -inf
        %8896 = vmax.xlane.f32.xlu0 %v8895
        %v8897 = vpop.xlane.xlu0 %8896
        %v8898 = vsel %vm4141, %v8802, -inf
        %8899 = vmax.xlane.f32.xlu0 %v8898
        %v8900 = vpop.xlane.xlu0 %8899
        %v8901 = vsub.f32 %v6322, %v8807
        %v8902 = vsub.f32 %v6402, %v8810
        %v8903 = vsub.f32 %v6482, %v8813
        %v8904 = vsub.f32 %v6562, %v8816
        %v8905 = vsub.f32 %v6642, %v8819
        %v8906 = vsub.f32 %v6722, %v8822
        %v8907 = vsub.f32 %v6802, %v8825
        %v8908 = vsub.f32 %v6882, %v8828
        %v8909 = vsub.f32 %v6962, %v8831
        %v8910 = vsub.f32 %v7042, %v8834
        %v8911 = vsub.f32 %v7122, %v8837
        %v8912 = vsub.f32 %v7202, %v8840
        %v8913 = vsub.f32 %v7282, %v8843
        %v8914 = vsub.f32 %v7362, %v8846
        %v8915 = vsub.f32 %v7442, %v8849
        %v8916 = vsub.f32 %v7522, %v8852
        %v8917 = vsub.f32 %v7602, %v8855
        %v8918 = vsub.f32 %v7682, %v8858
        %v8919 = vsub.f32 %v7762, %v8861
        %v8920 = vsub.f32 %v7842, %v8864
        %v8921 = vsub.f32 %v7922, %v8867
        %v8922 = vsub.f32 %v8002, %v8870
        %v8923 = vsub.f32 %v8082, %v8873
        %v8924 = vsub.f32 %v8162, %v8876
        %v8925 = vsub.f32 %v8242, %v8879
        %v8926 = vsub.f32 %v8322, %v8882
        %v8927 = vsub.f32 %v8402, %v8885
        %v8928 = vsub.f32 %v8482, %v8888
        %v8929 = vsub.f32 %v8562, %v8891
        %v8930 = vsub.f32 %v8642, %v8894
        %v8931 = vsub.f32 %v8722, %v8897
        %v8932 = vsub.f32 %v8802, %v8900
        %v8933 = vmul.f32 %v8901, 1.442695
        %v8934 = vpow.pop %v8933
        %v8935 = vmul.f32 %v8902, 1.442695
        %v8936 = vpow.pop %v8935
        %v8937 = vmul.f32 %v8903, 1.442695
        %v8938 = vpow.pop %v8937
        %v8939 = vmul.f32 %v8904, 1.442695
        %v8940 = vpow.pop %v8939
        %v8941 = vmul.f32 %v8905, 1.442695
        %v8942 = vpow.pop %v8941
        %v8943 = vmul.f32 %v8906, 1.442695
        %v8944 = vpow.pop %v8943
        %v8945 = vmul.f32 %v8907, 1.442695
        %v8946 = vpow.pop %v8945
        %v8947 = vmul.f32 %v8908, 1.442695
        %v8948 = vpow.pop %v8947
        %v8949 = vmul.f32 %v8909, 1.442695
        %v8950 = vpow.pop %v8949
        %v8951 = vmul.f32 %v8910, 1.442695
        %v8952 = vpow.pop %v8951
        %v8953 = vmul.f32 %v8911, 1.442695
        %v8954 = vpow.pop %v8953
        %v8955 = vmul.f32 %v8912, 1.442695
        %v8956 = vpow.pop %v8955
        %v8957 = vmul.f32 %v8913, 1.442695
        %v8958 = vpow.pop %v8957
        %v8959 = vmul.f32 %v8914, 1.442695
        %v8960 = vpow.pop %v8959
        %v8961 = vmul.f32 %v8915, 1.442695
        %v8962 = vpow.pop %v8961
        %v8963 = vmul.f32 %v8916, 1.442695
        %v8964 = vpow.pop %v8963
        %v8965 = vmul.f32 %v8917, 1.442695
        %v8966 = vpow.pop %v8965
        %v8967 = vmul.f32 %v8918, 1.442695
        %v8968 = vpow.pop %v8967
        %v8969 = vmul.f32 %v8919, 1.442695
        %v8970 = vpow.pop %v8969
        %v8971 = vmul.f32 %v8920, 1.442695
        %v8972 = vpow.pop %v8971
        %v8973 = vmul.f32 %v8921, 1.442695
        %v8974 = vpow.pop %v8973
        %v8975 = vmul.f32 %v8922, 1.442695
        %v8976 = vpow.pop %v8975
        %v8977 = vmul.f32 %v8923, 1.442695
        %v8978 = vpow.pop %v8977
        %v8979 = vmul.f32 %v8924, 1.442695
        %v8980 = vpow.pop %v8979
        %v8981 = vmul.f32 %v8925, 1.442695
        %v8982 = vpow.pop %v8981
        %v8983 = vmul.f32 %v8926, 1.442695
        %v8984 = vpow.pop %v8983
        %v8985 = vmul.f32 %v8927, 1.442695
        %v8986 = vpow.pop %v8985
        %v8987 = vmul.f32 %v8928, 1.442695
        %v8988 = vpow.pop %v8987
        %v8989 = vmul.f32 %v8929, 1.442695
        %v8990 = vpow.pop %v8989
        %v8991 = vmul.f32 %v8930, 1.442695
        %v8992 = vpow.pop %v8991
        %v8993 = vmul.f32 %v8931, 1.442695
        %v8994 = vpow.pop %v8993
        %v8995 = vmul.f32 %v8932, 1.442695
        %v8996 = vpow.pop %v8995
        %v8997 = vsel %vm4141, %v8934, 0.0
        %8998 = vadd.xlane.f32.xlu0 %v8997
        %v8999 = vpop.xlane.xlu0 %8998
        %v9000 = vsel %vm4141, %v8936, 0.0
        %9001 = vadd.xlane.f32.xlu0 %v9000
        %v9002 = vpop.xlane.xlu0 %9001
        %v9003 = vsel %vm4141, %v8938, 0.0
        %9004 = vadd.xlane.f32.xlu0 %v9003
        %v9005 = vpop.xlane.xlu0 %9004
        %v9006 = vsel %vm4141, %v8940, 0.0
        %9007 = vadd.xlane.f32.xlu0 %v9006
        %v9008 = vpop.xlane.xlu0 %9007
        %v9009 = vsel %vm4141, %v8942, 0.0
        %9010 = vadd.xlane.f32.xlu0 %v9009
        %v9011 = vpop.xlane.xlu0 %9010
        %v9012 = vsel %vm4141, %v8944, 0.0
        %9013 = vadd.xlane.f32.xlu0 %v9012
        %v9014 = vpop.xlane.xlu0 %9013
        %v9015 = vsel %vm4141, %v8946, 0.0
        %9016 = vadd.xlane.f32.xlu0 %v9015
        %v9017 = vpop.xlane.xlu0 %9016
        %v9018 = vsel %vm4141, %v8948, 0.0
        %9019 = vadd.xlane.f32.xlu0 %v9018
        %v9020 = vpop.xlane.xlu0 %9019
        %v9021 = vsel %vm4141, %v8950, 0.0
        %9022 = vadd.xlane.f32.xlu0 %v9021
        %v9023 = vpop.xlane.xlu0 %9022
        %v9024 = vsel %vm4141, %v8952, 0.0
        %9025 = vadd.xlane.f32.xlu0 %v9024
        %v9026 = vpop.xlane.xlu0 %9025
        %v9027 = vsel %vm4141, %v8954, 0.0
        %9028 = vadd.xlane.f32.xlu0 %v9027
        %v9029 = vpop.xlane.xlu0 %9028
        %v9030 = vsel %vm4141, %v8956, 0.0
        %9031 = vadd.xlane.f32.xlu0 %v9030
        %v9032 = vpop.xlane.xlu0 %9031
        %v9033 = vsel %vm4141, %v8958, 0.0
        %9034 = vadd.xlane.f32.xlu0 %v9033
        %v9035 = vpop.xlane.xlu0 %9034
        %v9036 = vsel %vm4141, %v8960, 0.0
        %9037 = vadd.xlane.f32.xlu0 %v9036
        %v9038 = vpop.xlane.xlu0 %9037
        %v9039 = vsel %vm4141, %v8962, 0.0
        %9040 = vadd.xlane.f32.xlu0 %v9039
        %v9041 = vpop.xlane.xlu0 %9040
        %v9042 = vsel %vm4141, %v8964, 0.0
        %9043 = vadd.xlane.f32.xlu0 %v9042
        %v9044 = vpop.xlane.xlu0 %9043
        %v9045 = vsel %vm4141, %v8966, 0.0
        %9046 = vadd.xlane.f32.xlu0 %v9045
        %v9047 = vpop.xlane.xlu0 %9046
        %v9048 = vsel %vm4141, %v8968, 0.0
        %9049 = vadd.xlane.f32.xlu0 %v9048
        %v9050 = vpop.xlane.xlu0 %9049
        %v9051 = vsel %vm4141, %v8970, 0.0
        %9052 = vadd.xlane.f32.xlu0 %v9051
        %v9053 = vpop.xlane.xlu0 %9052
        %v9054 = vsel %vm4141, %v8972, 0.0
        %9055 = vadd.xlane.f32.xlu0 %v9054
        %v9056 = vpop.xlane.xlu0 %9055
        %v9057 = vsel %vm4141, %v8974, 0.0
        %9058 = vadd.xlane.f32.xlu0 %v9057
        %v9059 = vpop.xlane.xlu0 %9058
        %v9060 = vsel %vm4141, %v8976, 0.0
        %9061 = vadd.xlane.f32.xlu0 %v9060
        %v9062 = vpop.xlane.xlu0 %9061
        %v9063 = vsel %vm4141, %v8978, 0.0
        %9064 = vadd.xlane.f32.xlu0 %v9063
        %v9065 = vpop.xlane.xlu0 %9064
        %v9066 = vsel %vm4141, %v8980, 0.0
        %9067 = vadd.xlane.f32.xlu0 %v9066
        %v9068 = vpop.xlane.xlu0 %9067
        %v9069 = vsel %vm4141, %v8982, 0.0
        %9070 = vadd.xlane.f32.xlu0 %v9069
        %v9071 = vpop.xlane.xlu0 %9070
        %v9072 = vsel %vm4141, %v8984, 0.0
        %9073 = vadd.xlane.f32.xlu0 %v9072
        %v9074 = vpop.xlane.xlu0 %9073
        %v9075 = vsel %vm4141, %v8986, 0.0
        %9076 = vadd.xlane.f32.xlu0 %v9075
        %v9077 = vpop.xlane.xlu0 %9076
        %v9078 = vsel %vm4141, %v8988, 0.0
        %9079 = vadd.xlane.f32.xlu0 %v9078
        %v9080 = vpop.xlane.xlu0 %9079
        %v9081 = vsel %vm4141, %v8990, 0.0
        %9082 = vadd.xlane.f32.xlu0 %v9081
        %v9083 = vpop.xlane.xlu0 %9082
        %v9084 = vsel %vm4141, %v8992, 0.0
        %9085 = vadd.xlane.f32.xlu0 %v9084
        %v9086 = vpop.xlane.xlu0 %9085
        %v9087 = vsel %vm4141, %v8994, 0.0
        %9088 = vadd.xlane.f32.xlu0 %v9087
        %v9089 = vpop.xlane.xlu0 %9088
        %v9090 = vsel %vm4141, %v8996, 0.0
        %9091 = vadd.xlane.f32.xlu0 %v9090
        %v9092 = vpop.xlane.xlu0 %9091
        %v9093 = vrcp.pop %v8999
        %v9094 = vrcp.pop %v9002
        %v9095 = vrcp.pop %v9005
        %v9096 = vrcp.pop %v9008
        %v9097 = vrcp.pop %v9011
        %v9098 = vrcp.pop %v9014
        %v9099 = vrcp.pop %v9017
        %v9100 = vrcp.pop %v9020
        %v9101 = vrcp.pop %v9023
        %v9102 = vrcp.pop %v9026
        %v9103 = vrcp.pop %v9029
        %v9104 = vrcp.pop %v9032
        %v9105 = vrcp.pop %v9035
        %v9106 = vrcp.pop %v9038
        %v9107 = vrcp.pop %v9041
        %v9108 = vrcp.pop %v9044
        %v9109 = vrcp.pop %v9047
        %v9110 = vrcp.pop %v9050
        %v9111 = vrcp.pop %v9053
        %v9112 = vrcp.pop %v9056
        %v9113 = vrcp.pop %v9059
        %v9114 = vrcp.pop %v9062
        %v9115 = vrcp.pop %v9065
        %v9116 = vrcp.pop %v9068
        %v9117 = vrcp.pop %v9071
        %v9118 = vrcp.pop %v9074
        %v9119 = vrcp.pop %v9077
        %v9120 = vrcp.pop %v9080
        %v9121 = vrcp.pop %v9083
        %v9122 = vrcp.pop %v9086
        %v9123 = vrcp.pop %v9089
        %v9124 = vrcp.pop %v9092
        %v9125 = vmul.f32 %v8934, %v9093
        %v9126 = vmul.f32 %v8936, %v9094
        %v9127 = vmul.f32 %v8938, %v9095
        %v9128 = vmul.f32 %v8940, %v9096
        %v9129 = vmul.f32 %v8942, %v9097
        %v9130 = vmul.f32 %v8944, %v9098
        %v9131 = vmul.f32 %v8946, %v9099
        %v9132 = vmul.f32 %v8948, %v9100
        %v9133 = vmul.f32 %v8950, %v9101
        %v9134 = vmul.f32 %v8952, %v9102
        %v9135 = vmul.f32 %v8954, %v9103
        %v9136 = vmul.f32 %v8956, %v9104
        %v9137 = vmul.f32 %v8958, %v9105
        %v9138 = vmul.f32 %v8960, %v9106
        %v9139 = vmul.f32 %v8962, %v9107
        %v9140 = vmul.f32 %v8964, %v9108
        %v9141 = vmul.f32 %v8966, %v9109
        %v9142 = vmul.f32 %v8968, %v9110
        %v9143 = vmul.f32 %v8970, %v9111
        %v9144 = vmul.f32 %v8972, %v9112
        %v9145 = vmul.f32 %v8974, %v9113
        %v9146 = vmul.f32 %v8976, %v9114
        %v9147 = vmul.f32 %v8978, %v9115
        %v9148 = vmul.f32 %v8980, %v9116
        %v9149 = vmul.f32 %v8982, %v9117
        %v9150 = vmul.f32 %v8984, %v9118
        %v9151 = vmul.f32 %v8986, %v9119
        %v9152 = vmul.f32 %v8988, %v9120
        %v9153 = vmul.f32 %v8990, %v9121
        %v9154 = vmul.f32 %v8992, %v9122
        %v9155 = vmul.f32 %v8994, %v9123
        %v9156 = vmul.f32 %v8996, %v9124
        %v9157 = vmul.f32 %v5594, %v4500
        %v9158 = vmul.f32 %v5599, %v4500
        %v9159 = vmul.f32 %v5604, %v4500
        %v9160 = vmul.f32 %v5609, %v4500
        %v9161 = vmul.f32 %v5594, %v4512
        %v9162 = vmul.f32 %v5599, %v4512
        %v9163 = vmul.f32 %v5604, %v4512
        %v9164 = vmul.f32 %v5609, %v4512
        %v9181 = vrot.slane %v9125, 1
        %v9182 = vsel %vm4535, %v9126, %v9181
        %v9183 = vrot.slane %v9127, 7
        %v9184 = vsel %vm4538, %v9183, %v9182
        %v9185 = vrot.slane %v9128, 6
        %v9186 = vsel %vm4541, %v9185, %v9184
        %v9187 = vrot.slane %v9129, 5
        %v9188 = vsel %vm4544, %v9187, %v9186
        %v9189 = vrot.slane %v9130, 4
        %v9190 = vsel %vm4547, %v9189, %v9188
        %v9191 = vrot.slane %v9131, 3
        %v9192 = vsel %vm4550, %v9191, %v9190
        %v9193 = vrot.slane %v9132, 2
        %v9194 = vsel %vm4553, %v9193, %v9192
        %v9195 = vrot.slane %v9133, 1
        %v9196 = vsel %vm4535, %v9134, %v9195
        %v9197 = vrot.slane %v9135, 7
        %v9198 = vsel %vm4538, %v9197, %v9196
        %v9199 = vrot.slane %v9136, 6
        %v9200 = vsel %vm4541, %v9199, %v9198
        %v9201 = vrot.slane %v9137, 5
        %v9202 = vsel %vm4544, %v9201, %v9200
        %v9203 = vrot.slane %v9138, 4
        %v9204 = vsel %vm4547, %v9203, %v9202
        %v9205 = vrot.slane %v9139, 3
        %v9206 = vsel %vm4550, %v9205, %v9204
        %v9207 = vrot.slane %v9140, 2
        %v9208 = vsel %vm4553, %v9207, %v9206
        %9211 = vrot.lane.b32.xlu0 %v9161, 96
        %v9212 = vpop.permute.xlu0 %9211
        %9213 = vrot.lane.b32.xlu0 %v9162, 96
        %v9214 = vpop.permute.xlu0 %9213
        %v9217 = vsel %vm4577, %v9194, 0
        %v9219 = vsel %vm4577, %v9208, 0
        %9221 = vmatprep.subr.mxu0 0.0
        %9222 = vmatpush1.msra.mxu0 %v9212
        %9223 = vmatprep.subr.mxu0 0.0
        %9224 = vmatpush1.msra.mxu0 %v9214
        %9225 = vmatprep.subr.mxu0 0.0
        %9226 = vmatpush1.msra.mxu0 0.0
        %9227 = vmatprep.subr.mxu0 0.0
        %9228 = vmatpush1.msra.mxu0 0.0
        %9229 = vmatprep.subr.mxu0 0.0
        %9230 = vmatpush1.msra.mxu0 0.0
        %9231 = vmatprep.subr.mxu0 0.0
        %9232 = vmatpush1.msra.mxu0 0.0
        %9233 = vmatprep.subr.mxu0 0.0
        %9234 = vmatpush1.msra.mxu0 0.0
        %9235 = vmatprep.subr.mxu0 0.0
        %9236 = vmatpush1.msra.mxu0 0.0
        %9237 = vmatprep.subr.mxu0 0.0
        %9238 = vmatpush1.msra.mxu0 0.0
        %9239 = vmatprep.subr.mxu0 0.0
        %9240 = vmatpush1.msra.mxu0 0.0
        %9241 = vmatprep.subr.mxu0 0.0
        %9242 = vmatpush1.msra.mxu0 0.0
        %9243 = vmatprep.subr.mxu0 0.0
        %9244 = vmatpush1.msra.mxu0 0.0
        %9245 = vmatprep.subr.mxu0 0.0
        %9246 = vmatpush1.msra.mxu0 0.0
        %9247 = vmatprep.subr.mxu0 0.0
        %9248 = vmatpush1.msra.mxu0 0.0
        %9249 = vmatprep.subr.mxu0 0.0
        %9250 = vmatpush1.msra.mxu0 0.0
        %9251 = vmatprep.subr.mxu0 0.0
        %9252 = vmatpush1.msra.mxu0 0.0
        %9253 = vmatprep.subr.mxu0 0.0
        %9254 = vmatpush1.msra.mxu0 0.0
        %9255 = vmatprep.subr.mxu0 0.0
        %9256 = vmatpush1.msra.mxu0 0.0
        %9257 = vmatprep.subr.mxu0 0.0
        %9258 = vmatpush1.msra.mxu0 0.0
        %9259 = vmatprep.subr.mxu0 0.0
        %9260 = vmatpush1.msra.mxu0 0.0
        %9261 = vmatprep.subr.mxu0 0.0
        %9262 = vmatpush1.msra.mxu0 0.0
        %9263 = vmatprep.subr.mxu0 0.0
        %9264 = vmatpush1.msra.mxu0 0.0
        %9265 = vmatprep.subr.mxu0 0.0
        %9266 = vmatpush1.msra.mxu0 0.0
        %9267 = vmatprep.subr.mxu0 0.0
        %9268 = vmatpush1.msra.mxu0 0.0
        %9269 = vmatprep.subr.mxu0 0.0
        %9270 = vmatpush1.msra.mxu0 0.0
        %9271 = vmatprep.subr.mxu0 0.0
        %9272 = vmatpush1.msra.mxu0 0.0
        %9273 = vmatprep.subr.mxu0 0.0
        %9274 = vmatpush1.msra.mxu0 0.0
        %9275 = vmatprep.subr.mxu0 0.0
        %9276 = vmatpush1.msra.mxu0 0.0
        %9277 = vmatprep.subr.mxu0 0.0
        %9278 = vmatpush1.msra.mxu0 0.0
        %9279 = vmatprep.subr.mxu0 0.0
        %9280 = vmatpush1.msra.mxu0 0.0
        %9281 = vmatprep.subr.mxu0 0.0
        %9282 = vmatpush1.msra.mxu0 0.0
        %9283 = vmatprep.subr.mxu0 0.0
        %9284 = vmatpush1.msra.mxu0 0.0
        %9285 = vmatprep.mubr.f32.mxu0 0.0
        %9286 = vmatmul.mubr.f32.gmra.mrb[0].mxu0 %v9217
        %v9287 = vpop.f32.mrb[0].mxu0
        %v9288 = vadd.f32 0.0, %v9287
        %v9289 = vpop.f32.mrb[0].mxu0
        %9290 = vmatprep.mubr.f32.mxu0 0.0
        %9291 = vmatmul.mubr.f32.gmra.mrb[0].mxu0 %v9219
        %v9292 = vpop.f32.mrb[0].mxu0
        %v9293 = vadd.f32 0.0, %v9292
        %v9294 = vpop.f32.mrb[0].mxu0
        %9295 = vdwg.mxu0
        %v9312 = vrot.slane %v9141, 1
        %v9313 = vsel %vm4535, %v9142, %v9312
        %v9314 = vrot.slane %v9143, 7
        %v9315 = vsel %vm4538, %v9314, %v9313
        %v9316 = vrot.slane %v9144, 6
        %v9317 = vsel %vm4541, %v9316, %v9315
        %v9318 = vrot.slane %v9145, 5
        %v9319 = vsel %vm4544, %v9318, %v9317
        %v9320 = vrot.slane %v9146, 4
        %v9321 = vsel %vm4547, %v9320, %v9319
        %v9322 = vrot.slane %v9147, 3
        %v9323 = vsel %vm4550, %v9322, %v9321
        %v9324 = vrot.slane %v9148, 2
        %v9325 = vsel %vm4553, %v9324, %v9323
        %v9326 = vrot.slane %v9149, 1
        %v9327 = vsel %vm4535, %v9150, %v9326
        %v9328 = vrot.slane %v9151, 7
        %v9329 = vsel %vm4538, %v9328, %v9327
        %v9330 = vrot.slane %v9152, 6
        %v9331 = vsel %vm4541, %v9330, %v9329
        %v9332 = vrot.slane %v9153, 5
        %v9333 = vsel %vm4544, %v9332, %v9331
        %v9334 = vrot.slane %v9154, 4
        %v9335 = vsel %vm4547, %v9334, %v9333
        %v9336 = vrot.slane %v9155, 3
        %v9337 = vsel %vm4550, %v9336, %v9335
        %v9338 = vrot.slane %v9156, 2
        %v9339 = vsel %vm4553, %v9338, %v9337
        %9342 = vrot.lane.b32.xlu0 %v9163, 96
        %v9343 = vpop.permute.xlu0 %9342
        %9344 = vrot.lane.b32.xlu0 %v9164, 96
        %v9345 = vpop.permute.xlu0 %9344
        %v9348 = vsel %vm4577, %v9325, 0
        %v9350 = vsel %vm4577, %v9339, 0
        %9352 = vmatprep.subr.mxu0 0.0
        %9353 = vmatpush1.msra.mxu0 %v9343
        %9354 = vmatprep.subr.mxu0 0.0
        %9355 = vmatpush1.msra.mxu0 %v9345
        %9356 = vmatprep.subr.mxu0 0.0
        %9357 = vmatpush1.msra.mxu0 0.0
        %9358 = vmatprep.subr.mxu0 0.0
        %9359 = vmatpush1.msra.mxu0 0.0
        %9360 = vmatprep.subr.mxu0 0.0
        %9361 = vmatpush1.msra.mxu0 0.0
        %9362 = vmatprep.subr.mxu0 0.0
        %9363 = vmatpush1.msra.mxu0 0.0
        %9364 = vmatprep.subr.mxu0 0.0
        %9365 = vmatpush1.msra.mxu0 0.0
        %9366 = vmatprep.subr.mxu0 0.0
        %9367 = vmatpush1.msra.mxu0 0.0
        %9368 = vmatprep.subr.mxu0 0.0
        %9369 = vmatpush1.msra.mxu0 0.0
        %9370 = vmatprep.subr.mxu0 0.0
        %9371 = vmatpush1.msra.mxu0 0.0
        %9372 = vmatprep.subr.mxu0 0.0
        %9373 = vmatpush1.msra.mxu0 0.0
        %9374 = vmatprep.subr.mxu0 0.0
        %9375 = vmatpush1.msra.mxu0 0.0
        %9376 = vmatprep.subr.mxu0 0.0
        %9377 = vmatpush1.msra.mxu0 0.0
        %9378 = vmatprep.subr.mxu0 0.0
        %9379 = vmatpush1.msra.mxu0 0.0
        %9380 = vmatprep.subr.mxu0 0.0
        %9381 = vmatpush1.msra.mxu0 0.0
        %9382 = vmatprep.subr.mxu0 0.0
        %9383 = vmatpush1.msra.mxu0 0.0
        %9384 = vmatprep.subr.mxu0 0.0
        %9385 = vmatpush1.msra.mxu0 0.0
        %9386 = vmatprep.subr.mxu0 0.0
        %9387 = vmatpush1.msra.mxu0 0.0
        %9388 = vmatprep.subr.mxu0 0.0
        %9389 = vmatpush1.msra.mxu0 0.0
        %9390 = vmatprep.subr.mxu0 0.0
        %9391 = vmatpush1.msra.mxu0 0.0
        %9392 = vmatprep.subr.mxu0 0.0
        %9393 = vmatpush1.msra.mxu0 0.0
        %9394 = vmatprep.subr.mxu0 0.0
        %9395 = vmatpush1.msra.mxu0 0.0
        %9396 = vmatprep.subr.mxu0 0.0
        %9397 = vmatpush1.msra.mxu0 0.0
        %9398 = vmatprep.subr.mxu0 0.0
        %9399 = vmatpush1.msra.mxu0 0.0
        %9400 = vmatprep.subr.mxu0 0.0
        %9401 = vmatpush1.msra.mxu0 0.0
        %9402 = vmatprep.subr.mxu0 0.0
        %9403 = vmatpush1.msra.mxu0 0.0
        %9404 = vmatprep.subr.mxu0 0.0
        %9405 = vmatpush1.msra.mxu0 0.0
        %9406 = vmatprep.subr.mxu0 0.0
        %9407 = vmatpush1.msra.mxu0 0.0
        %9408 = vmatprep.subr.mxu0 0.0
        %9409 = vmatpush1.msra.mxu0 0.0
        %9410 = vmatprep.subr.mxu0 0.0
        %9411 = vmatpush1.msra.mxu0 0.0
        %9412 = vmatprep.subr.mxu0 0.0
        %9413 = vmatpush1.msra.mxu0 0.0
        %9414 = vmatprep.subr.mxu0 0.0
        %9415 = vmatpush1.msra.mxu0 0.0
        %9416 = vmatprep.mubr.f32.mxu0 0.0
        %9417 = vmatmul.mubr.f32.gmra.mrb[0].mxu0 %v9348
        %v9418 = vpop.f32.mrb[0].mxu0
        %v9419 = vadd.f32 0.0, %v9418
        %v9420 = vpop.f32.mrb[0].mxu0
        %9421 = vmatprep.mubr.f32.mxu0 0.0
        %9422 = vmatmul.mubr.f32.gmra.mrb[0].mxu0 %v9350
        %v9423 = vpop.f32.mrb[0].mxu0
        %v9424 = vadd.f32 0.0, %v9423
        %v9425 = vpop.f32.mrb[0].mxu0
        %9426 = vdwg.mxu0
        %v9427 = vrot.slane %v9126, 7
        %v9428 = vsel %vm4535, %v9427, %v9125
        %v9429 = vrot.slane %v9127, 6
        %v9430 = vsel %vm4538, %v9429, %v9428
        %v9431 = vrot.slane %v9128, 5
        %v9432 = vsel %vm4541, %v9431, %v9430
        %v9433 = vrot.slane %v9129, 4
        %v9434 = vsel %vm4544, %v9433, %v9432
        %v9435 = vrot.slane %v9130, 3
        %v9436 = vsel %vm4547, %v9435, %v9434
        %v9437 = vrot.slane %v9131, 2
        %v9438 = vsel %vm4550, %v9437, %v9436
        %v9439 = vrot.slane %v9132, 1
        %v9440 = vsel %vm4553, %v9439, %v9438
        %v9441 = vrot.slane %v9134, 7
        %v9442 = vsel %vm4535, %v9441, %v9133
        %v9443 = vrot.slane %v9135, 6
        %v9444 = vsel %vm4538, %v9443, %v9442
        %v9445 = vrot.slane %v9136, 5
        %v9446 = vsel %vm4541, %v9445, %v9444
        %v9447 = vrot.slane %v9137, 4
        %v9448 = vsel %vm4544, %v9447, %v9446
        %v9449 = vrot.slane %v9138, 3
        %v9450 = vsel %vm4547, %v9449, %v9448
        %v9451 = vrot.slane %v9139, 2
        %v9452 = vsel %vm4550, %v9451, %v9450
        %v9453 = vrot.slane %v9140, 1
        %v9454 = vsel %vm4553, %v9453, %v9452
        %9457 = vrot.lane.b32.xlu0 %v9157, 96
        %v9458 = vpop.permute.xlu0 %9457
        %9459 = vrot.lane.b32.xlu0 %v9158, 96
        %v9460 = vpop.permute.xlu0 %9459
        %v9463 = vsel %vm4577, %v9440, 0
        %v9465 = vsel %vm4577, %v9454, 0
        %9467 = vmatprep.subr.mxu0 0.0
        %9468 = vmatpush1.msra.mxu0 %v9458
        %9469 = vmatprep.subr.mxu0 0.0
        %9470 = vmatpush1.msra.mxu0 %v9460
        %9471 = vmatprep.subr.mxu0 0.0
        %9472 = vmatpush1.msra.mxu0 0.0
        %9473 = vmatprep.subr.mxu0 0.0
        %9474 = vmatpush1.msra.mxu0 0.0
        %9475 = vmatprep.subr.mxu0 0.0
        %9476 = vmatpush1.msra.mxu0 0.0
        %9477 = vmatprep.subr.mxu0 0.0
        %9478 = vmatpush1.msra.mxu0 0.0
        %9479 = vmatprep.subr.mxu0 0.0
        %9480 = vmatpush1.msra.mxu0 0.0
        %9481 = vmatprep.subr.mxu0 0.0
        %9482 = vmatpush1.msra.mxu0 0.0
        %9483 = vmatprep.subr.mxu0 0.0
        %9484 = vmatpush1.msra.mxu0 0.0
        %9485 = vmatprep.subr.mxu0 0.0
        %9486 = vmatpush1.msra.mxu0 0.0
        %9487 = vmatprep.subr.mxu0 0.0
        %9488 = vmatpush1.msra.mxu0 0.0
        %9489 = vmatprep.subr.mxu0 0.0
        %9490 = vmatpush1.msra.mxu0 0.0
        %9491 = vmatprep.subr.mxu0 0.0
        %9492 = vmatpush1.msra.mxu0 0.0
        %9493 = vmatprep.subr.mxu0 0.0
        %9494 = vmatpush1.msra.mxu0 0.0
        %9495 = vmatprep.subr.mxu0 0.0
        %9496 = vmatpush1.msra.mxu0 0.0
        %9497 = vmatprep.subr.mxu0 0.0
        %9498 = vmatpush1.msra.mxu0 0.0
        %9499 = vmatprep.subr.mxu0 0.0
        %9500 = vmatpush1.msra.mxu0 0.0
        %9501 = vmatprep.subr.mxu0 0.0
        %9502 = vmatpush1.msra.mxu0 0.0
        %9503 = vmatprep.subr.mxu0 0.0
        %9504 = vmatpush1.msra.mxu0 0.0
        %9505 = vmatprep.subr.mxu0 0.0
        %9506 = vmatpush1.msra.mxu0 0.0
        %9507 = vmatprep.subr.mxu0 0.0
        %9508 = vmatpush1.msra.mxu0 0.0
        %9509 = vmatprep.subr.mxu0 0.0
        %9510 = vmatpush1.msra.mxu0 0.0
        %9511 = vmatprep.subr.mxu0 0.0
        %9512 = vmatpush1.msra.mxu0 0.0
        %9513 = vmatprep.subr.mxu0 0.0
        %9514 = vmatpush1.msra.mxu0 0.0
        %9515 = vmatprep.subr.mxu0 0.0
        %9516 = vmatpush1.msra.mxu0 0.0
        %9517 = vmatprep.subr.mxu0 0.0
        %9518 = vmatpush1.msra.mxu0 0.0
        %9519 = vmatprep.subr.mxu0 0.0
        %9520 = vmatpush1.msra.mxu0 0.0
        %9521 = vmatprep.subr.mxu0 0.0
        %9522 = vmatpush1.msra.mxu0 0.0
        %9523 = vmatprep.subr.mxu0 0.0
        %9524 = vmatpush1.msra.mxu0 0.0
        %9525 = vmatprep.subr.mxu0 0.0
        %9526 = vmatpush1.msra.mxu0 0.0
        %9527 = vmatprep.subr.mxu0 0.0
        %9528 = vmatpush1.msra.mxu0 0.0
        %9529 = vmatprep.subr.mxu0 0.0
        %9530 = vmatpush1.msra.mxu0 0.0
        %9531 = vmatprep.mubr.f32.mxu0 0.0
        %9532 = vmatmul.mubr.f32.gmra.mrb[0].mxu0 %v9463
        %v9533 = vpop.f32.mrb[0].mxu0
        %v9534 = vadd.f32 %v9288, %v9533
        %v9535 = vpop.f32.mrb[0].mxu0
        %9536 = vmatprep.mubr.f32.mxu0 0.0
        %9537 = vmatmul.mubr.f32.gmra.mrb[0].mxu0 %v9465
        %v9538 = vpop.f32.mrb[0].mxu0
        %v9539 = vadd.f32 %v9293, %v9538
        %v9540 = vpop.f32.mrb[0].mxu0
        %9541 = vdwg.mxu0
        %v9542 = vrot.slane %v9142, 7
        %v9543 = vsel %vm4535, %v9542, %v9141
        %v9544 = vrot.slane %v9143, 6
        %v9545 = vsel %vm4538, %v9544, %v9543
        %v9546 = vrot.slane %v9144, 5
        %v9547 = vsel %vm4541, %v9546, %v9545
        %v9548 = vrot.slane %v9145, 4
        %v9549 = vsel %vm4544, %v9548, %v9547
        %v9550 = vrot.slane %v9146, 3
        %v9551 = vsel %vm4547, %v9550, %v9549
        %v9552 = vrot.slane %v9147, 2
        %v9553 = vsel %vm4550, %v9552, %v9551
        %v9554 = vrot.slane %v9148, 1
        %v9555 = vsel %vm4553, %v9554, %v9553
        %v9556 = vrot.slane %v9150, 7
        %v9557 = vsel %vm4535, %v9556, %v9149
        %v9558 = vrot.slane %v9151, 6
        %v9559 = vsel %vm4538, %v9558, %v9557
        %v9560 = vrot.slane %v9152, 5
        %v9561 = vsel %vm4541, %v9560, %v9559
        %v9562 = vrot.slane %v9153, 4
        %v9563 = vsel %vm4544, %v9562, %v9561
        %v9564 = vrot.slane %v9154, 3
        %v9565 = vsel %vm4547, %v9564, %v9563
        %v9566 = vrot.slane %v9155, 2
        %v9567 = vsel %vm4550, %v9566, %v9565
        %v9568 = vrot.slane %v9156, 1
        %v9569 = vsel %vm4553, %v9568, %v9567
        %9572 = vrot.lane.b32.xlu0 %v9159, 96
        %v9573 = vpop.permute.xlu0 %9572
        %9574 = vrot.lane.b32.xlu0 %v9160, 96
        %v9575 = vpop.permute.xlu0 %9574
        %v9578 = vsel %vm4577, %v9555, 0
        %v9580 = vsel %vm4577, %v9569, 0
        %9582 = vmatprep.subr.mxu0 0.0
        %9583 = vmatpush1.msra.mxu0 %v9573
        %9584 = vmatprep.subr.mxu0 0.0
        %9585 = vmatpush1.msra.mxu0 %v9575
        %9586 = vmatprep.subr.mxu0 0.0
        %9587 = vmatpush1.msra.mxu0 0.0
        %9588 = vmatprep.subr.mxu0 0.0
        %9589 = vmatpush1.msra.mxu0 0.0
        %9590 = vmatprep.subr.mxu0 0.0
        %9591 = vmatpush1.msra.mxu0 0.0
        %9592 = vmatprep.subr.mxu0 0.0
        %9593 = vmatpush1.msra.mxu0 0.0
        %9594 = vmatprep.subr.mxu0 0.0
        %9595 = vmatpush1.msra.mxu0 0.0
        %9596 = vmatprep.subr.mxu0 0.0
        %9597 = vmatpush1.msra.mxu0 0.0
        %9598 = vmatprep.subr.mxu0 0.0
        %9599 = vmatpush1.msra.mxu0 0.0
        %9600 = vmatprep.subr.mxu0 0.0
        %9601 = vmatpush1.msra.mxu0 0.0
        %9602 = vmatprep.subr.mxu0 0.0
        %9603 = vmatpush1.msra.mxu0 0.0
        %9604 = vmatprep.subr.mxu0 0.0
        %9605 = vmatpush1.msra.mxu0 0.0
        %9606 = vmatprep.subr.mxu0 0.0
        %9607 = vmatpush1.msra.mxu0 0.0
        %9608 = vmatprep.subr.mxu0 0.0
        %9609 = vmatpush1.msra.mxu0 0.0
        %9610 = vmatprep.subr.mxu0 0.0
        %9611 = vmatpush1.msra.mxu0 0.0
        %9612 = vmatprep.subr.mxu0 0.0
        %9613 = vmatpush1.msra.mxu0 0.0
        %9614 = vmatprep.subr.mxu0 0.0
        %9615 = vmatpush1.msra.mxu0 0.0
        %9616 = vmatprep.subr.mxu0 0.0
        %9617 = vmatpush1.msra.mxu0 0.0
        %9618 = vmatprep.subr.mxu0 0.0
        %9619 = vmatpush1.msra.mxu0 0.0
        %9620 = vmatprep.subr.mxu0 0.0
        %9621 = vmatpush1.msra.mxu0 0.0
        %9622 = vmatprep.subr.mxu0 0.0
        %9623 = vmatpush1.msra.mxu0 0.0
        %9624 = vmatprep.subr.mxu0 0.0
        %9625 = vmatpush1.msra.mxu0 0.0
        %9626 = vmatprep.subr.mxu0 0.0
        %9627 = vmatpush1.msra.mxu0 0.0
        %9628 = vmatprep.subr.mxu0 0.0
        %9629 = vmatpush1.msra.mxu0 0.0
        %9630 = vmatprep.subr.mxu0 0.0
        %9631 = vmatpush1.msra.mxu0 0.0
        %9632 = vmatprep.subr.mxu0 0.0
        %9633 = vmatpush1.msra.mxu0 0.0
        %9634 = vmatprep.subr.mxu0 0.0
        %9635 = vmatpush1.msra.mxu0 0.0
        %9636 = vmatprep.subr.mxu0 0.0
        %9637 = vmatpush1.msra.mxu0 0.0
        %9638 = vmatprep.subr.mxu0 0.0
        %9639 = vmatpush1.msra.mxu0 0.0
        %9640 = vmatprep.subr.mxu0 0.0
        %9641 = vmatpush1.msra.mxu0 0.0
        %9642 = vmatprep.subr.mxu0 0.0
        %9643 = vmatpush1.msra.mxu0 0.0
        %9644 = vmatprep.subr.mxu0 0.0
        %9645 = vmatpush1.msra.mxu0 0.0
        %9646 = vmatprep.mubr.f32.mxu0 0.0
        %9647 = vmatmul.mubr.f32.gmra.mrb[0].mxu0 %v9578
        %v9648 = vpop.f32.mrb[0].mxu0
        %v9649 = vadd.f32 %v9419, %v9648
        %v9650 = vpop.f32.mrb[0].mxu0
        %9651 = vmatprep.mubr.f32.mxu0 0.0
        %9652 = vmatmul.mubr.f32.gmra.mrb[0].mxu0 %v9580
        %v9653 = vpop.f32.mrb[0].mxu0
        %v9654 = vadd.f32 %v9424, %v9653
        %v9655 = vpop.f32.mrb[0].mxu0
        %9656 = vdwg.mxu0
        %v9657 = vmul.f32 %v5594, %v5024
        %v9658 = vmul.f32 %v5599, %v5024
        %v9659 = vmul.f32 %v5604, %v5024
        %v9660 = vmul.f32 %v5609, %v5024
        %v9661 = vrot.slane %v9125, 2
        %v9662 = vrot.slane %v9126, 1
        %v9663 = vsel %vm4535, %v9662, %v9661
        %v9664 = vsel %vm4538, %v9127, %v9663
        %v9665 = vrot.slane %v9128, 7
        %v9666 = vsel %vm4541, %v9665, %v9664
        %v9667 = vrot.slane %v9129, 6
        %v9668 = vsel %vm4544, %v9667, %v9666
        %v9669 = vrot.slane %v9130, 5
        %v9670 = vsel %vm4547, %v9669, %v9668
        %v9671 = vrot.slane %v9131, 4
        %v9672 = vsel %vm4550, %v9671, %v9670
        %v9673 = vrot.slane %v9132, 3
        %v9674 = vsel %vm4553, %v9673, %v9672
        %v9675 = vrot.slane %v9133, 2
        %v9676 = vrot.slane %v9134, 1
        %v9677 = vsel %vm4535, %v9676, %v9675
        %v9678 = vsel %vm4538, %v9135, %v9677
        %v9679 = vrot.slane %v9136, 7
        %v9680 = vsel %vm4541, %v9679, %v9678
        %v9681 = vrot.slane %v9137, 6
        %v9682 = vsel %vm4544, %v9681, %v9680
        %v9683 = vrot.slane %v9138, 5
        %v9684 = vsel %vm4547, %v9683, %v9682
        %v9685 = vrot.slane %v9139, 4
        %v9686 = vsel %vm4550, %v9685, %v9684
        %v9687 = vrot.slane %v9140, 3
        %v9688 = vsel %vm4553, %v9687, %v9686
        %9691 = vrot.lane.b32.xlu0 %v9657, 96
        %v9692 = vpop.permute.xlu0 %9691
        %9693 = vrot.lane.b32.xlu0 %v9658, 96
        %v9694 = vpop.permute.xlu0 %9693
        %v9697 = vsel %vm4577, %v9674, 0
        %v9699 = vsel %vm4577, %v9688, 0
        %9701 = vmatprep.subr.mxu0 0.0
        %9702 = vmatpush1.msra.mxu0 %v9692
        %9703 = vmatprep.subr.mxu0 0.0
        %9704 = vmatpush1.msra.mxu0 %v9694
        %9705 = vmatprep.subr.mxu0 0.0
        %9706 = vmatpush1.msra.mxu0 0.0
        %9707 = vmatprep.subr.mxu0 0.0
        %9708 = vmatpush1.msra.mxu0 0.0
        %9709 = vmatprep.subr.mxu0 0.0
        %9710 = vmatpush1.msra.mxu0 0.0
        %9711 = vmatprep.subr.mxu0 0.0
        %9712 = vmatpush1.msra.mxu0 0.0
        %9713 = vmatprep.subr.mxu0 0.0
        %9714 = vmatpush1.msra.mxu0 0.0
        %9715 = vmatprep.subr.mxu0 0.0
        %9716 = vmatpush1.msra.mxu0 0.0
        %9717 = vmatprep.subr.mxu0 0.0
        %9718 = vmatpush1.msra.mxu0 0.0
        %9719 = vmatprep.subr.mxu0 0.0
        %9720 = vmatpush1.msra.mxu0 0.0
        %9721 = vmatprep.subr.mxu0 0.0
        %9722 = vmatpush1.msra.mxu0 0.0
        %9723 = vmatprep.subr.mxu0 0.0
        %9724 = vmatpush1.msra.mxu0 0.0
        %9725 = vmatprep.subr.mxu0 0.0
        %9726 = vmatpush1.msra.mxu0 0.0
        %9727 = vmatprep.subr.mxu0 0.0
        %9728 = vmatpush1.msra.mxu0 0.0
        %9729 = vmatprep.subr.mxu0 0.0
        %9730 = vmatpush1.msra.mxu0 0.0
        %9731 = vmatprep.subr.mxu0 0.0
        %9732 = vmatpush1.msra.mxu0 0.0
        %9733 = vmatprep.subr.mxu0 0.0
        %9734 = vmatpush1.msra.mxu0 0.0
        %9735 = vmatprep.subr.mxu0 0.0
        %9736 = vmatpush1.msra.mxu0 0.0
        %9737 = vmatprep.subr.mxu0 0.0
        %9738 = vmatpush1.msra.mxu0 0.0
        %9739 = vmatprep.subr.mxu0 0.0
        %9740 = vmatpush1.msra.mxu0 0.0
        %9741 = vmatprep.subr.mxu0 0.0
        %9742 = vmatpush1.msra.mxu0 0.0
        %9743 = vmatprep.subr.mxu0 0.0
        %9744 = vmatpush1.msra.mxu0 0.0
        %9745 = vmatprep.subr.mxu0 0.0
        %9746 = vmatpush1.msra.mxu0 0.0
        %9747 = vmatprep.subr.mxu0 0.0
        %9748 = vmatpush1.msra.mxu0 0.0
        %9749 = vmatprep.subr.mxu0 0.0
        %9750 = vmatpush1.msra.mxu0 0.0
        %9751 = vmatprep.subr.mxu0 0.0
        %9752 = vmatpush1.msra.mxu0 0.0
        %9753 = vmatprep.subr.mxu0 0.0
        %9754 = vmatpush1.msra.mxu0 0.0
        %9755 = vmatprep.subr.mxu0 0.0
        %9756 = vmatpush1.msra.mxu0 0.0
        %9757 = vmatprep.subr.mxu0 0.0
        %9758 = vmatpush1.msra.mxu0 0.0
        %9759 = vmatprep.subr.mxu0 0.0
        %9760 = vmatpush1.msra.mxu0 0.0
        %9761 = vmatprep.subr.mxu0 0.0
        %9762 = vmatpush1.msra.mxu0 0.0
        %9763 = vmatprep.subr.mxu0 0.0
        %9764 = vmatpush1.msra.mxu0 0.0
        %9765 = vmatprep.mubr.f32.mxu0 0.0
        %9766 = vmatmul.mubr.f32.gmra.mrb[0].mxu0 %v9697
        %v9767 = vpop.f32.mrb[0].mxu0
        %v9768 = vadd.f32 0.0, %v9767
        %v9769 = vpop.f32.mrb[0].mxu0
        %9770 = vmatprep.mubr.f32.mxu0 0.0
        %9771 = vmatmul.mubr.f32.gmra.mrb[0].mxu0 %v9699
        %v9772 = vpop.f32.mrb[0].mxu0
        %v9773 = vadd.f32 0.0, %v9772
        %v9774 = vpop.f32.mrb[0].mxu0
        %9775 = vdwg.mxu0
        %v9776 = vrot.slane %v9141, 2
        %v9777 = vrot.slane %v9142, 1
        %v9778 = vsel %vm4535, %v9777, %v9776
        %v9779 = vsel %vm4538, %v9143, %v9778
        %v9780 = vrot.slane %v9144, 7
        %v9781 = vsel %vm4541, %v9780, %v9779
        %v9782 = vrot.slane %v9145, 6
        %v9783 = vsel %vm4544, %v9782, %v9781
        %v9784 = vrot.slane %v9146, 5
        %v9785 = vsel %vm4547, %v9784, %v9783
        %v9786 = vrot.slane %v9147, 4
        %v9787 = vsel %vm4550, %v9786, %v9785
        %v9788 = vrot.slane %v9148, 3
        %v9789 = vsel %vm4553, %v9788, %v9787
        %v9790 = vrot.slane %v9149, 2
        %v9791 = vrot.slane %v9150, 1
        %v9792 = vsel %vm4535, %v9791, %v9790
        %v9793 = vsel %vm4538, %v9151, %v9792
        %v9794 = vrot.slane %v9152, 7
        %v9795 = vsel %vm4541, %v9794, %v9793
        %v9796 = vrot.slane %v9153, 6
        %v9797 = vsel %vm4544, %v9796, %v9795
        %v9798 = vrot.slane %v9154, 5
        %v9799 = vsel %vm4547, %v9798, %v9797
        %v9800 = vrot.slane %v9155, 4
        %v9801 = vsel %vm4550, %v9800, %v9799
        %v9802 = vrot.slane %v9156, 3
        %v9803 = vsel %vm4553, %v9802, %v9801
        %9806 = vrot.lane.b32.xlu0 %v9659, 96
        %v9807 = vpop.permute.xlu0 %9806
        %9808 = vrot.lane.b32.xlu0 %v9660, 96
        %v9809 = vpop.permute.xlu0 %9808
        %v9812 = vsel %vm4577, %v9789, 0
        %v9814 = vsel %vm4577, %v9803, 0
        %9816 = vmatprep.subr.mxu0 0.0
        %9817 = vmatpush1.msra.mxu0 %v9807
        %9818 = vmatprep.subr.mxu0 0.0
        %9819 = vmatpush1.msra.mxu0 %v9809
        %9820 = vmatprep.subr.mxu0 0.0
        %9821 = vmatpush1.msra.mxu0 0.0
        %9822 = vmatprep.subr.mxu0 0.0
        %9823 = vmatpush1.msra.mxu0 0.0
        %9824 = vmatprep.subr.mxu0 0.0
        %9825 = vmatpush1.msra.mxu0 0.0
        %9826 = vmatprep.subr.mxu0 0.0
        %9827 = vmatpush1.msra.mxu0 0.0
        %9828 = vmatprep.subr.mxu0 0.0
        %9829 = vmatpush1.msra.mxu0 0.0
        %9830 = vmatprep.subr.mxu0 0.0
        %9831 = vmatpush1.msra.mxu0 0.0
        %9832 = vmatprep.subr.mxu0 0.0
        %9833 = vmatpush1.msra.mxu0 0.0
        %9834 = vmatprep.subr.mxu0 0.0
        %9835 = vmatpush1.msra.mxu0 0.0
        %9836 = vmatprep.subr.mxu0 0.0
        %9837 = vmatpush1.msra.mxu0 0.0
        %9838 = vmatprep.subr.mxu0 0.0
        %9839 = vmatpush1.msra.mxu0 0.0
        %9840 = vmatprep.subr.mxu0 0.0
        %9841 = vmatpush1.msra.mxu0 0.0
        %9842 = vmatprep.subr.mxu0 0.0
        %9843 = vmatpush1.msra.mxu0 0.0
        %9844 = vmatprep.subr.mxu0 0.0
        %9845 = vmatpush1.msra.mxu0 0.0
        %9846 = vmatprep.subr.mxu0 0.0
        %9847 = vmatpush1.msra.mxu0 0.0
        %9848 = vmatprep.subr.mxu0 0.0
        %9849 = vmatpush1.msra.mxu0 0.0
        %9850 = vmatprep.subr.mxu0 0.0
        %9851 = vmatpush1.msra.mxu0 0.0
        %9852 = vmatprep.subr.mxu0 0.0
        %9853 = vmatpush1.msra.mxu0 0.0
        %9854 = vmatprep.subr.mxu0 0.0
        %9855 = vmatpush1.msra.mxu0 0.0
        %9856 = vmatprep.subr.mxu0 0.0
        %9857 = vmatpush1.msra.mxu0 0.0
        %9858 = vmatprep.subr.mxu0 0.0
        %9859 = vmatpush1.msra.mxu0 0.0
        %9860 = vmatprep.subr.mxu0 0.0
        %9861 = vmatpush1.msra.mxu0 0.0
        %9862 = vmatprep.subr.mxu0 0.0
        %9863 = vmatpush1.msra.mxu0 0.0
        %9864 = vmatprep.subr.mxu0 0.0
        %9865 = vmatpush1.msra.mxu0 0.0
        %9866 = vmatprep.subr.mxu0 0.0
        %9867 = vmatpush1.msra.mxu0 0.0
        %9868 = vmatprep.subr.mxu0 0.0
        %9869 = vmatpush1.msra.mxu0 0.0
        %9870 = vmatprep.subr.mxu0 0.0
        %9871 = vmatpush1.msra.mxu0 0.0
        %9872 = vmatprep.subr.mxu0 0.0
        %9873 = vmatpush1.msra.mxu0 0.0
        %9874 = vmatprep.subr.mxu0 0.0
        %9875 = vmatpush1.msra.mxu0 0.0
        %9876 = vmatprep.subr.mxu0 0.0
        %9877 = vmatpush1.msra.mxu0 0.0
        %9878 = vmatprep.subr.mxu0 0.0
        %9879 = vmatpush1.msra.mxu0 0.0
        %9880 = vmatprep.mubr.f32.mxu0 0.0
        %9881 = vmatmul.mubr.f32.gmra.mrb[0].mxu0 %v9812
        %v9882 = vpop.f32.mrb[0].mxu0
        %v9883 = vadd.f32 0.0, %v9882
        %v9884 = vpop.f32.mrb[0].mxu0
        %9885 = vmatprep.mubr.f32.mxu0 0.0
        %9886 = vmatmul.mubr.f32.gmra.mrb[0].mxu0 %v9814
        %v9887 = vpop.f32.mrb[0].mxu0
        %v9888 = vadd.f32 0.0, %v9887
        %v9889 = vpop.f32.mrb[0].mxu0
        %9890 = vdwg.mxu0
        %v9891 = vadd.f32 %v9534, %v9768
        %v9892 = vadd.f32 %v9539, %v9773
        %v9893 = vadd.f32 %v9649, %v9883
        %v9894 = vadd.f32 %v9654, %v9888
        %v9895 = vmul.f32 %v5594, %v5270
        %v9896 = vmul.f32 %v5599, %v5270
        %v9897 = vmul.f32 %v5604, %v5270
        %v9898 = vmul.f32 %v5609, %v5270
        %v9899 = vrot.slane %v9125, 3
        %v9900 = vrot.slane %v9126, 2
        %v9901 = vsel %vm4535, %v9900, %v9899
        %v9902 = vrot.slane %v9127, 1
        %v9903 = vsel %vm4538, %v9902, %v9901
        %v9904 = vsel %vm4541, %v9128, %v9903
        %v9905 = vrot.slane %v9129, 7
        %v9906 = vsel %vm4544, %v9905, %v9904
        %v9907 = vrot.slane %v9130, 6
        %v9908 = vsel %vm4547, %v9907, %v9906
        %v9909 = vrot.slane %v9131, 5
        %v9910 = vsel %vm4550, %v9909, %v9908
        %v9911 = vrot.slane %v9132, 4
        %v9912 = vsel %vm4553, %v9911, %v9910
        %v9913 = vrot.slane %v9133, 3
        %v9914 = vrot.slane %v9134, 2
        %v9915 = vsel %vm4535, %v9914, %v9913
        %v9916 = vrot.slane %v9135, 1
        %v9917 = vsel %vm4538, %v9916, %v9915
        %v9918 = vsel %vm4541, %v9136, %v9917
        %v9919 = vrot.slane %v9137, 7
        %v9920 = vsel %vm4544, %v9919, %v9918
        %v9921 = vrot.slane %v9138, 6
        %v9922 = vsel %vm4547, %v9921, %v9920
        %v9923 = vrot.slane %v9139, 5
        %v9924 = vsel %vm4550, %v9923, %v9922
        %v9925 = vrot.slane %v9140, 4
        %v9926 = vsel %vm4553, %v9925, %v9924
        %9929 = vrot.lane.b32.xlu0 %v9895, 96
        %v9930 = vpop.permute.xlu0 %9929
        %9931 = vrot.lane.b32.xlu0 %v9896, 96
        %v9932 = vpop.permute.xlu0 %9931
        %v9935 = vsel %vm4577, %v9912, 0
        %v9937 = vsel %vm4577, %v9926, 0
        %9939 = vmatprep.subr.mxu0 0.0
        %9940 = vmatpush1.msra.mxu0 %v9930
        %9941 = vmatprep.subr.mxu0 0.0
        %9942 = vmatpush1.msra.mxu0 %v9932
        %9943 = vmatprep.subr.mxu0 0.0
        %9944 = vmatpush1.msra.mxu0 0.0
        %9945 = vmatprep.subr.mxu0 0.0
        %9946 = vmatpush1.msra.mxu0 0.0
        %9947 = vmatprep.subr.mxu0 0.0
        %9948 = vmatpush1.msra.mxu0 0.0
        %9949 = vmatprep.subr.mxu0 0.0
        %9950 = vmatpush1.msra.mxu0 0.0
        %9951 = vmatprep.subr.mxu0 0.0
        %9952 = vmatpush1.msra.mxu0 0.0
        %9953 = vmatprep.subr.mxu0 0.0
        %9954 = vmatpush1.msra.mxu0 0.0
        %9955 = vmatprep.subr.mxu0 0.0
        %9956 = vmatpush1.msra.mxu0 0.0
        %9957 = vmatprep.subr.mxu0 0.0
        %9958 = vmatpush1.msra.mxu0 0.0
        %9959 = vmatprep.subr.mxu0 0.0
        %9960 = vmatpush1.msra.mxu0 0.0
        %9961 = vmatprep.subr.mxu0 0.0
        %9962 = vmatpush1.msra.mxu0 0.0
        %9963 = vmatprep.subr.mxu0 0.0
        %9964 = vmatpush1.msra.mxu0 0.0
        %9965 = vmatprep.subr.mxu0 0.0
        %9966 = vmatpush1.msra.mxu0 0.0
        %9967 = vmatprep.subr.mxu0 0.0
        %9968 = vmatpush1.msra.mxu0 0.0
        %9969 = vmatprep.subr.mxu0 0.0
        %9970 = vmatpush1.msra.mxu0 0.0
        %9971 = vmatprep.subr.mxu0 0.0
        %9972 = vmatpush1.msra.mxu0 0.0
        %9973 = vmatprep.subr.mxu0 0.0
        %9974 = vmatpush1.msra.mxu0 0.0
        %9975 = vmatprep.subr.mxu0 0.0
        %9976 = vmatpush1.msra.mxu0 0.0
        %9977 = vmatprep.subr.mxu0 0.0
        %9978 = vmatpush1.msra.mxu0 0.0
        %9979 = vmatprep.subr.mxu0 0.0
        %9980 = vmatpush1.msra.mxu0 0.0
        %9981 = vmatprep.subr.mxu0 0.0
        %9982 = vmatpush1.msra.mxu0 0.0
        %9983 = vmatprep.subr.mxu0 0.0
        %9984 = vmatpush1.msra.mxu0 0.0
        %9985 = vmatprep.subr.mxu0 0.0
        %9986 = vmatpush1.msra.mxu0 0.0
        %9987 = vmatprep.subr.mxu0 0.0
        %9988 = vmatpush1.msra.mxu0 0.0
        %9989 = vmatprep.subr.mxu0 0.0
        %9990 = vmatpush1.msra.mxu0 0.0
        %9991 = vmatprep.subr.mxu0 0.0
        %9992 = vmatpush1.msra.mxu0 0.0
        %9993 = vmatprep.subr.mxu0 0.0
        %9994 = vmatpush1.msra.mxu0 0.0
        %9995 = vmatprep.subr.mxu0 0.0
        %9996 = vmatpush1.msra.mxu0 0.0
        %9997 = vmatprep.subr.mxu0 0.0
        %9998 = vmatpush1.msra.mxu0 0.0
        %9999 = vmatprep.subr.mxu0 0.0
        %10000 = vmatpush1.msra.mxu0 0.0
        %10001 = vmatprep.subr.mxu0 0.0
        %10002 = vmatpush1.msra.mxu0 0.0
        %10003 = vmatprep.mubr.f32.mxu0 0.0
        %10004 = vmatmul.mubr.f32.gmra.mrb[0].mxu0 %v9935
        %v10005 = vpop.f32.mrb[0].mxu0
        %v10006 = vadd.f32 0.0, %v10005
        %v10007 = vpop.f32.mrb[0].mxu0
        %10008 = vmatprep.mubr.f32.mxu0 0.0
        %10009 = vmatmul.mubr.f32.gmra.mrb[0].mxu0 %v9937
        %v10010 = vpop.f32.mrb[0].mxu0
        %v10011 = vadd.f32 0.0, %v10010
        %v10012 = vpop.f32.mrb[0].mxu0
        %10013 = vdwg.mxu0
        %v10014 = vrot.slane %v9141, 3
        %v10015 = vrot.slane %v9142, 2
        %v10016 = vsel %vm4535, %v10015, %v10014
        %v10017 = vrot.slane %v9143, 1
        %v10018 = vsel %vm4538, %v10017, %v10016
        %v10019 = vsel %vm4541, %v9144, %v10018
        %v10020 = vrot.slane %v9145, 7
        %v10021 = vsel %vm4544, %v10020, %v10019
        %v10022 = vrot.slane %v9146, 6
        %v10023 = vsel %vm4547, %v10022, %v10021
        %v10024 = vrot.slane %v9147, 5
        %v10025 = vsel %vm4550, %v10024, %v10023
        %v10026 = vrot.slane %v9148, 4
        %v10027 = vsel %vm4553, %v10026, %v10025
        %v10028 = vrot.slane %v9149, 3
        %v10029 = vrot.slane %v9150, 2
        %v10030 = vsel %vm4535, %v10029, %v10028
        %v10031 = vrot.slane %v9151, 1
        %v10032 = vsel %vm4538, %v10031, %v10030
        %v10033 = vsel %vm4541, %v9152, %v10032
        %v10034 = vrot.slane %v9153, 7
        %v10035 = vsel %vm4544, %v10034, %v10033
        %v10036 = vrot.slane %v9154, 6
        %v10037 = vsel %vm4547, %v10036, %v10035
        %v10038 = vrot.slane %v9155, 5
        %v10039 = vsel %vm4550, %v10038, %v10037
        %v10040 = vrot.slane %v9156, 4
        %v10041 = vsel %vm4553, %v10040, %v10039
        %10044 = vrot.lane.b32.xlu0 %v9897, 96
        %v10045 = vpop.permute.xlu0 %10044
        %10046 = vrot.lane.b32.xlu0 %v9898, 96
        %v10047 = vpop.permute.xlu0 %10046
        %v10050 = vsel %vm4577, %v10027, 0
        %v10052 = vsel %vm4577, %v10041, 0
        %10054 = vmatprep.subr.mxu0 0.0
        %10055 = vmatpush1.msra.mxu0 %v10045
        %10056 = vmatprep.subr.mxu0 0.0
        %10057 = vmatpush1.msra.mxu0 %v10047
        %10058 = vmatprep.subr.mxu0 0.0
        %10059 = vmatpush1.msra.mxu0 0.0
        %10060 = vmatprep.subr.mxu0 0.0
        %10061 = vmatpush1.msra.mxu0 0.0
        %10062 = vmatprep.subr.mxu0 0.0
        %10063 = vmatpush1.msra.mxu0 0.0
        %10064 = vmatprep.subr.mxu0 0.0
        %10065 = vmatpush1.msra.mxu0 0.0
        %10066 = vmatprep.subr.mxu0 0.0
        %10067 = vmatpush1.msra.mxu0 0.0
        %10068 = vmatprep.subr.mxu0 0.0
        %10069 = vmatpush1.msra.mxu0 0.0
        %10070 = vmatprep.subr.mxu0 0.0
        %10071 = vmatpush1.msra.mxu0 0.0
        %10072 = vmatprep.subr.mxu0 0.0
        %10073 = vmatpush1.msra.mxu0 0.0
        %10074 = vmatprep.subr.mxu0 0.0
        %10075 = vmatpush1.msra.mxu0 0.0
        %10076 = vmatprep.subr.mxu0 0.0
        %10077 = vmatpush1.msra.mxu0 0.0
        %10078 = vmatprep.subr.mxu0 0.0
        %10079 = vmatpush1.msra.mxu0 0.0
        %10080 = vmatprep.subr.mxu0 0.0
        %10081 = vmatpush1.msra.mxu0 0.0
        %10082 = vmatprep.subr.mxu0 0.0
        %10083 = vmatpush1.msra.mxu0 0.0
        %10084 = vmatprep.subr.mxu0 0.0
        %10085 = vmatpush1.msra.mxu0 0.0
        %10086 = vmatprep.subr.mxu0 0.0
        %10087 = vmatpush1.msra.mxu0 0.0
        %10088 = vmatprep.subr.mxu0 0.0
        %10089 = vmatpush1.msra.mxu0 0.0
        %10090 = vmatprep.subr.mxu0 0.0
        %10091 = vmatpush1.msra.mxu0 0.0
        %10092 = vmatprep.subr.mxu0 0.0
        %10093 = vmatpush1.msra.mxu0 0.0
        %10094 = vmatprep.subr.mxu0 0.0
        %10095 = vmatpush1.msra.mxu0 0.0
        %10096 = vmatprep.subr.mxu0 0.0
        %10097 = vmatpush1.msra.mxu0 0.0
        %10098 = vmatprep.subr.mxu0 0.0
        %10099 = vmatpush1.msra.mxu0 0.0
        %10100 = vmatprep.subr.mxu0 0.0
        %10101 = vmatpush1.msra.mxu0 0.0
        %10102 = vmatprep.subr.mxu0 0.0
        %10103 = vmatpush1.msra.mxu0 0.0
        %10104 = vmatprep.subr.mxu0 0.0
        %10105 = vmatpush1.msra.mxu0 0.0
        %10106 = vmatprep.subr.mxu0 0.0
        %10107 = vmatpush1.msra.mxu0 0.0
        %10108 = vmatprep.subr.mxu0 0.0
        %10109 = vmatpush1.msra.mxu0 0.0
        %10110 = vmatprep.subr.mxu0 0.0
        %10111 = vmatpush1.msra.mxu0 0.0
        %10112 = vmatprep.subr.mxu0 0.0
        %10113 = vmatpush1.msra.mxu0 0.0
        %10114 = vmatprep.subr.mxu0 0.0
        %10115 = vmatpush1.msra.mxu0 0.0
        %10116 = vmatprep.subr.mxu0 0.0
        %10117 = vmatpush1.msra.mxu0 0.0
        %10118 = vmatprep.mubr.f32.mxu0 0.0
        %10119 = vmatmul.mubr.f32.gmra.mrb[0].mxu0 %v10050
        %v10120 = vpop.f32.mrb[0].mxu0
        %v10121 = vadd.f32 0.0, %v10120
        %v10122 = vpop.f32.mrb[0].mxu0
        %10123 = vmatprep.mubr.f32.mxu0 0.0
        %10124 = vmatmul.mubr.f32.gmra.mrb[0].mxu0 %v10052
        %v10125 = vpop.f32.mrb[0].mxu0
        %v10126 = vadd.f32 0.0, %v10125
        %v10127 = vpop.f32.mrb[0].mxu0
        %10128 = vdwg.mxu0
        %v10129 = vadd.f32 %v9891, %v10006
        %v10130 = vadd.f32 %v9892, %v10011
        %v10131 = vadd.f32 %v9893, %v10121
        %v10132 = vadd.f32 %v9894, %v10126
        %v10133 = vld [vmem:[%s6] sm:$0xff]
        %v10134 = vld [vmem:[%s6 + $0x8] sm:$0xff]
        %v10135 = vld [vmem:[%s6 + $0x10] sm:$0xff]
        %v10136 = vld [vmem:[%s6 + $0x18] sm:$0xff]
        %v10138 = vsel %vm851, %v10129, 0
        %v10141 = vsel %vm851, %v10130, 0
        %v10144 = vsel %vm851, %v10131, 0
        %v10147 = vsel %vm851, %v10132, 0
        %10149 = vmatprep.subr.mxu0 0.0
        %10150 = vmatpush1.msra.mxu0 %v10133
        %10151 = vmatprep.subr.mxu0 0.0
        %10152 = vmatpush1.msra.mxu0 %v10134
        %10153 = vmatprep.subr.mxu0 0.0
        %10154 = vmatpush1.msra.mxu0 %v10135
        %10155 = vmatprep.subr.mxu0 0.0
        %10156 = vmatpush1.msra.mxu0 %v10136
        %10157 = vmatprep.subr.mxu0 0.0
        %10158 = vmatpush1.msra.mxu0 0.0
        %10159 = vmatprep.subr.mxu0 0.0
        %10160 = vmatpush1.msra.mxu0 0.0
        %10161 = vmatprep.subr.mxu0 0.0
        %10162 = vmatpush1.msra.mxu0 0.0
        %10163 = vmatprep.subr.mxu0 0.0
        %10164 = vmatpush1.msra.mxu0 0.0
        %10165 = vmatprep.subr.mxu0 0.0
        %10166 = vmatpush1.msra.mxu0 0.0
        %10167 = vmatprep.subr.mxu0 0.0
        %10168 = vmatpush1.msra.mxu0 0.0
        %10169 = vmatprep.subr.mxu0 0.0
        %10170 = vmatpush1.msra.mxu0 0.0
        %10171 = vmatprep.subr.mxu0 0.0
        %10172 = vmatpush1.msra.mxu0 0.0
        %10173 = vmatprep.subr.mxu0 0.0
        %10174 = vmatpush1.msra.mxu0 0.0
        %10175 = vmatprep.subr.mxu0 0.0
        %10176 = vmatpush1.msra.mxu0 0.0
        %10177 = vmatprep.subr.mxu0 0.0
        %10178 = vmatpush1.msra.mxu0 0.0
        %10179 = vmatprep.subr.mxu0 0.0
        %10180 = vmatpush1.msra.mxu0 0.0
        %10181 = vmatprep.subr.mxu0 0.0
        %10182 = vmatpush1.msra.mxu0 0.0
        %10183 = vmatprep.subr.mxu0 0.0
        %10184 = vmatpush1.msra.mxu0 0.0
        %10185 = vmatprep.subr.mxu0 0.0
        %10186 = vmatpush1.msra.mxu0 0.0
        %10187 = vmatprep.subr.mxu0 0.0
        %10188 = vmatpush1.msra.mxu0 0.0
        %10189 = vmatprep.subr.mxu0 0.0
        %10190 = vmatpush1.msra.mxu0 0.0
        %10191 = vmatprep.subr.mxu0 0.0
        %10192 = vmatpush1.msra.mxu0 0.0
        %10193 = vmatprep.subr.mxu0 0.0
        %10194 = vmatpush1.msra.mxu0 0.0
        %10195 = vmatprep.subr.mxu0 0.0
        %10196 = vmatpush1.msra.mxu0 0.0
        %10197 = vmatprep.subr.mxu0 0.0
        %10198 = vmatpush1.msra.mxu0 0.0
        %10199 = vmatprep.subr.mxu0 0.0
        %10200 = vmatpush1.msra.mxu0 0.0
        %10201 = vmatprep.subr.mxu0 0.0
        %10202 = vmatpush1.msra.mxu0 0.0
        %10203 = vmatprep.subr.mxu0 0.0
        %10204 = vmatpush1.msra.mxu0 0.0
        %10205 = vmatprep.subr.mxu0 0.0
        %10206 = vmatpush1.msra.mxu0 0.0
        %10207 = vmatprep.subr.mxu0 0.0
        %10208 = vmatpush1.msra.mxu0 0.0
        %10209 = vmatprep.subr.mxu0 0.0
        %10210 = vmatpush1.msra.mxu0 0.0
        %10211 = vmatprep.subr.mxu0 0.0
        %10212 = vmatpush1.msra.mxu0 0.0
        %10213 = vmatprep.mubr.f32.mxu0 0.0
        %10214 = vmatmul.mubr.f32.gmra.mrb[0].mxu0 %v10138
        %v10215 = vpop.f32.mrb[0].mxu0
        %v10216 = vadd.f32 0.0, %v10215
        %v10217 = vpop.f32.mrb[0].mxu0
        %10218 = vmatprep.mubr.f32.mxu0 0.0
        %10219 = vmatmul.mubr.f32.gmra.mrb[0].mxu0 %v10141
        %v10220 = vpop.f32.mrb[0].mxu0
        %v10221 = vadd.f32 0.0, %v10220
        %v10222 = vpop.f32.mrb[0].mxu0
        %10223 = vmatprep.mubr.f32.mxu0 0.0
        %10224 = vmatmul.mubr.f32.gmra.mrb[0].mxu0 %v10144
        %v10225 = vpop.f32.mrb[0].mxu0
        %v10226 = vadd.f32 0.0, %v10225
        %v10227 = vpop.f32.mrb[0].mxu0
        %10228 = vmatprep.mubr.f32.mxu0 0.0
        %10229 = vmatmul.mubr.f32.gmra.mrb[0].mxu0 %v10147
        %v10230 = vpop.f32.mrb[0].mxu0
        %v10231 = vadd.f32 0.0, %v10230
        %v10232 = vpop.f32.mrb[0].mxu0
        %10233 = vdwg.mxu0
        %10234 = vst [vmem:[%s365] sm:$0xff] %v10216
        %10235 = vst [vmem:[%s365 + $0x8] sm:$0xff] %v10221
        %10236 = vst [vmem:[%s365 + $0x10] sm:$0xff] %v10226
        %10237 = vst [vmem:[%s365 + $0x18] sm:$0xff] %v10231
        %s10238 = smul.u32 2, %s21
        %p10239 = scmp.lt.s32.totalorder %s10238, 3
        %s10240 = scalar_select %p10239, %s10238, 3
        %s10241 = smul.addr %s10240, 2
        %s10242 = smul.addr %s10241, 8
        %s10243 = scalar_lea.vmem %s7, %s10242
        // Predicated region
        $region65: #{gat_model_forward.1} parent=47 // pred_check
          %p10244 = pneg %p196
        $region66: #{gat_model_forward.1} parent=47 // pred_check_branch
          %10246 = sbr.rel (%p10244) target = $region68
        $region67: #{gat_model_forward.1} parent=47 // pred_region
          %s10247 = smul.u32 2, %s21
        $region68: #{gat_model_forward.1} parent=47 // pred_fallthru
          _
      $region48: #{gat_model_forward.1} parent=5 // pred_fallthru
        _
      %p10248 = scmp.le.s32.totalorder 2, %s16
      // Predicated region
      $region69: #{gat_model_forward.1} parent=5 // pred_check
        %p10249 = pneg %p10248
      $region70: #{gat_model_forward.1} parent=5 // pred_check_branch
        %10251 = sbr.rel (%p10249) target = $region72
      $region71: #{gat_model_forward.1} parent=5 // pred_region
        %s10252 = ssub.s32 %s16, 2
        // Predicated region
        $region73: #{gat_model_forward.1} parent=71 // pred_check
          %p10253 = pneg %p202
        $region74: #{gat_model_forward.1} parent=71 // pred_check_branch
          %10255 = sbr.rel (%p10253) target = $region76
        $region75: #{gat_model_forward.1} parent=71 // pred_region
          %s10256 = smul.u32 2, %s22
          %p10257 = scmp.lt.s32.totalorder %s10256, 3
          %s10258 = scalar_select %p10257, %s10256, 3
          %s10259 = smul.addr %s10258, 2
          %s10260 = smul.addr %s10259, 8
          %s10261 = scalar_lea.vmem %s7, %s10260
        $region76: #{gat_model_forward.1} parent=71 // pred_fallthru
          _
      $region72: #{gat_model_forward.1} parent=5 // pred_fallthru
        _
    $region6: #{gat_model_forward.1} parent=1 // loop_footer
      %s20 = sadd.s32 1, %s16
    $region7: #{gat_model_forward.1} parent=1 // loop_footer_branch
      %15 = sbr.rel target = $region3
    $region8: #{gat_model_forward.1} parent=1 // loop_exit
      _
    %10262 = vsyncpa [#allocation3], 1
    %s10263 = scalar_lea.sflag [#allocation3], 1
    %10264 = vsyncpa %s10263, 1
    %10265 = vsyncpa [#allocation5], 1
    %10266 = vsyncpa [#allocation8], 1

</llo_original>
